<compile_context>
chip_gen: v7x
topology: tpu7x:2x2x1
jax: 0.10.0
libtpu: 0.0.40
codegen_flags: <defaults>
</compile_context>

<pallas_src>
import functools

import jax
import jax.numpy as jnp
from jax import lax
from jax.experimental import pallas as pl
from jax.experimental.pallas import tpu as pltpu

EPS = 1e-5                       # nn.BatchNorm2d default eps
# Matmul operand dtype.  Set to jnp.bfloat16 on v5e/v6e/v7x for ~2x MXU
# throughput and half the activation DMA bytes (accumulation stays f32);
# kept f32 here so the demo matches the f32 PyTorch module tightly.
COMPUTE_DTYPE = jnp.float32
_VMEM_LIMIT = 32 * 1024 * 1024   # safe for v5e/v6e (128 MiB) and v7x (64 MiB)


# --------------------------------------------------------------------------
# helpers used inside kernels
# --------------------------------------------------------------------------
def _partial_stats(y):
    """Per-tile (sum, sum-of-squares) packed into an (8, C) block."""
    s = jnp.sum(y, axis=0, keepdims=True)
    sq = jnp.sum(y * y, axis=0, keepdims=True)
    rows = lax.broadcasted_iota(jnp.int32, (8, y.shape[1]), 0)
    return jnp.where(rows == 0, s, jnp.where(rows == 1, sq, 0.0))


def _bn_scale_bias(stats_ref, g_ref, b_ref, count, num_tiles):
    """Fold training-mode BN into per-channel (scale, bias) from partial sums."""
    c = stats_ref.shape[-1]
    st = stats_ref[...].reshape(num_tiles, 8, c)
    tot = jnp.sum(st, axis=0)                       # (8, C); rows 0/1 = sum/sumsq
    mean = tot[0:1, :] * (1.0 / count)
    var = tot[1:2, :] * (1.0 / count) - mean * mean
    scale = g_ref[...] * lax.rsqrt(var + EPS)
    bias = b_ref[...] - mean * scale
    return scale, bias


# --------------------------------------------------------------------------
# kernels
# --------------------------------------------------------------------------
def _k1_conv1(x_ref, w1_ref, y1_ref, st1_ref):
    y = jnp.dot(x_ref[...].astype(COMPUTE_DTYPE),
                w1_ref[...].astype(COMPUTE_DTYPE),
                preferred_element_type=jnp.float32)
    y1_ref[...] = y
    st1_ref[...] = _partial_stats(y)


def _k2_conv2(st1_ref, g1_ref, b1_ref, y1_ref, w2_ref, y2_ref, st2_ref,
              xcat_ref, *, H, W, width, nt1, count):
    HW = H * W
    scale, bias = _bn_scale_bias(st1_ref, g1_ref, b1_ref, count, nt1)
    t1 = jnp.maximum(y1_ref[...] * scale + bias, 0.0)            # (H*W, width)

    # Horizontal (kw) taps: shift the flattened rows by +-1 and zero the
    # positions that would wrap across the image's left/right edge.
    col = lax.broadcasted_iota(jnp.int32, (HW, 1), 0) % W
    zrow = jnp.zeros((1, width), jnp.float32)
    left = jnp.where(col == 0, 0.0,
                     jnp.concatenate([zrow, t1[:-1, :]], axis=0))   # pixel (h, w-1)
    right = jnp.where(col == W - 1, 0.0,
                      jnp.concatenate([t1[1:, :], zrow], axis=0))   # pixel (h, w+1)

    # Pack the three kw taps side by side in the lane dim; one zero halo row
    # of W pixels above and below handles the vertical padding.
    xcat_ref[W:W + HW, 0 * width:1 * width] = left
    xcat_ref[W:W + HW, 1 * width:2 * width] = t1
    xcat_ref[W:W + HW, 2 * width:3 * width] = right
    zhalo = jnp.zeros((W, 3 * width), jnp.float32)
    xcat_ref[0:W, :] = zhalo
    xcat_ref[W + HW:2 * W + HW, :] = zhalo

    # Vertical (kh) taps: 3 row-shifted matmuls with contraction K = 3*width,
    # accumulated directly into the resident f32 output block.
    for kh in range(3):
        xk = xcat_ref[kh * W:kh * W + HW, :]
        contrib = jnp.dot(xk.astype(COMPUTE_DTYPE),
                          w2_ref[kh].astype(COMPUTE_DTYPE),
                          preferred_element_type=jnp.float32)
        if kh == 0:
            y2_ref[...] = contrib
        else:
            y2_ref[...] += contrib
    st2_ref[...] = _partial_stats(y2_ref[...])


def _k3_conv3(st2_ref, g2_ref, b2_ref, y2_ref, w3_ref, y3_ref, st3_ref,
              *, nt2, count):
    scale, bias = _bn_scale_bias(st2_ref, g2_ref, b2_ref, count, nt2)
    t = jnp.maximum(y2_ref[...] * scale + bias, 0.0)
    y = jnp.dot(t.astype(COMPUTE_DTYPE), w3_ref[...].astype(COMPUTE_DTYPE),
                preferred_element_type=jnp.float32)
    y3_ref[...] = y
    st3_ref[...] = _partial_stats(y)


def _k4_finalize(st3_ref, g3_ref, b3_ref, y3_ref, x_ref, o_ref, *, nt3, count):
    scale, bias = _bn_scale_bias(st3_ref, g3_ref, b3_ref, count, nt3)
    o_ref[...] = jnp.maximum(y3_ref[...] * scale + bias + x_ref[...], 0.0)


# --------------------------------------------------------------------------
# wrapper
# --------------------------------------------------------------------------
def _full_spec(arr):
    nd = arr.ndim
    return pl.BlockSpec(arr.shape, lambda *_, _z=(0,) * nd: _z)


def _row_tile(rows, target=256):
    for tr in (target, 128, 64, 32, 16, 8):
        if rows % tr == 0:
            return tr
    return rows


def bottleneck_forward(x, p):
    N, H, W, cin = x.shape
    width = p["w1"].shape[1]
    cout = p["w3"].shape[1]
    if cin != cout:
        raise ValueError("identity residual requires inplanes == 4 * planes "
                         "(stride=1, downsample=None)")
    R = N * H * W
    HW = H * W
    x2d = x.reshape(R, cin)
    TR = _row_tile(R)
    nt = R // TR
    cparams = pltpu.CompilerParams(dimension_semantics=("parallel",),
                                   vmem_limit_bytes=_VMEM_LIMIT)

    # ---- K1: conv1 (1x1) + bn1 partial stats ----------------------------
    y1, s1 = pl.pallas_call(
        _k1_conv1,
        grid=(nt,),
        in_specs=[pl.BlockSpec((TR, cin), lambda i: (i, 0)),
                  _full_spec(p["w1"])],
        out_specs=[pl.BlockSpec((TR, width), lambda i: (i, 0)),
                   pl.BlockSpec((8, width), lambda i: (i, 0))],
        out_shape=[jax.ShapeDtypeStruct((R, width), jnp.float32),
                   jax.ShapeDtypeStruct((nt * 8, width), jnp.float32)],
        compiler_params=cparams,
    )(x2d, p["w1"])

    # ---- K2: bn1+relu -> conv2 (3x3) + bn2 partial stats ----------------
    y2, s2 = pl.pallas_call(
        functools.partial(_k2_conv2, H=H, W=W, width=width, nt1=nt,
                          count=float(R)),
        grid=(N,),
        in_specs=[_full_spec(s1), _full_spec(p["g1"]), _full_spec(p["b1"]),
                  pl.BlockSpec((HW, width), lambda n: (n, 0)),
                  _full_spec(p["w2"])],
        out_specs=[pl.BlockSpec((HW, width), lambda n: (n, 0)),
                   pl.BlockSpec((8, width), lambda n: (n, 0))],
        out_shape=[jax.ShapeDtypeStruct((R, width), jnp.float32),
                   jax.ShapeDtypeStruct((N * 8, width), jnp.float32)],
        scratch_shapes=[pltpu.VMEM(((H + 2) * W, 3 * width), jnp.float32)],
        compiler_params=cparams,
    )(s1, p["g1"], p["b1"], y1, p["w2"])

    # ---- K3: bn2+relu -> conv3 (1x1) + bn3 partial stats ----------------
    y3, s3 = pl.pallas_call(
        functools.partial(_k3_conv3, nt2=N, count=float(R)),
        grid=(nt,),
        in_specs=[_full_spec(s2), _full_spec(p["g2"]), _full_spec(p["b2"]),
                  pl.BlockSpec((TR, width), lambda i: (i, 0)),
                  _full_spec(p["w3"])],
        out_specs=[pl.BlockSpec((TR, cout), lambda i: (i, 0)),
                   pl.BlockSpec((8, cout), lambda i: (i, 0))],
        out_shape=[jax.ShapeDtypeStruct((R, cout), jnp.float32),
                   jax.ShapeDtypeStruct((nt * 8, cout), jnp.float32)],
        compiler_params=cparams,
    )(s2, p["g2"], p["b2"], y2, p["w3"])

    # ---- K4: bn3 -> + identity -> relu ----------------------------------
    out2d = pl.pallas_call(
        functools.partial(_k4_finalize, nt3=nt, count=float(R)),
        grid=(nt,),
        in_specs=[_full_spec(s3), _full_spec(p["g3"]), _full_spec(p["b3"]),
                  pl.BlockSpec((TR, cout), lambda i: (i, 0)),
                  pl.BlockSpec((TR, cin), lambda i: (i, 0))],
        out_specs=pl.BlockSpec((TR, cout), lambda i: (i, 0)),
        out_shape=jax.ShapeDtypeStruct((R, cout), jnp.float32),
        compiler_params=cparams,
    )(s3, p["g3"], p["b3"], y3, x2d)

    return out2d.reshape(N, H, W, cout)


# --------------------------------------------------------------------------
# params / reference / test
# --------------------------------------------------------------------------
def make_params(key, inplanes, planes, base_width=64, groups=1):
    width = int(planes * (base_width / 64.0)) * groups
    cout = planes * 4  # Bottleneck.expansion
    ks = jax.random.split(key, 9)
    f32 = jnp.float32
    return {
        # conv1/conv3 weights as (Cin, Cout); conv2 as (3, 3*width, width)
        # with layout [kh, kw*width + cin, cout] (torch OIHW transposed).
        "w1": jax.random.normal(ks[0], (inplanes, width), f32) / jnp.sqrt(float(inplanes)),
        "w2": jax.random.normal(ks[1], (3, 3 * width, width), f32) / jnp.sqrt(9.0 * width),
        "w3": jax.random.normal(ks[2], (width, cout), f32) / jnp.sqrt(float(width)),
        "g1": 1.0 + 0.1 * jax.random.normal(ks[3], (1, width), f32),
        "b1": 0.1 * jax.random.normal(ks[4], (1, width), f32),
        "g2": 1.0 + 0.1 * jax.random.normal(ks[5], (1, width), f32),
        "b2": 0.1 * jax.random.normal(ks[6], (1, width), f32),
        "g3": 1.0 + 0.1 * jax.random.normal(ks[7], (1, cout), f32),
        "b3": 0.1 * jax.random.normal(ks[8], (1, cout), f32),
    }


def reference(x, p):
    """Pure-JAX reference (training-mode BN), NHWC."""
    def bn(t, g, b):
        mean = jnp.mean(t, axis=(0, 1, 2), keepdims=True)
        var = jnp.mean((t - mean) ** 2, axis=(0, 1, 2), keepdims=True)
        return (t - mean) * lax.rsqrt(var + EPS) * g.reshape(1, 1, 1, -1) \
            + b.reshape(1, 1, 1, -1)

    width = p["w1"].shape[1]
    t = jnp.einsum("nhwc,cd->nhwd", x, p["w1"])
    t = jax.nn.relu(bn(t, p["g1"], p["b1"]))
    w2_hwio = p["w2"].reshape(3, 3, width, width)
    t = lax.conv_general_dilated(
        t, w2_hwio, window_strides=(1, 1), padding="SAME",
        dimension_numbers=("NHWC", "HWIO", "NHWC"))
    t = jax.nn.relu(bn(t, p["g2"], p["b2"]))
    t = jnp.einsum("nhwc,cd->nhwd", t, p["w3"])
    t = bn(t, p["g3"], p["b3"])
    return jax.nn.relu(t + x)


if __name__ == "__main__":
    # ResNet-50 "layer1"-style bottleneck at a small spatial size:
    # inplanes=256, planes=64 -> width=64, out channels=256 (lane-dense).
    # stride=1, downsample=None -> identity add requires inplanes == 4*planes.
    N, H, W = 2, 16, 16
    inplanes, planes = 256, 64

    key = jax.random.PRNGKey(0)
    kx, kp = jax.random.split(key)
    x = jax.random.normal(kx, (N, H, W, inplanes), jnp.float32)
    params = make_params(kp, inplanes, planes)

    fwd = jax.jit(bottleneck_forward)
    out = jax.block_until_ready(fwd(x, params))

    ref = jax.block_until_ready(reference(x, params))
    assert out.shape == (N, H, W, planes * 4)
    max_err = float(jnp.max(jnp.abs(out - ref)))
    assert jnp.allclose(out, ref, atol=2e-3, rtol=2e-3), \
        f"mismatch vs reference (max abs err {max_err})"

    print("KERNEL_OK")
</pallas_src>

<mosaic_0001>
module attributes {stable_mosaic.version = 11 : i64} {
  func.func @_k2_conv2(%arg0: i32, %arg1: memref<16x64xf32, #tpu.memory_space<vmem>>, %arg2: memref<1x64xf32, #tpu.memory_space<vmem>>, %arg3: memref<1x64xf32, #tpu.memory_space<vmem>>, %arg4: memref<256x64xf32, #tpu.memory_space<vmem>>, %arg5: memref<3x192x64xf32, #tpu.memory_space<vmem>>, %arg6: memref<256x64xf32, #tpu.memory_space<vmem>>, %arg7: memref<8x64xf32, #tpu.memory_space<vmem>>, %arg8: memref<288x192xf32, #tpu.memory_space<vmem>>) attributes {dimension_semantics = [#tpu.dimension_semantics<parallel>], iteration_bounds = array<i64: 2>, scalar_prefetch = 0 : i64, scratch_operands = 1 : i64, tpu.core_type = #tpu.core_type<tc>, window_params = [{pipeline_mode = #tpu.pipeline_mode<synchronous>, transform_indices = @transform_0, window_bounds = array<i64: 16, 64>}, {pipeline_mode = #tpu.pipeline_mode<synchronous>, transform_indices = @transform_1, window_bounds = array<i64: 1, 64>}, {pipeline_mode = #tpu.pipeline_mode<synchronous>, transform_indices = @transform_2, window_bounds = array<i64: 1, 64>}, {transform_indices = @transform_3, window_bounds = array<i64: 256, 64>}, {pipeline_mode = #tpu.pipeline_mode<synchronous>, transform_indices = @transform_4, window_bounds = array<i64: 3, 192, 64>}, {transform_indices = @transform_5, window_bounds = array<i64: 256, 64>}, {transform_indices = @transform_6, window_bounds = array<i64: 8, 64>}]} {
    %c0 = arith.constant 0 : index
    %c0_0 = arith.constant 0 : index
    %0 = vector.load %arg1[%c0, %c0_0] : memref<16x64xf32, #tpu.memory_space<vmem>>, vector<16x64xf32>
    %1 = vector.shape_cast %0 : vector<16x64xf32> to vector<2x8x64xf32>
    %cst = arith.constant dense<0.000000e+00> : vector<8x64xf32>
    %2 = vector.multi_reduction <add>, %1, %cst [0] : vector<2x8x64xf32> to vector<8x64xf32>
    %3 = vector.extract_strided_slice %2 {offsets = [0, 0], sizes = [1, 64], strides = [1, 1]} : vector<8x64xf32> to vector<1x64xf32>
    %cst_1 = arith.constant 0.001953125 : f32
    %4 = vector.broadcast %cst_1 : f32 to vector<1x64xf32>
    %5 = arith.mulf %3, %4 : vector<1x64xf32>
    %6 = vector.extract_strided_slice %2 {offsets = [1, 0], sizes = [1, 64], strides = [1, 1]} : vector<8x64xf32> to vector<1x64xf32>
    %cst_2 = arith.constant 0.001953125 : f32
    %7 = vector.broadcast %cst_2 : f32 to vector<1x64xf32>
    %8 = arith.mulf %6, %7 : vector<1x64xf32>
    %9 = arith.mulf %5, %5 : vector<1x64xf32>
    %10 = arith.subf %8, %9 : vector<1x64xf32>
    %c0_3 = arith.constant 0 : index
    %c0_4 = arith.constant 0 : index
    %11 = vector.load %arg2[%c0_3, %c0_4] : memref<1x64xf32, #tpu.memory_space<vmem>>, vector<1x64xf32>
    %cst_5 = arith.constant 9.99999974E-6 : f32
    %12 = vector.broadcast %cst_5 : f32 to vector<1x64xf32>
    %13 = arith.addf %10, %12 : vector<1x64xf32>
    %14 = math.rsqrt %13 : vector<1x64xf32>
    %15 = arith.mulf %11, %14 : vector<1x64xf32>
    %c0_6 = arith.constant 0 : index
    %c0_7 = arith.constant 0 : index
    %16 = vector.load %arg3[%c0_6, %c0_7] : memref<1x64xf32, #tpu.memory_space<vmem>>, vector<1x64xf32>
    %17 = arith.mulf %5, %15 : vector<1x64xf32>
    %18 = arith.subf %16, %17 : vector<1x64xf32>
    %c0_8 = arith.constant 0 : index
    %c0_9 = arith.constant 0 : index
    %19 = vector.load %arg4[%c0_8, %c0_9] : memref<256x64xf32, #tpu.memory_space<vmem>>, vector<256x64xf32>
    %20 = vector.broadcast %15 : vector<1x64xf32> to vector<256x64xf32>
    %21 = arith.mulf %19, %20 : vector<256x64xf32>
    %22 = vector.broadcast %18 : vector<1x64xf32> to vector<256x64xf32>
    %23 = arith.addf %21, %22 : vector<256x64xf32>
    %cst_10 = arith.constant 0.000000e+00 : f32
    %24 = vector.broadcast %cst_10 : f32 to vector<256x64xf32>
    %25 = arith.maximumf %23, %24 : vector<256x64xf32>
    %26 = tpu.iota {dimensions = array<i32: 0>} : vector<256x1xi32>
    %c16_i32 = arith.constant 16 : i32
    %c0_i32 = arith.constant 0 : i32
    %27 = arith.cmpi eq, %c16_i32, %c0_i32 : i32
    %c1_i32 = arith.constant 1 : i32
    %28 = arith.select %27, %c1_i32, %c16_i32 : i32
    %29 = vector.broadcast %28 : i32 to vector<256x1xi32>
    %30 = arith.remsi %26, %29 : vector<256x1xi32>
    %c0_i32_11 = arith.constant 0 : i32
    %31 = vector.broadcast %c0_i32_11 : i32 to vector<256x1xi32>
    %32 = arith.cmpi ne, %30, %31 : vector<256x1xi32>
    %c0_i32_12 = arith.constant 0 : i32
    %33 = vector.broadcast %c0_i32_12 : i32 to vector<256x1xi32>
    %34 = arith.cmpi slt, %30, %33 : vector<256x1xi32>
    %c0_i32_13 = arith.constant 0 : i32
    %35 = arith.cmpi slt, %28, %c0_i32_13 : i32
    %36 = vector.broadcast %35 : i1 to vector<256x1xi1>
    %37 = vector.broadcast %36 : vector<256x1xi1> to vector<256x1xi1>
    %38 = arith.xori %34, %37 : vector<256x1xi1>
    %39 = arith.andi %38, %32 : vector<256x1xi1>
    %40 = vector.broadcast %28 : i32 to vector<256x1xi32>
    %41 = arith.addi %30, %40 : vector<256x1xi32>
    %42 = arith.select %39, %41, %30 : vector<256x1xi1>, vector<256x1xi32>
    %cst_14 = arith.constant 0.000000e+00 : f32
    %43 = vector.broadcast %cst_14 : f32 to vector<1x64xf32>
    %c0_i32_15 = arith.constant 0 : i32
    %44 = vector.broadcast %c0_i32_15 : i32 to vector<256x1xi32>
    %45 = arith.cmpi eq, %42, %44 : vector<256x1xi32>
    %46 = vector.extract_strided_slice %25 {offsets = [0, 0], sizes = [255, 64], strides = [1, 1]} : vector<256x64xf32> to vector<255x64xf32>
    %47 = tpu.concatenate %43, %46 in 0 : vector<1x64xf32>, vector<255x64xf32> -> vector<256x64xf32>
    %cst_16 = arith.constant 0.000000e+00 : f32
    %48 = vector.shape_cast %45 : vector<256x1xi1> to vector<256x1xi1>
    %49 = vector.broadcast %48 : vector<256x1xi1> to vector<256x64xi1>
    %50 = vector.broadcast %cst_16 : f32 to vector<256x64xf32>
    %51 = arith.select %49, %50, %47 : vector<256x64xi1>, vector<256x64xf32>
    %c15_i32 = arith.constant 15 : i32
    %52 = vector.broadcast %c15_i32 : i32 to vector<256x1xi32>
    %53 = arith.cmpi eq, %42, %52 : vector<256x1xi32>
    %54 = vector.extract_strided_slice %25 {offsets = [1, 0], sizes = [255, 64], strides = [1, 1]} : vector<256x64xf32> to vector<255x64xf32>
    %55 = tpu.concatenate %54, %43 in 0 : vector<255x64xf32>, vector<1x64xf32> -> vector<256x64xf32>
    %cst_17 = arith.constant 0.000000e+00 : f32
    %56 = vector.shape_cast %53 : vector<256x1xi1> to vector<256x1xi1>
    %57 = vector.broadcast %56 : vector<256x1xi1> to vector<256x64xi1>
    %58 = vector.broadcast %cst_17 : f32 to vector<256x64xf32>
    %59 = arith.select %57, %58, %55 : vector<256x64xi1>, vector<256x64xf32>
    %c16 = arith.constant 16 : index
    %c0_18 = arith.constant 0 : index
    %60 = vector.load %arg8[%c16, %c0_18] : memref<288x192xf32, #tpu.memory_space<vmem>>, vector<256x64xf32>
    tpu.vector_store %arg8[%c16, %c0_18], %51 {strides = array<i32>} : memref<288x192xf32, #tpu.memory_space<vmem>>, vector<256x64xf32>,
    %c16_19 = arith.constant 16 : index
    %c64 = arith.constant 64 : index
    %61 = vector.load %arg8[%c16_19, %c64] : memref<288x192xf32, #tpu.memory_space<vmem>>, vector<256x64xf32>
    tpu.vector_store %arg8[%c16_19, %c64], %25 {strides = array<i32>} : memref<288x192xf32, #tpu.memory_space<vmem>>, vector<256x64xf32>,
    %c16_20 = arith.constant 16 : index
    %c128 = arith.constant 128 : index
    %62 = vector.load %arg8[%c16_20, %c128] : memref<288x192xf32, #tpu.memory_space<vmem>>, vector<256x64xf32>
    tpu.vector_store %arg8[%c16_20, %c128], %59 {strides = array<i32>} : memref<288x192xf32, #tpu.memory_space<vmem>>, vector<256x64xf32>,
    %cst_21 = arith.constant 0.000000e+00 : f32
    %63 = vector.broadcast %cst_21 : f32 to vector<16x192xf32>
    %c0_22 = arith.constant 0 : index
    %c0_23 = arith.constant 0 : index
    %64 = vector.load %arg8[%c0_22, %c0_23] : memref<288x192xf32, #tpu.memory_space<vmem>>, vector<16x192xf32>
    tpu.vector_store %arg8[%c0_22, %c0_23], %63 {strides = array<i32>} : memref<288x192xf32, #tpu.memory_space<vmem>>, vector<16x192xf32>,
    %c272 = arith.constant 272 : index
    %c0_24 = arith.constant 0 : index
    %65 = vector.load %arg8[%c272, %c0_24] : memref<288x192xf32, #tpu.memory_space<vmem>>, vector<16x192xf32>
    tpu.vector_store %arg8[%c272, %c0_24], %63 {strides = array<i32>} : memref<288x192xf32, #tpu.memory_space<vmem>>, vector<16x192xf32>,
    %c0_25 = arith.constant 0 : index
    %c0_26 = arith.constant 0 : index
    %66 = vector.load %arg8[%c0_25, %c0_26] : memref<288x192xf32, #tpu.memory_space<vmem>>, vector<256x192xf32>
    %c0_27 = arith.constant 0 : index
    %c0_28 = arith.constant 0 : index
    %c0_29 = arith.constant 0 : index
    %67 = vector.load %arg5[%c0_27, %c0_28, %c0_29] : memref<3x192x64xf32, #tpu.memory_space<vmem>>, vector<1x192x64xf32>
    %68 = vector.shape_cast %67 : vector<1x192x64xf32> to vector<192x64xf32>
    %cst_30 = arith.constant dense<0.000000e+00> : vector<256x64xf32>
    %69 = tpu.matmul %66, %68, %cst_30 {dimension_numbers = #tpu.dot_dimension_numbers<[1], [0], [0], [1], [0, 0, 1, 1], [], []>} : vector<256x192xf32>, vector<192x64xf32>, vector<256x64xf32> -> vector<256x64xf32>
    %c0_31 = arith.constant 0 : index
    %c0_32 = arith.constant 0 : index
    %70 = vector.load %arg6[%c0_31, %c0_32] : memref<256x64xf32, #tpu.memory_space<vmem>>, vector<256x64xf32>
    tpu.vector_store %arg6[%c0_31, %c0_32], %69 {strides = array<i32>} : memref<256x64xf32, #tpu.memory_space<vmem>>, vector<256x64xf32>,
    %c16_33 = arith.constant 16 : index
    %c0_34 = arith.constant 0 : index
    %71 = vector.load %arg8[%c16_33, %c0_34] : memref<288x192xf32, #tpu.memory_space<vmem>>, vector<256x192xf32>
    %c1 = arith.constant 1 : index
    %c0_35 = arith.constant 0 : index
    %c0_36 = arith.constant 0 : index
    %72 = vector.load %arg5[%c1, %c0_35, %c0_36] : memref<3x192x64xf32, #tpu.memory_space<vmem>>, vector<1x192x64xf32>
    %73 = vector.shape_cast %72 : vector<1x192x64xf32> to vector<192x64xf32>
    %cst_37 = arith.constant dense<0.000000e+00> : vector<256x64xf32>
    %74 = tpu.matmul %71, %73, %cst_37 {dimension_numbers = #tpu.dot_dimension_numbers<[1], [0], [0], [1], [0, 0, 1, 1], [], []>} : vector<256x192xf32>, vector<192x64xf32>, vector<256x64xf32> -> vector<256x64xf32>
    %c0_38 = arith.constant 0 : index
    %c0_39 = arith.constant 0 : index
    %75 = vector.load %arg6[%c0_38, %c0_39] : memref<256x64xf32, #tpu.memory_space<vmem>>, vector<256x64xf32>
    %76 = arith.addf %75, %74 : vector<256x64xf32>
    %c0_40 = arith.constant 0 : index
    %c0_41 = arith.constant 0 : index
    %77 = vector.load %arg6[%c0_40, %c0_41] : memref<256x64xf32, #tpu.memory_space<vmem>>, vector<256x64xf32>
    tpu.vector_store %arg6[%c0_40, %c0_41], %76 {strides = array<i32>} : memref<256x64xf32, #tpu.memory_space<vmem>>, vector<256x64xf32>,
    %c32 = arith.constant 32 : index
    %c0_42 = arith.constant 0 : index
    %78 = vector.load %arg8[%c32, %c0_42] : memref<288x192xf32, #tpu.memory_space<vmem>>, vector<256x192xf32>
    %c2 = arith.constant 2 : index
    %c0_43 = arith.constant 0 : index
    %c0_44 = arith.constant 0 : index
    %79 = vector.load %arg5[%c2, %c0_43, %c0_44] : memref<3x192x64xf32, #tpu.memory_space<vmem>>, vector<1x192x64xf32>
    %80 = vector.shape_cast %79 : vector<1x192x64xf32> to vector<192x64xf32>
    %cst_45 = arith.constant dense<0.000000e+00> : vector<256x64xf32>
    %81 = tpu.matmul %78, %80, %cst_45 {dimension_numbers = #tpu.dot_dimension_numbers<[1], [0], [0], [1], [0, 0, 1, 1], [], []>} : vector<256x192xf32>, vector<192x64xf32>, vector<256x64xf32> -> vector<256x64xf32>
    %c0_46 = arith.constant 0 : index
    %c0_47 = arith.constant 0 : index
    %82 = vector.load %arg6[%c0_46, %c0_47] : memref<256x64xf32, #tpu.memory_space<vmem>>, vector<256x64xf32>
    %83 = arith.addf %82, %81 : vector<256x64xf32>
    %c0_48 = arith.constant 0 : index
    %c0_49 = arith.constant 0 : index
    %84 = vector.load %arg6[%c0_48, %c0_49] : memref<256x64xf32, #tpu.memory_space<vmem>>, vector<256x64xf32>
    tpu.vector_store %arg6[%c0_48, %c0_49], %83 {strides = array<i32>} : memref<256x64xf32, #tpu.memory_space<vmem>>, vector<256x64xf32>,
    %c0_50 = arith.constant 0 : index
    %c0_51 = arith.constant 0 : index
    %85 = vector.load %arg6[%c0_50, %c0_51] : memref<256x64xf32, #tpu.memory_space<vmem>>, vector<256x64xf32>
    %cst_52 = arith.constant dense<0.000000e+00> : vector<64xf32>
    %86 = vector.multi_reduction <add>, %85, %cst_52 [0] : vector<256x64xf32> to vector<64xf32>
    %87 = vector.shape_cast %86 : vector<64xf32> to vector<1x64xf32>
    %88 = arith.mulf %85, %85 : vector<256x64xf32>
    %cst_53 = arith.constant dense<0.000000e+00> : vector<64xf32>
    %89 = vector.multi_reduction <add>, %88, %cst_53 [0] : vector<256x64xf32> to vector<64xf32>
    %90 = vector.shape_cast %89 : vector<64xf32> to vector<1x64xf32>
    %91 = tpu.iota {dimensions = array<i32: 0>} : vector<8x64xi32>
    %c0_i32_54 = arith.constant 0 : i32
    %92 = vector.broadcast %c0_i32_54 : i32 to vector<8x64xi32>
    %93 = arith.cmpi eq, %91, %92 : vector<8x64xi32>
    %c1_i32_55 = arith.constant 1 : i32
    %94 = vector.broadcast %c1_i32_55 : i32 to vector<8x64xi32>
    %95 = arith.cmpi eq, %91, %94 : vector<8x64xi32>
    %cst_56 = arith.constant 0.000000e+00 : f32
    %96 = vector.shape_cast %90 : vector<1x64xf32> to vector<1x64xf32>
    %97 = vector.broadcast %96 : vector<1x64xf32> to vector<8x64xf32>
    %98 = vector.broadcast %cst_56 : f32 to vector<8x64xf32>
    %99 = arith.select %95, %97, %98 : vector<8x64xi1>, vector<8x64xf32>
    %100 = vector.shape_cast %87 : vector<1x64xf32> to vector<1x64xf32>
    %101 = vector.broadcast %100 : vector<1x64xf32> to vector<8x64xf32>
    %102 = arith.select %93, %101, %99 : vector<8x64xi1>, vector<8x64xf32>
    %c0_57 = arith.constant 0 : index
    %c0_58 = arith.constant 0 : index
    %103 = vector.load %arg7[%c0_57, %c0_58] : memref<8x64xf32, #tpu.memory_space<vmem>>, vector<8x64xf32>
    tpu.vector_store %arg7[%c0_57, %c0_58], %102 {strides = array<i32>} : memref<8x64xf32, #tpu.memory_space<vmem>>, vector<8x64xf32>,
    return
  }
  func.func @transform_0(%arg0: i32) -> (i32, i32) {
    %c0_i32 = arith.constant 0 : i32
    %c0_i32_0 = arith.constant 0 : i32
    %c0_i32_1 = arith.constant 0 : i32
    return %c0_i32, %c0_i32_0 : i32, i32
  }
  func.func @transform_1(%arg0: i32) -> (i32, i32) {
    %c0_i32 = arith.constant 0 : i32
    %c0_i32_0 = arith.constant 0 : i32
    %c0_i32_1 = arith.constant 0 : i32
    return %c0_i32, %c0_i32_0 : i32, i32
  }
  func.func @transform_2(%arg0: i32) -> (i32, i32) {
    %c0_i32 = arith.constant 0 : i32
    %c0_i32_0 = arith.constant 0 : i32
    %c0_i32_1 = arith.constant 0 : i32
    return %c0_i32, %c0_i32_0 : i32, i32
  }
  func.func @transform_3(%arg0: i32) -> (i32, i32) {
    %c0_i32 = arith.constant 0 : i32
    %c0_i32_0 = arith.constant 0 : i32
    return %arg0, %c0_i32 : i32, i32
  }
  func.func @transform_4(%arg0: i32) -> (i32, i32, i32) {
    %c0_i32 = arith.constant 0 : i32
    %c0_i32_0 = arith.constant 0 : i32
    %c0_i32_1 = arith.constant 0 : i32
    %c0_i32_2 = arith.constant 0 : i32
    return %c0_i32, %c0_i32_0, %c0_i32_1 : i32, i32, i32
  }
  func.func @transform_5(%arg0: i32) -> (i32, i32) {
    %c0_i32 = arith.constant 0 : i32
    %c0_i32_0 = arith.constant 0 : i32
    return %arg0, %c0_i32 : i32, i32
  }
  func.func @transform_6(%arg0: i32) -> (i32, i32) {
    %c0_i32 = arith.constant 0 : i32
    %c0_i32_0 = arith.constant 0 : i32
    return %arg0, %c0_i32 : i32, i32
  }
}

module attributes {stable_mosaic.version = 11 : i64} {
  func.func @_k1_conv1(%arg0: i32, %arg1: memref<256x256xf32, #tpu.memory_space<vmem>>, %arg2: memref<256x64xf32, #tpu.memory_space<vmem>>, %arg3: memref<256x64xf32, #tpu.memory_space<vmem>>, %arg4: memref<8x64xf32, #tpu.memory_space<vmem>>) attributes {dimension_semantics = [#tpu.dimension_semantics<parallel>], iteration_bounds = array<i64: 2>, scalar_prefetch = 0 : i64, scratch_operands = 0 : i64, tpu.core_type = #tpu.core_type<tc>, window_params = [{transform_indices = @transform_0, window_bounds = array<i64: 256, 256>}, {pipeline_mode = #tpu.pipeline_mode<synchronous>, transform_indices = @transform_1, window_bounds = array<i64: 256, 64>}, {transform_indices = @transform_2, window_bounds = array<i64: 256, 64>}, {transform_indices = @transform_3, window_bounds = array<i64: 8, 64>}]} {
    %c0 = arith.constant 0 : index
    %c0_0 = arith.constant 0 : index
    %0 = vector.load %arg1[%c0, %c0_0] : memref<256x256xf32, #tpu.memory_space<vmem>>, vector<256x256xf32>
    %c0_1 = arith.constant 0 : index
    %c0_2 = arith.constant 0 : index
    %1 = vector.load %arg2[%c0_1, %c0_2] : memref<256x64xf32, #tpu.memory_space<vmem>>, vector<256x64xf32>
    %cst = arith.constant dense<0.000000e+00> : vector<256x64xf32>
    %2 = tpu.matmul %0, %1, %cst {dimension_numbers = #tpu.dot_dimension_numbers<[1], [0], [0], [1], [0, 0, 1, 1], [], []>} : vector<256x256xf32>, vector<256x64xf32>, vector<256x64xf32> -> vector<256x64xf32>
    %c0_3 = arith.constant 0 : index
    %c0_4 = arith.constant 0 : index
    %3 = vector.load %arg3[%c0_3, %c0_4] : memref<256x64xf32, #tpu.memory_space<vmem>>, vector<256x64xf32>
    tpu.vector_store %arg3[%c0_3, %c0_4], %2 {strides = array<i32>} : memref<256x64xf32, #tpu.memory_space<vmem>>, vector<256x64xf32>,
    %cst_5 = arith.constant dense<0.000000e+00> : vector<64xf32>
    %4 = vector.multi_reduction <add>, %2, %cst_5 [0] : vector<256x64xf32> to vector<64xf32>
    %5 = vector.shape_cast %4 : vector<64xf32> to vector<1x64xf32>
    %6 = arith.mulf %2, %2 : vector<256x64xf32>
    %cst_6 = arith.constant dense<0.000000e+00> : vector<64xf32>
    %7 = vector.multi_reduction <add>, %6, %cst_6 [0] : vector<256x64xf32> to vector<64xf32>
    %8 = vector.shape_cast %7 : vector<64xf32> to vector<1x64xf32>
    %9 = tpu.iota {dimensions = array<i32: 0>} : vector<8x64xi32>
    %c0_i32 = arith.constant 0 : i32
    %10 = vector.broadcast %c0_i32 : i32 to vector<8x64xi32>
    %11 = arith.cmpi eq, %9, %10 : vector<8x64xi32>
    %c1_i32 = arith.constant 1 : i32
    %12 = vector.broadcast %c1_i32 : i32 to vector<8x64xi32>
    %13 = arith.cmpi eq, %9, %12 : vector<8x64xi32>
    %cst_7 = arith.constant 0.000000e+00 : f32
    %14 = vector.shape_cast %8 : vector<1x64xf32> to vector<1x64xf32>
    %15 = vector.broadcast %14 : vector<1x64xf32> to vector<8x64xf32>
    %16 = vector.broadcast %cst_7 : f32 to vector<8x64xf32>
    %17 = arith.select %13, %15, %16 : vector<8x64xi1>, vector<8x64xf32>
    %18 = vector.shape_cast %5 : vector<1x64xf32> to vector<1x64xf32>
    %19 = vector.broadcast %18 : vector<1x64xf32> to vector<8x64xf32>
    %20 = arith.select %11, %19, %17 : vector<8x64xi1>, vector<8x64xf32>
    %c0_8 = arith.constant 0 : index
    %c0_9 = arith.constant 0 : index
    %21 = vector.load %arg4[%c0_8, %c0_9] : memref<8x64xf32, #tpu.memory_space<vmem>>, vector<8x64xf32>
    tpu.vector_store %arg4[%c0_8, %c0_9], %20 {strides = array<i32>} : memref<8x64xf32, #tpu.memory_space<vmem>>, vector<8x64xf32>,
    return
  }
  func.func @transform_0(%arg0: i32) -> (i32, i32) {
    %c0_i32 = arith.constant 0 : i32
    %c0_i32_0 = arith.constant 0 : i32
    return %arg0, %c0_i32 : i32, i32
  }
  func.func @transform_1(%arg0: i32) -> (i32, i32) {
    %c0_i32 = arith.constant 0 : i32
    %c0_i32_0 = arith.constant 0 : i32
    %c0_i32_1 = arith.constant 0 : i32
    return %c0_i32, %c0_i32_0 : i32, i32
  }
  func.func @transform_2(%arg0: i32) -> (i32, i32) {
    %c0_i32 = arith.constant 0 : i32
    %c0_i32_0 = arith.constant 0 : i32
    return %arg0, %c0_i32 : i32, i32
  }
  func.func @transform_3(%arg0: i32) -> (i32, i32) {
    %c0_i32 = arith.constant 0 : i32
    %c0_i32_0 = arith.constant 0 : i32
    return %arg0, %c0_i32 : i32, i32
  }
}

module attributes {stable_mosaic.version = 11 : i64} {
  func.func @_k4_finalize(%arg0: i32, %arg1: memref<16x256xf32, #tpu.memory_space<vmem>>, %arg2: memref<1x256xf32, #tpu.memory_space<vmem>>, %arg3: memref<1x256xf32, #tpu.memory_space<vmem>>, %arg4: memref<256x256xf32, #tpu.memory_space<vmem>>, %arg5: memref<256x256xf32, #tpu.memory_space<vmem>>, %arg6: memref<256x256xf32, #tpu.memory_space<vmem>>) attributes {dimension_semantics = [#tpu.dimension_semantics<parallel>], iteration_bounds = array<i64: 2>, scalar_prefetch = 0 : i64, scratch_operands = 0 : i64, tpu.core_type = #tpu.core_type<tc>, window_params = [{pipeline_mode = #tpu.pipeline_mode<synchronous>, transform_indices = @transform_0, window_bounds = array<i64: 16, 256>}, {pipeline_mode = #tpu.pipeline_mode<synchronous>, transform_indices = @transform_1, window_bounds = array<i64: 1, 256>}, {pipeline_mode = #tpu.pipeline_mode<synchronous>, transform_indices = @transform_2, window_bounds = array<i64: 1, 256>}, {transform_indices = @transform_3, window_bounds = array<i64: 256, 256>}, {transform_indices = @transform_4, window_bounds = array<i64: 256, 256>}, {transform_indices = @transform_5, window_bounds = array<i64: 256, 256>}]} {
    %c0 = arith.constant 0 : index
    %c0_0 = arith.constant 0 : index
    %0 = vector.load %arg1[%c0, %c0_0] : memref<16x256xf32, #tpu.memory_space<vmem>>, vector<16x256xf32>
    %1 = vector.shape_cast %0 : vector<16x256xf32> to vector<2x8x256xf32>
    %cst = arith.constant dense<0.000000e+00> : vector<8x256xf32>
    %2 = vector.multi_reduction <add>, %1, %cst [0] : vector<2x8x256xf32> to vector<8x256xf32>
    %3 = vector.extract_strided_slice %2 {offsets = [0, 0], sizes = [1, 256], strides = [1, 1]} : vector<8x256xf32> to vector<1x256xf32>
    %cst_1 = arith.constant 0.001953125 : f32
    %4 = vector.broadcast %cst_1 : f32 to vector<1x256xf32>
    %5 = arith.mulf %3, %4 : vector<1x256xf32>
    %6 = vector.extract_strided_slice %2 {offsets = [1, 0], sizes = [1, 256], strides = [1, 1]} : vector<8x256xf32> to vector<1x256xf32>
    %cst_2 = arith.constant 0.001953125 : f32
    %7 = vector.broadcast %cst_2 : f32 to vector<1x256xf32>
    %8 = arith.mulf %6, %7 : vector<1x256xf32>
    %9 = arith.mulf %5, %5 : vector<1x256xf32>
    %10 = arith.subf %8, %9 : vector<1x256xf32>
    %c0_3 = arith.constant 0 : index
    %c0_4 = arith.constant 0 : index
    %11 = vector.load %arg2[%c0_3, %c0_4] : memref<1x256xf32, #tpu.memory_space<vmem>>, vector<1x256xf32>
    %cst_5 = arith.constant 9.99999974E-6 : f32
    %12 = vector.broadcast %cst_5 : f32 to vector<1x256xf32>
    %13 = arith.addf %10, %12 : vector<1x256xf32>
    %14 = math.rsqrt %13 : vector<1x256xf32>
    %15 = arith.mulf %11, %14 : vector<1x256xf32>
    %c0_6 = arith.constant 0 : index
    %c0_7 = arith.constant 0 : index
    %16 = vector.load %arg3[%c0_6, %c0_7] : memref<1x256xf32, #tpu.memory_space<vmem>>, vector<1x256xf32>
    %17 = arith.mulf %5, %15 : vector<1x256xf32>
    %18 = arith.subf %16, %17 : vector<1x256xf32>
    %c0_8 = arith.constant 0 : index
    %c0_9 = arith.constant 0 : index
    %19 = vector.load %arg4[%c0_8, %c0_9] : memref<256x256xf32, #tpu.memory_space<vmem>>, vector<256x256xf32>
    %20 = vector.broadcast %15 : vector<1x256xf32> to vector<256x256xf32>
    %21 = arith.mulf %19, %20 : vector<256x256xf32>
    %22 = vector.broadcast %18 : vector<1x256xf32> to vector<256x256xf32>
    %23 = arith.addf %21, %22 : vector<256x256xf32>
    %c0_10 = arith.constant 0 : index
    %c0_11 = arith.constant 0 : index
    %24 = vector.load %arg5[%c0_10, %c0_11] : memref<256x256xf32, #tpu.memory_space<vmem>>, vector<256x256xf32>
    %25 = arith.addf %23, %24 : vector<256x256xf32>
    %cst_12 = arith.constant 0.000000e+00 : f32
    %26 = vector.broadcast %cst_12 : f32 to vector<256x256xf32>
    %27 = arith.maximumf %25, %26 : vector<256x256xf32>
    %c0_13 = arith.constant 0 : index
    %c0_14 = arith.constant 0 : index
    %28 = vector.load %arg6[%c0_13, %c0_14] : memref<256x256xf32, #tpu.memory_space<vmem>>, vector<256x256xf32>
    tpu.vector_store %arg6[%c0_13, %c0_14], %27 {strides = array<i32>} : memref<256x256xf32, #tpu.memory_space<vmem>>, vector<256x256xf32>,
    return
  }
  func.func @transform_0(%arg0: i32) -> (i32, i32) {
    %c0_i32 = arith.constant 0 : i32
    %c0_i32_0 = arith.constant 0 : i32
    %c0_i32_1 = arith.constant 0 : i32
    return %c0_i32, %c0_i32_0 : i32, i32
  }
  func.func @transform_1(%arg0: i32) -> (i32, i32) {
    %c0_i32 = arith.constant 0 : i32
    %c0_i32_0 = arith.constant 0 : i32
    %c0_i32_1 = arith.constant 0 : i32
    return %c0_i32, %c0_i32_0 : i32, i32
  }
  func.func @transform_2(%arg0: i32) -> (i32, i32) {
    %c0_i32 = arith.constant 0 : i32
    %c0_i32_0 = arith.constant 0 : i32
    %c0_i32_1 = arith.constant 0 : i32
    return %c0_i32, %c0_i32_0 : i32, i32
  }
  func.func @transform_3(%arg0: i32) -> (i32, i32) {
    %c0_i32 = arith.constant 0 : i32
    %c0_i32_0 = arith.constant 0 : i32
    return %arg0, %c0_i32 : i32, i32
  }
  func.func @transform_4(%arg0: i32) -> (i32, i32) {
    %c0_i32 = arith.constant 0 : i32
    %c0_i32_0 = arith.constant 0 : i32
    return %arg0, %c0_i32 : i32, i32
  }
  func.func @transform_5(%arg0: i32) -> (i32, i32) {
    %c0_i32 = arith.constant 0 : i32
    %c0_i32_0 = arith.constant 0 : i32
    return %arg0, %c0_i32 : i32, i32
  }
}

module attributes {stable_mosaic.version = 11 : i64} {
  func.func @_k3_conv3(%arg0: i32, %arg1: memref<16x64xf32, #tpu.memory_space<vmem>>, %arg2: memref<1x64xf32, #tpu.memory_space<vmem>>, %arg3: memref<1x64xf32, #tpu.memory_space<vmem>>, %arg4: memref<256x64xf32, #tpu.memory_space<vmem>>, %arg5: memref<64x256xf32, #tpu.memory_space<vmem>>, %arg6: memref<256x256xf32, #tpu.memory_space<vmem>>, %arg7: memref<8x256xf32, #tpu.memory_space<vmem>>) attributes {dimension_semantics = [#tpu.dimension_semantics<parallel>], iteration_bounds = array<i64: 2>, scalar_prefetch = 0 : i64, scratch_operands = 0 : i64, tpu.core_type = #tpu.core_type<tc>, window_params = [{pipeline_mode = #tpu.pipeline_mode<synchronous>, transform_indices = @transform_0, window_bounds = array<i64: 16, 64>}, {pipeline_mode = #tpu.pipeline_mode<synchronous>, transform_indices = @transform_1, window_bounds = array<i64: 1, 64>}, {pipeline_mode = #tpu.pipeline_mode<synchronous>, transform_indices = @transform_2, window_bounds = array<i64: 1, 64>}, {transform_indices = @transform_3, window_bounds = array<i64: 256, 64>}, {pipeline_mode = #tpu.pipeline_mode<synchronous>, transform_indices = @transform_4, window_bounds = array<i64: 64, 256>}, {transform_indices = @transform_5, window_bounds = array<i64: 256, 256>}, {transform_indices = @transform_6, window_bounds = array<i64: 8, 256>}]} {
    %c0 = arith.constant 0 : index
    %c0_0 = arith.constant 0 : index
    %0 = vector.load %arg1[%c0, %c0_0] : memref<16x64xf32, #tpu.memory_space<vmem>>, vector<16x64xf32>
    %1 = vector.shape_cast %0 : vector<16x64xf32> to vector<2x8x64xf32>
    %cst = arith.constant dense<0.000000e+00> : vector<8x64xf32>
    %2 = vector.multi_reduction <add>, %1, %cst [0] : vector<2x8x64xf32> to vector<8x64xf32>
    %3 = vector.extract_strided_slice %2 {offsets = [0, 0], sizes = [1, 64], strides = [1, 1]} : vector<8x64xf32> to vector<1x64xf32>
    %cst_1 = arith.constant 0.001953125 : f32
    %4 = vector.broadcast %cst_1 : f32 to vector<1x64xf32>
    %5 = arith.mulf %3, %4 : vector<1x64xf32>
    %6 = vector.extract_strided_slice %2 {offsets = [1, 0], sizes = [1, 64], strides = [1, 1]} : vector<8x64xf32> to vector<1x64xf32>
    %cst_2 = arith.constant 0.001953125 : f32
    %7 = vector.broadcast %cst_2 : f32 to vector<1x64xf32>
    %8 = arith.mulf %6, %7 : vector<1x64xf32>
    %9 = arith.mulf %5, %5 : vector<1x64xf32>
    %10 = arith.subf %8, %9 : vector<1x64xf32>
    %c0_3 = arith.constant 0 : index
    %c0_4 = arith.constant 0 : index
    %11 = vector.load %arg2[%c0_3, %c0_4] : memref<1x64xf32, #tpu.memory_space<vmem>>, vector<1x64xf32>
    %cst_5 = arith.constant 9.99999974E-6 : f32
    %12 = vector.broadcast %cst_5 : f32 to vector<1x64xf32>
    %13 = arith.addf %10, %12 : vector<1x64xf32>
    %14 = math.rsqrt %13 : vector<1x64xf32>
    %15 = arith.mulf %11, %14 : vector<1x64xf32>
    %c0_6 = arith.constant 0 : index
    %c0_7 = arith.constant 0 : index
    %16 = vector.load %arg3[%c0_6, %c0_7] : memref<1x64xf32, #tpu.memory_space<vmem>>, vector<1x64xf32>
    %17 = arith.mulf %5, %15 : vector<1x64xf32>
    %18 = arith.subf %16, %17 : vector<1x64xf32>
    %c0_8 = arith.constant 0 : index
    %c0_9 = arith.constant 0 : index
    %19 = vector.load %arg4[%c0_8, %c0_9] : memref<256x64xf32, #tpu.memory_space<vmem>>, vector<256x64xf32>
    %20 = vector.broadcast %15 : vector<1x64xf32> to vector<256x64xf32>
    %21 = arith.mulf %19, %20 : vector<256x64xf32>
    %22 = vector.broadcast %18 : vector<1x64xf32> to vector<256x64xf32>
    %23 = arith.addf %21, %22 : vector<256x64xf32>
    %cst_10 = arith.constant 0.000000e+00 : f32
    %24 = vector.broadcast %cst_10 : f32 to vector<256x64xf32>
    %25 = arith.maximumf %23, %24 : vector<256x64xf32>
    %c0_11 = arith.constant 0 : index
    %c0_12 = arith.constant 0 : index
    %26 = vector.load %arg5[%c0_11, %c0_12] : memref<64x256xf32, #tpu.memory_space<vmem>>, vector<64x256xf32>
    %cst_13 = arith.constant dense<0.000000e+00> : vector<256x256xf32>
    %27 = tpu.matmul %25, %26, %cst_13 {dimension_numbers = #tpu.dot_dimension_numbers<[1], [0], [0], [1], [0, 0, 1, 1], [], []>} : vector<256x64xf32>, vector<64x256xf32>, vector<256x256xf32> -> vector<256x256xf32>
    %c0_14 = arith.constant 0 : index
    %c0_15 = arith.constant 0 : index
    %28 = vector.load %arg6[%c0_14, %c0_15] : memref<256x256xf32, #tpu.memory_space<vmem>>, vector<256x256xf32>
    tpu.vector_store %arg6[%c0_14, %c0_15], %27 {strides = array<i32>} : memref<256x256xf32, #tpu.memory_space<vmem>>, vector<256x256xf32>,
    %cst_16 = arith.constant dense<0.000000e+00> : vector<256xf32>
    %29 = vector.multi_reduction <add>, %27, %cst_16 [0] : vector<256x256xf32> to vector<256xf32>
    %30 = vector.shape_cast %29 : vector<256xf32> to vector<1x256xf32>
    %31 = arith.mulf %27, %27 : vector<256x256xf32>
    %cst_17 = arith.constant dense<0.000000e+00> : vector<256xf32>
    %32 = vector.multi_reduction <add>, %31, %cst_17 [0] : vector<256x256xf32> to vector<256xf32>
    %33 = vector.shape_cast %32 : vector<256xf32> to vector<1x256xf32>
    %34 = tpu.iota {dimensions = array<i32: 0>} : vector<8x256xi32>
    %c0_i32 = arith.constant 0 : i32
    %35 = vector.broadcast %c0_i32 : i32 to vector<8x256xi32>
    %36 = arith.cmpi eq, %34, %35 : vector<8x256xi32>
    %c1_i32 = arith.constant 1 : i32
    %37 = vector.broadcast %c1_i32 : i32 to vector<8x256xi32>
    %38 = arith.cmpi eq, %34, %37 : vector<8x256xi32>
    %cst_18 = arith.constant 0.000000e+00 : f32
    %39 = vector.shape_cast %33 : vector<1x256xf32> to vector<1x256xf32>
    %40 = vector.broadcast %39 : vector<1x256xf32> to vector<8x256xf32>
    %41 = vector.broadcast %cst_18 : f32 to vector<8x256xf32>
    %42 = arith.select %38, %40, %41 : vector<8x256xi1>, vector<8x256xf32>
    %43 = vector.shape_cast %30 : vector<1x256xf32> to vector<1x256xf32>
    %44 = vector.broadcast %43 : vector<1x256xf32> to vector<8x256xf32>
    %45 = arith.select %36, %44, %42 : vector<8x256xi1>, vector<8x256xf32>
    %c0_19 = arith.constant 0 : index
    %c0_20 = arith.constant 0 : index
    %46 = vector.load %arg7[%c0_19, %c0_20] : memref<8x256xf32, #tpu.memory_space<vmem>>, vector<8x256xf32>
    tpu.vector_store %arg7[%c0_19, %c0_20], %45 {strides = array<i32>} : memref<8x256xf32, #tpu.memory_space<vmem>>, vector<8x256xf32>,
    return
  }
  func.func @transform_0(%arg0: i32) -> (i32, i32) {
    %c0_i32 = arith.constant 0 : i32
    %c0_i32_0 = arith.constant 0 : i32
    %c0_i32_1 = arith.constant 0 : i32
    return %c0_i32, %c0_i32_0 : i32, i32
  }
  func.func @transform_1(%arg0: i32) -> (i32, i32) {
    %c0_i32 = arith.constant 0 : i32
    %c0_i32_0 = arith.constant 0 : i32
    %c0_i32_1 = arith.constant 0 : i32
    return %c0_i32, %c0_i32_0 : i32, i32
  }
  func.func @transform_2(%arg0: i32) -> (i32, i32) {
    %c0_i32 = arith.constant 0 : i32
    %c0_i32_0 = arith.constant 0 : i32
    %c0_i32_1 = arith.constant 0 : i32
    return %c0_i32, %c0_i32_0 : i32, i32
  }
  func.func @transform_3(%arg0: i32) -> (i32, i32) {
    %c0_i32 = arith.constant 0 : i32
    %c0_i32_0 = arith.constant 0 : i32
    return %arg0, %c0_i32 : i32, i32
  }
  func.func @transform_4(%arg0: i32) -> (i32, i32) {
    %c0_i32 = arith.constant 0 : i32
    %c0_i32_0 = arith.constant 0 : i32
    %c0_i32_1 = arith.constant 0 : i32
    return %c0_i32, %c0_i32_0 : i32, i32
  }
  func.func @transform_5(%arg0: i32) -> (i32, i32) {
    %c0_i32 = arith.constant 0 : i32
    %c0_i32_0 = arith.constant 0 : i32
    return %arg0, %c0_i32 : i32, i32
  }
  func.func @transform_6(%arg0: i32) -> (i32, i32) {
    %c0_i32 = arith.constant 0 : i32
    %c0_i32_0 = arith.constant 0 : i32
    return %arg0, %c0_i32 : i32, i32
  }
}

</mosaic_0001>

<llo_original>
// kernel: bottleneck_forward.4
$region0: #{bottleneck_forward.4}
  #allocation0 [shape = 'u32[]', space=smem, size = 0x4, offset = 0x4, fixed_abs, tag = 'smem constant byte address 0x4 - core index']
  #allocation1 [shape = 'u32[144,128]{1,0:T(1,128)}', space=vmem, size = 0x12000, scoped, tag = 'internal scratch']
  %s0 = inlined_call_operand.hbm [shape: f32[512,256], index: 0, kind: input, shape index: {}]
  %s1 = inlined_call_operand.vmem [shape: f32[256,64], index: 1, kind: input, shape index: {}]
  %s2 = inlined_call_operand.vmem [shape: f32[512,64], index: 2, kind: output, shape index: {0}]
  %s3 = inlined_call_operand.vmem [shape: f32[16,64], index: 3, kind: output, shape index: {1}]
  %4 = xla_tuple %s2, %s3
  %s5 = sld [smem:[#allocation0]]
  $region53: #{bottleneck_forward.4} parent=0
    _
  %s7 = ssub.s32 1, %s5
  %s8 = scalar_select 0, %s7, %s5
  $region1: #{bottleneck_forward.4} parent=0
    #allocation2 [shape = 'u8[524288]{0}', space=vmem, size = 0x80000, scoped, tag = 'input window, operand 0']
    #allocation3 [shape = 's32[2]{0}', space=sflag, size = 0x8, scoped, tag = 'scoped memory for bottleneck_forward.4']
    %9 = vsyncpa [#allocation3], 0
    %s10 = scalar_lea.sflag [#allocation3], 1
    %11 = vsyncpa %s10, 0
    loop: start=0, step=1, limit=4
    $region2: #{bottleneck_forward.4} parent=1 // loop_pre_header
      _
    $region3: #{bottleneck_forward.4} parent=1 // loop_header
      %s13 = sphi 0, %s17
      %p14 = scmp.ge.s32.totalorder %s13, 4
      %s23 = sphi 0, %s25
      %s26 = sphi 0, %s23
      %s27 = sphi 0, %s26
      %s43 = sphi 0, %s27
      %s47 = sphi 0, %s47
      %s49 = sphi 0, %s47
      %s50 = sphi 0, %s49
      %s64 = sphi 0, %s50
      %s70 = sphi 0, %s72
      %s73 = sphi 0, %s70
      %s74 = sphi 0, %s73
      %s90 = sphi 0, %s74
      %s96 = sphi 0, %s98
      %s99 = sphi 0, %s96
      %s100 = sphi 0, %s99
      %s116 = sphi 0, %s100
    $region4: #{bottleneck_forward.4} parent=1 // loop_header_branch
      %16 = sbr.rel (%p14) target = $region8
    $region5: #{bottleneck_forward.4} parent=1 // loop_body
      %s18 = ssub.s32 %s13, 1
      %s19 = ssub.s32 %s13, 2
      %s20 = sadd.s32 %s13, 1
      %s21 = ssub.s32 %s13, %s20
      %p22 = scmp.eq.s32.totalorder %s21, 0
      %s24 = sadd.s32 %s23, 1
      %s25 = scalar_select %p22, %s23, %s24
      %p28 = pneg %p22
      %p29 = scmp.eq.s32.totalorder %s13, 1
      %p30 = por %p28, %p29
      %p31 = scmp.ne.s32.totalorder %s23, %s26
      %p32 = scmp.eq.s32.totalorder %s13, 0
      %p33 = por %p31, %p32
      %p34 = scmp.ne.s32.totalorder %s23, %s26
      %p35 = scmp.eq.s32.totalorder %s18, 1
      %p36 = por %p34, %p35
      %p37 = scmp.ne.s32.totalorder %s26, %s27
      %p38 = scmp.eq.s32.totalorder %s18, 0
      %p39 = por %p37, %p38
      %p40 = scmp.ne.s32.totalorder %s26, %s27
      %p41 = scmp.eq.s32.totalorder %s19, 1
      %p42 = por %p40, %p41
      %p44 = scmp.ne.s32.totalorder %s27, %s43
      %p45 = scmp.eq.s32.totalorder %s19, 0
      %p46 = por %p44, %p45
      %s48 = sadd.s32 %s47, 1
      %p51 = scmp.eq.s32.totalorder %s13, 1
      %p52 = scmp.ne.s32.totalorder %s47, %s49
      %p53 = scmp.eq.s32.totalorder %s13, 0
      %p54 = por %p52, %p53
      %p55 = scmp.ne.s32.totalorder %s47, %s49
      %p56 = scmp.eq.s32.totalorder %s18, 1
      %p57 = por %p55, %p56
      %p58 = scmp.ne.s32.totalorder %s49, %s50
      %p59 = scmp.eq.s32.totalorder %s18, 0
      %p60 = por %p58, %p59
      %p61 = scmp.ne.s32.totalorder %s49, %s50
      %p62 = scmp.eq.s32.totalorder %s19, 1
      %p63 = por %p61, %p62
      %p65 = scmp.ne.s32.totalorder %s50, %s64
      %p66 = scmp.eq.s32.totalorder %s19, 0
      %p67 = por %p65, %p66
      %s68 = ssub.s32 %s13, %s20
      %p69 = scmp.eq.s32.totalorder %s68, 0
      %s71 = sadd.s32 %s70, 1
      %s72 = scalar_select %p69, %s70, %s71
      %p75 = pneg %p69
      %p76 = scmp.eq.s32.totalorder %s13, 1
      %p77 = por %p75, %p76
      %p78 = scmp.ne.s32.totalorder %s70, %s73
      %p79 = scmp.eq.s32.totalorder %s13, 0
      %p80 = por %p78, %p79
      %p81 = scmp.ne.s32.totalorder %s70, %s73
      %p82 = scmp.eq.s32.totalorder %s18, 1
      %p83 = por %p81, %p82
      %p84 = scmp.ne.s32.totalorder %s73, %s74
      %p85 = scmp.eq.s32.totalorder %s18, 0
      %p86 = por %p84, %p85
      %p87 = scmp.ne.s32.totalorder %s73, %s74
      %p88 = scmp.eq.s32.totalorder %s19, 1
      %p89 = por %p87, %p88
      %p91 = scmp.ne.s32.totalorder %s74, %s90
      %p92 = scmp.eq.s32.totalorder %s19, 0
      %p93 = por %p91, %p92
      %s94 = ssub.s32 %s13, %s20
      %p95 = scmp.eq.s32.totalorder %s94, 0
      %s97 = sadd.s32 %s96, 1
      %s98 = scalar_select %p95, %s96, %s97
      %p101 = pneg %p95
      %p102 = scmp.eq.s32.totalorder %s13, 1
      %p103 = por %p101, %p102
      %p104 = scmp.ne.s32.totalorder %s96, %s99
      %p105 = scmp.eq.s32.totalorder %s13, 0
      %p106 = por %p104, %p105
      %p107 = scmp.ne.s32.totalorder %s96, %s99
      %p108 = scmp.eq.s32.totalorder %s18, 1
      %p109 = por %p107, %p108
      %p110 = scmp.ne.s32.totalorder %s99, %s100
      %p111 = scmp.eq.s32.totalorder %s18, 0
      %p112 = por %p110, %p111
      %p113 = scmp.ne.s32.totalorder %s99, %s100
      %p114 = scmp.eq.s32.totalorder %s19, 1
      %p115 = por %p113, %p114
      %p117 = scmp.ne.s32.totalorder %s100, %s116
      %p118 = scmp.eq.s32.totalorder %s19, 0
      %p119 = por %p117, %p118
      %p120 = scmp.le.s32.totalorder 1, %s13
      %p121 = scmp.lt.s32.totalorder %s13, 3
      %p122 = pnand %p120, %p121
      %p123 = pneg %p122
      // Predicated region
      $region9: #{bottleneck_forward.4} parent=5 // pred_check
        _
      $region10: #{bottleneck_forward.4} parent=5 // pred_check_branch
        %125 = sbr.rel (%p122) target = $region12
      $region11: #{bottleneck_forward.4} parent=5 // pred_region
        %s126 = ssub.s32 %s13, 1
        // Predicated region
        $region13: #{bottleneck_forward.4} parent=11 // pred_check
          %p127 = pneg %p60
        $region14: #{bottleneck_forward.4} parent=11 // pred_check_branch
          %129 = sbr.rel (%p127) target = $region16
        $region15: #{bottleneck_forward.4} parent=11 // pred_region
          _
        $region16: #{bottleneck_forward.4} parent=11 // pred_fallthru
          _
      $region12: #{bottleneck_forward.4} parent=5 // pred_fallthru
        _
      %p130 = scmp.lt.s32.totalorder %s13, 2
      // Predicated region
      $region17: #{bottleneck_forward.4} parent=5 // pred_check
        %p131 = pneg %p130
      $region18: #{bottleneck_forward.4} parent=5 // pred_check_branch
        %133 = sbr.rel (%p131) target = $region20
      $region19: #{bottleneck_forward.4} parent=5 // pred_region
        // Predicated region
        $region21: #{bottleneck_forward.4} parent=19 // pred_check
          %p134 = pneg %p33
        $region22: #{bottleneck_forward.4} parent=19 // pred_check_branch
          %136 = sbr.rel (%p134) target = $region24
        $region23: #{bottleneck_forward.4} parent=19 // pred_region
          %s137 = sand.u32 %s23, 1
          %s138 = scalar_lea.sflag [#allocation3], %s137
          %s139 = sand.u32 %s23, 1
          %s140 = smul.addr %s139, 512
          %s141 = scalar_lea.vmem [#allocation2], %s140
          %s142 = smul.u32 32, %s13
          %s144 = ssub.s32 8192, 8192
          %145 = vsyncadd %s138, %s144
          %s146 = smul.addr %s142, 2
          %s147 = smul.addr %s146, 128
          %s148 = scalar_lea.hbm %s0, %s147
          %s149 = sshll.u32 %s141, 4
          %s150 = int_to_ptr.vmem [resolvable:$true] %s149
          %155 = dma.hbm_to_vmem [thread:$0]  %s148, 8192, %s150, %s138, 256, 256, 16
        $region24: #{bottleneck_forward.4} parent=19 // pred_fallthru
          _
      $region20: #{bottleneck_forward.4} parent=5 // pred_fallthru
        _
      %p156 = scmp.le.s32.totalorder 1, %s13
      %p157 = scmp.lt.s32.totalorder %s13, 3
      %p158 = pnand %p156, %p157
      %p159 = pneg %p158
      // Predicated region
      $region25: #{bottleneck_forward.4} parent=5 // pred_check
        _
      $region26: #{bottleneck_forward.4} parent=5 // pred_check_branch
        %161 = sbr.rel (%p158) target = $region28
      $region27: #{bottleneck_forward.4} parent=5 // pred_region
        %s162 = ssub.s32 %s13, 1
        %s163 = sand.u32 %s26, 1
        %s164 = scalar_lea.sflag [#allocation3], %s163
        %s165 = sand.u32 %s26, 1
        %s166 = smul.addr %s165, 512
        %s167 = scalar_lea.vmem [#allocation2], %s166
        // Predicated region
        $region29: #{bottleneck_forward.4} parent=27 // pred_check
          %p168 = pneg %p39
        $region30: #{bottleneck_forward.4} parent=27 // pred_check_branch
          %170 = sbr.rel (%p168) target = $region32
        $region31: #{bottleneck_forward.4} parent=27 // pred_region
          %171 = dma.done %s164, 8192
        $region32: #{bottleneck_forward.4} parent=27 // pred_fallthru
          _
        %s172 = sand.u32 %s26, 1
        %s173 = scalar_lea.sflag [#allocation3], %s172
        %s174 = sand.u32 %s26, 1
        %s175 = smul.addr %s174, 512
        %s176 = scalar_lea.vmem [#allocation2], %s175
        %p177 = pneg %p39
        %p178 = pneg %p36
        %p179 = pneg %p60
        %p180 = pneg %p57
        %p181 = pneg %p86
        %p182 = pneg %p83
        %s183 = smul.u32 32, %s18
        %p184 = scmp.lt.s32.totalorder %s183, 63
        %s185 = scalar_select %p184, %s183, 63
        %s186 = smul.addr %s185, 8
        %s187 = scalar_lea.vmem %s2, %s186
        %p188 = pneg %p112
        %p189 = pneg %p109
        %p190 = scmp.lt.s32.totalorder %s18, 1
        %s191 = scalar_select %p190, %s18, 1
        %s192 = smul.addr %s191, 8
        %s193 = scalar_lea.vmem %s3, %s192
        %s194 = smul.u32 32, %s18
        %s195 = smul.u32 32, %s18
        %p196 = scmp.lt.s32.totalorder %s195, 63
        %s197 = scalar_select %p196, %s195, 63
        %s198 = smul.addr %s197, 8
        %s199 = scalar_lea.vmem %s2, %s198
        %s200 = smul.u32 32, %s18
        %p201 = scmp.lt.s32.totalorder %s18, 1
        %s202 = scalar_select %p201, %s18, 1
        %s203 = smul.addr %s202, 8
        %s204 = scalar_lea.vmem %s3, %s203
        %v205 = vld [vmem:[%s167] sm:$0xff]
        %v206 = vld [vmem:[%s167 + $0x8] sm:$0xff]
        %v207 = vld [vmem:[%s167 + $0x10] sm:$0xff]
        %v208 = vld [vmem:[%s167 + $0x18] sm:$0xff]
        %v209 = vld [vmem:[%s167 + $0x20] sm:$0xff]
        %v210 = vld [vmem:[%s167 + $0x28] sm:$0xff]
        %v211 = vld [vmem:[%s167 + $0x30] sm:$0xff]
        %v212 = vld [vmem:[%s167 + $0x38] sm:$0xff]
        %v213 = vld [vmem:[%s167 + $0x40] sm:$0xff]
        %v214 = vld [vmem:[%s167 + $0x48] sm:$0xff]
        %v215 = vld [vmem:[%s167 + $0x50] sm:$0xff]
        %v216 = vld [vmem:[%s167 + $0x58] sm:$0xff]
        %v217 = vld [vmem:[%s167 + $0x60] sm:$0xff]
        %v218 = vld [vmem:[%s167 + $0x68] sm:$0xff]
        %v219 = vld [vmem:[%s167 + $0x70] sm:$0xff]
        %v220 = vld [vmem:[%s167 + $0x78] sm:$0xff]
        %v221 = vld [vmem:[%s167 + $0x80] sm:$0xff]
        %v222 = vld [vmem:[%s167 + $0x88] sm:$0xff]
        %v223 = vld [vmem:[%s167 + $0x90] sm:$0xff]
        %v224 = vld [vmem:[%s167 + $0x98] sm:$0xff]
        %v225 = vld [vmem:[%s167 + $0xa0] sm:$0xff]
        %v226 = vld [vmem:[%s167 + $0xa8] sm:$0xff]
        %v227 = vld [vmem:[%s167 + $0xb0] sm:$0xff]
        %v228 = vld [vmem:[%s167 + $0xb8] sm:$0xff]
        %v229 = vld [vmem:[%s167 + $0xc0] sm:$0xff]
        %v230 = vld [vmem:[%s167 + $0xc8] sm:$0xff]
        %v231 = vld [vmem:[%s167 + $0xd0] sm:$0xff]
        %v232 = vld [vmem:[%s167 + $0xd8] sm:$0xff]
        %v233 = vld [vmem:[%s167 + $0xe0] sm:$0xff]
        %v234 = vld [vmem:[%s167 + $0xe8] sm:$0xff]
        %v235 = vld [vmem:[%s167 + $0xf0] sm:$0xff]
        %v236 = vld [vmem:[%s167 + $0xf8] sm:$0xff]
        %v237 = vld [vmem:[%s167 + $0x100] sm:$0xff]
        %v238 = vld [vmem:[%s167 + $0x108] sm:$0xff]
        %v239 = vld [vmem:[%s167 + $0x110] sm:$0xff]
        %v240 = vld [vmem:[%s167 + $0x118] sm:$0xff]
        %v241 = vld [vmem:[%s167 + $0x120] sm:$0xff]
        %v242 = vld [vmem:[%s167 + $0x128] sm:$0xff]
        %v243 = vld [vmem:[%s167 + $0x130] sm:$0xff]
        %v244 = vld [vmem:[%s167 + $0x138] sm:$0xff]
        %v245 = vld [vmem:[%s167 + $0x140] sm:$0xff]
        %v246 = vld [vmem:[%s167 + $0x148] sm:$0xff]
        %v247 = vld [vmem:[%s167 + $0x150] sm:$0xff]
        %v248 = vld [vmem:[%s167 + $0x158] sm:$0xff]
        %v249 = vld [vmem:[%s167 + $0x160] sm:$0xff]
        %v250 = vld [vmem:[%s167 + $0x168] sm:$0xff]
        %v251 = vld [vmem:[%s167 + $0x170] sm:$0xff]
        %v252 = vld [vmem:[%s167 + $0x178] sm:$0xff]
        %v253 = vld [vmem:[%s167 + $0x180] sm:$0xff]
        %v254 = vld [vmem:[%s167 + $0x188] sm:$0xff]
        %v255 = vld [vmem:[%s167 + $0x190] sm:$0xff]
        %v256 = vld [vmem:[%s167 + $0x198] sm:$0xff]
        %v257 = vld [vmem:[%s167 + $0x1a0] sm:$0xff]
        %v258 = vld [vmem:[%s167 + $0x1a8] sm:$0xff]
        %v259 = vld [vmem:[%s167 + $0x1b0] sm:$0xff]
        %v260 = vld [vmem:[%s167 + $0x1b8] sm:$0xff]
        %v261 = vld [vmem:[%s167 + $0x1c0] sm:$0xff]
        %v262 = vld [vmem:[%s167 + $0x1c8] sm:$0xff]
        %v263 = vld [vmem:[%s167 + $0x1d0] sm:$0xff]
        %v264 = vld [vmem:[%s167 + $0x1d8] sm:$0xff]
        %v265 = vld [vmem:[%s167 + $0x1e0] sm:$0xff]
        %v266 = vld [vmem:[%s167 + $0x1e8] sm:$0xff]
        %v267 = vld [vmem:[%s167 + $0x1f0] sm:$0xff]
        %v268 = vld [vmem:[%s167 + $0x1f8] sm:$0xff]
        %v269 = vld [vmem:[%s1] sm:$0xff]
        %v270 = vld [vmem:[%s1 + $0x8] sm:$0xff]
        %v271 = vld [vmem:[%s1 + $0x10] sm:$0xff]
        %v272 = vld [vmem:[%s1 + $0x18] sm:$0xff]
        %v273 = vld [vmem:[%s1 + $0x20] sm:$0xff]
        %v274 = vld [vmem:[%s1 + $0x28] sm:$0xff]
        %v275 = vld [vmem:[%s1 + $0x30] sm:$0xff]
        %v276 = vld [vmem:[%s1 + $0x38] sm:$0xff]
        %v277 = vld [vmem:[%s1 + $0x40] sm:$0xff]
        %v278 = vld [vmem:[%s1 + $0x48] sm:$0xff]
        %v279 = vld [vmem:[%s1 + $0x50] sm:$0xff]
        %v280 = vld [vmem:[%s1 + $0x58] sm:$0xff]
        %v281 = vld [vmem:[%s1 + $0x60] sm:$0xff]
        %v282 = vld [vmem:[%s1 + $0x68] sm:$0xff]
        %v283 = vld [vmem:[%s1 + $0x70] sm:$0xff]
        %v284 = vld [vmem:[%s1 + $0x78] sm:$0xff]
        %v285 = vld [vmem:[%s1 + $0x80] sm:$0xff]
        %v286 = vld [vmem:[%s1 + $0x88] sm:$0xff]
        %v287 = vld [vmem:[%s1 + $0x90] sm:$0xff]
        %v288 = vld [vmem:[%s1 + $0x98] sm:$0xff]
        %v289 = vld [vmem:[%s1 + $0xa0] sm:$0xff]
        %v290 = vld [vmem:[%s1 + $0xa8] sm:$0xff]
        %v291 = vld [vmem:[%s1 + $0xb0] sm:$0xff]
        %v292 = vld [vmem:[%s1 + $0xb8] sm:$0xff]
        %v293 = vld [vmem:[%s1 + $0xc0] sm:$0xff]
        %v294 = vld [vmem:[%s1 + $0xc8] sm:$0xff]
        %v295 = vld [vmem:[%s1 + $0xd0] sm:$0xff]
        %v296 = vld [vmem:[%s1 + $0xd8] sm:$0xff]
        %v297 = vld [vmem:[%s1 + $0xe0] sm:$0xff]
        %v298 = vld [vmem:[%s1 + $0xe8] sm:$0xff]
        %v299 = vld [vmem:[%s1 + $0xf0] sm:$0xff]
        %v300 = vld [vmem:[%s1 + $0xf8] sm:$0xff]
        %301 = vmatprep.subr.mxu0 0.0
        %302 = vmatpush1.msra.mxu0 %v269
        %303 = vmatprep.subr.mxu0 0.0
        %304 = vmatpush1.msra.mxu0 %v270
        %305 = vmatprep.subr.mxu0 0.0
        %306 = vmatpush1.msra.mxu0 %v271
        %307 = vmatprep.subr.mxu0 0.0
        %308 = vmatpush1.msra.mxu0 %v272
        %309 = vmatprep.subr.mxu0 0.0
        %310 = vmatpush1.msra.mxu0 %v273
        %311 = vmatprep.subr.mxu0 0.0
        %312 = vmatpush1.msra.mxu0 %v274
        %313 = vmatprep.subr.mxu0 0.0
        %314 = vmatpush1.msra.mxu0 %v275
        %315 = vmatprep.subr.mxu0 0.0
        %316 = vmatpush1.msra.mxu0 %v276
        %317 = vmatprep.subr.mxu0 0.0
        %318 = vmatpush1.msra.mxu0 %v277
        %319 = vmatprep.subr.mxu0 0.0
        %320 = vmatpush1.msra.mxu0 %v278
        %321 = vmatprep.subr.mxu0 0.0
        %322 = vmatpush1.msra.mxu0 %v279
        %323 = vmatprep.subr.mxu0 0.0
        %324 = vmatpush1.msra.mxu0 %v280
        %325 = vmatprep.subr.mxu0 0.0
        %326 = vmatpush1.msra.mxu0 %v281
        %327 = vmatprep.subr.mxu0 0.0
        %328 = vmatpush1.msra.mxu0 %v282
        %329 = vmatprep.subr.mxu0 0.0
        %330 = vmatpush1.msra.mxu0 %v283
        %331 = vmatprep.subr.mxu0 0.0
        %332 = vmatpush1.msra.mxu0 %v284
        %333 = vmatprep.subr.mxu0 0.0
        %334 = vmatpush1.msra.mxu0 %v285
        %335 = vmatprep.subr.mxu0 0.0
        %336 = vmatpush1.msra.mxu0 %v286
        %337 = vmatprep.subr.mxu0 0.0
        %338 = vmatpush1.msra.mxu0 %v287
        %339 = vmatprep.subr.mxu0 0.0
        %340 = vmatpush1.msra.mxu0 %v288
        %341 = vmatprep.subr.mxu0 0.0
        %342 = vmatpush1.msra.mxu0 %v289
        %343 = vmatprep.subr.mxu0 0.0
        %344 = vmatpush1.msra.mxu0 %v290
        %345 = vmatprep.subr.mxu0 0.0
        %346 = vmatpush1.msra.mxu0 %v291
        %347 = vmatprep.subr.mxu0 0.0
        %348 = vmatpush1.msra.mxu0 %v292
        %349 = vmatprep.subr.mxu0 0.0
        %350 = vmatpush1.msra.mxu0 %v293
        %351 = vmatprep.subr.mxu0 0.0
        %352 = vmatpush1.msra.mxu0 %v294
        %353 = vmatprep.subr.mxu0 0.0
        %354 = vmatpush1.msra.mxu0 %v295
        %355 = vmatprep.subr.mxu0 0.0
        %356 = vmatpush1.msra.mxu0 %v296
        %357 = vmatprep.subr.mxu0 0.0
        %358 = vmatpush1.msra.mxu0 %v297
        %359 = vmatprep.subr.mxu0 0.0
        %360 = vmatpush1.msra.mxu0 %v298
        %361 = vmatprep.subr.mxu0 0.0
        %362 = vmatpush1.msra.mxu0 %v299
        %363 = vmatprep.subr.mxu0 0.0
        %364 = vmatpush1.msra.mxu0 %v300
        %365 = vmatprep.mubr.f32.mxu0 %v206
        %366 = vmatmul.mubr.f32.gmra.mrb[0].mxu0 %v205
        %v367 = vpop.f32.mrb[0].mxu0
        %v368 = vadd.f32 0.0, %v367
        %v369 = vpop.f32.mrb[0].mxu0
        %370 = vmatprep.mubr.f32.mxu0 %v208
        %371 = vmatmul.mubr.f32.gmra.mrb[0].mxu0 %v207
        %v372 = vpop.f32.mrb[0].mxu0
        %v373 = vadd.f32 0.0, %v372
        %v374 = vpop.f32.mrb[0].mxu0
        %375 = vmatprep.mubr.f32.mxu0 %v210
        %376 = vmatmul.mubr.f32.gmra.mrb[0].mxu0 %v209
        %v377 = vpop.f32.mrb[0].mxu0
        %v378 = vadd.f32 0.0, %v377
        %v379 = vpop.f32.mrb[0].mxu0
        %380 = vmatprep.mubr.f32.mxu0 %v212
        %381 = vmatmul.mubr.f32.gmra.mrb[0].mxu0 %v211
        %v382 = vpop.f32.mrb[0].mxu0
        %v383 = vadd.f32 0.0, %v382
        %v384 = vpop.f32.mrb[0].mxu0
        %385 = vmatprep.mubr.f32.mxu0 %v214
        %386 = vmatmul.mubr.f32.gmra.mrb[0].mxu0 %v213
        %v387 = vpop.f32.mrb[0].mxu0
        %v388 = vadd.f32 0.0, %v387
        %v389 = vpop.f32.mrb[0].mxu0
        %390 = vmatprep.mubr.f32.mxu0 %v216
        %391 = vmatmul.mubr.f32.gmra.mrb[0].mxu0 %v215
        %v392 = vpop.f32.mrb[0].mxu0
        %v393 = vadd.f32 0.0, %v392
        %v394 = vpop.f32.mrb[0].mxu0
        %395 = vmatprep.mubr.f32.mxu0 %v218
        %396 = vmatmul.mubr.f32.gmra.mrb[0].mxu0 %v217
        %v397 = vpop.f32.mrb[0].mxu0
        %v398 = vadd.f32 0.0, %v397
        %v399 = vpop.f32.mrb[0].mxu0
        %400 = vmatprep.mubr.f32.mxu0 %v220
        %401 = vmatmul.mubr.f32.gmra.mrb[0].mxu0 %v219
        %v402 = vpop.f32.mrb[0].mxu0
        %v403 = vadd.f32 0.0, %v402
        %v404 = vpop.f32.mrb[0].mxu0
        %405 = vmatprep.mubr.f32.mxu0 %v222
        %406 = vmatmul.mubr.f32.gmra.mrb[0].mxu0 %v221
        %v407 = vpop.f32.mrb[0].mxu0
        %v408 = vadd.f32 0.0, %v407
        %v409 = vpop.f32.mrb[0].mxu0
        %410 = vmatprep.mubr.f32.mxu0 %v224
        %411 = vmatmul.mubr.f32.gmra.mrb[0].mxu0 %v223
        %v412 = vpop.f32.mrb[0].mxu0
        %v413 = vadd.f32 0.0, %v412
        %v414 = vpop.f32.mrb[0].mxu0
        %415 = vmatprep.mubr.f32.mxu0 %v226
        %416 = vmatmul.mubr.f32.gmra.mrb[0].mxu0 %v225
        %v417 = vpop.f32.mrb[0].mxu0
        %v418 = vadd.f32 0.0, %v417
        %v419 = vpop.f32.mrb[0].mxu0
        %420 = vmatprep.mubr.f32.mxu0 %v228
        %421 = vmatmul.mubr.f32.gmra.mrb[0].mxu0 %v227
        %v422 = vpop.f32.mrb[0].mxu0
        %v423 = vadd.f32 0.0, %v422
        %v424 = vpop.f32.mrb[0].mxu0
        %425 = vmatprep.mubr.f32.mxu0 %v230
        %426 = vmatmul.mubr.f32.gmra.mrb[0].mxu0 %v229
        %v427 = vpop.f32.mrb[0].mxu0
        %v428 = vadd.f32 0.0, %v427
        %v429 = vpop.f32.mrb[0].mxu0
        %430 = vmatprep.mubr.f32.mxu0 %v232
        %431 = vmatmul.mubr.f32.gmra.mrb[0].mxu0 %v231
        %v432 = vpop.f32.mrb[0].mxu0
        %v433 = vadd.f32 0.0, %v432
        %v434 = vpop.f32.mrb[0].mxu0
        %435 = vmatprep.mubr.f32.mxu0 %v234
        %436 = vmatmul.mubr.f32.gmra.mrb[0].mxu0 %v233
        %v437 = vpop.f32.mrb[0].mxu0
        %v438 = vadd.f32 0.0, %v437
        %v439 = vpop.f32.mrb[0].mxu0
        %440 = vmatprep.mubr.f32.mxu0 %v236
        %441 = vmatmul.mubr.f32.gmra.mrb[0].mxu0 %v235
        %v442 = vpop.f32.mrb[0].mxu0
        %v443 = vadd.f32 0.0, %v442
        %v444 = vpop.f32.mrb[0].mxu0
        %445 = vmatprep.mubr.f32.mxu0 %v238
        %446 = vmatmul.mubr.f32.gmra.mrb[0].mxu0 %v237
        %v447 = vpop.f32.mrb[0].mxu0
        %v448 = vadd.f32 0.0, %v447
        %v449 = vpop.f32.mrb[0].mxu0
        %450 = vmatprep.mubr.f32.mxu0 %v240
        %451 = vmatmul.mubr.f32.gmra.mrb[0].mxu0 %v239
        %v452 = vpop.f32.mrb[0].mxu0
        %v453 = vadd.f32 0.0, %v452
        %v454 = vpop.f32.mrb[0].mxu0
        %455 = vmatprep.mubr.f32.mxu0 %v242
        %456 = vmatmul.mubr.f32.gmra.mrb[0].mxu0 %v241
        %v457 = vpop.f32.mrb[0].mxu0
        %v458 = vadd.f32 0.0, %v457
        %v459 = vpop.f32.mrb[0].mxu0
        %460 = vmatprep.mubr.f32.mxu0 %v244
        %461 = vmatmul.mubr.f32.gmra.mrb[0].mxu0 %v243
        %v462 = vpop.f32.mrb[0].mxu0
        %v463 = vadd.f32 0.0, %v462
        %v464 = vpop.f32.mrb[0].mxu0
        %465 = vmatprep.mubr.f32.mxu0 %v246
        %466 = vmatmul.mubr.f32.gmra.mrb[0].mxu0 %v245
        %v467 = vpop.f32.mrb[0].mxu0
        %v468 = vadd.f32 0.0, %v467
        %v469 = vpop.f32.mrb[0].mxu0
        %470 = vmatprep.mubr.f32.mxu0 %v248
        %471 = vmatmul.mubr.f32.gmra.mrb[0].mxu0 %v247
        %v472 = vpop.f32.mrb[0].mxu0
        %v473 = vadd.f32 0.0, %v472
        %v474 = vpop.f32.mrb[0].mxu0
        %475 = vmatprep.mubr.f32.mxu0 %v250
        %476 = vmatmul.mubr.f32.gmra.mrb[0].mxu0 %v249
        %v477 = vpop.f32.mrb[0].mxu0
        %v478 = vadd.f32 0.0, %v477
        %v479 = vpop.f32.mrb[0].mxu0
        %480 = vmatprep.mubr.f32.mxu0 %v252
        %481 = vmatmul.mubr.f32.gmra.mrb[0].mxu0 %v251
        %v482 = vpop.f32.mrb[0].mxu0
        %v483 = vadd.f32 0.0, %v482
        %v484 = vpop.f32.mrb[0].mxu0
        %485 = vmatprep.mubr.f32.mxu0 %v254
        %486 = vmatmul.mubr.f32.gmra.mrb[0].mxu0 %v253
        %v487 = vpop.f32.mrb[0].mxu0
        %v488 = vadd.f32 0.0, %v487
        %v489 = vpop.f32.mrb[0].mxu0
        %490 = vmatprep.mubr.f32.mxu0 %v256
        %491 = vmatmul.mubr.f32.gmra.mrb[0].mxu0 %v255
        %v492 = vpop.f32.mrb[0].mxu0
        %v493 = vadd.f32 0.0, %v492
        %v494 = vpop.f32.mrb[0].mxu0
        %495 = vmatprep.mubr.f32.mxu0 %v258
        %496 = vmatmul.mubr.f32.gmra.mrb[0].mxu0 %v257
        %v497 = vpop.f32.mrb[0].mxu0
        %v498 = vadd.f32 0.0, %v497
        %v499 = vpop.f32.mrb[0].mxu0
        %500 = vmatprep.mubr.f32.mxu0 %v260
        %501 = vmatmul.mubr.f32.gmra.mrb[0].mxu0 %v259
        %v502 = vpop.f32.mrb[0].mxu0
        %v503 = vadd.f32 0.0, %v502
        %v504 = vpop.f32.mrb[0].mxu0
        %505 = vmatprep.mubr.f32.mxu0 %v262
        %506 = vmatmul.mubr.f32.gmra.mrb[0].mxu0 %v261
        %v507 = vpop.f32.mrb[0].mxu0
        %v508 = vadd.f32 0.0, %v507
        %v509 = vpop.f32.mrb[0].mxu0
        %510 = vmatprep.mubr.f32.mxu0 %v264
        %511 = vmatmul.mubr.f32.gmra.mrb[0].mxu0 %v263
        %v512 = vpop.f32.mrb[0].mxu0
        %v513 = vadd.f32 0.0, %v512
        %v514 = vpop.f32.mrb[0].mxu0
        %515 = vmatprep.mubr.f32.mxu0 %v266
        %516 = vmatmul.mubr.f32.gmra.mrb[0].mxu0 %v265
        %v517 = vpop.f32.mrb[0].mxu0
        %v518 = vadd.f32 0.0, %v517
        %v519 = vpop.f32.mrb[0].mxu0
        %520 = vmatprep.mubr.f32.mxu0 %v268
        %521 = vmatmul.mubr.f32.gmra.mrb[0].mxu0 %v267
        %v522 = vpop.f32.mrb[0].mxu0
        %v523 = vadd.f32 0.0, %v522
        %v524 = vpop.f32.mrb[0].mxu0
        %525 = vdwg.mxu0
        %vm526 = vcmask 523264
        %527 = vst.msk [vmem:[%s199] sm:$0xff] %vm526, %v368
        %528 = vst.msk [vmem:[%s199 + $0x8] sm:$0xff] %vm526, %v373
        %529 = vst.msk [vmem:[%s199 + $0x10] sm:$0xff] %vm526, %v378
        %530 = vst.msk [vmem:[%s199 + $0x18] sm:$0xff] %vm526, %v383
        %531 = vst.msk [vmem:[%s199 + $0x20] sm:$0xff] %vm526, %v388
        %532 = vst.msk [vmem:[%s199 + $0x28] sm:$0xff] %vm526, %v393
        %533 = vst.msk [vmem:[%s199 + $0x30] sm:$0xff] %vm526, %v398
        %534 = vst.msk [vmem:[%s199 + $0x38] sm:$0xff] %vm526, %v403
        %535 = vst.msk [vmem:[%s199 + $0x40] sm:$0xff] %vm526, %v408
        %536 = vst.msk [vmem:[%s199 + $0x48] sm:$0xff] %vm526, %v413
        %537 = vst.msk [vmem:[%s199 + $0x50] sm:$0xff] %vm526, %v418
        %538 = vst.msk [vmem:[%s199 + $0x58] sm:$0xff] %vm526, %v423
        %539 = vst.msk [vmem:[%s199 + $0x60] sm:$0xff] %vm526, %v428
        %540 = vst.msk [vmem:[%s199 + $0x68] sm:$0xff] %vm526, %v433
        %541 = vst.msk [vmem:[%s199 + $0x70] sm:$0xff] %vm526, %v438
        %542 = vst.msk [vmem:[%s199 + $0x78] sm:$0xff] %vm526, %v443
        %543 = vst.msk [vmem:[%s199 + $0x80] sm:$0xff] %vm526, %v448
        %544 = vst.msk [vmem:[%s199 + $0x88] sm:$0xff] %vm526, %v453
        %545 = vst.msk [vmem:[%s199 + $0x90] sm:$0xff] %vm526, %v458
        %546 = vst.msk [vmem:[%s199 + $0x98] sm:$0xff] %vm526, %v463
        %547 = vst.msk [vmem:[%s199 + $0xa0] sm:$0xff] %vm526, %v468
        %548 = vst.msk [vmem:[%s199 + $0xa8] sm:$0xff] %vm526, %v473
        %549 = vst.msk [vmem:[%s199 + $0xb0] sm:$0xff] %vm526, %v478
        %550 = vst.msk [vmem:[%s199 + $0xb8] sm:$0xff] %vm526, %v483
        %551 = vst.msk [vmem:[%s199 + $0xc0] sm:$0xff] %vm526, %v488
        %552 = vst.msk [vmem:[%s199 + $0xc8] sm:$0xff] %vm526, %v493
        %553 = vst.msk [vmem:[%s199 + $0xd0] sm:$0xff] %vm526, %v498
        %554 = vst.msk [vmem:[%s199 + $0xd8] sm:$0xff] %vm526, %v503
        %555 = vst.msk [vmem:[%s199 + $0xe0] sm:$0xff] %vm526, %v508
        %556 = vst.msk [vmem:[%s199 + $0xe8] sm:$0xff] %vm526, %v513
        %557 = vst.msk [vmem:[%s199 + $0xf0] sm:$0xff] %vm526, %v518
        %558 = vst.msk [vmem:[%s199 + $0xf8] sm:$0xff] %vm526, %v523
        %v559 = vsel %vm526, %v368, 0.0
        %v560 = vsel %vm526, %v373, 0.0
        %v561 = vadd.f32 %v559, %v560
        %v562 = vsel %vm526, %v378, 0.0
        %v563 = vadd.f32 %v561, %v562
        %v564 = vsel %vm526, %v383, 0.0
        %v565 = vadd.f32 %v563, %v564
        %v566 = vsel %vm526, %v388, 0.0
        %v567 = vadd.f32 %v565, %v566
        %v568 = vsel %vm526, %v393, 0.0
        %v569 = vadd.f32 %v567, %v568
        %v570 = vsel %vm526, %v398, 0.0
        %v571 = vadd.f32 %v569, %v570
        %v572 = vsel %vm526, %v403, 0.0
        %v573 = vadd.f32 %v571, %v572
        %v574 = vsel %vm526, %v408, 0.0
        %v575 = vadd.f32 %v573, %v574
        %v576 = vsel %vm526, %v413, 0.0
        %v577 = vadd.f32 %v575, %v576
        %v578 = vsel %vm526, %v418, 0.0
        %v579 = vadd.f32 %v577, %v578
        %v580 = vsel %vm526, %v423, 0.0
        %v581 = vadd.f32 %v579, %v580
        %v582 = vsel %vm526, %v428, 0.0
        %v583 = vadd.f32 %v581, %v582
        %v584 = vsel %vm526, %v433, 0.0
        %v585 = vadd.f32 %v583, %v584
        %v586 = vsel %vm526, %v438, 0.0
        %v587 = vadd.f32 %v585, %v586
        %v588 = vsel %vm526, %v443, 0.0
        %v589 = vadd.f32 %v587, %v588
        %v590 = vsel %vm526, %v448, 0.0
        %v591 = vadd.f32 %v589, %v590
        %v592 = vsel %vm526, %v453, 0.0
        %v593 = vadd.f32 %v591, %v592
        %v594 = vsel %vm526, %v458, 0.0
        %v595 = vadd.f32 %v593, %v594
        %v596 = vsel %vm526, %v463, 0.0
        %v597 = vadd.f32 %v595, %v596
        %v598 = vsel %vm526, %v468, 0.0
        %v599 = vadd.f32 %v597, %v598
        %v600 = vsel %vm526, %v473, 0.0
        %v601 = vadd.f32 %v599, %v600
        %v602 = vsel %vm526, %v478, 0.0
        %v603 = vadd.f32 %v601, %v602
        %v604 = vsel %vm526, %v483, 0.0
        %v605 = vadd.f32 %v603, %v604
        %v606 = vsel %vm526, %v488, 0.0
        %v607 = vadd.f32 %v605, %v606
        %v608 = vsel %vm526, %v493, 0.0
        %v609 = vadd.f32 %v607, %v608
        %v610 = vsel %vm526, %v498, 0.0
        %v611 = vadd.f32 %v609, %v610
        %v612 = vsel %vm526, %v503, 0.0
        %v613 = vadd.f32 %v611, %v612
        %v614 = vsel %vm526, %v508, 0.0
        %v615 = vadd.f32 %v613, %v614
        %v616 = vsel %vm526, %v513, 0.0
        %v617 = vadd.f32 %v615, %v616
        %v618 = vsel %vm526, %v518, 0.0
        %v619 = vadd.f32 %v617, %v618
        %v620 = vsel %vm526, %v523, 0.0
        %v621 = vadd.f32 %v619, %v620
        %v622 = vrot.slane %v621, 4
        %v623 = vadd.f32 %v621, %v622
        %v624 = vrot.slane %v623, 2
        %v625 = vadd.f32 %v623, %v624
        %v626 = vrot.slane %v625, 1
        %v627 = vadd.f32 %v625, %v626
        %v628 = vmul.f32 %v368, %v368
        %v629 = vmul.f32 %v373, %v373
        %v630 = vmul.f32 %v378, %v378
        %v631 = vmul.f32 %v383, %v383
        %v632 = vmul.f32 %v388, %v388
        %v633 = vmul.f32 %v393, %v393
        %v634 = vmul.f32 %v398, %v398
        %v635 = vmul.f32 %v403, %v403
        %v636 = vmul.f32 %v408, %v408
        %v637 = vmul.f32 %v413, %v413
        %v638 = vmul.f32 %v418, %v418
        %v639 = vmul.f32 %v423, %v423
        %v640 = vmul.f32 %v428, %v428
        %v641 = vmul.f32 %v433, %v433
        %v642 = vmul.f32 %v438, %v438
        %v643 = vmul.f32 %v443, %v443
        %v644 = vmul.f32 %v448, %v448
        %v645 = vmul.f32 %v453, %v453
        %v646 = vmul.f32 %v458, %v458
        %v647 = vmul.f32 %v463, %v463
        %v648 = vmul.f32 %v468, %v468
        %v649 = vmul.f32 %v473, %v473
        %v650 = vmul.f32 %v478, %v478
        %v651 = vmul.f32 %v483, %v483
        %v652 = vmul.f32 %v488, %v488
        %v653 = vmul.f32 %v493, %v493
        %v654 = vmul.f32 %v498, %v498
        %v655 = vmul.f32 %v503, %v503
        %v656 = vmul.f32 %v508, %v508
        %v657 = vmul.f32 %v513, %v513
        %v658 = vmul.f32 %v518, %v518
        %v659 = vmul.f32 %v523, %v523
        %v660 = vsel %vm526, %v628, 0.0
        %v661 = vsel %vm526, %v629, 0.0
        %v662 = vadd.f32 %v660, %v661
        %v663 = vsel %vm526, %v630, 0.0
        %v664 = vadd.f32 %v662, %v663
        %v665 = vsel %vm526, %v631, 0.0
        %v666 = vadd.f32 %v664, %v665
        %v667 = vsel %vm526, %v632, 0.0
        %v668 = vadd.f32 %v666, %v667
        %v669 = vsel %vm526, %v633, 0.0
        %v670 = vadd.f32 %v668, %v669
        %v671 = vsel %vm526, %v634, 0.0
        %v672 = vadd.f32 %v670, %v671
        %v673 = vsel %vm526, %v635, 0.0
        %v674 = vadd.f32 %v672, %v673
        %v675 = vsel %vm526, %v636, 0.0
        %v676 = vadd.f32 %v674, %v675
        %v677 = vsel %vm526, %v637, 0.0
        %v678 = vadd.f32 %v676, %v677
        %v679 = vsel %vm526, %v638, 0.0
        %v680 = vadd.f32 %v678, %v679
        %v681 = vsel %vm526, %v639, 0.0
        %v682 = vadd.f32 %v680, %v681
        %v683 = vsel %vm526, %v640, 0.0
        %v684 = vadd.f32 %v682, %v683
        %v685 = vsel %vm526, %v641, 0.0
        %v686 = vadd.f32 %v684, %v685
        %v687 = vsel %vm526, %v642, 0.0
        %v688 = vadd.f32 %v686, %v687
        %v689 = vsel %vm526, %v643, 0.0
        %v690 = vadd.f32 %v688, %v689
        %v691 = vsel %vm526, %v644, 0.0
        %v692 = vadd.f32 %v690, %v691
        %v693 = vsel %vm526, %v645, 0.0
        %v694 = vadd.f32 %v692, %v693
        %v695 = vsel %vm526, %v646, 0.0
        %v696 = vadd.f32 %v694, %v695
        %v697 = vsel %vm526, %v647, 0.0
        %v698 = vadd.f32 %v696, %v697
        %v699 = vsel %vm526, %v648, 0.0
        %v700 = vadd.f32 %v698, %v699
        %v701 = vsel %vm526, %v649, 0.0
        %v702 = vadd.f32 %v700, %v701
        %v703 = vsel %vm526, %v650, 0.0
        %v704 = vadd.f32 %v702, %v703
        %v705 = vsel %vm526, %v651, 0.0
        %v706 = vadd.f32 %v704, %v705
        %v707 = vsel %vm526, %v652, 0.0
        %v708 = vadd.f32 %v706, %v707
        %v709 = vsel %vm526, %v653, 0.0
        %v710 = vadd.f32 %v708, %v709
        %v711 = vsel %vm526, %v654, 0.0
        %v712 = vadd.f32 %v710, %v711
        %v713 = vsel %vm526, %v655, 0.0
        %v714 = vadd.f32 %v712, %v713
        %v715 = vsel %vm526, %v656, 0.0
        %v716 = vadd.f32 %v714, %v715
        %v717 = vsel %vm526, %v657, 0.0
        %v718 = vadd.f32 %v716, %v717
        %v719 = vsel %vm526, %v658, 0.0
        %v720 = vadd.f32 %v718, %v719
        %v721 = vsel %vm526, %v659, 0.0
        %v722 = vadd.f32 %v720, %v721
        %v723 = vrot.slane %v722, 4
        %v724 = vadd.f32 %v722, %v723
        %v725 = vrot.slane %v724, 2
        %v726 = vadd.f32 %v724, %v725
        %v727 = vrot.slane %v726, 1
        %v728 = vadd.f32 %v726, %v727
        %v729 = vlaneseq
        %v730 = vshrl.u32 %v729, 7
        %vm731 = vcmp.eq.s32.totalorder %v730, 0
        %vm732 = vcmp.eq.s32.totalorder %v730, 1
        %v733 = vsel %vm732, %v728, 0.0
        %v734 = vsel %vm731, %v627, %v733
        %735 = vst.msk [vmem:[%s204] sm:$0xff] %vm526, %v734
        %s736 = smul.u32 32, %s18
        %p737 = scmp.lt.s32.totalorder %s736, 63
        %s738 = scalar_select %p737, %s736, 63
        %s739 = smul.addr %s738, 8
        %s740 = scalar_lea.vmem %s2, %s739
        %p741 = scmp.lt.s32.totalorder %s18, 1
        %s742 = scalar_select %p741, %s18, 1
        %s743 = smul.addr %s742, 8
        %s744 = scalar_lea.vmem %s3, %s743
        // Predicated region
        $region33: #{bottleneck_forward.4} parent=27 // pred_check
          %p745 = pneg %p83
        $region34: #{bottleneck_forward.4} parent=27 // pred_check_branch
          %747 = sbr.rel (%p745) target = $region36
        $region35: #{bottleneck_forward.4} parent=27 // pred_region
          %s748 = smul.u32 32, %s18
        $region36: #{bottleneck_forward.4} parent=27 // pred_fallthru
          _
        // Predicated region
        $region37: #{bottleneck_forward.4} parent=27 // pred_check
          %p749 = pneg %p109
        $region38: #{bottleneck_forward.4} parent=27 // pred_check_branch
          %751 = sbr.rel (%p749) target = $region40
        $region39: #{bottleneck_forward.4} parent=27 // pred_region
          _
        $region40: #{bottleneck_forward.4} parent=27 // pred_fallthru
          _
      $region28: #{bottleneck_forward.4} parent=5 // pred_fallthru
        _
      %p752 = scmp.le.s32.totalorder 2, %s13
      // Predicated region
      $region41: #{bottleneck_forward.4} parent=5 // pred_check
        %p753 = pneg %p752
      $region42: #{bottleneck_forward.4} parent=5 // pred_check_branch
        %755 = sbr.rel (%p753) target = $region44
      $region43: #{bottleneck_forward.4} parent=5 // pred_region
        %s756 = ssub.s32 %s13, 2
        // Predicated region
        $region45: #{bottleneck_forward.4} parent=43 // pred_check
          %p757 = pneg %p89
        $region46: #{bottleneck_forward.4} parent=43 // pred_check_branch
          %759 = sbr.rel (%p757) target = $region48
        $region47: #{bottleneck_forward.4} parent=43 // pred_region
          %s760 = smul.u32 32, %s19
          %p761 = scmp.lt.s32.totalorder %s760, 63
          %s762 = scalar_select %p761, %s760, 63
          %s763 = smul.addr %s762, 8
          %s764 = scalar_lea.vmem %s2, %s763
        $region48: #{bottleneck_forward.4} parent=43 // pred_fallthru
          _
        // Predicated region
        $region49: #{bottleneck_forward.4} parent=43 // pred_check
          %p765 = pneg %p115
        $region50: #{bottleneck_forward.4} parent=43 // pred_check_branch
          %767 = sbr.rel (%p765) target = $region52
        $region51: #{bottleneck_forward.4} parent=43 // pred_region
          %p768 = scmp.lt.s32.totalorder %s19, 1
          %s769 = scalar_select %p768, %s19, 1
          %s770 = smul.addr %s769, 8
          %s771 = scalar_lea.vmem %s3, %s770
        $region52: #{bottleneck_forward.4} parent=43 // pred_fallthru
          _
      $region44: #{bottleneck_forward.4} parent=5 // pred_fallthru
        _
    $region6: #{bottleneck_forward.4} parent=1 // loop_footer
      %s17 = sadd.s32 1, %s13
    $region7: #{bottleneck_forward.4} parent=1 // loop_footer_branch
      %12 = sbr.rel target = $region3
    $region8: #{bottleneck_forward.4} parent=1 // loop_exit
      _
    %772 = vsyncpa [#allocation3], 1
    %s773 = scalar_lea.sflag [#allocation3], 1
    %774 = vsyncpa %s773, 1

// kernel: bottleneck_forward.7
$region0: #{bottleneck_forward.7}
  #allocation0 [shape = 'u32[]', space=smem, size = 0x4, offset = 0x4, fixed_abs, tag = 'smem constant byte address 0x4 - core index']
  #allocation1 [shape = 'u32[144,128]{1,0:T(1,128)}', space=vmem, size = 0x12000, scoped, tag = 'internal scratch']
  %s0 = inlined_call_operand.vmem [shape: f32[16,256], index: 0, kind: input, shape index: {}]
  %s1 = inlined_call_operand.vmem [shape: f32[1,256], index: 1, kind: input, shape index: {}]
  %s2 = inlined_call_operand.vmem [shape: f32[1,256], index: 2, kind: input, shape index: {}]
  %s3 = inlined_call_operand.vmem [shape: f32[512,256], index: 3, kind: input, shape index: {}]
  %s4 = inlined_call_operand.vmem [shape: f32[512,256], index: 4, kind: input, shape index: {}]
  %s5 = inlined_call_operand.hbm [shape: f32[512,256], index: 5, kind: output, shape index: {}]
  %s6 = sld [smem:[#allocation0]]
  $region53: #{bottleneck_forward.7} parent=0
    _
  %s8 = ssub.s32 1, %s6
  %s9 = scalar_select 0, %s8, %s6
  $region1: #{bottleneck_forward.7} parent=0
    #allocation2 [shape = 'u8[524288]{0}', space=vmem, size = 0x80000, scoped, tag = 'output window, operand 0']
    #allocation3 [shape = 's32[2]{0}', space=sflag, size = 0x8, scoped, tag = 'scoped memory for bottleneck_forward.7']
    %10 = vsyncpa [#allocation3], 0
    %s11 = scalar_lea.sflag [#allocation3], 1
    %12 = vsyncpa %s11, 0
    loop: start=0, step=1, limit=4
    $region2: #{bottleneck_forward.7} parent=1 // loop_pre_header
      _
    $region3: #{bottleneck_forward.7} parent=1 // loop_header
      %s14 = sphi 0, %s18
      %p15 = scmp.ge.s32.totalorder %s14, 4
      %s22 = sphi 0, %s22
      %s24 = sphi 0, %s22
      %s25 = sphi 0, %s24
      %s39 = sphi 0, %s25
      %s43 = sphi 0, %s43
      %s45 = sphi 0, %s43
      %s46 = sphi 0, %s45
      %s60 = sphi 0, %s46
      %s64 = sphi 0, %s64
      %s66 = sphi 0, %s64
      %s67 = sphi 0, %s66
      %s81 = sphi 0, %s67
      %s87 = sphi 0, %s89
      %s90 = sphi 0, %s87
      %s91 = sphi 0, %s90
      %s107 = sphi 0, %s91
      %s113 = sphi 0, %s115
      %s116 = sphi 0, %s113
      %s117 = sphi 0, %s116
      %s133 = sphi 0, %s117
      %s139 = sphi 0, %s141
      %s142 = sphi 0, %s139
      %s143 = sphi 0, %s142
      %s159 = sphi 0, %s143
    $region4: #{bottleneck_forward.7} parent=1 // loop_header_branch
      %17 = sbr.rel (%p15) target = $region8
    $region5: #{bottleneck_forward.7} parent=1 // loop_body
      %s19 = ssub.s32 %s14, 1
      %s20 = ssub.s32 %s14, 2
      %s21 = sadd.s32 %s14, 1
      %s23 = sadd.s32 %s22, 1
      %p26 = scmp.eq.s32.totalorder %s14, 1
      %p27 = scmp.ne.s32.totalorder %s22, %s24
      %p28 = scmp.eq.s32.totalorder %s14, 0
      %p29 = por %p27, %p28
      %p30 = scmp.ne.s32.totalorder %s22, %s24
      %p31 = scmp.eq.s32.totalorder %s19, 1
      %p32 = por %p30, %p31
      %p33 = scmp.ne.s32.totalorder %s24, %s25
      %p34 = scmp.eq.s32.totalorder %s19, 0
      %p35 = por %p33, %p34
      %p36 = scmp.ne.s32.totalorder %s24, %s25
      %p37 = scmp.eq.s32.totalorder %s20, 1
      %p38 = por %p36, %p37
      %p40 = scmp.ne.s32.totalorder %s25, %s39
      %p41 = scmp.eq.s32.totalorder %s20, 0
      %p42 = por %p40, %p41
      %s44 = sadd.s32 %s43, 1
      %p47 = scmp.eq.s32.totalorder %s14, 1
      %p48 = scmp.ne.s32.totalorder %s43, %s45
      %p49 = scmp.eq.s32.totalorder %s14, 0
      %p50 = por %p48, %p49
      %p51 = scmp.ne.s32.totalorder %s43, %s45
      %p52 = scmp.eq.s32.totalorder %s19, 1
      %p53 = por %p51, %p52
      %p54 = scmp.ne.s32.totalorder %s45, %s46
      %p55 = scmp.eq.s32.totalorder %s19, 0
      %p56 = por %p54, %p55
      %p57 = scmp.ne.s32.totalorder %s45, %s46
      %p58 = scmp.eq.s32.totalorder %s20, 1
      %p59 = por %p57, %p58
      %p61 = scmp.ne.s32.totalorder %s46, %s60
      %p62 = scmp.eq.s32.totalorder %s20, 0
      %p63 = por %p61, %p62
      %s65 = sadd.s32 %s64, 1
      %p68 = scmp.eq.s32.totalorder %s14, 1
      %p69 = scmp.ne.s32.totalorder %s64, %s66
      %p70 = scmp.eq.s32.totalorder %s14, 0
      %p71 = por %p69, %p70
      %p72 = scmp.ne.s32.totalorder %s64, %s66
      %p73 = scmp.eq.s32.totalorder %s19, 1
      %p74 = por %p72, %p73
      %p75 = scmp.ne.s32.totalorder %s66, %s67
      %p76 = scmp.eq.s32.totalorder %s19, 0
      %p77 = por %p75, %p76
      %p78 = scmp.ne.s32.totalorder %s66, %s67
      %p79 = scmp.eq.s32.totalorder %s20, 1
      %p80 = por %p78, %p79
      %p82 = scmp.ne.s32.totalorder %s67, %s81
      %p83 = scmp.eq.s32.totalorder %s20, 0
      %p84 = por %p82, %p83
      %s85 = ssub.s32 %s14, %s21
      %p86 = scmp.eq.s32.totalorder %s85, 0
      %s88 = sadd.s32 %s87, 1
      %s89 = scalar_select %p86, %s87, %s88
      %p92 = pneg %p86
      %p93 = scmp.eq.s32.totalorder %s14, 1
      %p94 = por %p92, %p93
      %p95 = scmp.ne.s32.totalorder %s87, %s90
      %p96 = scmp.eq.s32.totalorder %s14, 0
      %p97 = por %p95, %p96
      %p98 = scmp.ne.s32.totalorder %s87, %s90
      %p99 = scmp.eq.s32.totalorder %s19, 1
      %p100 = por %p98, %p99
      %p101 = scmp.ne.s32.totalorder %s90, %s91
      %p102 = scmp.eq.s32.totalorder %s19, 0
      %p103 = por %p101, %p102
      %p104 = scmp.ne.s32.totalorder %s90, %s91
      %p105 = scmp.eq.s32.totalorder %s20, 1
      %p106 = por %p104, %p105
      %p108 = scmp.ne.s32.totalorder %s91, %s107
      %p109 = scmp.eq.s32.totalorder %s20, 0
      %p110 = por %p108, %p109
      %s111 = ssub.s32 %s14, %s21
      %p112 = scmp.eq.s32.totalorder %s111, 0
      %s114 = sadd.s32 %s113, 1
      %s115 = scalar_select %p112, %s113, %s114
      %p118 = pneg %p112
      %p119 = scmp.eq.s32.totalorder %s14, 1
      %p120 = por %p118, %p119
      %p121 = scmp.ne.s32.totalorder %s113, %s116
      %p122 = scmp.eq.s32.totalorder %s14, 0
      %p123 = por %p121, %p122
      %p124 = scmp.ne.s32.totalorder %s113, %s116
      %p125 = scmp.eq.s32.totalorder %s19, 1
      %p126 = por %p124, %p125
      %p127 = scmp.ne.s32.totalorder %s116, %s117
      %p128 = scmp.eq.s32.totalorder %s19, 0
      %p129 = por %p127, %p128
      %p130 = scmp.ne.s32.totalorder %s116, %s117
      %p131 = scmp.eq.s32.totalorder %s20, 1
      %p132 = por %p130, %p131
      %p134 = scmp.ne.s32.totalorder %s117, %s133
      %p135 = scmp.eq.s32.totalorder %s20, 0
      %p136 = por %p134, %p135
      %s137 = ssub.s32 %s14, %s21
      %p138 = scmp.eq.s32.totalorder %s137, 0
      %s140 = sadd.s32 %s139, 1
      %s141 = scalar_select %p138, %s139, %s140
      %p144 = pneg %p138
      %p145 = scmp.eq.s32.totalorder %s14, 1
      %p146 = por %p144, %p145
      %p147 = scmp.ne.s32.totalorder %s139, %s142
      %p148 = scmp.eq.s32.totalorder %s14, 0
      %p149 = por %p147, %p148
      %p150 = scmp.ne.s32.totalorder %s139, %s142
      %p151 = scmp.eq.s32.totalorder %s19, 1
      %p152 = por %p150, %p151
      %p153 = scmp.ne.s32.totalorder %s142, %s143
      %p154 = scmp.eq.s32.totalorder %s19, 0
      %p155 = por %p153, %p154
      %p156 = scmp.ne.s32.totalorder %s142, %s143
      %p157 = scmp.eq.s32.totalorder %s20, 1
      %p158 = por %p156, %p157
      %p160 = scmp.ne.s32.totalorder %s143, %s159
      %p161 = scmp.eq.s32.totalorder %s20, 0
      %p162 = por %p160, %p161
      %p163 = scmp.le.s32.totalorder 1, %s14
      %p164 = scmp.lt.s32.totalorder %s14, 3
      %p165 = pnand %p163, %p164
      %p166 = pneg %p165
      // Predicated region
      $region9: #{bottleneck_forward.7} parent=5 // pred_check
        _
      $region10: #{bottleneck_forward.7} parent=5 // pred_check_branch
        %168 = sbr.rel (%p165) target = $region12
      $region11: #{bottleneck_forward.7} parent=5 // pred_region
        %s169 = ssub.s32 %s14, 1
        // Predicated region
        $region13: #{bottleneck_forward.7} parent=11 // pred_check
          %p170 = pneg %p35
        $region14: #{bottleneck_forward.7} parent=11 // pred_check_branch
          %172 = sbr.rel (%p170) target = $region16
        $region15: #{bottleneck_forward.7} parent=11 // pred_region
          _
        $region16: #{bottleneck_forward.7} parent=11 // pred_fallthru
          _
        // Predicated region
        $region17: #{bottleneck_forward.7} parent=11 // pred_check
          %p173 = pneg %p56
        $region18: #{bottleneck_forward.7} parent=11 // pred_check_branch
          %175 = sbr.rel (%p173) target = $region20
        $region19: #{bottleneck_forward.7} parent=11 // pred_region
          _
        $region20: #{bottleneck_forward.7} parent=11 // pred_fallthru
          _
        // Predicated region
        $region21: #{bottleneck_forward.7} parent=11 // pred_check
          %p176 = pneg %p77
        $region22: #{bottleneck_forward.7} parent=11 // pred_check_branch
          %178 = sbr.rel (%p176) target = $region24
        $region23: #{bottleneck_forward.7} parent=11 // pred_region
          _
        $region24: #{bottleneck_forward.7} parent=11 // pred_fallthru
          _
      $region12: #{bottleneck_forward.7} parent=5 // pred_fallthru
        _
      %p179 = scmp.lt.s32.totalorder %s14, 2
      // Predicated region
      $region25: #{bottleneck_forward.7} parent=5 // pred_check
        %p180 = pneg %p179
      $region26: #{bottleneck_forward.7} parent=5 // pred_check_branch
        %182 = sbr.rel (%p180) target = $region28
      $region27: #{bottleneck_forward.7} parent=5 // pred_region
        // Predicated region
        $region29: #{bottleneck_forward.7} parent=27 // pred_check
          %p183 = pneg %p97
        $region30: #{bottleneck_forward.7} parent=27 // pred_check_branch
          %185 = sbr.rel (%p183) target = $region32
        $region31: #{bottleneck_forward.7} parent=27 // pred_region
          %s186 = smul.u32 32, %s14
          %p187 = scmp.lt.s32.totalorder %s186, 63
          %s188 = scalar_select %p187, %s186, 63
          %s189 = smul.addr %s188, 2
          %s190 = smul.addr %s189, 8
          %s191 = scalar_lea.vmem %s3, %s190
          %s192 = smul.u32 32, %s14
        $region32: #{bottleneck_forward.7} parent=27 // pred_fallthru
          _
        // Predicated region
        $region33: #{bottleneck_forward.7} parent=27 // pred_check
          %p193 = pneg %p123
        $region34: #{bottleneck_forward.7} parent=27 // pred_check_branch
          %195 = sbr.rel (%p193) target = $region36
        $region35: #{bottleneck_forward.7} parent=27 // pred_region
          %s196 = smul.u32 32, %s14
          %p197 = scmp.lt.s32.totalorder %s196, 63
          %s198 = scalar_select %p197, %s196, 63
          %s199 = smul.addr %s198, 2
          %s200 = smul.addr %s199, 8
          %s201 = scalar_lea.vmem %s4, %s200
          %s202 = smul.u32 32, %s14
        $region36: #{bottleneck_forward.7} parent=27 // pred_fallthru
          _
      $region28: #{bottleneck_forward.7} parent=5 // pred_fallthru
        _
      %p203 = scmp.le.s32.totalorder 1, %s14
      %p204 = scmp.lt.s32.totalorder %s14, 3
      %p205 = pnand %p203, %p204
      %p206 = pneg %p205
      // Predicated region
      $region37: #{bottleneck_forward.7} parent=5 // pred_check
        _
      $region38: #{bottleneck_forward.7} parent=5 // pred_check_branch
        %208 = sbr.rel (%p205) target = $region40
      $region39: #{bottleneck_forward.7} parent=5 // pred_region
        %s209 = ssub.s32 %s14, 1
        %p210 = pneg %p35
        %p211 = pneg %p32
        %p212 = pneg %p56
        %p213 = pneg %p53
        %p214 = pneg %p77
        %p215 = pneg %p74
        %s216 = smul.u32 32, %s19
        %p217 = scmp.lt.s32.totalorder %s216, 63
        %s218 = scalar_select %p217, %s216, 63
        %s219 = smul.addr %s218, 2
        %s220 = smul.addr %s219, 8
        %s221 = scalar_lea.vmem %s3, %s220
        %p222 = pneg %p103
        %p223 = pneg %p100
        %s224 = smul.u32 32, %s19
        %p225 = scmp.lt.s32.totalorder %s224, 63
        %s226 = scalar_select %p225, %s224, 63
        %s227 = smul.addr %s226, 2
        %s228 = smul.addr %s227, 8
        %s229 = scalar_lea.vmem %s4, %s228
        %p230 = pneg %p129
        %p231 = pneg %p126
        %p232 = pneg %p155
        %p233 = pneg %p152
        %s234 = sand.u32 %s142, 1
        %s235 = scalar_lea.sflag [#allocation3], %s234
        %s236 = sand.u32 %s142, 1
        %s237 = smul.addr %s236, 512
        %s238 = scalar_lea.vmem [#allocation2], %s237
        %s239 = smul.u32 32, %s19
        %p240 = scmp.lt.s32.totalorder %s239, 63
        %s241 = scalar_select %p240, %s239, 63
        %s242 = smul.addr %s241, 2
        %s243 = smul.addr %s242, 8
        %s244 = scalar_lea.vmem %s3, %s243
        %s245 = smul.u32 32, %s19
        %s246 = smul.u32 32, %s19
        %p247 = scmp.lt.s32.totalorder %s246, 63
        %s248 = scalar_select %p247, %s246, 63
        %s249 = smul.addr %s248, 2
        %s250 = smul.addr %s249, 8
        %s251 = scalar_lea.vmem %s4, %s250
        %s252 = smul.u32 32, %s19
        %s253 = smul.u32 32, %s19
        %v254 = vld [vmem:[%s0] sm:$0xff]
        %v255 = vld [vmem:[%s0 + $0x8] sm:$0xff]
        %v256 = vld [vmem:[%s0 + $0x10] sm:$0xff]
        %v257 = vld [vmem:[%s0 + $0x18] sm:$0xff]
        %v258 = vadd.f32 %v254, %v256
        %v259 = vadd.f32 %v255, %v257
        %v260 = vmul.f32 %v258, 0.001953125
        %v261 = vmul.f32 %v259, 0.001953125
        %v262 = vmul.f32 %v260, %v260
        %v263 = vmul.f32 %v261, %v261
        %v266 = vrot.slane %v262, 7
        %v267 = vrot.slane %v263, 7
        %v270 = vsub.f32 %v260, %v266
        %v271 = vsub.f32 %v261, %v267
        %v272 = vld [vmem:[%s1] sm:$0x3]
        %v273 = vadd.f32 %v270, 1e-05
        %v274 = vadd.f32 %v271, 1e-05
        %v275 = vrsqrt.pop %v273
        %v276 = vrsqrt.pop %v274
        %v279 = vcombine.low %v275, %v276
        %v281 = vunpack.c.l.s4 1966171168
        %v282 = vunpack.c.0.s8 %v281
        %v283 = vlaneseq
        %v284 = vshrl.u32 %v283, 7
        %v285 = vsub.s32 %v282, %v284
        %v286 = vrot.slane %v279, %v285
        %v287 = vcombine.high %v286, %v286
        %v289 = vunpack.c.l.s4 1966171168
        %v290 = vunpack.c.0.s8 %v289
        %v291 = vlaneseq
        %v292 = vshrl.u32 %v291, 7
        %v293 = vsub.s32 %v290, %v292
        %v294 = vrot.slane %v287, %v293
        %v296 = vmul.f32 %v272, %v294
        %v297 = vld [vmem:[%s2] sm:$0x3]
        %v299 = vlaneseq
        %v300 = vshrl.u32 %v299, 7
        %v301 = vsub.s32 0, %v300
        %v302 = vrot.slane %v296, %v301
        %v303 = vlaneseq
        %v304 = vshrl.u32 %v303, 7
        %v305 = vsub.s32 1, %v304
        %v306 = vrot.slane %v296, %v305
        %v309 = vmul.f32 %v260, %v302
        %v310 = vmul.f32 %v261, %v306
        %v313 = vcombine.low %v309, %v310
        %v315 = vunpack.c.l.s4 1966171168
        %v316 = vunpack.c.0.s8 %v315
        %v317 = vlaneseq
        %v318 = vshrl.u32 %v317, 7
        %v319 = vsub.s32 %v316, %v318
        %v320 = vrot.slane %v313, %v319
        %v322 = vunpack.c.l.s4 1966171168
        %v323 = vunpack.c.0.s8 %v322
        %v324 = vlaneseq
        %v325 = vshrl.u32 %v324, 7
        %v326 = vsub.s32 %v323, %v325
        %v327 = vrot.slane %v320, %v326
        %v329 = vsub.f32 %v297, %v327
        %v330 = vld [vmem:[%s244] sm:$0xff]
        %v331 = vld [vmem:[%s244 + $0x8] sm:$0xff]
        %v332 = vld [vmem:[%s244 + $0x10] sm:$0xff]
        %v333 = vld [vmem:[%s244 + $0x18] sm:$0xff]
        %v334 = vld [vmem:[%s244 + $0x20] sm:$0xff]
        %v335 = vld [vmem:[%s244 + $0x28] sm:$0xff]
        %v336 = vld [vmem:[%s244 + $0x30] sm:$0xff]
        %v337 = vld [vmem:[%s244 + $0x38] sm:$0xff]
        %v338 = vld [vmem:[%s244 + $0x40] sm:$0xff]
        %v339 = vld [vmem:[%s244 + $0x48] sm:$0xff]
        %v340 = vld [vmem:[%s244 + $0x50] sm:$0xff]
        %v341 = vld [vmem:[%s244 + $0x58] sm:$0xff]
        %v342 = vld [vmem:[%s244 + $0x60] sm:$0xff]
        %v343 = vld [vmem:[%s244 + $0x68] sm:$0xff]
        %v344 = vld [vmem:[%s244 + $0x70] sm:$0xff]
        %v345 = vld [vmem:[%s244 + $0x78] sm:$0xff]
        %v346 = vld [vmem:[%s244 + $0x80] sm:$0xff]
        %v347 = vld [vmem:[%s244 + $0x88] sm:$0xff]
        %v348 = vld [vmem:[%s244 + $0x90] sm:$0xff]
        %v349 = vld [vmem:[%s244 + $0x98] sm:$0xff]
        %v350 = vld [vmem:[%s244 + $0xa0] sm:$0xff]
        %v351 = vld [vmem:[%s244 + $0xa8] sm:$0xff]
        %v352 = vld [vmem:[%s244 + $0xb0] sm:$0xff]
        %v353 = vld [vmem:[%s244 + $0xb8] sm:$0xff]
        %v354 = vld [vmem:[%s244 + $0xc0] sm:$0xff]
        %v355 = vld [vmem:[%s244 + $0xc8] sm:$0xff]
        %v356 = vld [vmem:[%s244 + $0xd0] sm:$0xff]
        %v357 = vld [vmem:[%s244 + $0xd8] sm:$0xff]
        %v358 = vld [vmem:[%s244 + $0xe0] sm:$0xff]
        %v359 = vld [vmem:[%s244 + $0xe8] sm:$0xff]
        %v360 = vld [vmem:[%s244 + $0xf0] sm:$0xff]
        %v361 = vld [vmem:[%s244 + $0xf8] sm:$0xff]
        %v362 = vld [vmem:[%s244 + $0x100] sm:$0xff]
        %v363 = vld [vmem:[%s244 + $0x108] sm:$0xff]
        %v364 = vld [vmem:[%s244 + $0x110] sm:$0xff]
        %v365 = vld [vmem:[%s244 + $0x118] sm:$0xff]
        %v366 = vld [vmem:[%s244 + $0x120] sm:$0xff]
        %v367 = vld [vmem:[%s244 + $0x128] sm:$0xff]
        %v368 = vld [vmem:[%s244 + $0x130] sm:$0xff]
        %v369 = vld [vmem:[%s244 + $0x138] sm:$0xff]
        %v370 = vld [vmem:[%s244 + $0x140] sm:$0xff]
        %v371 = vld [vmem:[%s244 + $0x148] sm:$0xff]
        %v372 = vld [vmem:[%s244 + $0x150] sm:$0xff]
        %v373 = vld [vmem:[%s244 + $0x158] sm:$0xff]
        %v374 = vld [vmem:[%s244 + $0x160] sm:$0xff]
        %v375 = vld [vmem:[%s244 + $0x168] sm:$0xff]
        %v376 = vld [vmem:[%s244 + $0x170] sm:$0xff]
        %v377 = vld [vmem:[%s244 + $0x178] sm:$0xff]
        %v378 = vld [vmem:[%s244 + $0x180] sm:$0xff]
        %v379 = vld [vmem:[%s244 + $0x188] sm:$0xff]
        %v380 = vld [vmem:[%s244 + $0x190] sm:$0xff]
        %v381 = vld [vmem:[%s244 + $0x198] sm:$0xff]
        %v382 = vld [vmem:[%s244 + $0x1a0] sm:$0xff]
        %v383 = vld [vmem:[%s244 + $0x1a8] sm:$0xff]
        %v384 = vld [vmem:[%s244 + $0x1b0] sm:$0xff]
        %v385 = vld [vmem:[%s244 + $0x1b8] sm:$0xff]
        %v386 = vld [vmem:[%s244 + $0x1c0] sm:$0xff]
        %v387 = vld [vmem:[%s244 + $0x1c8] sm:$0xff]
        %v388 = vld [vmem:[%s244 + $0x1d0] sm:$0xff]
        %v389 = vld [vmem:[%s244 + $0x1d8] sm:$0xff]
        %v390 = vld [vmem:[%s244 + $0x1e0] sm:$0xff]
        %v391 = vld [vmem:[%s244 + $0x1e8] sm:$0xff]
        %v392 = vld [vmem:[%s244 + $0x1f0] sm:$0xff]
        %v393 = vld [vmem:[%s244 + $0x1f8] sm:$0xff]
        %v394 = vmul.f32 %v330, %v302
        %v395 = vmul.f32 %v331, %v306
        %v396 = vmul.f32 %v332, %v302
        %v397 = vmul.f32 %v333, %v306
        %v398 = vmul.f32 %v334, %v302
        %v399 = vmul.f32 %v335, %v306
        %v400 = vmul.f32 %v336, %v302
        %v401 = vmul.f32 %v337, %v306
        %v402 = vmul.f32 %v338, %v302
        %v403 = vmul.f32 %v339, %v306
        %v404 = vmul.f32 %v340, %v302
        %v405 = vmul.f32 %v341, %v306
        %v406 = vmul.f32 %v342, %v302
        %v407 = vmul.f32 %v343, %v306
        %v408 = vmul.f32 %v344, %v302
        %v409 = vmul.f32 %v345, %v306
        %v410 = vmul.f32 %v346, %v302
        %v411 = vmul.f32 %v347, %v306
        %v412 = vmul.f32 %v348, %v302
        %v413 = vmul.f32 %v349, %v306
        %v414 = vmul.f32 %v350, %v302
        %v415 = vmul.f32 %v351, %v306
        %v416 = vmul.f32 %v352, %v302
        %v417 = vmul.f32 %v353, %v306
        %v418 = vmul.f32 %v354, %v302
        %v419 = vmul.f32 %v355, %v306
        %v420 = vmul.f32 %v356, %v302
        %v421 = vmul.f32 %v357, %v306
        %v422 = vmul.f32 %v358, %v302
        %v423 = vmul.f32 %v359, %v306
        %v424 = vmul.f32 %v360, %v302
        %v425 = vmul.f32 %v361, %v306
        %v426 = vmul.f32 %v362, %v302
        %v427 = vmul.f32 %v363, %v306
        %v428 = vmul.f32 %v364, %v302
        %v429 = vmul.f32 %v365, %v306
        %v430 = vmul.f32 %v366, %v302
        %v431 = vmul.f32 %v367, %v306
        %v432 = vmul.f32 %v368, %v302
        %v433 = vmul.f32 %v369, %v306
        %v434 = vmul.f32 %v370, %v302
        %v435 = vmul.f32 %v371, %v306
        %v436 = vmul.f32 %v372, %v302
        %v437 = vmul.f32 %v373, %v306
        %v438 = vmul.f32 %v374, %v302
        %v439 = vmul.f32 %v375, %v306
        %v440 = vmul.f32 %v376, %v302
        %v441 = vmul.f32 %v377, %v306
        %v442 = vmul.f32 %v378, %v302
        %v443 = vmul.f32 %v379, %v306
        %v444 = vmul.f32 %v380, %v302
        %v445 = vmul.f32 %v381, %v306
        %v446 = vmul.f32 %v382, %v302
        %v447 = vmul.f32 %v383, %v306
        %v448 = vmul.f32 %v384, %v302
        %v449 = vmul.f32 %v385, %v306
        %v450 = vmul.f32 %v386, %v302
        %v451 = vmul.f32 %v387, %v306
        %v452 = vmul.f32 %v388, %v302
        %v453 = vmul.f32 %v389, %v306
        %v454 = vmul.f32 %v390, %v302
        %v455 = vmul.f32 %v391, %v306
        %v456 = vmul.f32 %v392, %v302
        %v457 = vmul.f32 %v393, %v306
        %v459 = vlaneseq
        %v460 = vshrl.u32 %v459, 7
        %v461 = vsub.s32 0, %v460
        %v462 = vrot.slane %v329, %v461
        %v463 = vlaneseq
        %v464 = vshrl.u32 %v463, 7
        %v465 = vsub.s32 1, %v464
        %v466 = vrot.slane %v329, %v465
        %v469 = vadd.f32 %v394, %v462
        %v470 = vadd.f32 %v395, %v466
        %v471 = vadd.f32 %v396, %v462
        %v472 = vadd.f32 %v397, %v466
        %v473 = vadd.f32 %v398, %v462
        %v474 = vadd.f32 %v399, %v466
        %v475 = vadd.f32 %v400, %v462
        %v476 = vadd.f32 %v401, %v466
        %v477 = vadd.f32 %v402, %v462
        %v478 = vadd.f32 %v403, %v466
        %v479 = vadd.f32 %v404, %v462
        %v480 = vadd.f32 %v405, %v466
        %v481 = vadd.f32 %v406, %v462
        %v482 = vadd.f32 %v407, %v466
        %v483 = vadd.f32 %v408, %v462
        %v484 = vadd.f32 %v409, %v466
        %v485 = vadd.f32 %v410, %v462
        %v486 = vadd.f32 %v411, %v466
        %v487 = vadd.f32 %v412, %v462
        %v488 = vadd.f32 %v413, %v466
        %v489 = vadd.f32 %v414, %v462
        %v490 = vadd.f32 %v415, %v466
        %v491 = vadd.f32 %v416, %v462
        %v492 = vadd.f32 %v417, %v466
        %v493 = vadd.f32 %v418, %v462
        %v494 = vadd.f32 %v419, %v466
        %v495 = vadd.f32 %v420, %v462
        %v496 = vadd.f32 %v421, %v466
        %v497 = vadd.f32 %v422, %v462
        %v498 = vadd.f32 %v423, %v466
        %v499 = vadd.f32 %v424, %v462
        %v500 = vadd.f32 %v425, %v466
        %v501 = vadd.f32 %v426, %v462
        %v502 = vadd.f32 %v427, %v466
        %v503 = vadd.f32 %v428, %v462
        %v504 = vadd.f32 %v429, %v466
        %v505 = vadd.f32 %v430, %v462
        %v506 = vadd.f32 %v431, %v466
        %v507 = vadd.f32 %v432, %v462
        %v508 = vadd.f32 %v433, %v466
        %v509 = vadd.f32 %v434, %v462
        %v510 = vadd.f32 %v435, %v466
        %v511 = vadd.f32 %v436, %v462
        %v512 = vadd.f32 %v437, %v466
        %v513 = vadd.f32 %v438, %v462
        %v514 = vadd.f32 %v439, %v466
        %v515 = vadd.f32 %v440, %v462
        %v516 = vadd.f32 %v441, %v466
        %v517 = vadd.f32 %v442, %v462
        %v518 = vadd.f32 %v443, %v466
        %v519 = vadd.f32 %v444, %v462
        %v520 = vadd.f32 %v445, %v466
        %v521 = vadd.f32 %v446, %v462
        %v522 = vadd.f32 %v447, %v466
        %v523 = vadd.f32 %v448, %v462
        %v524 = vadd.f32 %v449, %v466
        %v525 = vadd.f32 %v450, %v462
        %v526 = vadd.f32 %v451, %v466
        %v527 = vadd.f32 %v452, %v462
        %v528 = vadd.f32 %v453, %v466
        %v529 = vadd.f32 %v454, %v462
        %v530 = vadd.f32 %v455, %v466
        %v531 = vadd.f32 %v456, %v462
        %v532 = vadd.f32 %v457, %v466
        %v533 = vld [vmem:[%s251] sm:$0xff]
        %v534 = vld [vmem:[%s251 + $0x8] sm:$0xff]
        %v535 = vld [vmem:[%s251 + $0x10] sm:$0xff]
        %v536 = vld [vmem:[%s251 + $0x18] sm:$0xff]
        %v537 = vld [vmem:[%s251 + $0x20] sm:$0xff]
        %v538 = vld [vmem:[%s251 + $0x28] sm:$0xff]
        %v539 = vld [vmem:[%s251 + $0x30] sm:$0xff]
        %v540 = vld [vmem:[%s251 + $0x38] sm:$0xff]
        %v541 = vld [vmem:[%s251 + $0x40] sm:$0xff]
        %v542 = vld [vmem:[%s251 + $0x48] sm:$0xff]
        %v543 = vld [vmem:[%s251 + $0x50] sm:$0xff]
        %v544 = vld [vmem:[%s251 + $0x58] sm:$0xff]
        %v545 = vld [vmem:[%s251 + $0x60] sm:$0xff]
        %v546 = vld [vmem:[%s251 + $0x68] sm:$0xff]
        %v547 = vld [vmem:[%s251 + $0x70] sm:$0xff]
        %v548 = vld [vmem:[%s251 + $0x78] sm:$0xff]
        %v549 = vld [vmem:[%s251 + $0x80] sm:$0xff]
        %v550 = vld [vmem:[%s251 + $0x88] sm:$0xff]
        %v551 = vld [vmem:[%s251 + $0x90] sm:$0xff]
        %v552 = vld [vmem:[%s251 + $0x98] sm:$0xff]
        %v553 = vld [vmem:[%s251 + $0xa0] sm:$0xff]
        %v554 = vld [vmem:[%s251 + $0xa8] sm:$0xff]
        %v555 = vld [vmem:[%s251 + $0xb0] sm:$0xff]
        %v556 = vld [vmem:[%s251 + $0xb8] sm:$0xff]
        %v557 = vld [vmem:[%s251 + $0xc0] sm:$0xff]
        %v558 = vld [vmem:[%s251 + $0xc8] sm:$0xff]
        %v559 = vld [vmem:[%s251 + $0xd0] sm:$0xff]
        %v560 = vld [vmem:[%s251 + $0xd8] sm:$0xff]
        %v561 = vld [vmem:[%s251 + $0xe0] sm:$0xff]
        %v562 = vld [vmem:[%s251 + $0xe8] sm:$0xff]
        %v563 = vld [vmem:[%s251 + $0xf0] sm:$0xff]
        %v564 = vld [vmem:[%s251 + $0xf8] sm:$0xff]
        %v565 = vld [vmem:[%s251 + $0x100] sm:$0xff]
        %v566 = vld [vmem:[%s251 + $0x108] sm:$0xff]
        %v567 = vld [vmem:[%s251 + $0x110] sm:$0xff]
        %v568 = vld [vmem:[%s251 + $0x118] sm:$0xff]
        %v569 = vld [vmem:[%s251 + $0x120] sm:$0xff]
        %v570 = vld [vmem:[%s251 + $0x128] sm:$0xff]
        %v571 = vld [vmem:[%s251 + $0x130] sm:$0xff]
        %v572 = vld [vmem:[%s251 + $0x138] sm:$0xff]
        %v573 = vld [vmem:[%s251 + $0x140] sm:$0xff]
        %v574 = vld [vmem:[%s251 + $0x148] sm:$0xff]
        %v575 = vld [vmem:[%s251 + $0x150] sm:$0xff]
        %v576 = vld [vmem:[%s251 + $0x158] sm:$0xff]
        %v577 = vld [vmem:[%s251 + $0x160] sm:$0xff]
        %v578 = vld [vmem:[%s251 + $0x168] sm:$0xff]
        %v579 = vld [vmem:[%s251 + $0x170] sm:$0xff]
        %v580 = vld [vmem:[%s251 + $0x178] sm:$0xff]
        %v581 = vld [vmem:[%s251 + $0x180] sm:$0xff]
        %v582 = vld [vmem:[%s251 + $0x188] sm:$0xff]
        %v583 = vld [vmem:[%s251 + $0x190] sm:$0xff]
        %v584 = vld [vmem:[%s251 + $0x198] sm:$0xff]
        %v585 = vld [vmem:[%s251 + $0x1a0] sm:$0xff]
        %v586 = vld [vmem:[%s251 + $0x1a8] sm:$0xff]
        %v587 = vld [vmem:[%s251 + $0x1b0] sm:$0xff]
        %v588 = vld [vmem:[%s251 + $0x1b8] sm:$0xff]
        %v589 = vld [vmem:[%s251 + $0x1c0] sm:$0xff]
        %v590 = vld [vmem:[%s251 + $0x1c8] sm:$0xff]
        %v591 = vld [vmem:[%s251 + $0x1d0] sm:$0xff]
        %v592 = vld [vmem:[%s251 + $0x1d8] sm:$0xff]
        %v593 = vld [vmem:[%s251 + $0x1e0] sm:$0xff]
        %v594 = vld [vmem:[%s251 + $0x1e8] sm:$0xff]
        %v595 = vld [vmem:[%s251 + $0x1f0] sm:$0xff]
        %v596 = vld [vmem:[%s251 + $0x1f8] sm:$0xff]
        %v597 = vadd.f32 %v469, %v533
        %v598 = vadd.f32 %v470, %v534
        %v599 = vadd.f32 %v471, %v535
        %v600 = vadd.f32 %v472, %v536
        %v601 = vadd.f32 %v473, %v537
        %v602 = vadd.f32 %v474, %v538
        %v603 = vadd.f32 %v475, %v539
        %v604 = vadd.f32 %v476, %v540
        %v605 = vadd.f32 %v477, %v541
        %v606 = vadd.f32 %v478, %v542
        %v607 = vadd.f32 %v479, %v543
        %v608 = vadd.f32 %v480, %v544
        %v609 = vadd.f32 %v481, %v545
        %v610 = vadd.f32 %v482, %v546
        %v611 = vadd.f32 %v483, %v547
        %v612 = vadd.f32 %v484, %v548
        %v613 = vadd.f32 %v485, %v549
        %v614 = vadd.f32 %v486, %v550
        %v615 = vadd.f32 %v487, %v551
        %v616 = vadd.f32 %v488, %v552
        %v617 = vadd.f32 %v489, %v553
        %v618 = vadd.f32 %v490, %v554
        %v619 = vadd.f32 %v491, %v555
        %v620 = vadd.f32 %v492, %v556
        %v621 = vadd.f32 %v493, %v557
        %v622 = vadd.f32 %v494, %v558
        %v623 = vadd.f32 %v495, %v559
        %v624 = vadd.f32 %v496, %v560
        %v625 = vadd.f32 %v497, %v561
        %v626 = vadd.f32 %v498, %v562
        %v627 = vadd.f32 %v499, %v563
        %v628 = vadd.f32 %v500, %v564
        %v629 = vadd.f32 %v501, %v565
        %v630 = vadd.f32 %v502, %v566
        %v631 = vadd.f32 %v503, %v567
        %v632 = vadd.f32 %v504, %v568
        %v633 = vadd.f32 %v505, %v569
        %v634 = vadd.f32 %v506, %v570
        %v635 = vadd.f32 %v507, %v571
        %v636 = vadd.f32 %v508, %v572
        %v637 = vadd.f32 %v509, %v573
        %v638 = vadd.f32 %v510, %v574
        %v639 = vadd.f32 %v511, %v575
        %v640 = vadd.f32 %v512, %v576
        %v641 = vadd.f32 %v513, %v577
        %v642 = vadd.f32 %v514, %v578
        %v643 = vadd.f32 %v515, %v579
        %v644 = vadd.f32 %v516, %v580
        %v645 = vadd.f32 %v517, %v581
        %v646 = vadd.f32 %v518, %v582
        %v647 = vadd.f32 %v519, %v583
        %v648 = vadd.f32 %v520, %v584
        %v649 = vadd.f32 %v521, %v585
        %v650 = vadd.f32 %v522, %v586
        %v651 = vadd.f32 %v523, %v587
        %v652 = vadd.f32 %v524, %v588
        %v653 = vadd.f32 %v525, %v589
        %v654 = vadd.f32 %v526, %v590
        %v655 = vadd.f32 %v527, %v591
        %v656 = vadd.f32 %v528, %v592
        %v657 = vadd.f32 %v529, %v593
        %v658 = vadd.f32 %v530, %v594
        %v659 = vadd.f32 %v531, %v595
        %v660 = vadd.f32 %v532, %v596
        %v661 = vmax.f32 %v597, 0.0
        %v662 = vmax.f32 %v598, 0.0
        %v663 = vmax.f32 %v599, 0.0
        %v664 = vmax.f32 %v600, 0.0
        %v665 = vmax.f32 %v601, 0.0
        %v666 = vmax.f32 %v602, 0.0
        %v667 = vmax.f32 %v603, 0.0
        %v668 = vmax.f32 %v604, 0.0
        %v669 = vmax.f32 %v605, 0.0
        %v670 = vmax.f32 %v606, 0.0
        %v671 = vmax.f32 %v607, 0.0
        %v672 = vmax.f32 %v608, 0.0
        %v673 = vmax.f32 %v609, 0.0
        %v674 = vmax.f32 %v610, 0.0
        %v675 = vmax.f32 %v611, 0.0
        %v676 = vmax.f32 %v612, 0.0
        %v677 = vmax.f32 %v613, 0.0
        %v678 = vmax.f32 %v614, 0.0
        %v679 = vmax.f32 %v615, 0.0
        %v680 = vmax.f32 %v616, 0.0
        %v681 = vmax.f32 %v617, 0.0
        %v682 = vmax.f32 %v618, 0.0
        %v683 = vmax.f32 %v619, 0.0
        %v684 = vmax.f32 %v620, 0.0
        %v685 = vmax.f32 %v621, 0.0
        %v686 = vmax.f32 %v622, 0.0
        %v687 = vmax.f32 %v623, 0.0
        %v688 = vmax.f32 %v624, 0.0
        %v689 = vmax.f32 %v625, 0.0
        %v690 = vmax.f32 %v626, 0.0
        %v691 = vmax.f32 %v627, 0.0
        %v692 = vmax.f32 %v628, 0.0
        %v693 = vmax.f32 %v629, 0.0
        %v694 = vmax.f32 %v630, 0.0
        %v695 = vmax.f32 %v631, 0.0
        %v696 = vmax.f32 %v632, 0.0
        %v697 = vmax.f32 %v633, 0.0
        %v698 = vmax.f32 %v634, 0.0
        %v699 = vmax.f32 %v635, 0.0
        %v700 = vmax.f32 %v636, 0.0
        %v701 = vmax.f32 %v637, 0.0
        %v702 = vmax.f32 %v638, 0.0
        %v703 = vmax.f32 %v639, 0.0
        %v704 = vmax.f32 %v640, 0.0
        %v705 = vmax.f32 %v641, 0.0
        %v706 = vmax.f32 %v642, 0.0
        %v707 = vmax.f32 %v643, 0.0
        %v708 = vmax.f32 %v644, 0.0
        %v709 = vmax.f32 %v645, 0.0
        %v710 = vmax.f32 %v646, 0.0
        %v711 = vmax.f32 %v647, 0.0
        %v712 = vmax.f32 %v648, 0.0
        %v713 = vmax.f32 %v649, 0.0
        %v714 = vmax.f32 %v650, 0.0
        %v715 = vmax.f32 %v651, 0.0
        %v716 = vmax.f32 %v652, 0.0
        %v717 = vmax.f32 %v653, 0.0
        %v718 = vmax.f32 %v654, 0.0
        %v719 = vmax.f32 %v655, 0.0
        %v720 = vmax.f32 %v656, 0.0
        %v721 = vmax.f32 %v657, 0.0
        %v722 = vmax.f32 %v658, 0.0
        %v723 = vmax.f32 %v659, 0.0
        %v724 = vmax.f32 %v660, 0.0
        %725 = vst [vmem:[%s238] sm:$0xff] %v661
        %726 = vst [vmem:[%s238 + $0x8] sm:$0xff] %v662
        %727 = vst [vmem:[%s238 + $0x10] sm:$0xff] %v663
        %728 = vst [vmem:[%s238 + $0x18] sm:$0xff] %v664
        %729 = vst [vmem:[%s238 + $0x20] sm:$0xff] %v665
        %730 = vst [vmem:[%s238 + $0x28] sm:$0xff] %v666
        %731 = vst [vmem:[%s238 + $0x30] sm:$0xff] %v667
        %732 = vst [vmem:[%s238 + $0x38] sm:$0xff] %v668
        %733 = vst [vmem:[%s238 + $0x40] sm:$0xff] %v669
        %734 = vst [vmem:[%s238 + $0x48] sm:$0xff] %v670
        %735 = vst [vmem:[%s238 + $0x50] sm:$0xff] %v671
        %736 = vst [vmem:[%s238 + $0x58] sm:$0xff] %v672
        %737 = vst [vmem:[%s238 + $0x60] sm:$0xff] %v673
        %738 = vst [vmem:[%s238 + $0x68] sm:$0xff] %v674
        %739 = vst [vmem:[%s238 + $0x70] sm:$0xff] %v675
        %740 = vst [vmem:[%s238 + $0x78] sm:$0xff] %v676
        %741 = vst [vmem:[%s238 + $0x80] sm:$0xff] %v677
        %742 = vst [vmem:[%s238 + $0x88] sm:$0xff] %v678
        %743 = vst [vmem:[%s238 + $0x90] sm:$0xff] %v679
        %744 = vst [vmem:[%s238 + $0x98] sm:$0xff] %v680
        %745 = vst [vmem:[%s238 + $0xa0] sm:$0xff] %v681
        %746 = vst [vmem:[%s238 + $0xa8] sm:$0xff] %v682
        %747 = vst [vmem:[%s238 + $0xb0] sm:$0xff] %v683
        %748 = vst [vmem:[%s238 + $0xb8] sm:$0xff] %v684
        %749 = vst [vmem:[%s238 + $0xc0] sm:$0xff] %v685
        %750 = vst [vmem:[%s238 + $0xc8] sm:$0xff] %v686
        %751 = vst [vmem:[%s238 + $0xd0] sm:$0xff] %v687
        %752 = vst [vmem:[%s238 + $0xd8] sm:$0xff] %v688
        %753 = vst [vmem:[%s238 + $0xe0] sm:$0xff] %v689
        %754 = vst [vmem:[%s238 + $0xe8] sm:$0xff] %v690
        %755 = vst [vmem:[%s238 + $0xf0] sm:$0xff] %v691
        %756 = vst [vmem:[%s238 + $0xf8] sm:$0xff] %v692
        %757 = vst [vmem:[%s238 + $0x100] sm:$0xff] %v693
        %758 = vst [vmem:[%s238 + $0x108] sm:$0xff] %v694
        %759 = vst [vmem:[%s238 + $0x110] sm:$0xff] %v695
        %760 = vst [vmem:[%s238 + $0x118] sm:$0xff] %v696
        %761 = vst [vmem:[%s238 + $0x120] sm:$0xff] %v697
        %762 = vst [vmem:[%s238 + $0x128] sm:$0xff] %v698
        %763 = vst [vmem:[%s238 + $0x130] sm:$0xff] %v699
        %764 = vst [vmem:[%s238 + $0x138] sm:$0xff] %v700
        %765 = vst [vmem:[%s238 + $0x140] sm:$0xff] %v701
        %766 = vst [vmem:[%s238 + $0x148] sm:$0xff] %v702
        %767 = vst [vmem:[%s238 + $0x150] sm:$0xff] %v703
        %768 = vst [vmem:[%s238 + $0x158] sm:$0xff] %v704
        %769 = vst [vmem:[%s238 + $0x160] sm:$0xff] %v705
        %770 = vst [vmem:[%s238 + $0x168] sm:$0xff] %v706
        %771 = vst [vmem:[%s238 + $0x170] sm:$0xff] %v707
        %772 = vst [vmem:[%s238 + $0x178] sm:$0xff] %v708
        %773 = vst [vmem:[%s238 + $0x180] sm:$0xff] %v709
        %774 = vst [vmem:[%s238 + $0x188] sm:$0xff] %v710
        %775 = vst [vmem:[%s238 + $0x190] sm:$0xff] %v711
        %776 = vst [vmem:[%s238 + $0x198] sm:$0xff] %v712
        %777 = vst [vmem:[%s238 + $0x1a0] sm:$0xff] %v713
        %778 = vst [vmem:[%s238 + $0x1a8] sm:$0xff] %v714
        %779 = vst [vmem:[%s238 + $0x1b0] sm:$0xff] %v715
        %780 = vst [vmem:[%s238 + $0x1b8] sm:$0xff] %v716
        %781 = vst [vmem:[%s238 + $0x1c0] sm:$0xff] %v717
        %782 = vst [vmem:[%s238 + $0x1c8] sm:$0xff] %v718
        %783 = vst [vmem:[%s238 + $0x1d0] sm:$0xff] %v719
        %784 = vst [vmem:[%s238 + $0x1d8] sm:$0xff] %v720
        %785 = vst [vmem:[%s238 + $0x1e0] sm:$0xff] %v721
        %786 = vst [vmem:[%s238 + $0x1e8] sm:$0xff] %v722
        %787 = vst [vmem:[%s238 + $0x1f0] sm:$0xff] %v723
        %788 = vst [vmem:[%s238 + $0x1f8] sm:$0xff] %v724
        %s789 = sand.u32 %s142, 1
        %s790 = scalar_lea.sflag [#allocation3], %s789
        %s791 = sand.u32 %s142, 1
        %s792 = smul.addr %s791, 512
        %s793 = scalar_lea.vmem [#allocation2], %s792
        // Predicated region
        $region41: #{bottleneck_forward.7} parent=39 // pred_check
          %p794 = pneg %p152
        $region42: #{bottleneck_forward.7} parent=39 // pred_check_branch
          %796 = sbr.rel (%p794) target = $region44
        $region43: #{bottleneck_forward.7} parent=39 // pred_region
          %s797 = smul.u32 32, %s19
          %s799 = ssub.s32 8192, 8192
          %800 = vsyncadd %s790, %s799
          %s801 = smul.addr %s797, 2
          %s802 = smul.addr %s801, 128
          %s803 = scalar_lea.hbm %s5, %s802
          %s804 = sshll.u32 %s793, 4
          %s805 = int_to_ptr.vmem [resolvable:$true] %s804
          %810 = dma.vmem_to_hbm [thread:$0]  %s805, 8192, %s803, %s790, 256, 256, 16
        $region44: #{bottleneck_forward.7} parent=39 // pred_fallthru
          _
      $region40: #{bottleneck_forward.7} parent=5 // pred_fallthru
        _
      %p811 = scmp.le.s32.totalorder 2, %s14
      // Predicated region
      $region45: #{bottleneck_forward.7} parent=5 // pred_check
        %p812 = pneg %p811
      $region46: #{bottleneck_forward.7} parent=5 // pred_check_branch
        %814 = sbr.rel (%p812) target = $region48
      $region47: #{bottleneck_forward.7} parent=5 // pred_region
        %s815 = ssub.s32 %s14, 2
        // Predicated region
        $region49: #{bottleneck_forward.7} parent=47 // pred_check
          %p816 = pneg %p158
        $region50: #{bottleneck_forward.7} parent=47 // pred_check_branch
          %818 = sbr.rel (%p816) target = $region52
        $region51: #{bottleneck_forward.7} parent=47 // pred_region
          %s819 = sand.u32 %s143, 1
          %s820 = scalar_lea.sflag [#allocation3], %s819
          %s821 = sand.u32 %s143, 1
          %s822 = smul.addr %s821, 512
          %s823 = scalar_lea.vmem [#allocation2], %s822
          %824 = dma.done %s820, 8192
        $region52: #{bottleneck_forward.7} parent=47 // pred_fallthru
          _
      $region48: #{bottleneck_forward.7} parent=5 // pred_fallthru
        _
    $region6: #{bottleneck_forward.7} parent=1 // loop_footer
      %s18 = sadd.s32 1, %s14
    $region7: #{bottleneck_forward.7} parent=1 // loop_footer_branch
      %13 = sbr.rel target = $region3
    $region8: #{bottleneck_forward.7} parent=1 // loop_exit
      _
    %825 = vsyncpa [#allocation3], 1
    %s826 = scalar_lea.sflag [#allocation3], 1
    %827 = vsyncpa %s826, 1

// kernel: bottleneck_forward.6
$region0: #{bottleneck_forward.6}
  #allocation0 [shape = 'u32[]', space=smem, size = 0x4, offset = 0x4, fixed_abs, tag = 'smem constant byte address 0x4 - core index']
  #allocation1 [shape = 'u32[144,128]{1,0:T(1,128)}', space=vmem, size = 0x12000, scoped, tag = 'internal scratch']
  %s0 = inlined_call_operand.vmem [shape: f32[16,64], index: 0, kind: input, shape index: {}]
  %s1 = inlined_call_operand.vmem [shape: f32[1,64], index: 1, kind: input, shape index: {}]
  %s2 = inlined_call_operand.vmem [shape: f32[1,64], index: 2, kind: input, shape index: {}]
  %s3 = inlined_call_operand.vmem [shape: f32[512,64], index: 3, kind: input, shape index: {}]
  %s4 = inlined_call_operand.vmem [shape: f32[64,256], index: 4, kind: input, shape index: {}]
  %s5 = inlined_call_operand.vmem [shape: f32[512,256], index: 5, kind: output, shape index: {0}]
  %s6 = inlined_call_operand.vmem [shape: f32[16,256], index: 6, kind: output, shape index: {1}]
  %7 = xla_tuple %s5, %s6
  %s8 = sld [smem:[#allocation0]]
  $region61: #{bottleneck_forward.6} parent=0
    _
  %s10 = ssub.s32 1, %s8
  %s11 = scalar_select 0, %s10, %s8
  loop: start=0, step=1, limit=4
  $region2: #{bottleneck_forward.6} parent=0 // loop_pre_header
    _
  $region3: #{bottleneck_forward.6} parent=0 // loop_header
    %s13 = sphi 0, %s17
    %p14 = scmp.ge.s32.totalorder %s13, 4
    %s21 = sphi 0, %s21
    %s23 = sphi 0, %s21
    %s24 = sphi 0, %s23
    %s38 = sphi 0, %s24
    %s42 = sphi 0, %s42
    %s44 = sphi 0, %s42
    %s45 = sphi 0, %s44
    %s59 = sphi 0, %s45
    %s63 = sphi 0, %s63
    %s65 = sphi 0, %s63
    %s66 = sphi 0, %s65
    %s80 = sphi 0, %s66
    %s86 = sphi 0, %s88
    %s89 = sphi 0, %s86
    %s90 = sphi 0, %s89
    %s106 = sphi 0, %s90
    %s110 = sphi 0, %s110
    %s112 = sphi 0, %s110
    %s113 = sphi 0, %s112
    %s127 = sphi 0, %s113
    %s133 = sphi 0, %s135
    %s136 = sphi 0, %s133
    %s137 = sphi 0, %s136
    %s153 = sphi 0, %s137
    %s159 = sphi 0, %s161
    %s162 = sphi 0, %s159
    %s163 = sphi 0, %s162
    %s179 = sphi 0, %s163
  $region4: #{bottleneck_forward.6} parent=0 // loop_header_branch
    %16 = sbr.rel (%p14) target = $region8
  $region5: #{bottleneck_forward.6} parent=0 // loop_body
    %s18 = ssub.s32 %s13, 1
    %s19 = ssub.s32 %s13, 2
    %s20 = sadd.s32 %s13, 1
    %s22 = sadd.s32 %s21, 1
    %p25 = scmp.eq.s32.totalorder %s13, 1
    %p26 = scmp.ne.s32.totalorder %s21, %s23
    %p27 = scmp.eq.s32.totalorder %s13, 0
    %p28 = por %p26, %p27
    %p29 = scmp.ne.s32.totalorder %s21, %s23
    %p30 = scmp.eq.s32.totalorder %s18, 1
    %p31 = por %p29, %p30
    %p32 = scmp.ne.s32.totalorder %s23, %s24
    %p33 = scmp.eq.s32.totalorder %s18, 0
    %p34 = por %p32, %p33
    %p35 = scmp.ne.s32.totalorder %s23, %s24
    %p36 = scmp.eq.s32.totalorder %s19, 1
    %p37 = por %p35, %p36
    %p39 = scmp.ne.s32.totalorder %s24, %s38
    %p40 = scmp.eq.s32.totalorder %s19, 0
    %p41 = por %p39, %p40
    %s43 = sadd.s32 %s42, 1
    %p46 = scmp.eq.s32.totalorder %s13, 1
    %p47 = scmp.ne.s32.totalorder %s42, %s44
    %p48 = scmp.eq.s32.totalorder %s13, 0
    %p49 = por %p47, %p48
    %p50 = scmp.ne.s32.totalorder %s42, %s44
    %p51 = scmp.eq.s32.totalorder %s18, 1
    %p52 = por %p50, %p51
    %p53 = scmp.ne.s32.totalorder %s44, %s45
    %p54 = scmp.eq.s32.totalorder %s18, 0
    %p55 = por %p53, %p54
    %p56 = scmp.ne.s32.totalorder %s44, %s45
    %p57 = scmp.eq.s32.totalorder %s19, 1
    %p58 = por %p56, %p57
    %p60 = scmp.ne.s32.totalorder %s45, %s59
    %p61 = scmp.eq.s32.totalorder %s19, 0
    %p62 = por %p60, %p61
    %s64 = sadd.s32 %s63, 1
    %p67 = scmp.eq.s32.totalorder %s13, 1
    %p68 = scmp.ne.s32.totalorder %s63, %s65
    %p69 = scmp.eq.s32.totalorder %s13, 0
    %p70 = por %p68, %p69
    %p71 = scmp.ne.s32.totalorder %s63, %s65
    %p72 = scmp.eq.s32.totalorder %s18, 1
    %p73 = por %p71, %p72
    %p74 = scmp.ne.s32.totalorder %s65, %s66
    %p75 = scmp.eq.s32.totalorder %s18, 0
    %p76 = por %p74, %p75
    %p77 = scmp.ne.s32.totalorder %s65, %s66
    %p78 = scmp.eq.s32.totalorder %s19, 1
    %p79 = por %p77, %p78
    %p81 = scmp.ne.s32.totalorder %s66, %s80
    %p82 = scmp.eq.s32.totalorder %s19, 0
    %p83 = por %p81, %p82
    %s84 = ssub.s32 %s13, %s20
    %p85 = scmp.eq.s32.totalorder %s84, 0
    %s87 = sadd.s32 %s86, 1
    %s88 = scalar_select %p85, %s86, %s87
    %p91 = pneg %p85
    %p92 = scmp.eq.s32.totalorder %s13, 1
    %p93 = por %p91, %p92
    %p94 = scmp.ne.s32.totalorder %s86, %s89
    %p95 = scmp.eq.s32.totalorder %s13, 0
    %p96 = por %p94, %p95
    %p97 = scmp.ne.s32.totalorder %s86, %s89
    %p98 = scmp.eq.s32.totalorder %s18, 1
    %p99 = por %p97, %p98
    %p100 = scmp.ne.s32.totalorder %s89, %s90
    %p101 = scmp.eq.s32.totalorder %s18, 0
    %p102 = por %p100, %p101
    %p103 = scmp.ne.s32.totalorder %s89, %s90
    %p104 = scmp.eq.s32.totalorder %s19, 1
    %p105 = por %p103, %p104
    %p107 = scmp.ne.s32.totalorder %s90, %s106
    %p108 = scmp.eq.s32.totalorder %s19, 0
    %p109 = por %p107, %p108
    %s111 = sadd.s32 %s110, 1
    %p114 = scmp.eq.s32.totalorder %s13, 1
    %p115 = scmp.ne.s32.totalorder %s110, %s112
    %p116 = scmp.eq.s32.totalorder %s13, 0
    %p117 = por %p115, %p116
    %p118 = scmp.ne.s32.totalorder %s110, %s112
    %p119 = scmp.eq.s32.totalorder %s18, 1
    %p120 = por %p118, %p119
    %p121 = scmp.ne.s32.totalorder %s112, %s113
    %p122 = scmp.eq.s32.totalorder %s18, 0
    %p123 = por %p121, %p122
    %p124 = scmp.ne.s32.totalorder %s112, %s113
    %p125 = scmp.eq.s32.totalorder %s19, 1
    %p126 = por %p124, %p125
    %p128 = scmp.ne.s32.totalorder %s113, %s127
    %p129 = scmp.eq.s32.totalorder %s19, 0
    %p130 = por %p128, %p129
    %s131 = ssub.s32 %s13, %s20
    %p132 = scmp.eq.s32.totalorder %s131, 0
    %s134 = sadd.s32 %s133, 1
    %s135 = scalar_select %p132, %s133, %s134
    %p138 = pneg %p132
    %p139 = scmp.eq.s32.totalorder %s13, 1
    %p140 = por %p138, %p139
    %p141 = scmp.ne.s32.totalorder %s133, %s136
    %p142 = scmp.eq.s32.totalorder %s13, 0
    %p143 = por %p141, %p142
    %p144 = scmp.ne.s32.totalorder %s133, %s136
    %p145 = scmp.eq.s32.totalorder %s18, 1
    %p146 = por %p144, %p145
    %p147 = scmp.ne.s32.totalorder %s136, %s137
    %p148 = scmp.eq.s32.totalorder %s18, 0
    %p149 = por %p147, %p148
    %p150 = scmp.ne.s32.totalorder %s136, %s137
    %p151 = scmp.eq.s32.totalorder %s19, 1
    %p152 = por %p150, %p151
    %p154 = scmp.ne.s32.totalorder %s137, %s153
    %p155 = scmp.eq.s32.totalorder %s19, 0
    %p156 = por %p154, %p155
    %s157 = ssub.s32 %s13, %s20
    %p158 = scmp.eq.s32.totalorder %s157, 0
    %s160 = sadd.s32 %s159, 1
    %s161 = scalar_select %p158, %s159, %s160
    %p164 = pneg %p158
    %p165 = scmp.eq.s32.totalorder %s13, 1
    %p166 = por %p164, %p165
    %p167 = scmp.ne.s32.totalorder %s159, %s162
    %p168 = scmp.eq.s32.totalorder %s13, 0
    %p169 = por %p167, %p168
    %p170 = scmp.ne.s32.totalorder %s159, %s162
    %p171 = scmp.eq.s32.totalorder %s18, 1
    %p172 = por %p170, %p171
    %p173 = scmp.ne.s32.totalorder %s162, %s163
    %p174 = scmp.eq.s32.totalorder %s18, 0
    %p175 = por %p173, %p174
    %p176 = scmp.ne.s32.totalorder %s162, %s163
    %p177 = scmp.eq.s32.totalorder %s19, 1
    %p178 = por %p176, %p177
    %p180 = scmp.ne.s32.totalorder %s163, %s179
    %p181 = scmp.eq.s32.totalorder %s19, 0
    %p182 = por %p180, %p181
    %p183 = scmp.le.s32.totalorder 1, %s13
    %p184 = scmp.lt.s32.totalorder %s13, 3
    %p185 = pnand %p183, %p184
    %p186 = pneg %p185
    // Predicated region
    $region9: #{bottleneck_forward.6} parent=5 // pred_check
      _
    $region10: #{bottleneck_forward.6} parent=5 // pred_check_branch
      %188 = sbr.rel (%p185) target = $region12
    $region11: #{bottleneck_forward.6} parent=5 // pred_region
      %s189 = ssub.s32 %s13, 1
      // Predicated region
      $region13: #{bottleneck_forward.6} parent=11 // pred_check
        %p190 = pneg %p34
      $region14: #{bottleneck_forward.6} parent=11 // pred_check_branch
        %192 = sbr.rel (%p190) target = $region16
      $region15: #{bottleneck_forward.6} parent=11 // pred_region
        _
      $region16: #{bottleneck_forward.6} parent=11 // pred_fallthru
        _
      // Predicated region
      $region17: #{bottleneck_forward.6} parent=11 // pred_check
        %p193 = pneg %p55
      $region18: #{bottleneck_forward.6} parent=11 // pred_check_branch
        %195 = sbr.rel (%p193) target = $region20
      $region19: #{bottleneck_forward.6} parent=11 // pred_region
        _
      $region20: #{bottleneck_forward.6} parent=11 // pred_fallthru
        _
      // Predicated region
      $region21: #{bottleneck_forward.6} parent=11 // pred_check
        %p196 = pneg %p76
      $region22: #{bottleneck_forward.6} parent=11 // pred_check_branch
        %198 = sbr.rel (%p196) target = $region24
      $region23: #{bottleneck_forward.6} parent=11 // pred_region
        _
      $region24: #{bottleneck_forward.6} parent=11 // pred_fallthru
        _
      // Predicated region
      $region25: #{bottleneck_forward.6} parent=11 // pred_check
        %p199 = pneg %p123
      $region26: #{bottleneck_forward.6} parent=11 // pred_check_branch
        %201 = sbr.rel (%p199) target = $region28
      $region27: #{bottleneck_forward.6} parent=11 // pred_region
        _
      $region28: #{bottleneck_forward.6} parent=11 // pred_fallthru
        _
    $region12: #{bottleneck_forward.6} parent=5 // pred_fallthru
      _
    %p202 = scmp.lt.s32.totalorder %s13, 2
    // Predicated region
    $region29: #{bottleneck_forward.6} parent=5 // pred_check
      %p203 = pneg %p202
    $region30: #{bottleneck_forward.6} parent=5 // pred_check_branch
      %205 = sbr.rel (%p203) target = $region32
    $region31: #{bottleneck_forward.6} parent=5 // pred_region
      // Predicated region
      $region33: #{bottleneck_forward.6} parent=31 // pred_check
        %p206 = pneg %p96
      $region34: #{bottleneck_forward.6} parent=31 // pred_check_branch
        %208 = sbr.rel (%p206) target = $region36
      $region35: #{bottleneck_forward.6} parent=31 // pred_region
        %s209 = smul.u32 32, %s13
        %p210 = scmp.lt.s32.totalorder %s209, 63
        %s211 = scalar_select %p210, %s209, 63
        %s212 = smul.addr %s211, 8
        %s213 = scalar_lea.vmem %s3, %s212
        %s214 = smul.u32 32, %s13
      $region36: #{bottleneck_forward.6} parent=31 // pred_fallthru
        _
    $region32: #{bottleneck_forward.6} parent=5 // pred_fallthru
      _
    %p215 = scmp.le.s32.totalorder 1, %s13
    %p216 = scmp.lt.s32.totalorder %s13, 3
    %p217 = pnand %p215, %p216
    %p218 = pneg %p217
    // Predicated region
    $region37: #{bottleneck_forward.6} parent=5 // pred_check
      _
    $region38: #{bottleneck_forward.6} parent=5 // pred_check_branch
      %220 = sbr.rel (%p217) target = $region40
    $region39: #{bottleneck_forward.6} parent=5 // pred_region
      %s221 = ssub.s32 %s13, 1
      %p222 = pneg %p34
      %p223 = pneg %p31
      %p224 = pneg %p55
      %p225 = pneg %p52
      %p226 = pneg %p76
      %p227 = pneg %p73
      %s228 = smul.u32 32, %s18
      %p229 = scmp.lt.s32.totalorder %s228, 63
      %s230 = scalar_select %p229, %s228, 63
      %s231 = smul.addr %s230, 8
      %s232 = scalar_lea.vmem %s3, %s231
      %p233 = pneg %p102
      %p234 = pneg %p99
      %p235 = pneg %p123
      %p236 = pneg %p120
      %p237 = pneg %p149
      %p238 = pneg %p146
      %s239 = smul.u32 32, %s18
      %p240 = scmp.lt.s32.totalorder %s239, 63
      %s241 = scalar_select %p240, %s239, 63
      %s242 = smul.addr %s241, 2
      %s243 = smul.addr %s242, 8
      %s244 = scalar_lea.vmem %s5, %s243
      %p245 = pneg %p175
      %p246 = pneg %p172
      %p247 = scmp.lt.s32.totalorder %s18, 1
      %s248 = scalar_select %p247, %s18, 1
      %s249 = smul.addr %s248, 2
      %s250 = smul.addr %s249, 8
      %s251 = scalar_lea.vmem %s6, %s250
      %s252 = smul.u32 32, %s18
      %p253 = scmp.lt.s32.totalorder %s252, 63
      %s254 = scalar_select %p253, %s252, 63
      %s255 = smul.addr %s254, 8
      %s256 = scalar_lea.vmem %s3, %s255
      %s257 = smul.u32 32, %s18
      %s258 = smul.u32 32, %s18
      %p259 = scmp.lt.s32.totalorder %s258, 63
      %s260 = scalar_select %p259, %s258, 63
      %s261 = smul.addr %s260, 2
      %s262 = smul.addr %s261, 8
      %s263 = scalar_lea.vmem %s5, %s262
      %s264 = smul.u32 32, %s18
      %p265 = scmp.lt.s32.totalorder %s18, 1
      %s266 = scalar_select %p265, %s18, 1
      %s267 = smul.addr %s266, 2
      %s268 = smul.addr %s267, 8
      %s269 = scalar_lea.vmem %s6, %s268
      %v270 = vld [vmem:[%s0] sm:$0xff]
      %v271 = vld [vmem:[%s0 + $0x8] sm:$0xff]
      %vm272 = vcmask 523264
      %v273 = vsel %vm272, %v270, 0.0
      %v274 = vsel %vm272, %v271, 0.0
      %v275 = vadd.f32 %v273, %v274
      %v276 = vmul.f32 %v275, 0.001953125
      %v277 = vmul.f32 %v276, %v276
      %v279 = vrot.slane %v277, 7
      %v281 = vsub.f32 %v276, %v279
      %v282 = vld [vmem:[%s1] sm:$0x1]
      %v283 = vadd.f32 %v281, 1e-05
      %v284 = vrsqrt.pop %v283
      %v287 = vunpack.c.l.s4 1966171168
      %v288 = vunpack.c.0.s8 %v287
      %v289 = vlaneseq
      %v290 = vshrl.u32 %v289, 7
      %v291 = vsub.s32 %v288, %v290
      %v292 = vrot.slane %v284, %v291
      %v293 = vcombine.high %v292, %v292
      %v295 = vunpack.c.l.s4 1966171168
      %v296 = vunpack.c.0.s8 %v295
      %v297 = vlaneseq
      %v298 = vshrl.u32 %v297, 7
      %v299 = vsub.s32 %v296, %v298
      %v300 = vrot.slane %v293, %v299
      %v302 = vmul.f32 %v282, %v300
      %v303 = vld [vmem:[%s2] sm:$0x1]
      %v304 = vmul.f32 %v276, %v302
      %v305 = vsub.f32 %v303, %v304
      %v306 = vld [vmem:[%s256] sm:$0xff]
      %v307 = vld [vmem:[%s256 + $0x8] sm:$0xff]
      %v308 = vld [vmem:[%s256 + $0x10] sm:$0xff]
      %v309 = vld [vmem:[%s256 + $0x18] sm:$0xff]
      %v310 = vld [vmem:[%s256 + $0x20] sm:$0xff]
      %v311 = vld [vmem:[%s256 + $0x28] sm:$0xff]
      %v312 = vld [vmem:[%s256 + $0x30] sm:$0xff]
      %v313 = vld [vmem:[%s256 + $0x38] sm:$0xff]
      %v314 = vld [vmem:[%s256 + $0x40] sm:$0xff]
      %v315 = vld [vmem:[%s256 + $0x48] sm:$0xff]
      %v316 = vld [vmem:[%s256 + $0x50] sm:$0xff]
      %v317 = vld [vmem:[%s256 + $0x58] sm:$0xff]
      %v318 = vld [vmem:[%s256 + $0x60] sm:$0xff]
      %v319 = vld [vmem:[%s256 + $0x68] sm:$0xff]
      %v320 = vld [vmem:[%s256 + $0x70] sm:$0xff]
      %v321 = vld [vmem:[%s256 + $0x78] sm:$0xff]
      %v322 = vld [vmem:[%s256 + $0x80] sm:$0xff]
      %v323 = vld [vmem:[%s256 + $0x88] sm:$0xff]
      %v324 = vld [vmem:[%s256 + $0x90] sm:$0xff]
      %v325 = vld [vmem:[%s256 + $0x98] sm:$0xff]
      %v326 = vld [vmem:[%s256 + $0xa0] sm:$0xff]
      %v327 = vld [vmem:[%s256 + $0xa8] sm:$0xff]
      %v328 = vld [vmem:[%s256 + $0xb0] sm:$0xff]
      %v329 = vld [vmem:[%s256 + $0xb8] sm:$0xff]
      %v330 = vld [vmem:[%s256 + $0xc0] sm:$0xff]
      %v331 = vld [vmem:[%s256 + $0xc8] sm:$0xff]
      %v332 = vld [vmem:[%s256 + $0xd0] sm:$0xff]
      %v333 = vld [vmem:[%s256 + $0xd8] sm:$0xff]
      %v334 = vld [vmem:[%s256 + $0xe0] sm:$0xff]
      %v335 = vld [vmem:[%s256 + $0xe8] sm:$0xff]
      %v336 = vld [vmem:[%s256 + $0xf0] sm:$0xff]
      %v337 = vld [vmem:[%s256 + $0xf8] sm:$0xff]
      %v339 = vlaneseq
      %v340 = vshrl.u32 %v339, 7
      %v341 = vsub.s32 0, %v340
      %v342 = vrot.slane %v302, %v341
      %v344 = vmul.f32 %v306, %v342
      %v345 = vmul.f32 %v307, %v342
      %v346 = vmul.f32 %v308, %v342
      %v347 = vmul.f32 %v309, %v342
      %v348 = vmul.f32 %v310, %v342
      %v349 = vmul.f32 %v311, %v342
      %v350 = vmul.f32 %v312, %v342
      %v351 = vmul.f32 %v313, %v342
      %v352 = vmul.f32 %v314, %v342
      %v353 = vmul.f32 %v315, %v342
      %v354 = vmul.f32 %v316, %v342
      %v355 = vmul.f32 %v317, %v342
      %v356 = vmul.f32 %v318, %v342
      %v357 = vmul.f32 %v319, %v342
      %v358 = vmul.f32 %v320, %v342
      %v359 = vmul.f32 %v321, %v342
      %v360 = vmul.f32 %v322, %v342
      %v361 = vmul.f32 %v323, %v342
      %v362 = vmul.f32 %v324, %v342
      %v363 = vmul.f32 %v325, %v342
      %v364 = vmul.f32 %v326, %v342
      %v365 = vmul.f32 %v327, %v342
      %v366 = vmul.f32 %v328, %v342
      %v367 = vmul.f32 %v329, %v342
      %v368 = vmul.f32 %v330, %v342
      %v369 = vmul.f32 %v331, %v342
      %v370 = vmul.f32 %v332, %v342
      %v371 = vmul.f32 %v333, %v342
      %v372 = vmul.f32 %v334, %v342
      %v373 = vmul.f32 %v335, %v342
      %v374 = vmul.f32 %v336, %v342
      %v375 = vmul.f32 %v337, %v342
      %v377 = vlaneseq
      %v378 = vshrl.u32 %v377, 7
      %v379 = vsub.s32 0, %v378
      %v380 = vrot.slane %v305, %v379
      %v382 = vadd.f32 %v344, %v380
      %v383 = vadd.f32 %v345, %v380
      %v384 = vadd.f32 %v346, %v380
      %v385 = vadd.f32 %v347, %v380
      %v386 = vadd.f32 %v348, %v380
      %v387 = vadd.f32 %v349, %v380
      %v388 = vadd.f32 %v350, %v380
      %v389 = vadd.f32 %v351, %v380
      %v390 = vadd.f32 %v352, %v380
      %v391 = vadd.f32 %v353, %v380
      %v392 = vadd.f32 %v354, %v380
      %v393 = vadd.f32 %v355, %v380
      %v394 = vadd.f32 %v356, %v380
      %v395 = vadd.f32 %v357, %v380
      %v396 = vadd.f32 %v358, %v380
      %v397 = vadd.f32 %v359, %v380
      %v398 = vadd.f32 %v360, %v380
      %v399 = vadd.f32 %v361, %v380
      %v400 = vadd.f32 %v362, %v380
      %v401 = vadd.f32 %v363, %v380
      %v402 = vadd.f32 %v364, %v380
      %v403 = vadd.f32 %v365, %v380
      %v404 = vadd.f32 %v366, %v380
      %v405 = vadd.f32 %v367, %v380
      %v406 = vadd.f32 %v368, %v380
      %v407 = vadd.f32 %v369, %v380
      %v408 = vadd.f32 %v370, %v380
      %v409 = vadd.f32 %v371, %v380
      %v410 = vadd.f32 %v372, %v380
      %v411 = vadd.f32 %v373, %v380
      %v412 = vadd.f32 %v374, %v380
      %v413 = vadd.f32 %v375, %v380
      %v414 = vmax.f32 %v382, 0.0
      %v415 = vmax.f32 %v383, 0.0
      %v416 = vmax.f32 %v384, 0.0
      %v417 = vmax.f32 %v385, 0.0
      %v418 = vmax.f32 %v386, 0.0
      %v419 = vmax.f32 %v387, 0.0
      %v420 = vmax.f32 %v388, 0.0
      %v421 = vmax.f32 %v389, 0.0
      %v422 = vmax.f32 %v390, 0.0
      %v423 = vmax.f32 %v391, 0.0
      %v424 = vmax.f32 %v392, 0.0
      %v425 = vmax.f32 %v393, 0.0
      %v426 = vmax.f32 %v394, 0.0
      %v427 = vmax.f32 %v395, 0.0
      %v428 = vmax.f32 %v396, 0.0
      %v429 = vmax.f32 %v397, 0.0
      %v430 = vmax.f32 %v398, 0.0
      %v431 = vmax.f32 %v399, 0.0
      %v432 = vmax.f32 %v400, 0.0
      %v433 = vmax.f32 %v401, 0.0
      %v434 = vmax.f32 %v402, 0.0
      %v435 = vmax.f32 %v403, 0.0
      %v436 = vmax.f32 %v404, 0.0
      %v437 = vmax.f32 %v405, 0.0
      %v438 = vmax.f32 %v406, 0.0
      %v439 = vmax.f32 %v407, 0.0
      %v440 = vmax.f32 %v408, 0.0
      %v441 = vmax.f32 %v409, 0.0
      %v442 = vmax.f32 %v410, 0.0
      %v443 = vmax.f32 %v411, 0.0
      %v444 = vmax.f32 %v412, 0.0
      %v445 = vmax.f32 %v413, 0.0
      %v446 = vld [vmem:[%s4] sm:$0xff]
      %v447 = vld [vmem:[%s4 + $0x8] sm:$0xff]
      %v448 = vld [vmem:[%s4 + $0x10] sm:$0xff]
      %v449 = vld [vmem:[%s4 + $0x18] sm:$0xff]
      %v450 = vld [vmem:[%s4 + $0x20] sm:$0xff]
      %v451 = vld [vmem:[%s4 + $0x28] sm:$0xff]
      %v452 = vld [vmem:[%s4 + $0x30] sm:$0xff]
      %v453 = vld [vmem:[%s4 + $0x38] sm:$0xff]
      %v454 = vld [vmem:[%s4 + $0x40] sm:$0xff]
      %v455 = vld [vmem:[%s4 + $0x48] sm:$0xff]
      %v456 = vld [vmem:[%s4 + $0x50] sm:$0xff]
      %v457 = vld [vmem:[%s4 + $0x58] sm:$0xff]
      %v458 = vld [vmem:[%s4 + $0x60] sm:$0xff]
      %v459 = vld [vmem:[%s4 + $0x68] sm:$0xff]
      %v460 = vld [vmem:[%s4 + $0x70] sm:$0xff]
      %v461 = vld [vmem:[%s4 + $0x78] sm:$0xff]
      %v463 = vsel %vm272, %v414, 0
      %v466 = vsel %vm272, %v415, 0
      %v469 = vsel %vm272, %v416, 0
      %v472 = vsel %vm272, %v417, 0
      %v475 = vsel %vm272, %v418, 0
      %v478 = vsel %vm272, %v419, 0
      %v481 = vsel %vm272, %v420, 0
      %v484 = vsel %vm272, %v421, 0
      %v487 = vsel %vm272, %v422, 0
      %v490 = vsel %vm272, %v423, 0
      %v493 = vsel %vm272, %v424, 0
      %v496 = vsel %vm272, %v425, 0
      %v499 = vsel %vm272, %v426, 0
      %v502 = vsel %vm272, %v427, 0
      %v505 = vsel %vm272, %v428, 0
      %v508 = vsel %vm272, %v429, 0
      %v511 = vsel %vm272, %v430, 0
      %v514 = vsel %vm272, %v431, 0
      %v517 = vsel %vm272, %v432, 0
      %v520 = vsel %vm272, %v433, 0
      %v523 = vsel %vm272, %v434, 0
      %v526 = vsel %vm272, %v435, 0
      %v529 = vsel %vm272, %v436, 0
      %v532 = vsel %vm272, %v437, 0
      %v535 = vsel %vm272, %v438, 0
      %v538 = vsel %vm272, %v439, 0
      %v541 = vsel %vm272, %v440, 0
      %v544 = vsel %vm272, %v441, 0
      %v547 = vsel %vm272, %v442, 0
      %v550 = vsel %vm272, %v443, 0
      %v553 = vsel %vm272, %v444, 0
      %v556 = vsel %vm272, %v445, 0
      %558 = vmatprep.subr.mxu0 %v447
      %559 = vmatpush1.msra.mxu0 %v446
      %560 = vmatprep.subr.mxu0 %v449
      %561 = vmatpush1.msra.mxu0 %v448
      %562 = vmatprep.subr.mxu0 %v451
      %563 = vmatpush1.msra.mxu0 %v450
      %564 = vmatprep.subr.mxu0 %v453
      %565 = vmatpush1.msra.mxu0 %v452
      %566 = vmatprep.subr.mxu0 %v455
      %567 = vmatpush1.msra.mxu0 %v454
      %568 = vmatprep.subr.mxu0 %v457
      %569 = vmatpush1.msra.mxu0 %v456
      %570 = vmatprep.subr.mxu0 %v459
      %571 = vmatpush1.msra.mxu0 %v458
      %572 = vmatprep.subr.mxu0 %v461
      %573 = vmatpush1.msra.mxu0 %v460
      %574 = vmatprep.subr.mxu0 0.0
      %575 = vmatpush1.msra.mxu0 0.0
      %576 = vmatprep.subr.mxu0 0.0
      %577 = vmatpush1.msra.mxu0 0.0
      %578 = vmatprep.subr.mxu0 0.0
      %579 = vmatpush1.msra.mxu0 0.0
      %580 = vmatprep.subr.mxu0 0.0
      %581 = vmatpush1.msra.mxu0 0.0
      %582 = vmatprep.subr.mxu0 0.0
      %583 = vmatpush1.msra.mxu0 0.0
      %584 = vmatprep.subr.mxu0 0.0
      %585 = vmatpush1.msra.mxu0 0.0
      %586 = vmatprep.subr.mxu0 0.0
      %587 = vmatpush1.msra.mxu0 0.0
      %588 = vmatprep.subr.mxu0 0.0
      %589 = vmatpush1.msra.mxu0 0.0
      %590 = vmatprep.subr.mxu0 0.0
      %591 = vmatpush1.msra.mxu0 0.0
      %592 = vmatprep.subr.mxu0 0.0
      %593 = vmatpush1.msra.mxu0 0.0
      %594 = vmatprep.subr.mxu0 0.0
      %595 = vmatpush1.msra.mxu0 0.0
      %596 = vmatprep.subr.mxu0 0.0
      %597 = vmatpush1.msra.mxu0 0.0
      %598 = vmatprep.subr.mxu0 0.0
      %599 = vmatpush1.msra.mxu0 0.0
      %600 = vmatprep.subr.mxu0 0.0
      %601 = vmatpush1.msra.mxu0 0.0
      %602 = vmatprep.subr.mxu0 0.0
      %603 = vmatpush1.msra.mxu0 0.0
      %604 = vmatprep.subr.mxu0 0.0
      %605 = vmatpush1.msra.mxu0 0.0
      %606 = vmatprep.subr.mxu0 0.0
      %607 = vmatpush1.msra.mxu0 0.0
      %608 = vmatprep.subr.mxu0 0.0
      %609 = vmatpush1.msra.mxu0 0.0
      %610 = vmatprep.subr.mxu0 0.0
      %611 = vmatpush1.msra.mxu0 0.0
      %612 = vmatprep.subr.mxu0 0.0
      %613 = vmatpush1.msra.mxu0 0.0
      %614 = vmatprep.subr.mxu0 0.0
      %615 = vmatpush1.msra.mxu0 0.0
      %616 = vmatprep.subr.mxu0 0.0
      %617 = vmatpush1.msra.mxu0 0.0
      %618 = vmatprep.subr.mxu0 0.0
      %619 = vmatpush1.msra.mxu0 0.0
      %620 = vmatprep.subr.mxu0 0.0
      %621 = vmatpush1.msra.mxu0 0.0
      %622 = vmatprep.mubr.f32.mxu0 0.0
      %623 = vmatmul.mubr.f32.gmra.mrb[0].mxu0 %v463
      %v624 = vpop.f32.mrb[0].mxu0
      %v625 = vadd.f32 0.0, %v624
      %v626 = vpop.f32.mrb[0].mxu0
      %v627 = vadd.f32 0.0, %v626
      %628 = vmatprep.mubr.f32.mxu0 0.0
      %629 = vmatmul.mubr.f32.gmra.mrb[0].mxu0 %v466
      %v630 = vpop.f32.mrb[0].mxu0
      %v631 = vadd.f32 0.0, %v630
      %v632 = vpop.f32.mrb[0].mxu0
      %v633 = vadd.f32 0.0, %v632
      %634 = vmatprep.mubr.f32.mxu0 0.0
      %635 = vmatmul.mubr.f32.gmra.mrb[0].mxu0 %v469
      %v636 = vpop.f32.mrb[0].mxu0
      %v637 = vadd.f32 0.0, %v636
      %v638 = vpop.f32.mrb[0].mxu0
      %v639 = vadd.f32 0.0, %v638
      %640 = vmatprep.mubr.f32.mxu0 0.0
      %641 = vmatmul.mubr.f32.gmra.mrb[0].mxu0 %v472
      %v642 = vpop.f32.mrb[0].mxu0
      %v643 = vadd.f32 0.0, %v642
      %v644 = vpop.f32.mrb[0].mxu0
      %v645 = vadd.f32 0.0, %v644
      %646 = vmatprep.mubr.f32.mxu0 0.0
      %647 = vmatmul.mubr.f32.gmra.mrb[0].mxu0 %v475
      %v648 = vpop.f32.mrb[0].mxu0
      %v649 = vadd.f32 0.0, %v648
      %v650 = vpop.f32.mrb[0].mxu0
      %v651 = vadd.f32 0.0, %v650
      %652 = vmatprep.mubr.f32.mxu0 0.0
      %653 = vmatmul.mubr.f32.gmra.mrb[0].mxu0 %v478
      %v654 = vpop.f32.mrb[0].mxu0
      %v655 = vadd.f32 0.0, %v654
      %v656 = vpop.f32.mrb[0].mxu0
      %v657 = vadd.f32 0.0, %v656
      %658 = vmatprep.mubr.f32.mxu0 0.0
      %659 = vmatmul.mubr.f32.gmra.mrb[0].mxu0 %v481
      %v660 = vpop.f32.mrb[0].mxu0
      %v661 = vadd.f32 0.0, %v660
      %v662 = vpop.f32.mrb[0].mxu0
      %v663 = vadd.f32 0.0, %v662
      %664 = vmatprep.mubr.f32.mxu0 0.0
      %665 = vmatmul.mubr.f32.gmra.mrb[0].mxu0 %v484
      %v666 = vpop.f32.mrb[0].mxu0
      %v667 = vadd.f32 0.0, %v666
      %v668 = vpop.f32.mrb[0].mxu0
      %v669 = vadd.f32 0.0, %v668
      %670 = vmatprep.mubr.f32.mxu0 0.0
      %671 = vmatmul.mubr.f32.gmra.mrb[0].mxu0 %v487
      %v672 = vpop.f32.mrb[0].mxu0
      %v673 = vadd.f32 0.0, %v672
      %v674 = vpop.f32.mrb[0].mxu0
      %v675 = vadd.f32 0.0, %v674
      %676 = vmatprep.mubr.f32.mxu0 0.0
      %677 = vmatmul.mubr.f32.gmra.mrb[0].mxu0 %v490
      %v678 = vpop.f32.mrb[0].mxu0
      %v679 = vadd.f32 0.0, %v678
      %v680 = vpop.f32.mrb[0].mxu0
      %v681 = vadd.f32 0.0, %v680
      %682 = vmatprep.mubr.f32.mxu0 0.0
      %683 = vmatmul.mubr.f32.gmra.mrb[0].mxu0 %v493
      %v684 = vpop.f32.mrb[0].mxu0
      %v685 = vadd.f32 0.0, %v684
      %v686 = vpop.f32.mrb[0].mxu0
      %v687 = vadd.f32 0.0, %v686
      %688 = vmatprep.mubr.f32.mxu0 0.0
      %689 = vmatmul.mubr.f32.gmra.mrb[0].mxu0 %v496
      %v690 = vpop.f32.mrb[0].mxu0
      %v691 = vadd.f32 0.0, %v690
      %v692 = vpop.f32.mrb[0].mxu0
      %v693 = vadd.f32 0.0, %v692
      %694 = vmatprep.mubr.f32.mxu0 0.0
      %695 = vmatmul.mubr.f32.gmra.mrb[0].mxu0 %v499
      %v696 = vpop.f32.mrb[0].mxu0
      %v697 = vadd.f32 0.0, %v696
      %v698 = vpop.f32.mrb[0].mxu0
      %v699 = vadd.f32 0.0, %v698
      %700 = vmatprep.mubr.f32.mxu0 0.0
      %701 = vmatmul.mubr.f32.gmra.mrb[0].mxu0 %v502
      %v702 = vpop.f32.mrb[0].mxu0
      %v703 = vadd.f32 0.0, %v702
      %v704 = vpop.f32.mrb[0].mxu0
      %v705 = vadd.f32 0.0, %v704
      %706 = vmatprep.mubr.f32.mxu0 0.0
      %707 = vmatmul.mubr.f32.gmra.mrb[0].mxu0 %v505
      %v708 = vpop.f32.mrb[0].mxu0
      %v709 = vadd.f32 0.0, %v708
      %v710 = vpop.f32.mrb[0].mxu0
      %v711 = vadd.f32 0.0, %v710
      %712 = vmatprep.mubr.f32.mxu0 0.0
      %713 = vmatmul.mubr.f32.gmra.mrb[0].mxu0 %v508
      %v714 = vpop.f32.mrb[0].mxu0
      %v715 = vadd.f32 0.0, %v714
      %v716 = vpop.f32.mrb[0].mxu0
      %v717 = vadd.f32 0.0, %v716
      %718 = vmatprep.mubr.f32.mxu0 0.0
      %719 = vmatmul.mubr.f32.gmra.mrb[0].mxu0 %v511
      %v720 = vpop.f32.mrb[0].mxu0
      %v721 = vadd.f32 0.0, %v720
      %v722 = vpop.f32.mrb[0].mxu0
      %v723 = vadd.f32 0.0, %v722
      %724 = vmatprep.mubr.f32.mxu0 0.0
      %725 = vmatmul.mubr.f32.gmra.mrb[0].mxu0 %v514
      %v726 = vpop.f32.mrb[0].mxu0
      %v727 = vadd.f32 0.0, %v726
      %v728 = vpop.f32.mrb[0].mxu0
      %v729 = vadd.f32 0.0, %v728
      %730 = vmatprep.mubr.f32.mxu0 0.0
      %731 = vmatmul.mubr.f32.gmra.mrb[0].mxu0 %v517
      %v732 = vpop.f32.mrb[0].mxu0
      %v733 = vadd.f32 0.0, %v732
      %v734 = vpop.f32.mrb[0].mxu0
      %v735 = vadd.f32 0.0, %v734
      %736 = vmatprep.mubr.f32.mxu0 0.0
      %737 = vmatmul.mubr.f32.gmra.mrb[0].mxu0 %v520
      %v738 = vpop.f32.mrb[0].mxu0
      %v739 = vadd.f32 0.0, %v738
      %v740 = vpop.f32.mrb[0].mxu0
      %v741 = vadd.f32 0.0, %v740
      %742 = vmatprep.mubr.f32.mxu0 0.0
      %743 = vmatmul.mubr.f32.gmra.mrb[0].mxu0 %v523
      %v744 = vpop.f32.mrb[0].mxu0
      %v745 = vadd.f32 0.0, %v744
      %v746 = vpop.f32.mrb[0].mxu0
      %v747 = vadd.f32 0.0, %v746
      %748 = vmatprep.mubr.f32.mxu0 0.0
      %749 = vmatmul.mubr.f32.gmra.mrb[0].mxu0 %v526
      %v750 = vpop.f32.mrb[0].mxu0
      %v751 = vadd.f32 0.0, %v750
      %v752 = vpop.f32.mrb[0].mxu0
      %v753 = vadd.f32 0.0, %v752
      %754 = vmatprep.mubr.f32.mxu0 0.0
      %755 = vmatmul.mubr.f32.gmra.mrb[0].mxu0 %v529
      %v756 = vpop.f32.mrb[0].mxu0
      %v757 = vadd.f32 0.0, %v756
      %v758 = vpop.f32.mrb[0].mxu0
      %v759 = vadd.f32 0.0, %v758
      %760 = vmatprep.mubr.f32.mxu0 0.0
      %761 = vmatmul.mubr.f32.gmra.mrb[0].mxu0 %v532
      %v762 = vpop.f32.mrb[0].mxu0
      %v763 = vadd.f32 0.0, %v762
      %v764 = vpop.f32.mrb[0].mxu0
      %v765 = vadd.f32 0.0, %v764
      %766 = vmatprep.mubr.f32.mxu0 0.0
      %767 = vmatmul.mubr.f32.gmra.mrb[0].mxu0 %v535
      %v768 = vpop.f32.mrb[0].mxu0
      %v769 = vadd.f32 0.0, %v768
      %v770 = vpop.f32.mrb[0].mxu0
      %v771 = vadd.f32 0.0, %v770
      %772 = vmatprep.mubr.f32.mxu0 0.0
      %773 = vmatmul.mubr.f32.gmra.mrb[0].mxu0 %v538
      %v774 = vpop.f32.mrb[0].mxu0
      %v775 = vadd.f32 0.0, %v774
      %v776 = vpop.f32.mrb[0].mxu0
      %v777 = vadd.f32 0.0, %v776
      %778 = vmatprep.mubr.f32.mxu0 0.0
      %779 = vmatmul.mubr.f32.gmra.mrb[0].mxu0 %v541
      %v780 = vpop.f32.mrb[0].mxu0
      %v781 = vadd.f32 0.0, %v780
      %v782 = vpop.f32.mrb[0].mxu0
      %v783 = vadd.f32 0.0, %v782
      %784 = vmatprep.mubr.f32.mxu0 0.0
      %785 = vmatmul.mubr.f32.gmra.mrb[0].mxu0 %v544
      %v786 = vpop.f32.mrb[0].mxu0
      %v787 = vadd.f32 0.0, %v786
      %v788 = vpop.f32.mrb[0].mxu0
      %v789 = vadd.f32 0.0, %v788
      %790 = vmatprep.mubr.f32.mxu0 0.0
      %791 = vmatmul.mubr.f32.gmra.mrb[0].mxu0 %v547
      %v792 = vpop.f32.mrb[0].mxu0
      %v793 = vadd.f32 0.0, %v792
      %v794 = vpop.f32.mrb[0].mxu0
      %v795 = vadd.f32 0.0, %v794
      %796 = vmatprep.mubr.f32.mxu0 0.0
      %797 = vmatmul.mubr.f32.gmra.mrb[0].mxu0 %v550
      %v798 = vpop.f32.mrb[0].mxu0
      %v799 = vadd.f32 0.0, %v798
      %v800 = vpop.f32.mrb[0].mxu0
      %v801 = vadd.f32 0.0, %v800
      %802 = vmatprep.mubr.f32.mxu0 0.0
      %803 = vmatmul.mubr.f32.gmra.mrb[0].mxu0 %v553
      %v804 = vpop.f32.mrb[0].mxu0
      %v805 = vadd.f32 0.0, %v804
      %v806 = vpop.f32.mrb[0].mxu0
      %v807 = vadd.f32 0.0, %v806
      %808 = vmatprep.mubr.f32.mxu0 0.0
      %809 = vmatmul.mubr.f32.gmra.mrb[0].mxu0 %v556
      %v810 = vpop.f32.mrb[0].mxu0
      %v811 = vadd.f32 0.0, %v810
      %v812 = vpop.f32.mrb[0].mxu0
      %v813 = vadd.f32 0.0, %v812
      %814 = vdwg.mxu0
      %815 = vst [vmem:[%s263] sm:$0xff] %v625
      %816 = vst [vmem:[%s263 + $0x8] sm:$0xff] %v627
      %817 = vst [vmem:[%s263 + $0x10] sm:$0xff] %v631
      %818 = vst [vmem:[%s263 + $0x18] sm:$0xff] %v633
      %819 = vst [vmem:[%s263 + $0x20] sm:$0xff] %v637
      %820 = vst [vmem:[%s263 + $0x28] sm:$0xff] %v639
      %821 = vst [vmem:[%s263 + $0x30] sm:$0xff] %v643
      %822 = vst [vmem:[%s263 + $0x38] sm:$0xff] %v645
      %823 = vst [vmem:[%s263 + $0x40] sm:$0xff] %v649
      %824 = vst [vmem:[%s263 + $0x48] sm:$0xff] %v651
      %825 = vst [vmem:[%s263 + $0x50] sm:$0xff] %v655
      %826 = vst [vmem:[%s263 + $0x58] sm:$0xff] %v657
      %827 = vst [vmem:[%s263 + $0x60] sm:$0xff] %v661
      %828 = vst [vmem:[%s263 + $0x68] sm:$0xff] %v663
      %829 = vst [vmem:[%s263 + $0x70] sm:$0xff] %v667
      %830 = vst [vmem:[%s263 + $0x78] sm:$0xff] %v669
      %831 = vst [vmem:[%s263 + $0x80] sm:$0xff] %v673
      %832 = vst [vmem:[%s263 + $0x88] sm:$0xff] %v675
      %833 = vst [vmem:[%s263 + $0x90] sm:$0xff] %v679
      %834 = vst [vmem:[%s263 + $0x98] sm:$0xff] %v681
      %835 = vst [vmem:[%s263 + $0xa0] sm:$0xff] %v685
      %836 = vst [vmem:[%s263 + $0xa8] sm:$0xff] %v687
      %837 = vst [vmem:[%s263 + $0xb0] sm:$0xff] %v691
      %838 = vst [vmem:[%s263 + $0xb8] sm:$0xff] %v693
      %839 = vst [vmem:[%s263 + $0xc0] sm:$0xff] %v697
      %840 = vst [vmem:[%s263 + $0xc8] sm:$0xff] %v699
      %841 = vst [vmem:[%s263 + $0xd0] sm:$0xff] %v703
      %842 = vst [vmem:[%s263 + $0xd8] sm:$0xff] %v705
      %843 = vst [vmem:[%s263 + $0xe0] sm:$0xff] %v709
      %844 = vst [vmem:[%s263 + $0xe8] sm:$0xff] %v711
      %845 = vst [vmem:[%s263 + $0xf0] sm:$0xff] %v715
      %846 = vst [vmem:[%s263 + $0xf8] sm:$0xff] %v717
      %847 = vst [vmem:[%s263 + $0x100] sm:$0xff] %v721
      %848 = vst [vmem:[%s263 + $0x108] sm:$0xff] %v723
      %849 = vst [vmem:[%s263 + $0x110] sm:$0xff] %v727
      %850 = vst [vmem:[%s263 + $0x118] sm:$0xff] %v729
      %851 = vst [vmem:[%s263 + $0x120] sm:$0xff] %v733
      %852 = vst [vmem:[%s263 + $0x128] sm:$0xff] %v735
      %853 = vst [vmem:[%s263 + $0x130] sm:$0xff] %v739
      %854 = vst [vmem:[%s263 + $0x138] sm:$0xff] %v741
      %855 = vst [vmem:[%s263 + $0x140] sm:$0xff] %v745
      %856 = vst [vmem:[%s263 + $0x148] sm:$0xff] %v747
      %857 = vst [vmem:[%s263 + $0x150] sm:$0xff] %v751
      %858 = vst [vmem:[%s263 + $0x158] sm:$0xff] %v753
      %859 = vst [vmem:[%s263 + $0x160] sm:$0xff] %v757
      %860 = vst [vmem:[%s263 + $0x168] sm:$0xff] %v759
      %861 = vst [vmem:[%s263 + $0x170] sm:$0xff] %v763
      %862 = vst [vmem:[%s263 + $0x178] sm:$0xff] %v765
      %863 = vst [vmem:[%s263 + $0x180] sm:$0xff] %v769
      %864 = vst [vmem:[%s263 + $0x188] sm:$0xff] %v771
      %865 = vst [vmem:[%s263 + $0x190] sm:$0xff] %v775
      %866 = vst [vmem:[%s263 + $0x198] sm:$0xff] %v777
      %867 = vst [vmem:[%s263 + $0x1a0] sm:$0xff] %v781
      %868 = vst [vmem:[%s263 + $0x1a8] sm:$0xff] %v783
      %869 = vst [vmem:[%s263 + $0x1b0] sm:$0xff] %v787
      %870 = vst [vmem:[%s263 + $0x1b8] sm:$0xff] %v789
      %871 = vst [vmem:[%s263 + $0x1c0] sm:$0xff] %v793
      %872 = vst [vmem:[%s263 + $0x1c8] sm:$0xff] %v795
      %873 = vst [vmem:[%s263 + $0x1d0] sm:$0xff] %v799
      %874 = vst [vmem:[%s263 + $0x1d8] sm:$0xff] %v801
      %875 = vst [vmem:[%s263 + $0x1e0] sm:$0xff] %v805
      %876 = vst [vmem:[%s263 + $0x1e8] sm:$0xff] %v807
      %877 = vst [vmem:[%s263 + $0x1f0] sm:$0xff] %v811
      %878 = vst [vmem:[%s263 + $0x1f8] sm:$0xff] %v813
      %v879 = vadd.f32 %v625, %v631
      %v880 = vadd.f32 %v879, %v637
      %v881 = vadd.f32 %v880, %v643
      %v882 = vadd.f32 %v881, %v649
      %v883 = vadd.f32 %v882, %v655
      %v884 = vadd.f32 %v883, %v661
      %v885 = vadd.f32 %v884, %v667
      %v886 = vadd.f32 %v885, %v673
      %v887 = vadd.f32 %v886, %v679
      %v888 = vadd.f32 %v887, %v685
      %v889 = vadd.f32 %v888, %v691
      %v890 = vadd.f32 %v889, %v697
      %v891 = vadd.f32 %v890, %v703
      %v892 = vadd.f32 %v891, %v709
      %v893 = vadd.f32 %v892, %v715
      %v894 = vadd.f32 %v893, %v721
      %v895 = vadd.f32 %v894, %v727
      %v896 = vadd.f32 %v895, %v733
      %v897 = vadd.f32 %v896, %v739
      %v898 = vadd.f32 %v897, %v745
      %v899 = vadd.f32 %v898, %v751
      %v900 = vadd.f32 %v899, %v757
      %v901 = vadd.f32 %v900, %v763
      %v902 = vadd.f32 %v901, %v769
      %v903 = vadd.f32 %v902, %v775
      %v904 = vadd.f32 %v903, %v781
      %v905 = vadd.f32 %v904, %v787
      %v906 = vadd.f32 %v905, %v793
      %v907 = vadd.f32 %v906, %v799
      %v908 = vadd.f32 %v907, %v805
      %v909 = vadd.f32 %v908, %v811
      %v910 = vrot.slane %v909, 4
      %v911 = vadd.f32 %v909, %v910
      %v912 = vrot.slane %v911, 2
      %v913 = vadd.f32 %v911, %v912
      %v914 = vrot.slane %v913, 1
      %v915 = vadd.f32 %v913, %v914
      %v916 = vadd.f32 %v627, %v633
      %v917 = vadd.f32 %v916, %v639
      %v918 = vadd.f32 %v917, %v645
      %v919 = vadd.f32 %v918, %v651
      %v920 = vadd.f32 %v919, %v657
      %v921 = vadd.f32 %v920, %v663
      %v922 = vadd.f32 %v921, %v669
      %v923 = vadd.f32 %v922, %v675
      %v924 = vadd.f32 %v923, %v681
      %v925 = vadd.f32 %v924, %v687
      %v926 = vadd.f32 %v925, %v693
      %v927 = vadd.f32 %v926, %v699
      %v928 = vadd.f32 %v927, %v705
      %v929 = vadd.f32 %v928, %v711
      %v930 = vadd.f32 %v929, %v717
      %v931 = vadd.f32 %v930, %v723
      %v932 = vadd.f32 %v931, %v729
      %v933 = vadd.f32 %v932, %v735
      %v934 = vadd.f32 %v933, %v741
      %v935 = vadd.f32 %v934, %v747
      %v936 = vadd.f32 %v935, %v753
      %v937 = vadd.f32 %v936, %v759
      %v938 = vadd.f32 %v937, %v765
      %v939 = vadd.f32 %v938, %v771
      %v940 = vadd.f32 %v939, %v777
      %v941 = vadd.f32 %v940, %v783
      %v942 = vadd.f32 %v941, %v789
      %v943 = vadd.f32 %v942, %v795
      %v944 = vadd.f32 %v943, %v801
      %v945 = vadd.f32 %v944, %v807
      %v946 = vadd.f32 %v945, %v813
      %v947 = vrot.slane %v946, 4
      %v948 = vadd.f32 %v946, %v947
      %v949 = vrot.slane %v948, 2
      %v950 = vadd.f32 %v948, %v949
      %v951 = vrot.slane %v950, 1
      %v952 = vadd.f32 %v950, %v951
      %v953 = vmul.f32 %v625, %v625
      %v954 = vmul.f32 %v627, %v627
      %v955 = vmul.f32 %v631, %v631
      %v956 = vmul.f32 %v633, %v633
      %v957 = vmul.f32 %v637, %v637
      %v958 = vmul.f32 %v639, %v639
      %v959 = vmul.f32 %v643, %v643
      %v960 = vmul.f32 %v645, %v645
      %v961 = vmul.f32 %v649, %v649
      %v962 = vmul.f32 %v651, %v651
      %v963 = vmul.f32 %v655, %v655
      %v964 = vmul.f32 %v657, %v657
      %v965 = vmul.f32 %v661, %v661
      %v966 = vmul.f32 %v663, %v663
      %v967 = vmul.f32 %v667, %v667
      %v968 = vmul.f32 %v669, %v669
      %v969 = vmul.f32 %v673, %v673
      %v970 = vmul.f32 %v675, %v675
      %v971 = vmul.f32 %v679, %v679
      %v972 = vmul.f32 %v681, %v681
      %v973 = vmul.f32 %v685, %v685
      %v974 = vmul.f32 %v687, %v687
      %v975 = vmul.f32 %v691, %v691
      %v976 = vmul.f32 %v693, %v693
      %v977 = vmul.f32 %v697, %v697
      %v978 = vmul.f32 %v699, %v699
      %v979 = vmul.f32 %v703, %v703
      %v980 = vmul.f32 %v705, %v705
      %v981 = vmul.f32 %v709, %v709
      %v982 = vmul.f32 %v711, %v711
      %v983 = vmul.f32 %v715, %v715
      %v984 = vmul.f32 %v717, %v717
      %v985 = vmul.f32 %v721, %v721
      %v986 = vmul.f32 %v723, %v723
      %v987 = vmul.f32 %v727, %v727
      %v988 = vmul.f32 %v729, %v729
      %v989 = vmul.f32 %v733, %v733
      %v990 = vmul.f32 %v735, %v735
      %v991 = vmul.f32 %v739, %v739
      %v992 = vmul.f32 %v741, %v741
      %v993 = vmul.f32 %v745, %v745
      %v994 = vmul.f32 %v747, %v747
      %v995 = vmul.f32 %v751, %v751
      %v996 = vmul.f32 %v753, %v753
      %v997 = vmul.f32 %v757, %v757
      %v998 = vmul.f32 %v759, %v759
      %v999 = vmul.f32 %v763, %v763
      %v1000 = vmul.f32 %v765, %v765
      %v1001 = vmul.f32 %v769, %v769
      %v1002 = vmul.f32 %v771, %v771
      %v1003 = vmul.f32 %v775, %v775
      %v1004 = vmul.f32 %v777, %v777
      %v1005 = vmul.f32 %v781, %v781
      %v1006 = vmul.f32 %v783, %v783
      %v1007 = vmul.f32 %v787, %v787
      %v1008 = vmul.f32 %v789, %v789
      %v1009 = vmul.f32 %v793, %v793
      %v1010 = vmul.f32 %v795, %v795
      %v1011 = vmul.f32 %v799, %v799
      %v1012 = vmul.f32 %v801, %v801
      %v1013 = vmul.f32 %v805, %v805
      %v1014 = vmul.f32 %v807, %v807
      %v1015 = vmul.f32 %v811, %v811
      %v1016 = vmul.f32 %v813, %v813
      %v1017 = vadd.f32 %v953, %v955
      %v1018 = vadd.f32 %v1017, %v957
      %v1019 = vadd.f32 %v1018, %v959
      %v1020 = vadd.f32 %v1019, %v961
      %v1021 = vadd.f32 %v1020, %v963
      %v1022 = vadd.f32 %v1021, %v965
      %v1023 = vadd.f32 %v1022, %v967
      %v1024 = vadd.f32 %v1023, %v969
      %v1025 = vadd.f32 %v1024, %v971
      %v1026 = vadd.f32 %v1025, %v973
      %v1027 = vadd.f32 %v1026, %v975
      %v1028 = vadd.f32 %v1027, %v977
      %v1029 = vadd.f32 %v1028, %v979
      %v1030 = vadd.f32 %v1029, %v981
      %v1031 = vadd.f32 %v1030, %v983
      %v1032 = vadd.f32 %v1031, %v985
      %v1033 = vadd.f32 %v1032, %v987
      %v1034 = vadd.f32 %v1033, %v989
      %v1035 = vadd.f32 %v1034, %v991
      %v1036 = vadd.f32 %v1035, %v993
      %v1037 = vadd.f32 %v1036, %v995
      %v1038 = vadd.f32 %v1037, %v997
      %v1039 = vadd.f32 %v1038, %v999
      %v1040 = vadd.f32 %v1039, %v1001
      %v1041 = vadd.f32 %v1040, %v1003
      %v1042 = vadd.f32 %v1041, %v1005
      %v1043 = vadd.f32 %v1042, %v1007
      %v1044 = vadd.f32 %v1043, %v1009
      %v1045 = vadd.f32 %v1044, %v1011
      %v1046 = vadd.f32 %v1045, %v1013
      %v1047 = vadd.f32 %v1046, %v1015
      %v1048 = vrot.slane %v1047, 4
      %v1049 = vadd.f32 %v1047, %v1048
      %v1050 = vrot.slane %v1049, 2
      %v1051 = vadd.f32 %v1049, %v1050
      %v1052 = vrot.slane %v1051, 1
      %v1053 = vadd.f32 %v1051, %v1052
      %v1054 = vadd.f32 %v954, %v956
      %v1055 = vadd.f32 %v1054, %v958
      %v1056 = vadd.f32 %v1055, %v960
      %v1057 = vadd.f32 %v1056, %v962
      %v1058 = vadd.f32 %v1057, %v964
      %v1059 = vadd.f32 %v1058, %v966
      %v1060 = vadd.f32 %v1059, %v968
      %v1061 = vadd.f32 %v1060, %v970
      %v1062 = vadd.f32 %v1061, %v972
      %v1063 = vadd.f32 %v1062, %v974
      %v1064 = vadd.f32 %v1063, %v976
      %v1065 = vadd.f32 %v1064, %v978
      %v1066 = vadd.f32 %v1065, %v980
      %v1067 = vadd.f32 %v1066, %v982
      %v1068 = vadd.f32 %v1067, %v984
      %v1069 = vadd.f32 %v1068, %v986
      %v1070 = vadd.f32 %v1069, %v988
      %v1071 = vadd.f32 %v1070, %v990
      %v1072 = vadd.f32 %v1071, %v992
      %v1073 = vadd.f32 %v1072, %v994
      %v1074 = vadd.f32 %v1073, %v996
      %v1075 = vadd.f32 %v1074, %v998
      %v1076 = vadd.f32 %v1075, %v1000
      %v1077 = vadd.f32 %v1076, %v1002
      %v1078 = vadd.f32 %v1077, %v1004
      %v1079 = vadd.f32 %v1078, %v1006
      %v1080 = vadd.f32 %v1079, %v1008
      %v1081 = vadd.f32 %v1080, %v1010
      %v1082 = vadd.f32 %v1081, %v1012
      %v1083 = vadd.f32 %v1082, %v1014
      %v1084 = vadd.f32 %v1083, %v1016
      %v1085 = vrot.slane %v1084, 4
      %v1086 = vadd.f32 %v1084, %v1085
      %v1087 = vrot.slane %v1086, 2
      %v1088 = vadd.f32 %v1086, %v1087
      %v1089 = vrot.slane %v1088, 1
      %v1090 = vadd.f32 %v1088, %v1089
      %v1091 = vlaneseq
      %v1092 = vshrl.u32 %v1091, 7
      %vm1093 = vcmp.eq.s32.totalorder %v1092, 0
      %vm1094 = vcmp.eq.s32.totalorder %v1092, 1
      %v1095 = vsel %vm1094, %v1053, 0.0
      %v1096 = vsel %vm1094, %v1090, 0.0
      %v1097 = vsel %vm1093, %v915, %v1095
      %v1098 = vsel %vm1093, %v952, %v1096
      %1099 = vst [vmem:[%s269] sm:$0xff] %v1097
      %1100 = vst [vmem:[%s269 + $0x8] sm:$0xff] %v1098
      %s1101 = smul.u32 32, %s18
      %p1102 = scmp.lt.s32.totalorder %s1101, 63
      %s1103 = scalar_select %p1102, %s1101, 63
      %s1104 = smul.addr %s1103, 2
      %s1105 = smul.addr %s1104, 8
      %s1106 = scalar_lea.vmem %s5, %s1105
      %p1107 = scmp.lt.s32.totalorder %s18, 1
      %s1108 = scalar_select %p1107, %s18, 1
      %s1109 = smul.addr %s1108, 2
      %s1110 = smul.addr %s1109, 8
      %s1111 = scalar_lea.vmem %s6, %s1110
      // Predicated region
      $region41: #{bottleneck_forward.6} parent=39 // pred_check
        %p1112 = pneg %p146
      $region42: #{bottleneck_forward.6} parent=39 // pred_check_branch
        %1114 = sbr.rel (%p1112) target = $region44
      $region43: #{bottleneck_forward.6} parent=39 // pred_region
        %s1115 = smul.u32 32, %s18
      $region44: #{bottleneck_forward.6} parent=39 // pred_fallthru
        _
      // Predicated region
      $region45: #{bottleneck_forward.6} parent=39 // pred_check
        %p1116 = pneg %p172
      $region46: #{bottleneck_forward.6} parent=39 // pred_check_branch
        %1118 = sbr.rel (%p1116) target = $region48
      $region47: #{bottleneck_forward.6} parent=39 // pred_region
        _
      $region48: #{bottleneck_forward.6} parent=39 // pred_fallthru
        _
    $region40: #{bottleneck_forward.6} parent=5 // pred_fallthru
      _
    %p1119 = scmp.le.s32.totalorder 2, %s13
    // Predicated region
    $region49: #{bottleneck_forward.6} parent=5 // pred_check
      %p1120 = pneg %p1119
    $region50: #{bottleneck_forward.6} parent=5 // pred_check_branch
      %1122 = sbr.rel (%p1120) target = $region52
    $region51: #{bottleneck_forward.6} parent=5 // pred_region
      %s1123 = ssub.s32 %s13, 2
      // Predicated region
      $region53: #{bottleneck_forward.6} parent=51 // pred_check
        %p1124 = pneg %p152
      $region54: #{bottleneck_forward.6} parent=51 // pred_check_branch
        %1126 = sbr.rel (%p1124) target = $region56
      $region55: #{bottleneck_forward.6} parent=51 // pred_region
        %s1127 = smul.u32 32, %s19
        %p1128 = scmp.lt.s32.totalorder %s1127, 63
        %s1129 = scalar_select %p1128, %s1127, 63
        %s1130 = smul.addr %s1129, 2
        %s1131 = smul.addr %s1130, 8
        %s1132 = scalar_lea.vmem %s5, %s1131
      $region56: #{bottleneck_forward.6} parent=51 // pred_fallthru
        _
      // Predicated region
      $region57: #{bottleneck_forward.6} parent=51 // pred_check
        %p1133 = pneg %p178
      $region58: #{bottleneck_forward.6} parent=51 // pred_check_branch
        %1135 = sbr.rel (%p1133) target = $region60
      $region59: #{bottleneck_forward.6} parent=51 // pred_region
        %p1136 = scmp.lt.s32.totalorder %s19, 1
        %s1137 = scalar_select %p1136, %s19, 1
        %s1138 = smul.addr %s1137, 2
        %s1139 = smul.addr %s1138, 8
        %s1140 = scalar_lea.vmem %s6, %s1139
      $region60: #{bottleneck_forward.6} parent=51 // pred_fallthru
        _
    $region52: #{bottleneck_forward.6} parent=5 // pred_fallthru
      _
  $region6: #{bottleneck_forward.6} parent=0 // loop_footer
    %s17 = sadd.s32 1, %s13
  $region7: #{bottleneck_forward.6} parent=0 // loop_footer_branch
    %12 = sbr.rel target = $region3
  $region8: #{bottleneck_forward.6} parent=0 // loop_exit
    _

// kernel: bottleneck_forward.5
$region0: #{bottleneck_forward.5}
  #allocation0 [shape = 'u32[]', space=smem, size = 0x4, offset = 0x4, fixed_abs, tag = 'smem constant byte address 0x4 - core index']
  #allocation1 [shape = 'u32[144,128]{1,0:T(1,128)}', space=vmem, size = 0x12000, scoped, tag = 'internal scratch']
  #allocation2 [shape = 'f32[288,192]{1,0:T(8,128)}', space=vmem, size = 0x48000, scoped, tag = 'scratch operand']
  %s0 = inlined_call_operand.vmem [shape: f32[16,64], index: 0, kind: input, shape index: {}]
  %s1 = inlined_call_operand.vmem [shape: f32[1,64], index: 1, kind: input, shape index: {}]
  %s2 = inlined_call_operand.vmem [shape: f32[1,64], index: 2, kind: input, shape index: {}]
  %s3 = inlined_call_operand.vmem [shape: f32[512,64], index: 3, kind: input, shape index: {}]
  %s4 = inlined_call_operand.vmem [shape: f32[3,192,64], index: 4, kind: input, shape index: {}]
  %s5 = inlined_call_operand.vmem [shape: f32[512,64], index: 5, kind: output, shape index: {0}]
  %s6 = inlined_call_operand.vmem [shape: f32[16,64], index: 6, kind: output, shape index: {1}]
  %7 = xla_tuple %s5, %s6
  %s8 = sld [smem:[#allocation0]]
  $region61: #{bottleneck_forward.5} parent=0
    _
  %s10 = ssub.s32 1, %s8
  %s11 = scalar_select 0, %s10, %s8
  loop: start=0, step=1, limit=4
  $region2: #{bottleneck_forward.5} parent=0 // loop_pre_header
    _
  $region3: #{bottleneck_forward.5} parent=0 // loop_header
    %s13 = sphi 0, %s17
    %p14 = scmp.ge.s32.totalorder %s13, 4
    %s21 = sphi 0, %s21
    %s23 = sphi 0, %s21
    %s24 = sphi 0, %s23
    %s38 = sphi 0, %s24
    %s42 = sphi 0, %s42
    %s44 = sphi 0, %s42
    %s45 = sphi 0, %s44
    %s59 = sphi 0, %s45
    %s63 = sphi 0, %s63
    %s65 = sphi 0, %s63
    %s66 = sphi 0, %s65
    %s80 = sphi 0, %s66
    %s86 = sphi 0, %s88
    %s89 = sphi 0, %s86
    %s90 = sphi 0, %s89
    %s106 = sphi 0, %s90
    %s110 = sphi 0, %s110
    %s112 = sphi 0, %s110
    %s113 = sphi 0, %s112
    %s127 = sphi 0, %s113
    %s133 = sphi 0, %s135
    %s136 = sphi 0, %s133
    %s137 = sphi 0, %s136
    %s153 = sphi 0, %s137
    %s159 = sphi 0, %s161
    %s162 = sphi 0, %s159
    %s163 = sphi 0, %s162
    %s179 = sphi 0, %s163
  $region4: #{bottleneck_forward.5} parent=0 // loop_header_branch
    %16 = sbr.rel (%p14) target = $region8
  $region5: #{bottleneck_forward.5} parent=0 // loop_body
    %s18 = ssub.s32 %s13, 1
    %s19 = ssub.s32 %s13, 2
    %s20 = sadd.s32 %s13, 1
    %s22 = sadd.s32 %s21, 1
    %p25 = scmp.eq.s32.totalorder %s13, 1
    %p26 = scmp.ne.s32.totalorder %s21, %s23
    %p27 = scmp.eq.s32.totalorder %s13, 0
    %p28 = por %p26, %p27
    %p29 = scmp.ne.s32.totalorder %s21, %s23
    %p30 = scmp.eq.s32.totalorder %s18, 1
    %p31 = por %p29, %p30
    %p32 = scmp.ne.s32.totalorder %s23, %s24
    %p33 = scmp.eq.s32.totalorder %s18, 0
    %p34 = por %p32, %p33
    %p35 = scmp.ne.s32.totalorder %s23, %s24
    %p36 = scmp.eq.s32.totalorder %s19, 1
    %p37 = por %p35, %p36
    %p39 = scmp.ne.s32.totalorder %s24, %s38
    %p40 = scmp.eq.s32.totalorder %s19, 0
    %p41 = por %p39, %p40
    %s43 = sadd.s32 %s42, 1
    %p46 = scmp.eq.s32.totalorder %s13, 1
    %p47 = scmp.ne.s32.totalorder %s42, %s44
    %p48 = scmp.eq.s32.totalorder %s13, 0
    %p49 = por %p47, %p48
    %p50 = scmp.ne.s32.totalorder %s42, %s44
    %p51 = scmp.eq.s32.totalorder %s18, 1
    %p52 = por %p50, %p51
    %p53 = scmp.ne.s32.totalorder %s44, %s45
    %p54 = scmp.eq.s32.totalorder %s18, 0
    %p55 = por %p53, %p54
    %p56 = scmp.ne.s32.totalorder %s44, %s45
    %p57 = scmp.eq.s32.totalorder %s19, 1
    %p58 = por %p56, %p57
    %p60 = scmp.ne.s32.totalorder %s45, %s59
    %p61 = scmp.eq.s32.totalorder %s19, 0
    %p62 = por %p60, %p61
    %s64 = sadd.s32 %s63, 1
    %p67 = scmp.eq.s32.totalorder %s13, 1
    %p68 = scmp.ne.s32.totalorder %s63, %s65
    %p69 = scmp.eq.s32.totalorder %s13, 0
    %p70 = por %p68, %p69
    %p71 = scmp.ne.s32.totalorder %s63, %s65
    %p72 = scmp.eq.s32.totalorder %s18, 1
    %p73 = por %p71, %p72
    %p74 = scmp.ne.s32.totalorder %s65, %s66
    %p75 = scmp.eq.s32.totalorder %s18, 0
    %p76 = por %p74, %p75
    %p77 = scmp.ne.s32.totalorder %s65, %s66
    %p78 = scmp.eq.s32.totalorder %s19, 1
    %p79 = por %p77, %p78
    %p81 = scmp.ne.s32.totalorder %s66, %s80
    %p82 = scmp.eq.s32.totalorder %s19, 0
    %p83 = por %p81, %p82
    %s84 = ssub.s32 %s13, %s20
    %p85 = scmp.eq.s32.totalorder %s84, 0
    %s87 = sadd.s32 %s86, 1
    %s88 = scalar_select %p85, %s86, %s87
    %p91 = pneg %p85
    %p92 = scmp.eq.s32.totalorder %s13, 1
    %p93 = por %p91, %p92
    %p94 = scmp.ne.s32.totalorder %s86, %s89
    %p95 = scmp.eq.s32.totalorder %s13, 0
    %p96 = por %p94, %p95
    %p97 = scmp.ne.s32.totalorder %s86, %s89
    %p98 = scmp.eq.s32.totalorder %s18, 1
    %p99 = por %p97, %p98
    %p100 = scmp.ne.s32.totalorder %s89, %s90
    %p101 = scmp.eq.s32.totalorder %s18, 0
    %p102 = por %p100, %p101
    %p103 = scmp.ne.s32.totalorder %s89, %s90
    %p104 = scmp.eq.s32.totalorder %s19, 1
    %p105 = por %p103, %p104
    %p107 = scmp.ne.s32.totalorder %s90, %s106
    %p108 = scmp.eq.s32.totalorder %s19, 0
    %p109 = por %p107, %p108
    %s111 = sadd.s32 %s110, 1
    %p114 = scmp.eq.s32.totalorder %s13, 1
    %p115 = scmp.ne.s32.totalorder %s110, %s112
    %p116 = scmp.eq.s32.totalorder %s13, 0
    %p117 = por %p115, %p116
    %p118 = scmp.ne.s32.totalorder %s110, %s112
    %p119 = scmp.eq.s32.totalorder %s18, 1
    %p120 = por %p118, %p119
    %p121 = scmp.ne.s32.totalorder %s112, %s113
    %p122 = scmp.eq.s32.totalorder %s18, 0
    %p123 = por %p121, %p122
    %p124 = scmp.ne.s32.totalorder %s112, %s113
    %p125 = scmp.eq.s32.totalorder %s19, 1
    %p126 = por %p124, %p125
    %p128 = scmp.ne.s32.totalorder %s113, %s127
    %p129 = scmp.eq.s32.totalorder %s19, 0
    %p130 = por %p128, %p129
    %s131 = ssub.s32 %s13, %s20
    %p132 = scmp.eq.s32.totalorder %s131, 0
    %s134 = sadd.s32 %s133, 1
    %s135 = scalar_select %p132, %s133, %s134
    %p138 = pneg %p132
    %p139 = scmp.eq.s32.totalorder %s13, 1
    %p140 = por %p138, %p139
    %p141 = scmp.ne.s32.totalorder %s133, %s136
    %p142 = scmp.eq.s32.totalorder %s13, 0
    %p143 = por %p141, %p142
    %p144 = scmp.ne.s32.totalorder %s133, %s136
    %p145 = scmp.eq.s32.totalorder %s18, 1
    %p146 = por %p144, %p145
    %p147 = scmp.ne.s32.totalorder %s136, %s137
    %p148 = scmp.eq.s32.totalorder %s18, 0
    %p149 = por %p147, %p148
    %p150 = scmp.ne.s32.totalorder %s136, %s137
    %p151 = scmp.eq.s32.totalorder %s19, 1
    %p152 = por %p150, %p151
    %p154 = scmp.ne.s32.totalorder %s137, %s153
    %p155 = scmp.eq.s32.totalorder %s19, 0
    %p156 = por %p154, %p155
    %s157 = ssub.s32 %s13, %s20
    %p158 = scmp.eq.s32.totalorder %s157, 0
    %s160 = sadd.s32 %s159, 1
    %s161 = scalar_select %p158, %s159, %s160
    %p164 = pneg %p158
    %p165 = scmp.eq.s32.totalorder %s13, 1
    %p166 = por %p164, %p165
    %p167 = scmp.ne.s32.totalorder %s159, %s162
    %p168 = scmp.eq.s32.totalorder %s13, 0
    %p169 = por %p167, %p168
    %p170 = scmp.ne.s32.totalorder %s159, %s162
    %p171 = scmp.eq.s32.totalorder %s18, 1
    %p172 = por %p170, %p171
    %p173 = scmp.ne.s32.totalorder %s162, %s163
    %p174 = scmp.eq.s32.totalorder %s18, 0
    %p175 = por %p173, %p174
    %p176 = scmp.ne.s32.totalorder %s162, %s163
    %p177 = scmp.eq.s32.totalorder %s19, 1
    %p178 = por %p176, %p177
    %p180 = scmp.ne.s32.totalorder %s163, %s179
    %p181 = scmp.eq.s32.totalorder %s19, 0
    %p182 = por %p180, %p181
    %p183 = scmp.le.s32.totalorder 1, %s13
    %p184 = scmp.lt.s32.totalorder %s13, 3
    %p185 = pnand %p183, %p184
    %p186 = pneg %p185
    // Predicated region
    $region9: #{bottleneck_forward.5} parent=5 // pred_check
      _
    $region10: #{bottleneck_forward.5} parent=5 // pred_check_branch
      %188 = sbr.rel (%p185) target = $region12
    $region11: #{bottleneck_forward.5} parent=5 // pred_region
      %s189 = ssub.s32 %s13, 1
      // Predicated region
      $region13: #{bottleneck_forward.5} parent=11 // pred_check
        %p190 = pneg %p34
      $region14: #{bottleneck_forward.5} parent=11 // pred_check_branch
        %192 = sbr.rel (%p190) target = $region16
      $region15: #{bottleneck_forward.5} parent=11 // pred_region
        _
      $region16: #{bottleneck_forward.5} parent=11 // pred_fallthru
        _
      // Predicated region
      $region17: #{bottleneck_forward.5} parent=11 // pred_check
        %p193 = pneg %p55
      $region18: #{bottleneck_forward.5} parent=11 // pred_check_branch
        %195 = sbr.rel (%p193) target = $region20
      $region19: #{bottleneck_forward.5} parent=11 // pred_region
        _
      $region20: #{bottleneck_forward.5} parent=11 // pred_fallthru
        _
      // Predicated region
      $region21: #{bottleneck_forward.5} parent=11 // pred_check
        %p196 = pneg %p76
      $region22: #{bottleneck_forward.5} parent=11 // pred_check_branch
        %198 = sbr.rel (%p196) target = $region24
      $region23: #{bottleneck_forward.5} parent=11 // pred_region
        _
      $region24: #{bottleneck_forward.5} parent=11 // pred_fallthru
        _
      // Predicated region
      $region25: #{bottleneck_forward.5} parent=11 // pred_check
        %p199 = pneg %p123
      $region26: #{bottleneck_forward.5} parent=11 // pred_check_branch
        %201 = sbr.rel (%p199) target = $region28
      $region27: #{bottleneck_forward.5} parent=11 // pred_region
        _
      $region28: #{bottleneck_forward.5} parent=11 // pred_fallthru
        _
    $region12: #{bottleneck_forward.5} parent=5 // pred_fallthru
      _
    %p202 = scmp.lt.s32.totalorder %s13, 2
    // Predicated region
    $region29: #{bottleneck_forward.5} parent=5 // pred_check
      %p203 = pneg %p202
    $region30: #{bottleneck_forward.5} parent=5 // pred_check_branch
      %205 = sbr.rel (%p203) target = $region32
    $region31: #{bottleneck_forward.5} parent=5 // pred_region
      // Predicated region
      $region33: #{bottleneck_forward.5} parent=31 // pred_check
        %p206 = pneg %p96
      $region34: #{bottleneck_forward.5} parent=31 // pred_check_branch
        %208 = sbr.rel (%p206) target = $region36
      $region35: #{bottleneck_forward.5} parent=31 // pred_region
        %s209 = smul.u32 32, %s13
        %p210 = scmp.lt.s32.totalorder %s209, 63
        %s211 = scalar_select %p210, %s209, 63
        %s212 = smul.addr %s211, 8
        %s213 = scalar_lea.vmem %s3, %s212
        %s214 = smul.u32 32, %s13
      $region36: #{bottleneck_forward.5} parent=31 // pred_fallthru
        _
    $region32: #{bottleneck_forward.5} parent=5 // pred_fallthru
      _
    %p215 = scmp.le.s32.totalorder 1, %s13
    %p216 = scmp.lt.s32.totalorder %s13, 3
    %p217 = pnand %p215, %p216
    %p218 = pneg %p217
    // Predicated region
    $region37: #{bottleneck_forward.5} parent=5 // pred_check
      _
    $region38: #{bottleneck_forward.5} parent=5 // pred_check_branch
      %220 = sbr.rel (%p217) target = $region40
    $region39: #{bottleneck_forward.5} parent=5 // pred_region
      %s221 = ssub.s32 %s13, 1
      %p222 = pneg %p34
      %p223 = pneg %p31
      %p224 = pneg %p55
      %p225 = pneg %p52
      %p226 = pneg %p76
      %p227 = pneg %p73
      %s228 = smul.u32 32, %s18
      %p229 = scmp.lt.s32.totalorder %s228, 63
      %s230 = scalar_select %p229, %s228, 63
      %s231 = smul.addr %s230, 8
      %s232 = scalar_lea.vmem %s3, %s231
      %p233 = pneg %p102
      %p234 = pneg %p99
      %p235 = pneg %p123
      %p236 = pneg %p120
      %p237 = pneg %p149
      %p238 = pneg %p146
      %s239 = smul.u32 32, %s18
      %p240 = scmp.lt.s32.totalorder %s239, 63
      %s241 = scalar_select %p240, %s239, 63
      %s242 = smul.addr %s241, 8
      %s243 = scalar_lea.vmem %s5, %s242
      %p244 = pneg %p175
      %p245 = pneg %p172
      %p246 = scmp.lt.s32.totalorder %s18, 1
      %s247 = scalar_select %p246, %s18, 1
      %s248 = smul.addr %s247, 8
      %s249 = scalar_lea.vmem %s6, %s248
      %s250 = smul.u32 32, %s18
      %p251 = scmp.lt.s32.totalorder %s250, 63
      %s252 = scalar_select %p251, %s250, 63
      %s253 = smul.addr %s252, 8
      %s254 = scalar_lea.vmem %s3, %s253
      %s255 = smul.u32 32, %s18
      %s256 = smul.u32 32, %s18
      %p257 = scmp.lt.s32.totalorder %s256, 63
      %s258 = scalar_select %p257, %s256, 63
      %s259 = smul.addr %s258, 8
      %s260 = scalar_lea.vmem %s5, %s259
      %s261 = smul.u32 32, %s18
      %p262 = scmp.lt.s32.totalorder %s18, 1
      %s263 = scalar_select %p262, %s18, 1
      %s264 = smul.addr %s263, 8
      %s265 = scalar_lea.vmem %s6, %s264
      %v266 = vld [vmem:[%s0] sm:$0xff]
      %v267 = vld [vmem:[%s0 + $0x8] sm:$0xff]
      %vm268 = vcmask 523264
      %v269 = vsel %vm268, %v266, 0.0
      %v270 = vsel %vm268, %v267, 0.0
      %v271 = vadd.f32 %v269, %v270
      %v272 = vmul.f32 %v271, 0.001953125
      %v273 = vmul.f32 %v272, %v272
      %v275 = vrot.slane %v273, 7
      %v277 = vsub.f32 %v272, %v275
      %v278 = vld [vmem:[%s1] sm:$0x1]
      %v279 = vadd.f32 %v277, 1e-05
      %v280 = vrsqrt.pop %v279
      %v283 = vunpack.c.l.s4 1966171168
      %v284 = vunpack.c.0.s8 %v283
      %v285 = vlaneseq
      %v286 = vshrl.u32 %v285, 7
      %v287 = vsub.s32 %v284, %v286
      %v288 = vrot.slane %v280, %v287
      %v289 = vcombine.high %v288, %v288
      %v291 = vunpack.c.l.s4 1966171168
      %v292 = vunpack.c.0.s8 %v291
      %v293 = vlaneseq
      %v294 = vshrl.u32 %v293, 7
      %v295 = vsub.s32 %v292, %v294
      %v296 = vrot.slane %v289, %v295
      %v298 = vmul.f32 %v278, %v296
      %v299 = vld [vmem:[%s2] sm:$0x1]
      %v300 = vmul.f32 %v272, %v298
      %v301 = vsub.f32 %v299, %v300
      %v302 = vld [vmem:[%s254] sm:$0xff]
      %v303 = vld [vmem:[%s254 + $0x8] sm:$0xff]
      %v304 = vld [vmem:[%s254 + $0x10] sm:$0xff]
      %v305 = vld [vmem:[%s254 + $0x18] sm:$0xff]
      %v306 = vld [vmem:[%s254 + $0x20] sm:$0xff]
      %v307 = vld [vmem:[%s254 + $0x28] sm:$0xff]
      %v308 = vld [vmem:[%s254 + $0x30] sm:$0xff]
      %v309 = vld [vmem:[%s254 + $0x38] sm:$0xff]
      %v310 = vld [vmem:[%s254 + $0x40] sm:$0xff]
      %v311 = vld [vmem:[%s254 + $0x48] sm:$0xff]
      %v312 = vld [vmem:[%s254 + $0x50] sm:$0xff]
      %v313 = vld [vmem:[%s254 + $0x58] sm:$0xff]
      %v314 = vld [vmem:[%s254 + $0x60] sm:$0xff]
      %v315 = vld [vmem:[%s254 + $0x68] sm:$0xff]
      %v316 = vld [vmem:[%s254 + $0x70] sm:$0xff]
      %v317 = vld [vmem:[%s254 + $0x78] sm:$0xff]
      %v318 = vld [vmem:[%s254 + $0x80] sm:$0xff]
      %v319 = vld [vmem:[%s254 + $0x88] sm:$0xff]
      %v320 = vld [vmem:[%s254 + $0x90] sm:$0xff]
      %v321 = vld [vmem:[%s254 + $0x98] sm:$0xff]
      %v322 = vld [vmem:[%s254 + $0xa0] sm:$0xff]
      %v323 = vld [vmem:[%s254 + $0xa8] sm:$0xff]
      %v324 = vld [vmem:[%s254 + $0xb0] sm:$0xff]
      %v325 = vld [vmem:[%s254 + $0xb8] sm:$0xff]
      %v326 = vld [vmem:[%s254 + $0xc0] sm:$0xff]
      %v327 = vld [vmem:[%s254 + $0xc8] sm:$0xff]
      %v328 = vld [vmem:[%s254 + $0xd0] sm:$0xff]
      %v329 = vld [vmem:[%s254 + $0xd8] sm:$0xff]
      %v330 = vld [vmem:[%s254 + $0xe0] sm:$0xff]
      %v331 = vld [vmem:[%s254 + $0xe8] sm:$0xff]
      %v332 = vld [vmem:[%s254 + $0xf0] sm:$0xff]
      %v333 = vld [vmem:[%s254 + $0xf8] sm:$0xff]
      %v335 = vlaneseq
      %v336 = vshrl.u32 %v335, 7
      %v337 = vsub.s32 0, %v336
      %v338 = vrot.slane %v298, %v337
      %v340 = vmul.f32 %v302, %v338
      %v341 = vmul.f32 %v303, %v338
      %v342 = vmul.f32 %v304, %v338
      %v343 = vmul.f32 %v305, %v338
      %v344 = vmul.f32 %v306, %v338
      %v345 = vmul.f32 %v307, %v338
      %v346 = vmul.f32 %v308, %v338
      %v347 = vmul.f32 %v309, %v338
      %v348 = vmul.f32 %v310, %v338
      %v349 = vmul.f32 %v311, %v338
      %v350 = vmul.f32 %v312, %v338
      %v351 = vmul.f32 %v313, %v338
      %v352 = vmul.f32 %v314, %v338
      %v353 = vmul.f32 %v315, %v338
      %v354 = vmul.f32 %v316, %v338
      %v355 = vmul.f32 %v317, %v338
      %v356 = vmul.f32 %v318, %v338
      %v357 = vmul.f32 %v319, %v338
      %v358 = vmul.f32 %v320, %v338
      %v359 = vmul.f32 %v321, %v338
      %v360 = vmul.f32 %v322, %v338
      %v361 = vmul.f32 %v323, %v338
      %v362 = vmul.f32 %v324, %v338
      %v363 = vmul.f32 %v325, %v338
      %v364 = vmul.f32 %v326, %v338
      %v365 = vmul.f32 %v327, %v338
      %v366 = vmul.f32 %v328, %v338
      %v367 = vmul.f32 %v329, %v338
      %v368 = vmul.f32 %v330, %v338
      %v369 = vmul.f32 %v331, %v338
      %v370 = vmul.f32 %v332, %v338
      %v371 = vmul.f32 %v333, %v338
      %v373 = vlaneseq
      %v374 = vshrl.u32 %v373, 7
      %v375 = vsub.s32 0, %v374
      %v376 = vrot.slane %v301, %v375
      %v378 = vadd.f32 %v340, %v376
      %v379 = vadd.f32 %v341, %v376
      %v380 = vadd.f32 %v342, %v376
      %v381 = vadd.f32 %v343, %v376
      %v382 = vadd.f32 %v344, %v376
      %v383 = vadd.f32 %v345, %v376
      %v384 = vadd.f32 %v346, %v376
      %v385 = vadd.f32 %v347, %v376
      %v386 = vadd.f32 %v348, %v376
      %v387 = vadd.f32 %v349, %v376
      %v388 = vadd.f32 %v350, %v376
      %v389 = vadd.f32 %v351, %v376
      %v390 = vadd.f32 %v352, %v376
      %v391 = vadd.f32 %v353, %v376
      %v392 = vadd.f32 %v354, %v376
      %v393 = vadd.f32 %v355, %v376
      %v394 = vadd.f32 %v356, %v376
      %v395 = vadd.f32 %v357, %v376
      %v396 = vadd.f32 %v358, %v376
      %v397 = vadd.f32 %v359, %v376
      %v398 = vadd.f32 %v360, %v376
      %v399 = vadd.f32 %v361, %v376
      %v400 = vadd.f32 %v362, %v376
      %v401 = vadd.f32 %v363, %v376
      %v402 = vadd.f32 %v364, %v376
      %v403 = vadd.f32 %v365, %v376
      %v404 = vadd.f32 %v366, %v376
      %v405 = vadd.f32 %v367, %v376
      %v406 = vadd.f32 %v368, %v376
      %v407 = vadd.f32 %v369, %v376
      %v408 = vadd.f32 %v370, %v376
      %v409 = vadd.f32 %v371, %v376
      %v410 = vmax.f32 %v378, 0.0
      %v411 = vmax.f32 %v379, 0.0
      %v412 = vmax.f32 %v380, 0.0
      %v413 = vmax.f32 %v381, 0.0
      %v414 = vmax.f32 %v382, 0.0
      %v415 = vmax.f32 %v383, 0.0
      %v416 = vmax.f32 %v384, 0.0
      %v417 = vmax.f32 %v385, 0.0
      %v418 = vmax.f32 %v386, 0.0
      %v419 = vmax.f32 %v387, 0.0
      %v420 = vmax.f32 %v388, 0.0
      %v421 = vmax.f32 %v389, 0.0
      %v422 = vmax.f32 %v390, 0.0
      %v423 = vmax.f32 %v391, 0.0
      %v424 = vmax.f32 %v392, 0.0
      %v425 = vmax.f32 %v393, 0.0
      %v426 = vmax.f32 %v394, 0.0
      %v427 = vmax.f32 %v395, 0.0
      %v428 = vmax.f32 %v396, 0.0
      %v429 = vmax.f32 %v397, 0.0
      %v430 = vmax.f32 %v398, 0.0
      %v431 = vmax.f32 %v399, 0.0
      %v432 = vmax.f32 %v400, 0.0
      %v433 = vmax.f32 %v401, 0.0
      %v434 = vmax.f32 %v402, 0.0
      %v435 = vmax.f32 %v403, 0.0
      %v436 = vmax.f32 %v404, 0.0
      %v437 = vmax.f32 %v405, 0.0
      %v438 = vmax.f32 %v406, 0.0
      %v439 = vmax.f32 %v407, 0.0
      %v440 = vmax.f32 %v408, 0.0
      %v441 = vmax.f32 %v409, 0.0
      %v442 = vlaneseq
      %v443 = vshrl.u32 %v442, 7
      %v444 = vadd.s32 %v443, 8
      %v445 = vadd.s32 %v443, 16
      %v446 = vadd.s32 %v443, 24
      %v447 = vadd.s32 %v443, 32
      %v448 = vadd.s32 %v443, 40
      %v449 = vadd.s32 %v443, 48
      %v450 = vadd.s32 %v443, 56
      %v451 = vadd.s32 %v443, 64
      %v452 = vadd.s32 %v443, 72
      %v453 = vadd.s32 %v443, 80
      %v454 = vadd.s32 %v443, 88
      %v455 = vadd.s32 %v443, 96
      %v456 = vadd.s32 %v443, 104
      %v457 = vadd.s32 %v443, 112
      %v458 = vadd.s32 %v443, 120
      %v459 = vadd.s32 %v443, 128
      %v460 = vadd.s32 %v443, 136
      %v461 = vadd.s32 %v443, 144
      %v462 = vadd.s32 %v443, 152
      %v463 = vadd.s32 %v443, 160
      %v464 = vadd.s32 %v443, 168
      %v465 = vadd.s32 %v443, 176
      %v466 = vadd.s32 %v443, 184
      %v467 = vadd.s32 %v443, 192
      %v468 = vadd.s32 %v443, 200
      %v469 = vadd.s32 %v443, 208
      %v470 = vadd.s32 %v443, 216
      %v471 = vadd.s32 %v443, 224
      %v472 = vadd.s32 %v443, 232
      %v473 = vadd.s32 %v443, 240
      %v474 = vadd.s32 %v443, 248
      %vm475 = vcmp.lt.s32.totalorder %v443, 0
      %v476 = vsub.s32 0, %v443
      %v477 = vsel %vm475, %v476, %v443
      %v478 = vshrl.u32 %v477, 4
      %v479 = vand.u32 %v477, 15
      %v480 = vsub.s32 0, %v479
      %v481 = vsel %vm475, %v480, %v479
      %vm482 = vcmp.lt.s32.totalorder %v444, 0
      %v483 = vsub.s32 0, %v444
      %v484 = vsel %vm482, %v483, %v444
      %v485 = vshrl.u32 %v484, 4
      %v486 = vand.u32 %v484, 15
      %v487 = vsub.s32 0, %v486
      %v488 = vsel %vm482, %v487, %v486
      %vm489 = vcmp.lt.s32.totalorder %v445, 0
      %v490 = vsub.s32 0, %v445
      %v491 = vsel %vm489, %v490, %v445
      %v492 = vshrl.u32 %v491, 4
      %v493 = vand.u32 %v491, 15
      %v494 = vsub.s32 0, %v493
      %v495 = vsel %vm489, %v494, %v493
      %vm496 = vcmp.lt.s32.totalorder %v446, 0
      %v497 = vsub.s32 0, %v446
      %v498 = vsel %vm496, %v497, %v446
      %v499 = vshrl.u32 %v498, 4
      %v500 = vand.u32 %v498, 15
      %v501 = vsub.s32 0, %v500
      %v502 = vsel %vm496, %v501, %v500
      %vm503 = vcmp.lt.s32.totalorder %v447, 0
      %v504 = vsub.s32 0, %v447
      %v505 = vsel %vm503, %v504, %v447
      %v506 = vshrl.u32 %v505, 4
      %v507 = vand.u32 %v505, 15
      %v508 = vsub.s32 0, %v507
      %v509 = vsel %vm503, %v508, %v507
      %vm510 = vcmp.lt.s32.totalorder %v448, 0
      %v511 = vsub.s32 0, %v448
      %v512 = vsel %vm510, %v511, %v448
      %v513 = vshrl.u32 %v512, 4
      %v514 = vand.u32 %v512, 15
      %v515 = vsub.s32 0, %v514
      %v516 = vsel %vm510, %v515, %v514
      %vm517 = vcmp.lt.s32.totalorder %v449, 0
      %v518 = vsub.s32 0, %v449
      %v519 = vsel %vm517, %v518, %v449
      %v520 = vshrl.u32 %v519, 4
      %v521 = vand.u32 %v519, 15
      %v522 = vsub.s32 0, %v521
      %v523 = vsel %vm517, %v522, %v521
      %vm524 = vcmp.lt.s32.totalorder %v450, 0
      %v525 = vsub.s32 0, %v450
      %v526 = vsel %vm524, %v525, %v450
      %v527 = vshrl.u32 %v526, 4
      %v528 = vand.u32 %v526, 15
      %v529 = vsub.s32 0, %v528
      %v530 = vsel %vm524, %v529, %v528
      %vm531 = vcmp.lt.s32.totalorder %v451, 0
      %v532 = vsub.s32 0, %v451
      %v533 = vsel %vm531, %v532, %v451
      %v534 = vshrl.u32 %v533, 4
      %v535 = vand.u32 %v533, 15
      %v536 = vsub.s32 0, %v535
      %v537 = vsel %vm531, %v536, %v535
      %vm538 = vcmp.lt.s32.totalorder %v452, 0
      %v539 = vsub.s32 0, %v452
      %v540 = vsel %vm538, %v539, %v452
      %v541 = vshrl.u32 %v540, 4
      %v542 = vand.u32 %v540, 15
      %v543 = vsub.s32 0, %v542
      %v544 = vsel %vm538, %v543, %v542
      %vm545 = vcmp.lt.s32.totalorder %v453, 0
      %v546 = vsub.s32 0, %v453
      %v547 = vsel %vm545, %v546, %v453
      %v548 = vshrl.u32 %v547, 4
      %v549 = vand.u32 %v547, 15
      %v550 = vsub.s32 0, %v549
      %v551 = vsel %vm545, %v550, %v549
      %vm552 = vcmp.lt.s32.totalorder %v454, 0
      %v553 = vsub.s32 0, %v454
      %v554 = vsel %vm552, %v553, %v454
      %v555 = vshrl.u32 %v554, 4
      %v556 = vand.u32 %v554, 15
      %v557 = vsub.s32 0, %v556
      %v558 = vsel %vm552, %v557, %v556
      %vm559 = vcmp.lt.s32.totalorder %v455, 0
      %v560 = vsub.s32 0, %v455
      %v561 = vsel %vm559, %v560, %v455
      %v562 = vshrl.u32 %v561, 4
      %v563 = vand.u32 %v561, 15
      %v564 = vsub.s32 0, %v563
      %v565 = vsel %vm559, %v564, %v563
      %vm566 = vcmp.lt.s32.totalorder %v456, 0
      %v567 = vsub.s32 0, %v456
      %v568 = vsel %vm566, %v567, %v456
      %v569 = vshrl.u32 %v568, 4
      %v570 = vand.u32 %v568, 15
      %v571 = vsub.s32 0, %v570
      %v572 = vsel %vm566, %v571, %v570
      %vm573 = vcmp.lt.s32.totalorder %v457, 0
      %v574 = vsub.s32 0, %v457
      %v575 = vsel %vm573, %v574, %v457
      %v576 = vshrl.u32 %v575, 4
      %v577 = vand.u32 %v575, 15
      %v578 = vsub.s32 0, %v577
      %v579 = vsel %vm573, %v578, %v577
      %vm580 = vcmp.lt.s32.totalorder %v458, 0
      %v581 = vsub.s32 0, %v458
      %v582 = vsel %vm580, %v581, %v458
      %v583 = vshrl.u32 %v582, 4
      %v584 = vand.u32 %v582, 15
      %v585 = vsub.s32 0, %v584
      %v586 = vsel %vm580, %v585, %v584
      %vm587 = vcmp.lt.s32.totalorder %v459, 0
      %v588 = vsub.s32 0, %v459
      %v589 = vsel %vm587, %v588, %v459
      %v590 = vshrl.u32 %v589, 4
      %v591 = vand.u32 %v589, 15
      %v592 = vsub.s32 0, %v591
      %v593 = vsel %vm587, %v592, %v591
      %vm594 = vcmp.lt.s32.totalorder %v460, 0
      %v595 = vsub.s32 0, %v460
      %v596 = vsel %vm594, %v595, %v460
      %v597 = vshrl.u32 %v596, 4
      %v598 = vand.u32 %v596, 15
      %v599 = vsub.s32 0, %v598
      %v600 = vsel %vm594, %v599, %v598
      %vm601 = vcmp.lt.s32.totalorder %v461, 0
      %v602 = vsub.s32 0, %v461
      %v603 = vsel %vm601, %v602, %v461
      %v604 = vshrl.u32 %v603, 4
      %v605 = vand.u32 %v603, 15
      %v606 = vsub.s32 0, %v605
      %v607 = vsel %vm601, %v606, %v605
      %vm608 = vcmp.lt.s32.totalorder %v462, 0
      %v609 = vsub.s32 0, %v462
      %v610 = vsel %vm608, %v609, %v462
      %v611 = vshrl.u32 %v610, 4
      %v612 = vand.u32 %v610, 15
      %v613 = vsub.s32 0, %v612
      %v614 = vsel %vm608, %v613, %v612
      %vm615 = vcmp.lt.s32.totalorder %v463, 0
      %v616 = vsub.s32 0, %v463
      %v617 = vsel %vm615, %v616, %v463
      %v618 = vshrl.u32 %v617, 4
      %v619 = vand.u32 %v617, 15
      %v620 = vsub.s32 0, %v619
      %v621 = vsel %vm615, %v620, %v619
      %vm622 = vcmp.lt.s32.totalorder %v464, 0
      %v623 = vsub.s32 0, %v464
      %v624 = vsel %vm622, %v623, %v464
      %v625 = vshrl.u32 %v624, 4
      %v626 = vand.u32 %v624, 15
      %v627 = vsub.s32 0, %v626
      %v628 = vsel %vm622, %v627, %v626
      %vm629 = vcmp.lt.s32.totalorder %v465, 0
      %v630 = vsub.s32 0, %v465
      %v631 = vsel %vm629, %v630, %v465
      %v632 = vshrl.u32 %v631, 4
      %v633 = vand.u32 %v631, 15
      %v634 = vsub.s32 0, %v633
      %v635 = vsel %vm629, %v634, %v633
      %vm636 = vcmp.lt.s32.totalorder %v466, 0
      %v637 = vsub.s32 0, %v466
      %v638 = vsel %vm636, %v637, %v466
      %v639 = vshrl.u32 %v638, 4
      %v640 = vand.u32 %v638, 15
      %v641 = vsub.s32 0, %v640
      %v642 = vsel %vm636, %v641, %v640
      %vm643 = vcmp.lt.s32.totalorder %v467, 0
      %v644 = vsub.s32 0, %v467
      %v645 = vsel %vm643, %v644, %v467
      %v646 = vshrl.u32 %v645, 4
      %v647 = vand.u32 %v645, 15
      %v648 = vsub.s32 0, %v647
      %v649 = vsel %vm643, %v648, %v647
      %vm650 = vcmp.lt.s32.totalorder %v468, 0
      %v651 = vsub.s32 0, %v468
      %v652 = vsel %vm650, %v651, %v468
      %v653 = vshrl.u32 %v652, 4
      %v654 = vand.u32 %v652, 15
      %v655 = vsub.s32 0, %v654
      %v656 = vsel %vm650, %v655, %v654
      %vm657 = vcmp.lt.s32.totalorder %v469, 0
      %v658 = vsub.s32 0, %v469
      %v659 = vsel %vm657, %v658, %v469
      %v660 = vshrl.u32 %v659, 4
      %v661 = vand.u32 %v659, 15
      %v662 = vsub.s32 0, %v661
      %v663 = vsel %vm657, %v662, %v661
      %vm664 = vcmp.lt.s32.totalorder %v470, 0
      %v665 = vsub.s32 0, %v470
      %v666 = vsel %vm664, %v665, %v470
      %v667 = vshrl.u32 %v666, 4
      %v668 = vand.u32 %v666, 15
      %v669 = vsub.s32 0, %v668
      %v670 = vsel %vm664, %v669, %v668
      %vm671 = vcmp.lt.s32.totalorder %v471, 0
      %v672 = vsub.s32 0, %v471
      %v673 = vsel %vm671, %v672, %v471
      %v674 = vshrl.u32 %v673, 4
      %v675 = vand.u32 %v673, 15
      %v676 = vsub.s32 0, %v675
      %v677 = vsel %vm671, %v676, %v675
      %vm678 = vcmp.lt.s32.totalorder %v472, 0
      %v679 = vsub.s32 0, %v472
      %v680 = vsel %vm678, %v679, %v472
      %v681 = vshrl.u32 %v680, 4
      %v682 = vand.u32 %v680, 15
      %v683 = vsub.s32 0, %v682
      %v684 = vsel %vm678, %v683, %v682
      %vm685 = vcmp.lt.s32.totalorder %v473, 0
      %v686 = vsub.s32 0, %v473
      %v687 = vsel %vm685, %v686, %v473
      %v688 = vshrl.u32 %v687, 4
      %v689 = vand.u32 %v687, 15
      %v690 = vsub.s32 0, %v689
      %v691 = vsel %vm685, %v690, %v689
      %vm692 = vcmp.lt.s32.totalorder %v474, 0
      %v693 = vsub.s32 0, %v474
      %v694 = vsel %vm692, %v693, %v474
      %v695 = vshrl.u32 %v694, 4
      %v696 = vand.u32 %v694, 15
      %v697 = vsub.s32 0, %v696
      %v698 = vsel %vm692, %v697, %v696
      %vm699 = vcmp.ne.s32.totalorder %v481, 0
      %vm700 = vcmp.ne.s32.totalorder %v488, 0
      %vm701 = vcmp.ne.s32.totalorder %v495, 0
      %vm702 = vcmp.ne.s32.totalorder %v502, 0
      %vm703 = vcmp.ne.s32.totalorder %v509, 0
      %vm704 = vcmp.ne.s32.totalorder %v516, 0
      %vm705 = vcmp.ne.s32.totalorder %v523, 0
      %vm706 = vcmp.ne.s32.totalorder %v530, 0
      %vm707 = vcmp.ne.s32.totalorder %v537, 0
      %vm708 = vcmp.ne.s32.totalorder %v544, 0
      %vm709 = vcmp.ne.s32.totalorder %v551, 0
      %vm710 = vcmp.ne.s32.totalorder %v558, 0
      %vm711 = vcmp.ne.s32.totalorder %v565, 0
      %vm712 = vcmp.ne.s32.totalorder %v572, 0
      %vm713 = vcmp.ne.s32.totalorder %v579, 0
      %vm714 = vcmp.ne.s32.totalorder %v586, 0
      %vm715 = vcmp.ne.s32.totalorder %v593, 0
      %vm716 = vcmp.ne.s32.totalorder %v600, 0
      %vm717 = vcmp.ne.s32.totalorder %v607, 0
      %vm718 = vcmp.ne.s32.totalorder %v614, 0
      %vm719 = vcmp.ne.s32.totalorder %v621, 0
      %vm720 = vcmp.ne.s32.totalorder %v628, 0
      %vm721 = vcmp.ne.s32.totalorder %v635, 0
      %vm722 = vcmp.ne.s32.totalorder %v642, 0
      %vm723 = vcmp.ne.s32.totalorder %v649, 0
      %vm724 = vcmp.ne.s32.totalorder %v656, 0
      %vm725 = vcmp.ne.s32.totalorder %v663, 0
      %vm726 = vcmp.ne.s32.totalorder %v670, 0
      %vm727 = vcmp.ne.s32.totalorder %v677, 0
      %vm728 = vcmp.ne.s32.totalorder %v684, 0
      %vm729 = vcmp.ne.s32.totalorder %v691, 0
      %vm730 = vcmp.ne.s32.totalorder %v698, 0
      %vm731 = vcmp.lt.s32.totalorder %v481, 0
      %vm732 = vcmp.lt.s32.totalorder %v488, 0
      %vm733 = vcmp.lt.s32.totalorder %v495, 0
      %vm734 = vcmp.lt.s32.totalorder %v502, 0
      %vm735 = vcmp.lt.s32.totalorder %v509, 0
      %vm736 = vcmp.lt.s32.totalorder %v516, 0
      %vm737 = vcmp.lt.s32.totalorder %v523, 0
      %vm738 = vcmp.lt.s32.totalorder %v530, 0
      %vm739 = vcmp.lt.s32.totalorder %v537, 0
      %vm740 = vcmp.lt.s32.totalorder %v544, 0
      %vm741 = vcmp.lt.s32.totalorder %v551, 0
      %vm742 = vcmp.lt.s32.totalorder %v558, 0
      %vm743 = vcmp.lt.s32.totalorder %v565, 0
      %vm744 = vcmp.lt.s32.totalorder %v572, 0
      %vm745 = vcmp.lt.s32.totalorder %v579, 0
      %vm746 = vcmp.lt.s32.totalorder %v586, 0
      %vm747 = vcmp.lt.s32.totalorder %v593, 0
      %vm748 = vcmp.lt.s32.totalorder %v600, 0
      %vm749 = vcmp.lt.s32.totalorder %v607, 0
      %vm750 = vcmp.lt.s32.totalorder %v614, 0
      %vm751 = vcmp.lt.s32.totalorder %v621, 0
      %vm752 = vcmp.lt.s32.totalorder %v628, 0
      %vm753 = vcmp.lt.s32.totalorder %v635, 0
      %vm754 = vcmp.lt.s32.totalorder %v642, 0
      %vm755 = vcmp.lt.s32.totalorder %v649, 0
      %vm756 = vcmp.lt.s32.totalorder %v656, 0
      %vm757 = vcmp.lt.s32.totalorder %v663, 0
      %vm758 = vcmp.lt.s32.totalorder %v670, 0
      %vm759 = vcmp.lt.s32.totalorder %v677, 0
      %vm760 = vcmp.lt.s32.totalorder %v684, 0
      %vm761 = vcmp.lt.s32.totalorder %v691, 0
      %vm762 = vcmp.lt.s32.totalorder %v698, 0
      %vm763 = vmand %vm731, %vm699
      %vm764 = vmand %vm732, %vm700
      %vm765 = vmand %vm733, %vm701
      %vm766 = vmand %vm734, %vm702
      %vm767 = vmand %vm735, %vm703
      %vm768 = vmand %vm736, %vm704
      %vm769 = vmand %vm737, %vm705
      %vm770 = vmand %vm738, %vm706
      %vm771 = vmand %vm739, %vm707
      %vm772 = vmand %vm740, %vm708
      %vm773 = vmand %vm741, %vm709
      %vm774 = vmand %vm742, %vm710
      %vm775 = vmand %vm743, %vm711
      %vm776 = vmand %vm744, %vm712
      %vm777 = vmand %vm745, %vm713
      %vm778 = vmand %vm746, %vm714
      %vm779 = vmand %vm747, %vm715
      %vm780 = vmand %vm748, %vm716
      %vm781 = vmand %vm749, %vm717
      %vm782 = vmand %vm750, %vm718
      %vm783 = vmand %vm751, %vm719
      %vm784 = vmand %vm752, %vm720
      %vm785 = vmand %vm753, %vm721
      %vm786 = vmand %vm754, %vm722
      %vm787 = vmand %vm755, %vm723
      %vm788 = vmand %vm756, %vm724
      %vm789 = vmand %vm757, %vm725
      %vm790 = vmand %vm758, %vm726
      %vm791 = vmand %vm759, %vm727
      %vm792 = vmand %vm760, %vm728
      %vm793 = vmand %vm761, %vm729
      %vm794 = vmand %vm762, %vm730
      %v795 = vadd.s32 %v481, 16
      %v796 = vadd.s32 %v488, 16
      %v797 = vadd.s32 %v495, 16
      %v798 = vadd.s32 %v502, 16
      %v799 = vadd.s32 %v509, 16
      %v800 = vadd.s32 %v516, 16
      %v801 = vadd.s32 %v523, 16
      %v802 = vadd.s32 %v530, 16
      %v803 = vadd.s32 %v537, 16
      %v804 = vadd.s32 %v544, 16
      %v805 = vadd.s32 %v551, 16
      %v806 = vadd.s32 %v558, 16
      %v807 = vadd.s32 %v565, 16
      %v808 = vadd.s32 %v572, 16
      %v809 = vadd.s32 %v579, 16
      %v810 = vadd.s32 %v586, 16
      %v811 = vadd.s32 %v593, 16
      %v812 = vadd.s32 %v600, 16
      %v813 = vadd.s32 %v607, 16
      %v814 = vadd.s32 %v614, 16
      %v815 = vadd.s32 %v621, 16
      %v816 = vadd.s32 %v628, 16
      %v817 = vadd.s32 %v635, 16
      %v818 = vadd.s32 %v642, 16
      %v819 = vadd.s32 %v649, 16
      %v820 = vadd.s32 %v656, 16
      %v821 = vadd.s32 %v663, 16
      %v822 = vadd.s32 %v670, 16
      %v823 = vadd.s32 %v677, 16
      %v824 = vadd.s32 %v684, 16
      %v825 = vadd.s32 %v691, 16
      %v826 = vadd.s32 %v698, 16
      %v827 = vsel %vm763, %v795, %v481
      %v828 = vsel %vm764, %v796, %v488
      %v829 = vsel %vm765, %v797, %v495
      %v830 = vsel %vm766, %v798, %v502
      %v831 = vsel %vm767, %v799, %v509
      %v832 = vsel %vm768, %v800, %v516
      %v833 = vsel %vm769, %v801, %v523
      %v834 = vsel %vm770, %v802, %v530
      %v835 = vsel %vm771, %v803, %v537
      %v836 = vsel %vm772, %v804, %v544
      %v837 = vsel %vm773, %v805, %v551
      %v838 = vsel %vm774, %v806, %v558
      %v839 = vsel %vm775, %v807, %v565
      %v840 = vsel %vm776, %v808, %v572
      %v841 = vsel %vm777, %v809, %v579
      %v842 = vsel %vm778, %v810, %v586
      %v843 = vsel %vm779, %v811, %v593
      %v844 = vsel %vm780, %v812, %v600
      %v845 = vsel %vm781, %v813, %v607
      %v846 = vsel %vm782, %v814, %v614
      %v847 = vsel %vm783, %v815, %v621
      %v848 = vsel %vm784, %v816, %v628
      %v849 = vsel %vm785, %v817, %v635
      %v850 = vsel %vm786, %v818, %v642
      %v851 = vsel %vm787, %v819, %v649
      %v852 = vsel %vm788, %v820, %v656
      %v853 = vsel %vm789, %v821, %v663
      %v854 = vsel %vm790, %v822, %v670
      %v855 = vsel %vm791, %v823, %v677
      %v856 = vsel %vm792, %v824, %v684
      %v857 = vsel %vm793, %v825, %v691
      %v858 = vsel %vm794, %v826, %v698
      %vm859 = vcmp.eq.s32.totalorder %v827, 0
      %vm860 = vcmp.eq.s32.totalorder %v828, 0
      %vm861 = vcmp.eq.s32.totalorder %v829, 0
      %vm862 = vcmp.eq.s32.totalorder %v830, 0
      %vm863 = vcmp.eq.s32.totalorder %v831, 0
      %vm864 = vcmp.eq.s32.totalorder %v832, 0
      %vm865 = vcmp.eq.s32.totalorder %v833, 0
      %vm866 = vcmp.eq.s32.totalorder %v834, 0
      %vm867 = vcmp.eq.s32.totalorder %v835, 0
      %vm868 = vcmp.eq.s32.totalorder %v836, 0
      %vm869 = vcmp.eq.s32.totalorder %v837, 0
      %vm870 = vcmp.eq.s32.totalorder %v838, 0
      %vm871 = vcmp.eq.s32.totalorder %v839, 0
      %vm872 = vcmp.eq.s32.totalorder %v840, 0
      %vm873 = vcmp.eq.s32.totalorder %v841, 0
      %vm874 = vcmp.eq.s32.totalorder %v842, 0
      %vm875 = vcmp.eq.s32.totalorder %v843, 0
      %vm876 = vcmp.eq.s32.totalorder %v844, 0
      %vm877 = vcmp.eq.s32.totalorder %v845, 0
      %vm878 = vcmp.eq.s32.totalorder %v846, 0
      %vm879 = vcmp.eq.s32.totalorder %v847, 0
      %vm880 = vcmp.eq.s32.totalorder %v848, 0
      %vm881 = vcmp.eq.s32.totalorder %v849, 0
      %vm882 = vcmp.eq.s32.totalorder %v850, 0
      %vm883 = vcmp.eq.s32.totalorder %v851, 0
      %vm884 = vcmp.eq.s32.totalorder %v852, 0
      %vm885 = vcmp.eq.s32.totalorder %v853, 0
      %vm886 = vcmp.eq.s32.totalorder %v854, 0
      %vm887 = vcmp.eq.s32.totalorder %v855, 0
      %vm888 = vcmp.eq.s32.totalorder %v856, 0
      %vm889 = vcmp.eq.s32.totalorder %v857, 0
      %vm890 = vcmp.eq.s32.totalorder %v858, 0
      %vm923 = vcmask 1040384
      %v924 = vrot.slane %v410, 7
      %v925 = vrot.slane %v411, 7
      %v926 = vsel %vm923, %v924, %v925
      %v927 = vrot.slane %v412, 7
      %v928 = vsel %vm923, %v925, %v927
      %v929 = vrot.slane %v413, 7
      %v930 = vsel %vm923, %v927, %v929
      %v931 = vrot.slane %v414, 7
      %v932 = vsel %vm923, %v929, %v931
      %v933 = vrot.slane %v415, 7
      %v934 = vsel %vm923, %v931, %v933
      %v935 = vrot.slane %v416, 7
      %v936 = vsel %vm923, %v933, %v935
      %v937 = vrot.slane %v417, 7
      %v938 = vsel %vm923, %v935, %v937
      %v939 = vrot.slane %v418, 7
      %v940 = vsel %vm923, %v937, %v939
      %v941 = vrot.slane %v419, 7
      %v942 = vsel %vm923, %v939, %v941
      %v943 = vrot.slane %v420, 7
      %v944 = vsel %vm923, %v941, %v943
      %v945 = vrot.slane %v421, 7
      %v946 = vsel %vm923, %v943, %v945
      %v947 = vrot.slane %v422, 7
      %v948 = vsel %vm923, %v945, %v947
      %v949 = vrot.slane %v423, 7
      %v950 = vsel %vm923, %v947, %v949
      %v951 = vrot.slane %v424, 7
      %v952 = vsel %vm923, %v949, %v951
      %v953 = vrot.slane %v425, 7
      %v954 = vsel %vm923, %v951, %v953
      %v955 = vrot.slane %v426, 7
      %v956 = vsel %vm923, %v953, %v955
      %v957 = vrot.slane %v427, 7
      %v958 = vsel %vm923, %v955, %v957
      %v959 = vrot.slane %v428, 7
      %v960 = vsel %vm923, %v957, %v959
      %v961 = vrot.slane %v429, 7
      %v962 = vsel %vm923, %v959, %v961
      %v963 = vrot.slane %v430, 7
      %v964 = vsel %vm923, %v961, %v963
      %v965 = vrot.slane %v431, 7
      %v966 = vsel %vm923, %v963, %v965
      %v967 = vrot.slane %v432, 7
      %v968 = vsel %vm923, %v965, %v967
      %v969 = vrot.slane %v433, 7
      %v970 = vsel %vm923, %v967, %v969
      %v971 = vrot.slane %v434, 7
      %v972 = vsel %vm923, %v969, %v971
      %v973 = vrot.slane %v435, 7
      %v974 = vsel %vm923, %v971, %v973
      %v975 = vrot.slane %v436, 7
      %v976 = vsel %vm923, %v973, %v975
      %v977 = vrot.slane %v437, 7
      %v978 = vsel %vm923, %v975, %v977
      %v979 = vrot.slane %v438, 7
      %v980 = vsel %vm923, %v977, %v979
      %v981 = vrot.slane %v439, 7
      %v982 = vsel %vm923, %v979, %v981
      %v983 = vrot.slane %v440, 7
      %v984 = vsel %vm923, %v981, %v983
      %v985 = vrot.slane %v441, 7
      %v986 = vsel %vm923, %v983, %v985
      %v1019 = vsel %vm923, 0.0, %v924
      %v1020 = vsel %vm859, 1, 0
      %v1021 = vsel %vm860, 1, 0
      %v1022 = vsel %vm861, 1, 0
      %v1023 = vsel %vm862, 1, 0
      %v1024 = vsel %vm863, 1, 0
      %v1025 = vsel %vm864, 1, 0
      %v1026 = vsel %vm865, 1, 0
      %v1027 = vsel %vm866, 1, 0
      %v1028 = vsel %vm867, 1, 0
      %v1029 = vsel %vm868, 1, 0
      %v1030 = vsel %vm869, 1, 0
      %v1031 = vsel %vm870, 1, 0
      %v1032 = vsel %vm871, 1, 0
      %v1033 = vsel %vm872, 1, 0
      %v1034 = vsel %vm873, 1, 0
      %v1035 = vsel %vm874, 1, 0
      %v1036 = vsel %vm875, 1, 0
      %v1037 = vsel %vm876, 1, 0
      %v1038 = vsel %vm877, 1, 0
      %v1039 = vsel %vm878, 1, 0
      %v1040 = vsel %vm879, 1, 0
      %v1041 = vsel %vm880, 1, 0
      %v1042 = vsel %vm881, 1, 0
      %v1043 = vsel %vm882, 1, 0
      %v1044 = vsel %vm883, 1, 0
      %v1045 = vsel %vm884, 1, 0
      %v1046 = vsel %vm885, 1, 0
      %v1047 = vsel %vm886, 1, 0
      %v1048 = vsel %vm887, 1, 0
      %v1049 = vsel %vm888, 1, 0
      %v1050 = vsel %vm889, 1, 0
      %v1051 = vsel %vm890, 1, 0
      %vm1052 = vcmp.eq.s32.totalorder %v1020, 1
      %vm1053 = vcmp.eq.s32.totalorder %v1021, 1
      %vm1054 = vcmp.eq.s32.totalorder %v1022, 1
      %vm1055 = vcmp.eq.s32.totalorder %v1023, 1
      %vm1056 = vcmp.eq.s32.totalorder %v1024, 1
      %vm1057 = vcmp.eq.s32.totalorder %v1025, 1
      %vm1058 = vcmp.eq.s32.totalorder %v1026, 1
      %vm1059 = vcmp.eq.s32.totalorder %v1027, 1
      %vm1060 = vcmp.eq.s32.totalorder %v1028, 1
      %vm1061 = vcmp.eq.s32.totalorder %v1029, 1
      %vm1062 = vcmp.eq.s32.totalorder %v1030, 1
      %vm1063 = vcmp.eq.s32.totalorder %v1031, 1
      %vm1064 = vcmp.eq.s32.totalorder %v1032, 1
      %vm1065 = vcmp.eq.s32.totalorder %v1033, 1
      %vm1066 = vcmp.eq.s32.totalorder %v1034, 1
      %vm1067 = vcmp.eq.s32.totalorder %v1035, 1
      %vm1068 = vcmp.eq.s32.totalorder %v1036, 1
      %vm1069 = vcmp.eq.s32.totalorder %v1037, 1
      %vm1070 = vcmp.eq.s32.totalorder %v1038, 1
      %vm1071 = vcmp.eq.s32.totalorder %v1039, 1
      %vm1072 = vcmp.eq.s32.totalorder %v1040, 1
      %vm1073 = vcmp.eq.s32.totalorder %v1041, 1
      %vm1074 = vcmp.eq.s32.totalorder %v1042, 1
      %vm1075 = vcmp.eq.s32.totalorder %v1043, 1
      %vm1076 = vcmp.eq.s32.totalorder %v1044, 1
      %vm1077 = vcmp.eq.s32.totalorder %v1045, 1
      %vm1078 = vcmp.eq.s32.totalorder %v1046, 1
      %vm1079 = vcmp.eq.s32.totalorder %v1047, 1
      %vm1080 = vcmp.eq.s32.totalorder %v1048, 1
      %vm1081 = vcmp.eq.s32.totalorder %v1049, 1
      %vm1082 = vcmp.eq.s32.totalorder %v1050, 1
      %vm1083 = vcmp.eq.s32.totalorder %v1051, 1
      %v1084 = vsel %vm1052, 0.0, %v1019
      %v1085 = vsel %vm1053, 0.0, %v926
      %v1086 = vsel %vm1054, 0.0, %v928
      %v1087 = vsel %vm1055, 0.0, %v930
      %v1088 = vsel %vm1056, 0.0, %v932
      %v1089 = vsel %vm1057, 0.0, %v934
      %v1090 = vsel %vm1058, 0.0, %v936
      %v1091 = vsel %vm1059, 0.0, %v938
      %v1092 = vsel %vm1060, 0.0, %v940
      %v1093 = vsel %vm1061, 0.0, %v942
      %v1094 = vsel %vm1062, 0.0, %v944
      %v1095 = vsel %vm1063, 0.0, %v946
      %v1096 = vsel %vm1064, 0.0, %v948
      %v1097 = vsel %vm1065, 0.0, %v950
      %v1098 = vsel %vm1066, 0.0, %v952
      %v1099 = vsel %vm1067, 0.0, %v954
      %v1100 = vsel %vm1068, 0.0, %v956
      %v1101 = vsel %vm1069, 0.0, %v958
      %v1102 = vsel %vm1070, 0.0, %v960
      %v1103 = vsel %vm1071, 0.0, %v962
      %v1104 = vsel %vm1072, 0.0, %v964
      %v1105 = vsel %vm1073, 0.0, %v966
      %v1106 = vsel %vm1074, 0.0, %v968
      %v1107 = vsel %vm1075, 0.0, %v970
      %v1108 = vsel %vm1076, 0.0, %v972
      %v1109 = vsel %vm1077, 0.0, %v974
      %v1110 = vsel %vm1078, 0.0, %v976
      %v1111 = vsel %vm1079, 0.0, %v978
      %v1112 = vsel %vm1080, 0.0, %v980
      %v1113 = vsel %vm1081, 0.0, %v982
      %v1114 = vsel %vm1082, 0.0, %v984
      %v1115 = vsel %vm1083, 0.0, %v986
      %vm1116 = vcmp.eq.s32.totalorder %v827, 15
      %vm1117 = vcmp.eq.s32.totalorder %v828, 15
      %vm1118 = vcmp.eq.s32.totalorder %v829, 15
      %vm1119 = vcmp.eq.s32.totalorder %v830, 15
      %vm1120 = vcmp.eq.s32.totalorder %v831, 15
      %vm1121 = vcmp.eq.s32.totalorder %v832, 15
      %vm1122 = vcmp.eq.s32.totalorder %v833, 15
      %vm1123 = vcmp.eq.s32.totalorder %v834, 15
      %vm1124 = vcmp.eq.s32.totalorder %v835, 15
      %vm1125 = vcmp.eq.s32.totalorder %v836, 15
      %vm1126 = vcmp.eq.s32.totalorder %v837, 15
      %vm1127 = vcmp.eq.s32.totalorder %v838, 15
      %vm1128 = vcmp.eq.s32.totalorder %v839, 15
      %vm1129 = vcmp.eq.s32.totalorder %v840, 15
      %vm1130 = vcmp.eq.s32.totalorder %v841, 15
      %vm1131 = vcmp.eq.s32.totalorder %v842, 15
      %vm1132 = vcmp.eq.s32.totalorder %v843, 15
      %vm1133 = vcmp.eq.s32.totalorder %v844, 15
      %vm1134 = vcmp.eq.s32.totalorder %v845, 15
      %vm1135 = vcmp.eq.s32.totalorder %v846, 15
      %vm1136 = vcmp.eq.s32.totalorder %v847, 15
      %vm1137 = vcmp.eq.s32.totalorder %v848, 15
      %vm1138 = vcmp.eq.s32.totalorder %v849, 15
      %vm1139 = vcmp.eq.s32.totalorder %v850, 15
      %vm1140 = vcmp.eq.s32.totalorder %v851, 15
      %vm1141 = vcmp.eq.s32.totalorder %v852, 15
      %vm1142 = vcmp.eq.s32.totalorder %v853, 15
      %vm1143 = vcmp.eq.s32.totalorder %v854, 15
      %vm1144 = vcmp.eq.s32.totalorder %v855, 15
      %vm1145 = vcmp.eq.s32.totalorder %v856, 15
      %vm1146 = vcmp.eq.s32.totalorder %v857, 15
      %vm1147 = vcmp.eq.s32.totalorder %v858, 15
      %vm1148 = vcmask 1046528
      %v1149 = vrot.slane %v410, 1
      %v1150 = vrot.slane %v411, 1
      %v1151 = vsel %vm1148, %v1149, %v1150
      %v1152 = vrot.slane %v412, 1
      %v1153 = vsel %vm1148, %v1150, %v1152
      %v1154 = vrot.slane %v413, 1
      %v1155 = vsel %vm1148, %v1152, %v1154
      %v1156 = vrot.slane %v414, 1
      %v1157 = vsel %vm1148, %v1154, %v1156
      %v1158 = vrot.slane %v415, 1
      %v1159 = vsel %vm1148, %v1156, %v1158
      %v1160 = vrot.slane %v416, 1
      %v1161 = vsel %vm1148, %v1158, %v1160
      %v1162 = vrot.slane %v417, 1
      %v1163 = vsel %vm1148, %v1160, %v1162
      %v1164 = vrot.slane %v418, 1
      %v1165 = vsel %vm1148, %v1162, %v1164
      %v1166 = vrot.slane %v419, 1
      %v1167 = vsel %vm1148, %v1164, %v1166
      %v1168 = vrot.slane %v420, 1
      %v1169 = vsel %vm1148, %v1166, %v1168
      %v1170 = vrot.slane %v421, 1
      %v1171 = vsel %vm1148, %v1168, %v1170
      %v1172 = vrot.slane %v422, 1
      %v1173 = vsel %vm1148, %v1170, %v1172
      %v1174 = vrot.slane %v423, 1
      %v1175 = vsel %vm1148, %v1172, %v1174
      %v1176 = vrot.slane %v424, 1
      %v1177 = vsel %vm1148, %v1174, %v1176
      %v1178 = vrot.slane %v425, 1
      %v1179 = vsel %vm1148, %v1176, %v1178
      %v1180 = vrot.slane %v426, 1
      %v1181 = vsel %vm1148, %v1178, %v1180
      %v1182 = vrot.slane %v427, 1
      %v1183 = vsel %vm1148, %v1180, %v1182
      %v1184 = vrot.slane %v428, 1
      %v1185 = vsel %vm1148, %v1182, %v1184
      %v1186 = vrot.slane %v429, 1
      %v1187 = vsel %vm1148, %v1184, %v1186
      %v1188 = vrot.slane %v430, 1
      %v1189 = vsel %vm1148, %v1186, %v1188
      %v1190 = vrot.slane %v431, 1
      %v1191 = vsel %vm1148, %v1188, %v1190
      %v1192 = vrot.slane %v432, 1
      %v1193 = vsel %vm1148, %v1190, %v1192
      %v1194 = vrot.slane %v433, 1
      %v1195 = vsel %vm1148, %v1192, %v1194
      %v1196 = vrot.slane %v434, 1
      %v1197 = vsel %vm1148, %v1194, %v1196
      %v1198 = vrot.slane %v435, 1
      %v1199 = vsel %vm1148, %v1196, %v1198
      %v1200 = vrot.slane %v436, 1
      %v1201 = vsel %vm1148, %v1198, %v1200
      %v1202 = vrot.slane %v437, 1
      %v1203 = vsel %vm1148, %v1200, %v1202
      %v1204 = vrot.slane %v438, 1
      %v1205 = vsel %vm1148, %v1202, %v1204
      %v1206 = vrot.slane %v439, 1
      %v1207 = vsel %vm1148, %v1204, %v1206
      %v1208 = vrot.slane %v440, 1
      %v1209 = vsel %vm1148, %v1206, %v1208
      %v1210 = vrot.slane %v441, 1
      %v1211 = vsel %vm1148, %v1208, %v1210
      %v1244 = vsel %vm1148, %v1210, 0.0
      %v1245 = vsel %vm1116, 1, 0
      %v1246 = vsel %vm1117, 1, 0
      %v1247 = vsel %vm1118, 1, 0
      %v1248 = vsel %vm1119, 1, 0
      %v1249 = vsel %vm1120, 1, 0
      %v1250 = vsel %vm1121, 1, 0
      %v1251 = vsel %vm1122, 1, 0
      %v1252 = vsel %vm1123, 1, 0
      %v1253 = vsel %vm1124, 1, 0
      %v1254 = vsel %vm1125, 1, 0
      %v1255 = vsel %vm1126, 1, 0
      %v1256 = vsel %vm1127, 1, 0
      %v1257 = vsel %vm1128, 1, 0
      %v1258 = vsel %vm1129, 1, 0
      %v1259 = vsel %vm1130, 1, 0
      %v1260 = vsel %vm1131, 1, 0
      %v1261 = vsel %vm1132, 1, 0
      %v1262 = vsel %vm1133, 1, 0
      %v1263 = vsel %vm1134, 1, 0
      %v1264 = vsel %vm1135, 1, 0
      %v1265 = vsel %vm1136, 1, 0
      %v1266 = vsel %vm1137, 1, 0
      %v1267 = vsel %vm1138, 1, 0
      %v1268 = vsel %vm1139, 1, 0
      %v1269 = vsel %vm1140, 1, 0
      %v1270 = vsel %vm1141, 1, 0
      %v1271 = vsel %vm1142, 1, 0
      %v1272 = vsel %vm1143, 1, 0
      %v1273 = vsel %vm1144, 1, 0
      %v1274 = vsel %vm1145, 1, 0
      %v1275 = vsel %vm1146, 1, 0
      %v1276 = vsel %vm1147, 1, 0
      %vm1277 = vcmp.eq.s32.totalorder %v1245, 1
      %vm1278 = vcmp.eq.s32.totalorder %v1246, 1
      %vm1279 = vcmp.eq.s32.totalorder %v1247, 1
      %vm1280 = vcmp.eq.s32.totalorder %v1248, 1
      %vm1281 = vcmp.eq.s32.totalorder %v1249, 1
      %vm1282 = vcmp.eq.s32.totalorder %v1250, 1
      %vm1283 = vcmp.eq.s32.totalorder %v1251, 1
      %vm1284 = vcmp.eq.s32.totalorder %v1252, 1
      %vm1285 = vcmp.eq.s32.totalorder %v1253, 1
      %vm1286 = vcmp.eq.s32.totalorder %v1254, 1
      %vm1287 = vcmp.eq.s32.totalorder %v1255, 1
      %vm1288 = vcmp.eq.s32.totalorder %v1256, 1
      %vm1289 = vcmp.eq.s32.totalorder %v1257, 1
      %vm1290 = vcmp.eq.s32.totalorder %v1258, 1
      %vm1291 = vcmp.eq.s32.totalorder %v1259, 1
      %vm1292 = vcmp.eq.s32.totalorder %v1260, 1
      %vm1293 = vcmp.eq.s32.totalorder %v1261, 1
      %vm1294 = vcmp.eq.s32.totalorder %v1262, 1
      %vm1295 = vcmp.eq.s32.totalorder %v1263, 1
      %vm1296 = vcmp.eq.s32.totalorder %v1264, 1
      %vm1297 = vcmp.eq.s32.totalorder %v1265, 1
      %vm1298 = vcmp.eq.s32.totalorder %v1266, 1
      %vm1299 = vcmp.eq.s32.totalorder %v1267, 1
      %vm1300 = vcmp.eq.s32.totalorder %v1268, 1
      %vm1301 = vcmp.eq.s32.totalorder %v1269, 1
      %vm1302 = vcmp.eq.s32.totalorder %v1270, 1
      %vm1303 = vcmp.eq.s32.totalorder %v1271, 1
      %vm1304 = vcmp.eq.s32.totalorder %v1272, 1
      %vm1305 = vcmp.eq.s32.totalorder %v1273, 1
      %vm1306 = vcmp.eq.s32.totalorder %v1274, 1
      %vm1307 = vcmp.eq.s32.totalorder %v1275, 1
      %vm1308 = vcmp.eq.s32.totalorder %v1276, 1
      %v1309 = vsel %vm1277, 0.0, %v1151
      %v1310 = vsel %vm1278, 0.0, %v1153
      %v1311 = vsel %vm1279, 0.0, %v1155
      %v1312 = vsel %vm1280, 0.0, %v1157
      %v1313 = vsel %vm1281, 0.0, %v1159
      %v1314 = vsel %vm1282, 0.0, %v1161
      %v1315 = vsel %vm1283, 0.0, %v1163
      %v1316 = vsel %vm1284, 0.0, %v1165
      %v1317 = vsel %vm1285, 0.0, %v1167
      %v1318 = vsel %vm1286, 0.0, %v1169
      %v1319 = vsel %vm1287, 0.0, %v1171
      %v1320 = vsel %vm1288, 0.0, %v1173
      %v1321 = vsel %vm1289, 0.0, %v1175
      %v1322 = vsel %vm1290, 0.0, %v1177
      %v1323 = vsel %vm1291, 0.0, %v1179
      %v1324 = vsel %vm1292, 0.0, %v1181
      %v1325 = vsel %vm1293, 0.0, %v1183
      %v1326 = vsel %vm1294, 0.0, %v1185
      %v1327 = vsel %vm1295, 0.0, %v1187
      %v1328 = vsel %vm1296, 0.0, %v1189
      %v1329 = vsel %vm1297, 0.0, %v1191
      %v1330 = vsel %vm1298, 0.0, %v1193
      %v1331 = vsel %vm1299, 0.0, %v1195
      %v1332 = vsel %vm1300, 0.0, %v1197
      %v1333 = vsel %vm1301, 0.0, %v1199
      %v1334 = vsel %vm1302, 0.0, %v1201
      %v1335 = vsel %vm1303, 0.0, %v1203
      %v1336 = vsel %vm1304, 0.0, %v1205
      %v1337 = vsel %vm1305, 0.0, %v1207
      %v1338 = vsel %vm1306, 0.0, %v1209
      %v1339 = vsel %vm1307, 0.0, %v1211
      %v1340 = vsel %vm1308, 0.0, %v1244
      %1341 = vst.msk [vmem:[#allocation2 + $0x20] sm:$0xff] %vm268, %v1084
      %1342 = vst.msk [vmem:[#allocation2 + $0x30] sm:$0xff] %vm268, %v1085
      %1343 = vst.msk [vmem:[#allocation2 + $0x40] sm:$0xff] %vm268, %v1086
      %1344 = vst.msk [vmem:[#allocation2 + $0x50] sm:$0xff] %vm268, %v1087
      %1345 = vst.msk [vmem:[#allocation2 + $0x60] sm:$0xff] %vm268, %v1088
      %1346 = vst.msk [vmem:[#allocation2 + $0x70] sm:$0xff] %vm268, %v1089
      %1347 = vst.msk [vmem:[#allocation2 + $0x80] sm:$0xff] %vm268, %v1090
      %1348 = vst.msk [vmem:[#allocation2 + $0x90] sm:$0xff] %vm268, %v1091
      %1349 = vst.msk [vmem:[#allocation2 + $0xa0] sm:$0xff] %vm268, %v1092
      %1350 = vst.msk [vmem:[#allocation2 + $0xb0] sm:$0xff] %vm268, %v1093
      %1351 = vst.msk [vmem:[#allocation2 + $0xc0] sm:$0xff] %vm268, %v1094
      %1352 = vst.msk [vmem:[#allocation2 + $0xd0] sm:$0xff] %vm268, %v1095
      %1353 = vst.msk [vmem:[#allocation2 + $0xe0] sm:$0xff] %vm268, %v1096
      %1354 = vst.msk [vmem:[#allocation2 + $0xf0] sm:$0xff] %vm268, %v1097
      %1355 = vst.msk [vmem:[#allocation2 + $0x100] sm:$0xff] %vm268, %v1098
      %1356 = vst.msk [vmem:[#allocation2 + $0x110] sm:$0xff] %vm268, %v1099
      %1357 = vst.msk [vmem:[#allocation2 + $0x120] sm:$0xff] %vm268, %v1100
      %1358 = vst.msk [vmem:[#allocation2 + $0x130] sm:$0xff] %vm268, %v1101
      %1359 = vst.msk [vmem:[#allocation2 + $0x140] sm:$0xff] %vm268, %v1102
      %1360 = vst.msk [vmem:[#allocation2 + $0x150] sm:$0xff] %vm268, %v1103
      %1361 = vst.msk [vmem:[#allocation2 + $0x160] sm:$0xff] %vm268, %v1104
      %1362 = vst.msk [vmem:[#allocation2 + $0x170] sm:$0xff] %vm268, %v1105
      %1363 = vst.msk [vmem:[#allocation2 + $0x180] sm:$0xff] %vm268, %v1106
      %1364 = vst.msk [vmem:[#allocation2 + $0x190] sm:$0xff] %vm268, %v1107
      %1365 = vst.msk [vmem:[#allocation2 + $0x1a0] sm:$0xff] %vm268, %v1108
      %1366 = vst.msk [vmem:[#allocation2 + $0x1b0] sm:$0xff] %vm268, %v1109
      %1367 = vst.msk [vmem:[#allocation2 + $0x1c0] sm:$0xff] %vm268, %v1110
      %1368 = vst.msk [vmem:[#allocation2 + $0x1d0] sm:$0xff] %vm268, %v1111
      %1369 = vst.msk [vmem:[#allocation2 + $0x1e0] sm:$0xff] %vm268, %v1112
      %1370 = vst.msk [vmem:[#allocation2 + $0x1f0] sm:$0xff] %vm268, %v1113
      %1371 = vst.msk [vmem:[#allocation2 + $0x200] sm:$0xff] %vm268, %v1114
      %1372 = vst.msk [vmem:[#allocation2 + $0x210] sm:$0xff] %vm268, %v1115
      %1373 = vrot.lane.b32.xlu0 %v410, 64
      %v1374 = vpop.permute.xlu0 %1373
      %1375 = vrot.lane.b32.xlu0 %v411, 64
      %v1376 = vpop.permute.xlu0 %1375
      %1377 = vrot.lane.b32.xlu0 %v412, 64
      %v1378 = vpop.permute.xlu0 %1377
      %1379 = vrot.lane.b32.xlu0 %v413, 64
      %v1380 = vpop.permute.xlu0 %1379
      %1381 = vrot.lane.b32.xlu0 %v414, 64
      %v1382 = vpop.permute.xlu0 %1381
      %1383 = vrot.lane.b32.xlu0 %v415, 64
      %v1384 = vpop.permute.xlu0 %1383
      %1385 = vrot.lane.b32.xlu0 %v416, 64
      %v1386 = vpop.permute.xlu0 %1385
      %1387 = vrot.lane.b32.xlu0 %v417, 64
      %v1388 = vpop.permute.xlu0 %1387
      %1389 = vrot.lane.b32.xlu0 %v418, 64
      %v1390 = vpop.permute.xlu0 %1389
      %1391 = vrot.lane.b32.xlu0 %v419, 64
      %v1392 = vpop.permute.xlu0 %1391
      %1393 = vrot.lane.b32.xlu0 %v420, 64
      %v1394 = vpop.permute.xlu0 %1393
      %1395 = vrot.lane.b32.xlu0 %v421, 64
      %v1396 = vpop.permute.xlu0 %1395
      %1397 = vrot.lane.b32.xlu0 %v422, 64
      %v1398 = vpop.permute.xlu0 %1397
      %1399 = vrot.lane.b32.xlu0 %v423, 64
      %v1400 = vpop.permute.xlu0 %1399
      %1401 = vrot.lane.b32.xlu0 %v424, 64
      %v1402 = vpop.permute.xlu0 %1401
      %1403 = vrot.lane.b32.xlu0 %v425, 64
      %v1404 = vpop.permute.xlu0 %1403
      %1405 = vrot.lane.b32.xlu0 %v426, 64
      %v1406 = vpop.permute.xlu0 %1405
      %1407 = vrot.lane.b32.xlu0 %v427, 64
      %v1408 = vpop.permute.xlu0 %1407
      %1409 = vrot.lane.b32.xlu0 %v428, 64
      %v1410 = vpop.permute.xlu0 %1409
      %1411 = vrot.lane.b32.xlu0 %v429, 64
      %v1412 = vpop.permute.xlu0 %1411
      %1413 = vrot.lane.b32.xlu0 %v430, 64
      %v1414 = vpop.permute.xlu0 %1413
      %1415 = vrot.lane.b32.xlu0 %v431, 64
      %v1416 = vpop.permute.xlu0 %1415
      %1417 = vrot.lane.b32.xlu0 %v432, 64
      %v1418 = vpop.permute.xlu0 %1417
      %1419 = vrot.lane.b32.xlu0 %v433, 64
      %v1420 = vpop.permute.xlu0 %1419
      %1421 = vrot.lane.b32.xlu0 %v434, 64
      %v1422 = vpop.permute.xlu0 %1421
      %1423 = vrot.lane.b32.xlu0 %v435, 64
      %v1424 = vpop.permute.xlu0 %1423
      %1425 = vrot.lane.b32.xlu0 %v436, 64
      %v1426 = vpop.permute.xlu0 %1425
      %1427 = vrot.lane.b32.xlu0 %v437, 64
      %v1428 = vpop.permute.xlu0 %1427
      %1429 = vrot.lane.b32.xlu0 %v438, 64
      %v1430 = vpop.permute.xlu0 %1429
      %1431 = vrot.lane.b32.xlu0 %v439, 64
      %v1432 = vpop.permute.xlu0 %1431
      %1433 = vrot.lane.b32.xlu0 %v440, 64
      %v1434 = vpop.permute.xlu0 %1433
      %1435 = vrot.lane.b32.xlu0 %v441, 64
      %v1436 = vpop.permute.xlu0 %1435
      %vm1469 = vcmask 1048064
      %1470 = vst.msk [vmem:[#allocation2 + $0x20] sm:$0xff] %vm1469, %v1374
      %1471 = vst.msk [vmem:[#allocation2 + $0x30] sm:$0xff] %vm1469, %v1376
      %1472 = vst.msk [vmem:[#allocation2 + $0x40] sm:$0xff] %vm1469, %v1378
      %1473 = vst.msk [vmem:[#allocation2 + $0x50] sm:$0xff] %vm1469, %v1380
      %1474 = vst.msk [vmem:[#allocation2 + $0x60] sm:$0xff] %vm1469, %v1382
      %1475 = vst.msk [vmem:[#allocation2 + $0x70] sm:$0xff] %vm1469, %v1384
      %1476 = vst.msk [vmem:[#allocation2 + $0x80] sm:$0xff] %vm1469, %v1386
      %1477 = vst.msk [vmem:[#allocation2 + $0x90] sm:$0xff] %vm1469, %v1388
      %1478 = vst.msk [vmem:[#allocation2 + $0xa0] sm:$0xff] %vm1469, %v1390
      %1479 = vst.msk [vmem:[#allocation2 + $0xb0] sm:$0xff] %vm1469, %v1392
      %1480 = vst.msk [vmem:[#allocation2 + $0xc0] sm:$0xff] %vm1469, %v1394
      %1481 = vst.msk [vmem:[#allocation2 + $0xd0] sm:$0xff] %vm1469, %v1396
      %1482 = vst.msk [vmem:[#allocation2 + $0xe0] sm:$0xff] %vm1469, %v1398
      %1483 = vst.msk [vmem:[#allocation2 + $0xf0] sm:$0xff] %vm1469, %v1400
      %1484 = vst.msk [vmem:[#allocation2 + $0x100] sm:$0xff] %vm1469, %v1402
      %1485 = vst.msk [vmem:[#allocation2 + $0x110] sm:$0xff] %vm1469, %v1404
      %1486 = vst.msk [vmem:[#allocation2 + $0x120] sm:$0xff] %vm1469, %v1406
      %1487 = vst.msk [vmem:[#allocation2 + $0x130] sm:$0xff] %vm1469, %v1408
      %1488 = vst.msk [vmem:[#allocation2 + $0x140] sm:$0xff] %vm1469, %v1410
      %1489 = vst.msk [vmem:[#allocation2 + $0x150] sm:$0xff] %vm1469, %v1412
      %1490 = vst.msk [vmem:[#allocation2 + $0x160] sm:$0xff] %vm1469, %v1414
      %1491 = vst.msk [vmem:[#allocation2 + $0x170] sm:$0xff] %vm1469, %v1416
      %1492 = vst.msk [vmem:[#allocation2 + $0x180] sm:$0xff] %vm1469, %v1418
      %1493 = vst.msk [vmem:[#allocation2 + $0x190] sm:$0xff] %vm1469, %v1420
      %1494 = vst.msk [vmem:[#allocation2 + $0x1a0] sm:$0xff] %vm1469, %v1422
      %1495 = vst.msk [vmem:[#allocation2 + $0x1b0] sm:$0xff] %vm1469, %v1424
      %1496 = vst.msk [vmem:[#allocation2 + $0x1c0] sm:$0xff] %vm1469, %v1426
      %1497 = vst.msk [vmem:[#allocation2 + $0x1d0] sm:$0xff] %vm1469, %v1428
      %1498 = vst.msk [vmem:[#allocation2 + $0x1e0] sm:$0xff] %vm1469, %v1430
      %1499 = vst.msk [vmem:[#allocation2 + $0x1f0] sm:$0xff] %vm1469, %v1432
      %1500 = vst.msk [vmem:[#allocation2 + $0x200] sm:$0xff] %vm1469, %v1434
      %1501 = vst.msk [vmem:[#allocation2 + $0x210] sm:$0xff] %vm1469, %v1436
      %1502 = vst.msk [vmem:[#allocation2 + $0x28] sm:$0xff] %vm268, %v1309
      %1503 = vst.msk [vmem:[#allocation2 + $0x38] sm:$0xff] %vm268, %v1310
      %1504 = vst.msk [vmem:[#allocation2 + $0x48] sm:$0xff] %vm268, %v1311
      %1505 = vst.msk [vmem:[#allocation2 + $0x58] sm:$0xff] %vm268, %v1312
      %1506 = vst.msk [vmem:[#allocation2 + $0x68] sm:$0xff] %vm268, %v1313
      %1507 = vst.msk [vmem:[#allocation2 + $0x78] sm:$0xff] %vm268, %v1314
      %1508 = vst.msk [vmem:[#allocation2 + $0x88] sm:$0xff] %vm268, %v1315
      %1509 = vst.msk [vmem:[#allocation2 + $0x98] sm:$0xff] %vm268, %v1316
      %1510 = vst.msk [vmem:[#allocation2 + $0xa8] sm:$0xff] %vm268, %v1317
      %1511 = vst.msk [vmem:[#allocation2 + $0xb8] sm:$0xff] %vm268, %v1318
      %1512 = vst.msk [vmem:[#allocation2 + $0xc8] sm:$0xff] %vm268, %v1319
      %1513 = vst.msk [vmem:[#allocation2 + $0xd8] sm:$0xff] %vm268, %v1320
      %1514 = vst.msk [vmem:[#allocation2 + $0xe8] sm:$0xff] %vm268, %v1321
      %1515 = vst.msk [vmem:[#allocation2 + $0xf8] sm:$0xff] %vm268, %v1322
      %1516 = vst.msk [vmem:[#allocation2 + $0x108] sm:$0xff] %vm268, %v1323
      %1517 = vst.msk [vmem:[#allocation2 + $0x118] sm:$0xff] %vm268, %v1324
      %1518 = vst.msk [vmem:[#allocation2 + $0x128] sm:$0xff] %vm268, %v1325
      %1519 = vst.msk [vmem:[#allocation2 + $0x138] sm:$0xff] %vm268, %v1326
      %1520 = vst.msk [vmem:[#allocation2 + $0x148] sm:$0xff] %vm268, %v1327
      %1521 = vst.msk [vmem:[#allocation2 + $0x158] sm:$0xff] %vm268, %v1328
      %1522 = vst.msk [vmem:[#allocation2 + $0x168] sm:$0xff] %vm268, %v1329
      %1523 = vst.msk [vmem:[#allocation2 + $0x178] sm:$0xff] %vm268, %v1330
      %1524 = vst.msk [vmem:[#allocation2 + $0x188] sm:$0xff] %vm268, %v1331
      %1525 = vst.msk [vmem:[#allocation2 + $0x198] sm:$0xff] %vm268, %v1332
      %1526 = vst.msk [vmem:[#allocation2 + $0x1a8] sm:$0xff] %vm268, %v1333
      %1527 = vst.msk [vmem:[#allocation2 + $0x1b8] sm:$0xff] %vm268, %v1334
      %1528 = vst.msk [vmem:[#allocation2 + $0x1c8] sm:$0xff] %vm268, %v1335
      %1529 = vst.msk [vmem:[#allocation2 + $0x1d8] sm:$0xff] %vm268, %v1336
      %1530 = vst.msk [vmem:[#allocation2 + $0x1e8] sm:$0xff] %vm268, %v1337
      %1531 = vst.msk [vmem:[#allocation2 + $0x1f8] sm:$0xff] %vm268, %v1338
      %1532 = vst.msk [vmem:[#allocation2 + $0x208] sm:$0xff] %vm268, %v1339
      %1533 = vst.msk [vmem:[#allocation2 + $0x218] sm:$0xff] %vm268, %v1340
      %1534 = vst [vmem:[#allocation2] sm:$0xff] 0.0
      %1535 = vst.msk [vmem:[#allocation2 + $0x8] sm:$0xff] %vm268, 0.0
      %1536 = vst [vmem:[#allocation2 + $0x10] sm:$0xff] 0.0
      %1537 = vst.msk [vmem:[#allocation2 + $0x18] sm:$0xff] %vm268, 0.0
      %1538 = vst [vmem:[#allocation2 + $0x220] sm:$0xff] 0.0
      %1539 = vst.msk [vmem:[#allocation2 + $0x228] sm:$0xff] %vm268, 0.0
      %1540 = vst [vmem:[#allocation2 + $0x230] sm:$0xff] 0.0
      %1541 = vst.msk [vmem:[#allocation2 + $0x238] sm:$0xff] %vm268, 0.0
      %v1542 = vld [vmem:[#allocation2] sm:$0xff]
      %v1543 = vld [vmem:[#allocation2 + $0x8] sm:$0xff]
      %v1544 = vld [vmem:[#allocation2 + $0x10] sm:$0xff]
      %v1545 = vld [vmem:[#allocation2 + $0x18] sm:$0xff]
      %v1546 = vld [vmem:[#allocation2 + $0x20] sm:$0xff]
      %v1547 = vld [vmem:[#allocation2 + $0x28] sm:$0xff]
      %v1548 = vld [vmem:[#allocation2 + $0x30] sm:$0xff]
      %v1549 = vld [vmem:[#allocation2 + $0x38] sm:$0xff]
      %v1550 = vld [vmem:[#allocation2 + $0x40] sm:$0xff]
      %v1551 = vld [vmem:[#allocation2 + $0x48] sm:$0xff]
      %v1552 = vld [vmem:[#allocation2 + $0x50] sm:$0xff]
      %v1553 = vld [vmem:[#allocation2 + $0x58] sm:$0xff]
      %v1554 = vld [vmem:[#allocation2 + $0x60] sm:$0xff]
      %v1555 = vld [vmem:[#allocation2 + $0x68] sm:$0xff]
      %v1556 = vld [vmem:[#allocation2 + $0x70] sm:$0xff]
      %v1557 = vld [vmem:[#allocation2 + $0x78] sm:$0xff]
      %v1558 = vld [vmem:[#allocation2 + $0x80] sm:$0xff]
      %v1559 = vld [vmem:[#allocation2 + $0x88] sm:$0xff]
      %v1560 = vld [vmem:[#allocation2 + $0x90] sm:$0xff]
      %v1561 = vld [vmem:[#allocation2 + $0x98] sm:$0xff]
      %v1562 = vld [vmem:[#allocation2 + $0xa0] sm:$0xff]
      %v1563 = vld [vmem:[#allocation2 + $0xa8] sm:$0xff]
      %v1564 = vld [vmem:[#allocation2 + $0xb0] sm:$0xff]
      %v1565 = vld [vmem:[#allocation2 + $0xb8] sm:$0xff]
      %v1566 = vld [vmem:[#allocation2 + $0xc0] sm:$0xff]
      %v1567 = vld [vmem:[#allocation2 + $0xc8] sm:$0xff]
      %v1568 = vld [vmem:[#allocation2 + $0xd0] sm:$0xff]
      %v1569 = vld [vmem:[#allocation2 + $0xd8] sm:$0xff]
      %v1570 = vld [vmem:[#allocation2 + $0xe0] sm:$0xff]
      %v1571 = vld [vmem:[#allocation2 + $0xe8] sm:$0xff]
      %v1572 = vld [vmem:[#allocation2 + $0xf0] sm:$0xff]
      %v1573 = vld [vmem:[#allocation2 + $0xf8] sm:$0xff]
      %v1574 = vld [vmem:[#allocation2 + $0x100] sm:$0xff]
      %v1575 = vld [vmem:[#allocation2 + $0x108] sm:$0xff]
      %v1576 = vld [vmem:[#allocation2 + $0x110] sm:$0xff]
      %v1577 = vld [vmem:[#allocation2 + $0x118] sm:$0xff]
      %v1578 = vld [vmem:[#allocation2 + $0x120] sm:$0xff]
      %v1579 = vld [vmem:[#allocation2 + $0x128] sm:$0xff]
      %v1580 = vld [vmem:[#allocation2 + $0x130] sm:$0xff]
      %v1581 = vld [vmem:[#allocation2 + $0x138] sm:$0xff]
      %v1582 = vld [vmem:[#allocation2 + $0x140] sm:$0xff]
      %v1583 = vld [vmem:[#allocation2 + $0x148] sm:$0xff]
      %v1584 = vld [vmem:[#allocation2 + $0x150] sm:$0xff]
      %v1585 = vld [vmem:[#allocation2 + $0x158] sm:$0xff]
      %v1586 = vld [vmem:[#allocation2 + $0x160] sm:$0xff]
      %v1587 = vld [vmem:[#allocation2 + $0x168] sm:$0xff]
      %v1588 = vld [vmem:[#allocation2 + $0x170] sm:$0xff]
      %v1589 = vld [vmem:[#allocation2 + $0x178] sm:$0xff]
      %v1590 = vld [vmem:[#allocation2 + $0x180] sm:$0xff]
      %v1591 = vld [vmem:[#allocation2 + $0x188] sm:$0xff]
      %v1592 = vld [vmem:[#allocation2 + $0x190] sm:$0xff]
      %v1593 = vld [vmem:[#allocation2 + $0x198] sm:$0xff]
      %v1594 = vld [vmem:[#allocation2 + $0x1a0] sm:$0xff]
      %v1595 = vld [vmem:[#allocation2 + $0x1a8] sm:$0xff]
      %v1596 = vld [vmem:[#allocation2 + $0x1b0] sm:$0xff]
      %v1597 = vld [vmem:[#allocation2 + $0x1b8] sm:$0xff]
      %v1598 = vld [vmem:[#allocation2 + $0x1c0] sm:$0xff]
      %v1599 = vld [vmem:[#allocation2 + $0x1c8] sm:$0xff]
      %v1600 = vld [vmem:[#allocation2 + $0x1d0] sm:$0xff]
      %v1601 = vld [vmem:[#allocation2 + $0x1d8] sm:$0xff]
      %v1602 = vld [vmem:[#allocation2 + $0x1e0] sm:$0xff]
      %v1603 = vld [vmem:[#allocation2 + $0x1e8] sm:$0xff]
      %v1604 = vld [vmem:[#allocation2 + $0x1f0] sm:$0xff]
      %v1605 = vld [vmem:[#allocation2 + $0x1f8] sm:$0xff]
      %v1606 = vld [vmem:[%s4] sm:$0xff]
      %v1607 = vld [vmem:[%s4 + $0x8] sm:$0xff]
      %v1608 = vld [vmem:[%s4 + $0x10] sm:$0xff]
      %v1609 = vld [vmem:[%s4 + $0x18] sm:$0xff]
      %v1610 = vld [vmem:[%s4 + $0x20] sm:$0xff]
      %v1611 = vld [vmem:[%s4 + $0x28] sm:$0xff]
      %v1612 = vld [vmem:[%s4 + $0x30] sm:$0xff]
      %v1613 = vld [vmem:[%s4 + $0x38] sm:$0xff]
      %v1614 = vld [vmem:[%s4 + $0x40] sm:$0xff]
      %v1615 = vld [vmem:[%s4 + $0x48] sm:$0xff]
      %v1616 = vld [vmem:[%s4 + $0x50] sm:$0xff]
      %v1617 = vld [vmem:[%s4 + $0x58] sm:$0xff]
      %v1618 = vld [vmem:[%s4 + $0x60] sm:$0xff]
      %v1619 = vld [vmem:[%s4 + $0x68] sm:$0xff]
      %v1620 = vld [vmem:[%s4 + $0x70] sm:$0xff]
      %v1621 = vld [vmem:[%s4 + $0x78] sm:$0xff]
      %v1622 = vld [vmem:[%s4 + $0x80] sm:$0xff]
      %v1623 = vld [vmem:[%s4 + $0x88] sm:$0xff]
      %v1624 = vld [vmem:[%s4 + $0x90] sm:$0xff]
      %v1625 = vld [vmem:[%s4 + $0x98] sm:$0xff]
      %v1626 = vld [vmem:[%s4 + $0xa0] sm:$0xff]
      %v1627 = vld [vmem:[%s4 + $0xa8] sm:$0xff]
      %v1628 = vld [vmem:[%s4 + $0xb0] sm:$0xff]
      %v1629 = vld [vmem:[%s4 + $0xb8] sm:$0xff]
      %v1631 = vsel %vm268, %v1543, 0
      %v1634 = vsel %vm268, %v1545, 0
      %v1637 = vsel %vm268, %v1547, 0
      %v1640 = vsel %vm268, %v1549, 0
      %v1643 = vsel %vm268, %v1551, 0
      %v1646 = vsel %vm268, %v1553, 0
      %v1649 = vsel %vm268, %v1555, 0
      %v1652 = vsel %vm268, %v1557, 0
      %v1655 = vsel %vm268, %v1559, 0
      %v1658 = vsel %vm268, %v1561, 0
      %v1661 = vsel %vm268, %v1563, 0
      %v1664 = vsel %vm268, %v1565, 0
      %v1667 = vsel %vm268, %v1567, 0
      %v1670 = vsel %vm268, %v1569, 0
      %v1673 = vsel %vm268, %v1571, 0
      %v1676 = vsel %vm268, %v1573, 0
      %v1679 = vsel %vm268, %v1575, 0
      %v1682 = vsel %vm268, %v1577, 0
      %v1685 = vsel %vm268, %v1579, 0
      %v1688 = vsel %vm268, %v1581, 0
      %v1691 = vsel %vm268, %v1583, 0
      %v1694 = vsel %vm268, %v1585, 0
      %v1697 = vsel %vm268, %v1587, 0
      %v1700 = vsel %vm268, %v1589, 0
      %v1703 = vsel %vm268, %v1591, 0
      %v1706 = vsel %vm268, %v1593, 0
      %v1709 = vsel %vm268, %v1595, 0
      %v1712 = vsel %vm268, %v1597, 0
      %v1715 = vsel %vm268, %v1599, 0
      %v1718 = vsel %vm268, %v1601, 0
      %v1721 = vsel %vm268, %v1603, 0
      %v1724 = vsel %vm268, %v1605, 0
      %1726 = vmatprep.subr.mxu0 0.0
      %1727 = vmatpush1.msra.mxu0 %v1606
      %1728 = vmatprep.subr.mxu0 0.0
      %1729 = vmatpush1.msra.mxu0 %v1607
      %1730 = vmatprep.subr.mxu0 0.0
      %1731 = vmatpush1.msra.mxu0 %v1608
      %1732 = vmatprep.subr.mxu0 0.0
      %1733 = vmatpush1.msra.mxu0 %v1609
      %1734 = vmatprep.subr.mxu0 0.0
      %1735 = vmatpush1.msra.mxu0 %v1610
      %1736 = vmatprep.subr.mxu0 0.0
      %1737 = vmatpush1.msra.mxu0 %v1611
      %1738 = vmatprep.subr.mxu0 0.0
      %1739 = vmatpush1.msra.mxu0 %v1612
      %1740 = vmatprep.subr.mxu0 0.0
      %1741 = vmatpush1.msra.mxu0 %v1613
      %1742 = vmatprep.subr.mxu0 0.0
      %1743 = vmatpush1.msra.mxu0 %v1614
      %1744 = vmatprep.subr.mxu0 0.0
      %1745 = vmatpush1.msra.mxu0 %v1615
      %1746 = vmatprep.subr.mxu0 0.0
      %1747 = vmatpush1.msra.mxu0 %v1616
      %1748 = vmatprep.subr.mxu0 0.0
      %1749 = vmatpush1.msra.mxu0 %v1617
      %1750 = vmatprep.subr.mxu0 0.0
      %1751 = vmatpush1.msra.mxu0 %v1618
      %1752 = vmatprep.subr.mxu0 0.0
      %1753 = vmatpush1.msra.mxu0 %v1619
      %1754 = vmatprep.subr.mxu0 0.0
      %1755 = vmatpush1.msra.mxu0 %v1620
      %1756 = vmatprep.subr.mxu0 0.0
      %1757 = vmatpush1.msra.mxu0 %v1621
      %1758 = vmatprep.subr.mxu0 0.0
      %1759 = vmatpush1.msra.mxu0 %v1622
      %1760 = vmatprep.subr.mxu0 0.0
      %1761 = vmatpush1.msra.mxu0 %v1623
      %1762 = vmatprep.subr.mxu0 0.0
      %1763 = vmatpush1.msra.mxu0 %v1624
      %1764 = vmatprep.subr.mxu0 0.0
      %1765 = vmatpush1.msra.mxu0 %v1625
      %1766 = vmatprep.subr.mxu0 0.0
      %1767 = vmatpush1.msra.mxu0 %v1626
      %1768 = vmatprep.subr.mxu0 0.0
      %1769 = vmatpush1.msra.mxu0 %v1627
      %1770 = vmatprep.subr.mxu0 0.0
      %1771 = vmatpush1.msra.mxu0 %v1628
      %1772 = vmatprep.subr.mxu0 0.0
      %1773 = vmatpush1.msra.mxu0 %v1629
      %1774 = vmatprep.subr.mxu0 0.0
      %1775 = vmatpush1.msra.mxu0 0.0
      %1776 = vmatprep.subr.mxu0 0.0
      %1777 = vmatpush1.msra.mxu0 0.0
      %1778 = vmatprep.subr.mxu0 0.0
      %1779 = vmatpush1.msra.mxu0 0.0
      %1780 = vmatprep.subr.mxu0 0.0
      %1781 = vmatpush1.msra.mxu0 0.0
      %1782 = vmatprep.subr.mxu0 0.0
      %1783 = vmatpush1.msra.mxu0 0.0
      %1784 = vmatprep.subr.mxu0 0.0
      %1785 = vmatpush1.msra.mxu0 0.0
      %1786 = vmatprep.subr.mxu0 0.0
      %1787 = vmatpush1.msra.mxu0 0.0
      %1788 = vmatprep.subr.mxu0 0.0
      %1789 = vmatpush1.msra.mxu0 0.0
      %1790 = vmatprep.mubr.f32.mxu0 %v1631
      %1791 = vmatmul.mubr.f32.gmra.mrb[0].mxu0 %v1542
      %v1792 = vpop.f32.mrb[0].mxu0
      %v1793 = vadd.f32 0.0, %v1792
      %v1794 = vpop.f32.mrb[0].mxu0
      %1795 = vmatprep.mubr.f32.mxu0 %v1634
      %1796 = vmatmul.mubr.f32.gmra.mrb[0].mxu0 %v1544
      %v1797 = vpop.f32.mrb[0].mxu0
      %v1798 = vadd.f32 0.0, %v1797
      %v1799 = vpop.f32.mrb[0].mxu0
      %1800 = vmatprep.mubr.f32.mxu0 %v1637
      %1801 = vmatmul.mubr.f32.gmra.mrb[0].mxu0 %v1546
      %v1802 = vpop.f32.mrb[0].mxu0
      %v1803 = vadd.f32 0.0, %v1802
      %v1804 = vpop.f32.mrb[0].mxu0
      %1805 = vmatprep.mubr.f32.mxu0 %v1640
      %1806 = vmatmul.mubr.f32.gmra.mrb[0].mxu0 %v1548
      %v1807 = vpop.f32.mrb[0].mxu0
      %v1808 = vadd.f32 0.0, %v1807
      %v1809 = vpop.f32.mrb[0].mxu0
      %1810 = vmatprep.mubr.f32.mxu0 %v1643
      %1811 = vmatmul.mubr.f32.gmra.mrb[0].mxu0 %v1550
      %v1812 = vpop.f32.mrb[0].mxu0
      %v1813 = vadd.f32 0.0, %v1812
      %v1814 = vpop.f32.mrb[0].mxu0
      %1815 = vmatprep.mubr.f32.mxu0 %v1646
      %1816 = vmatmul.mubr.f32.gmra.mrb[0].mxu0 %v1552
      %v1817 = vpop.f32.mrb[0].mxu0
      %v1818 = vadd.f32 0.0, %v1817
      %v1819 = vpop.f32.mrb[0].mxu0
      %1820 = vmatprep.mubr.f32.mxu0 %v1649
      %1821 = vmatmul.mubr.f32.gmra.mrb[0].mxu0 %v1554
      %v1822 = vpop.f32.mrb[0].mxu0
      %v1823 = vadd.f32 0.0, %v1822
      %v1824 = vpop.f32.mrb[0].mxu0
      %1825 = vmatprep.mubr.f32.mxu0 %v1652
      %1826 = vmatmul.mubr.f32.gmra.mrb[0].mxu0 %v1556
      %v1827 = vpop.f32.mrb[0].mxu0
      %v1828 = vadd.f32 0.0, %v1827
      %v1829 = vpop.f32.mrb[0].mxu0
      %1830 = vmatprep.mubr.f32.mxu0 %v1655
      %1831 = vmatmul.mubr.f32.gmra.mrb[0].mxu0 %v1558
      %v1832 = vpop.f32.mrb[0].mxu0
      %v1833 = vadd.f32 0.0, %v1832
      %v1834 = vpop.f32.mrb[0].mxu0
      %1835 = vmatprep.mubr.f32.mxu0 %v1658
      %1836 = vmatmul.mubr.f32.gmra.mrb[0].mxu0 %v1560
      %v1837 = vpop.f32.mrb[0].mxu0
      %v1838 = vadd.f32 0.0, %v1837
      %v1839 = vpop.f32.mrb[0].mxu0
      %1840 = vmatprep.mubr.f32.mxu0 %v1661
      %1841 = vmatmul.mubr.f32.gmra.mrb[0].mxu0 %v1562
      %v1842 = vpop.f32.mrb[0].mxu0
      %v1843 = vadd.f32 0.0, %v1842
      %v1844 = vpop.f32.mrb[0].mxu0
      %1845 = vmatprep.mubr.f32.mxu0 %v1664
      %1846 = vmatmul.mubr.f32.gmra.mrb[0].mxu0 %v1564
      %v1847 = vpop.f32.mrb[0].mxu0
      %v1848 = vadd.f32 0.0, %v1847
      %v1849 = vpop.f32.mrb[0].mxu0
      %1850 = vmatprep.mubr.f32.mxu0 %v1667
      %1851 = vmatmul.mubr.f32.gmra.mrb[0].mxu0 %v1566
      %v1852 = vpop.f32.mrb[0].mxu0
      %v1853 = vadd.f32 0.0, %v1852
      %v1854 = vpop.f32.mrb[0].mxu0
      %1855 = vmatprep.mubr.f32.mxu0 %v1670
      %1856 = vmatmul.mubr.f32.gmra.mrb[0].mxu0 %v1568
      %v1857 = vpop.f32.mrb[0].mxu0
      %v1858 = vadd.f32 0.0, %v1857
      %v1859 = vpop.f32.mrb[0].mxu0
      %1860 = vmatprep.mubr.f32.mxu0 %v1673
      %1861 = vmatmul.mubr.f32.gmra.mrb[0].mxu0 %v1570
      %v1862 = vpop.f32.mrb[0].mxu0
      %v1863 = vadd.f32 0.0, %v1862
      %v1864 = vpop.f32.mrb[0].mxu0
      %1865 = vmatprep.mubr.f32.mxu0 %v1676
      %1866 = vmatmul.mubr.f32.gmra.mrb[0].mxu0 %v1572
      %v1867 = vpop.f32.mrb[0].mxu0
      %v1868 = vadd.f32 0.0, %v1867
      %v1869 = vpop.f32.mrb[0].mxu0
      %1870 = vmatprep.mubr.f32.mxu0 %v1679
      %1871 = vmatmul.mubr.f32.gmra.mrb[0].mxu0 %v1574
      %v1872 = vpop.f32.mrb[0].mxu0
      %v1873 = vadd.f32 0.0, %v1872
      %v1874 = vpop.f32.mrb[0].mxu0
      %1875 = vmatprep.mubr.f32.mxu0 %v1682
      %1876 = vmatmul.mubr.f32.gmra.mrb[0].mxu0 %v1576
      %v1877 = vpop.f32.mrb[0].mxu0
      %v1878 = vadd.f32 0.0, %v1877
      %v1879 = vpop.f32.mrb[0].mxu0
      %1880 = vmatprep.mubr.f32.mxu0 %v1685
      %1881 = vmatmul.mubr.f32.gmra.mrb[0].mxu0 %v1578
      %v1882 = vpop.f32.mrb[0].mxu0
      %v1883 = vadd.f32 0.0, %v1882
      %v1884 = vpop.f32.mrb[0].mxu0
      %1885 = vmatprep.mubr.f32.mxu0 %v1688
      %1886 = vmatmul.mubr.f32.gmra.mrb[0].mxu0 %v1580
      %v1887 = vpop.f32.mrb[0].mxu0
      %v1888 = vadd.f32 0.0, %v1887
      %v1889 = vpop.f32.mrb[0].mxu0
      %1890 = vmatprep.mubr.f32.mxu0 %v1691
      %1891 = vmatmul.mubr.f32.gmra.mrb[0].mxu0 %v1582
      %v1892 = vpop.f32.mrb[0].mxu0
      %v1893 = vadd.f32 0.0, %v1892
      %v1894 = vpop.f32.mrb[0].mxu0
      %1895 = vmatprep.mubr.f32.mxu0 %v1694
      %1896 = vmatmul.mubr.f32.gmra.mrb[0].mxu0 %v1584
      %v1897 = vpop.f32.mrb[0].mxu0
      %v1898 = vadd.f32 0.0, %v1897
      %v1899 = vpop.f32.mrb[0].mxu0
      %1900 = vmatprep.mubr.f32.mxu0 %v1697
      %1901 = vmatmul.mubr.f32.gmra.mrb[0].mxu0 %v1586
      %v1902 = vpop.f32.mrb[0].mxu0
      %v1903 = vadd.f32 0.0, %v1902
      %v1904 = vpop.f32.mrb[0].mxu0
      %1905 = vmatprep.mubr.f32.mxu0 %v1700
      %1906 = vmatmul.mubr.f32.gmra.mrb[0].mxu0 %v1588
      %v1907 = vpop.f32.mrb[0].mxu0
      %v1908 = vadd.f32 0.0, %v1907
      %v1909 = vpop.f32.mrb[0].mxu0
      %1910 = vmatprep.mubr.f32.mxu0 %v1703
      %1911 = vmatmul.mubr.f32.gmra.mrb[0].mxu0 %v1590
      %v1912 = vpop.f32.mrb[0].mxu0
      %v1913 = vadd.f32 0.0, %v1912
      %v1914 = vpop.f32.mrb[0].mxu0
      %1915 = vmatprep.mubr.f32.mxu0 %v1706
      %1916 = vmatmul.mubr.f32.gmra.mrb[0].mxu0 %v1592
      %v1917 = vpop.f32.mrb[0].mxu0
      %v1918 = vadd.f32 0.0, %v1917
      %v1919 = vpop.f32.mrb[0].mxu0
      %1920 = vmatprep.mubr.f32.mxu0 %v1709
      %1921 = vmatmul.mubr.f32.gmra.mrb[0].mxu0 %v1594
      %v1922 = vpop.f32.mrb[0].mxu0
      %v1923 = vadd.f32 0.0, %v1922
      %v1924 = vpop.f32.mrb[0].mxu0
      %1925 = vmatprep.mubr.f32.mxu0 %v1712
      %1926 = vmatmul.mubr.f32.gmra.mrb[0].mxu0 %v1596
      %v1927 = vpop.f32.mrb[0].mxu0
      %v1928 = vadd.f32 0.0, %v1927
      %v1929 = vpop.f32.mrb[0].mxu0
      %1930 = vmatprep.mubr.f32.mxu0 %v1715
      %1931 = vmatmul.mubr.f32.gmra.mrb[0].mxu0 %v1598
      %v1932 = vpop.f32.mrb[0].mxu0
      %v1933 = vadd.f32 0.0, %v1932
      %v1934 = vpop.f32.mrb[0].mxu0
      %1935 = vmatprep.mubr.f32.mxu0 %v1718
      %1936 = vmatmul.mubr.f32.gmra.mrb[0].mxu0 %v1600
      %v1937 = vpop.f32.mrb[0].mxu0
      %v1938 = vadd.f32 0.0, %v1937
      %v1939 = vpop.f32.mrb[0].mxu0
      %1940 = vmatprep.mubr.f32.mxu0 %v1721
      %1941 = vmatmul.mubr.f32.gmra.mrb[0].mxu0 %v1602
      %v1942 = vpop.f32.mrb[0].mxu0
      %v1943 = vadd.f32 0.0, %v1942
      %v1944 = vpop.f32.mrb[0].mxu0
      %1945 = vmatprep.mubr.f32.mxu0 %v1724
      %1946 = vmatmul.mubr.f32.gmra.mrb[0].mxu0 %v1604
      %v1947 = vpop.f32.mrb[0].mxu0
      %v1948 = vadd.f32 0.0, %v1947
      %v1949 = vpop.f32.mrb[0].mxu0
      %1950 = vdwg.mxu0
      %1951 = vst.msk [vmem:[%s260] sm:$0xff] %vm268, %v1793
      %1952 = vst.msk [vmem:[%s260 + $0x8] sm:$0xff] %vm268, %v1798
      %1953 = vst.msk [vmem:[%s260 + $0x10] sm:$0xff] %vm268, %v1803
      %1954 = vst.msk [vmem:[%s260 + $0x18] sm:$0xff] %vm268, %v1808
      %1955 = vst.msk [vmem:[%s260 + $0x20] sm:$0xff] %vm268, %v1813
      %1956 = vst.msk [vmem:[%s260 + $0x28] sm:$0xff] %vm268, %v1818
      %1957 = vst.msk [vmem:[%s260 + $0x30] sm:$0xff] %vm268, %v1823
      %1958 = vst.msk [vmem:[%s260 + $0x38] sm:$0xff] %vm268, %v1828
      %1959 = vst.msk [vmem:[%s260 + $0x40] sm:$0xff] %vm268, %v1833
      %1960 = vst.msk [vmem:[%s260 + $0x48] sm:$0xff] %vm268, %v1838
      %1961 = vst.msk [vmem:[%s260 + $0x50] sm:$0xff] %vm268, %v1843
      %1962 = vst.msk [vmem:[%s260 + $0x58] sm:$0xff] %vm268, %v1848
      %1963 = vst.msk [vmem:[%s260 + $0x60] sm:$0xff] %vm268, %v1853
      %1964 = vst.msk [vmem:[%s260 + $0x68] sm:$0xff] %vm268, %v1858
      %1965 = vst.msk [vmem:[%s260 + $0x70] sm:$0xff] %vm268, %v1863
      %1966 = vst.msk [vmem:[%s260 + $0x78] sm:$0xff] %vm268, %v1868
      %1967 = vst.msk [vmem:[%s260 + $0x80] sm:$0xff] %vm268, %v1873
      %1968 = vst.msk [vmem:[%s260 + $0x88] sm:$0xff] %vm268, %v1878
      %1969 = vst.msk [vmem:[%s260 + $0x90] sm:$0xff] %vm268, %v1883
      %1970 = vst.msk [vmem:[%s260 + $0x98] sm:$0xff] %vm268, %v1888
      %1971 = vst.msk [vmem:[%s260 + $0xa0] sm:$0xff] %vm268, %v1893
      %1972 = vst.msk [vmem:[%s260 + $0xa8] sm:$0xff] %vm268, %v1898
      %1973 = vst.msk [vmem:[%s260 + $0xb0] sm:$0xff] %vm268, %v1903
      %1974 = vst.msk [vmem:[%s260 + $0xb8] sm:$0xff] %vm268, %v1908
      %1975 = vst.msk [vmem:[%s260 + $0xc0] sm:$0xff] %vm268, %v1913
      %1976 = vst.msk [vmem:[%s260 + $0xc8] sm:$0xff] %vm268, %v1918
      %1977 = vst.msk [vmem:[%s260 + $0xd0] sm:$0xff] %vm268, %v1923
      %1978 = vst.msk [vmem:[%s260 + $0xd8] sm:$0xff] %vm268, %v1928
      %1979 = vst.msk [vmem:[%s260 + $0xe0] sm:$0xff] %vm268, %v1933
      %1980 = vst.msk [vmem:[%s260 + $0xe8] sm:$0xff] %vm268, %v1938
      %1981 = vst.msk [vmem:[%s260 + $0xf0] sm:$0xff] %vm268, %v1943
      %1982 = vst.msk [vmem:[%s260 + $0xf8] sm:$0xff] %vm268, %v1948
      %v1983 = vld [vmem:[#allocation2 + $0x20] sm:$0xff]
      %v1984 = vld [vmem:[#allocation2 + $0x28] sm:$0xff]
      %v1985 = vld [vmem:[#allocation2 + $0x30] sm:$0xff]
      %v1986 = vld [vmem:[#allocation2 + $0x38] sm:$0xff]
      %v1987 = vld [vmem:[#allocation2 + $0x40] sm:$0xff]
      %v1988 = vld [vmem:[#allocation2 + $0x48] sm:$0xff]
      %v1989 = vld [vmem:[#allocation2 + $0x50] sm:$0xff]
      %v1990 = vld [vmem:[#allocation2 + $0x58] sm:$0xff]
      %v1991 = vld [vmem:[#allocation2 + $0x60] sm:$0xff]
      %v1992 = vld [vmem:[#allocation2 + $0x68] sm:$0xff]
      %v1993 = vld [vmem:[#allocation2 + $0x70] sm:$0xff]
      %v1994 = vld [vmem:[#allocation2 + $0x78] sm:$0xff]
      %v1995 = vld [vmem:[#allocation2 + $0x80] sm:$0xff]
      %v1996 = vld [vmem:[#allocation2 + $0x88] sm:$0xff]
      %v1997 = vld [vmem:[#allocation2 + $0x90] sm:$0xff]
      %v1998 = vld [vmem:[#allocation2 + $0x98] sm:$0xff]
      %v1999 = vld [vmem:[#allocation2 + $0xa0] sm:$0xff]
      %v2000 = vld [vmem:[#allocation2 + $0xa8] sm:$0xff]
      %v2001 = vld [vmem:[#allocation2 + $0xb0] sm:$0xff]
      %v2002 = vld [vmem:[#allocation2 + $0xb8] sm:$0xff]
      %v2003 = vld [vmem:[#allocation2 + $0xc0] sm:$0xff]
      %v2004 = vld [vmem:[#allocation2 + $0xc8] sm:$0xff]
      %v2005 = vld [vmem:[#allocation2 + $0xd0] sm:$0xff]
      %v2006 = vld [vmem:[#allocation2 + $0xd8] sm:$0xff]
      %v2007 = vld [vmem:[#allocation2 + $0xe0] sm:$0xff]
      %v2008 = vld [vmem:[#allocation2 + $0xe8] sm:$0xff]
      %v2009 = vld [vmem:[#allocation2 + $0xf0] sm:$0xff]
      %v2010 = vld [vmem:[#allocation2 + $0xf8] sm:$0xff]
      %v2011 = vld [vmem:[#allocation2 + $0x100] sm:$0xff]
      %v2012 = vld [vmem:[#allocation2 + $0x108] sm:$0xff]
      %v2013 = vld [vmem:[#allocation2 + $0x110] sm:$0xff]
      %v2014 = vld [vmem:[#allocation2 + $0x118] sm:$0xff]
      %v2015 = vld [vmem:[#allocation2 + $0x120] sm:$0xff]
      %v2016 = vld [vmem:[#allocation2 + $0x128] sm:$0xff]
      %v2017 = vld [vmem:[#allocation2 + $0x130] sm:$0xff]
      %v2018 = vld [vmem:[#allocation2 + $0x138] sm:$0xff]
      %v2019 = vld [vmem:[#allocation2 + $0x140] sm:$0xff]
      %v2020 = vld [vmem:[#allocation2 + $0x148] sm:$0xff]
      %v2021 = vld [vmem:[#allocation2 + $0x150] sm:$0xff]
      %v2022 = vld [vmem:[#allocation2 + $0x158] sm:$0xff]
      %v2023 = vld [vmem:[#allocation2 + $0x160] sm:$0xff]
      %v2024 = vld [vmem:[#allocation2 + $0x168] sm:$0xff]
      %v2025 = vld [vmem:[#allocation2 + $0x170] sm:$0xff]
      %v2026 = vld [vmem:[#allocation2 + $0x178] sm:$0xff]
      %v2027 = vld [vmem:[#allocation2 + $0x180] sm:$0xff]
      %v2028 = vld [vmem:[#allocation2 + $0x188] sm:$0xff]
      %v2029 = vld [vmem:[#allocation2 + $0x190] sm:$0xff]
      %v2030 = vld [vmem:[#allocation2 + $0x198] sm:$0xff]
      %v2031 = vld [vmem:[#allocation2 + $0x1a0] sm:$0xff]
      %v2032 = vld [vmem:[#allocation2 + $0x1a8] sm:$0xff]
      %v2033 = vld [vmem:[#allocation2 + $0x1b0] sm:$0xff]
      %v2034 = vld [vmem:[#allocation2 + $0x1b8] sm:$0xff]
      %v2035 = vld [vmem:[#allocation2 + $0x1c0] sm:$0xff]
      %v2036 = vld [vmem:[#allocation2 + $0x1c8] sm:$0xff]
      %v2037 = vld [vmem:[#allocation2 + $0x1d0] sm:$0xff]
      %v2038 = vld [vmem:[#allocation2 + $0x1d8] sm:$0xff]
      %v2039 = vld [vmem:[#allocation2 + $0x1e0] sm:$0xff]
      %v2040 = vld [vmem:[#allocation2 + $0x1e8] sm:$0xff]
      %v2041 = vld [vmem:[#allocation2 + $0x1f0] sm:$0xff]
      %v2042 = vld [vmem:[#allocation2 + $0x1f8] sm:$0xff]
      %v2043 = vld [vmem:[#allocation2 + $0x200] sm:$0xff]
      %v2044 = vld [vmem:[#allocation2 + $0x208] sm:$0xff]
      %v2045 = vld [vmem:[#allocation2 + $0x210] sm:$0xff]
      %v2046 = vld [vmem:[#allocation2 + $0x218] sm:$0xff]
      %s2047 = scalar_lea.vmem %s4, 192
      %v2048 = vld [vmem:[%s2047] sm:$0xff]
      %v2049 = vld [vmem:[%s2047 + $0x8] sm:$0xff]
      %v2050 = vld [vmem:[%s2047 + $0x10] sm:$0xff]
      %v2051 = vld [vmem:[%s2047 + $0x18] sm:$0xff]
      %v2052 = vld [vmem:[%s2047 + $0x20] sm:$0xff]
      %v2053 = vld [vmem:[%s2047 + $0x28] sm:$0xff]
      %v2054 = vld [vmem:[%s2047 + $0x30] sm:$0xff]
      %v2055 = vld [vmem:[%s2047 + $0x38] sm:$0xff]
      %v2056 = vld [vmem:[%s2047 + $0x40] sm:$0xff]
      %v2057 = vld [vmem:[%s2047 + $0x48] sm:$0xff]
      %v2058 = vld [vmem:[%s2047 + $0x50] sm:$0xff]
      %v2059 = vld [vmem:[%s2047 + $0x58] sm:$0xff]
      %v2060 = vld [vmem:[%s2047 + $0x60] sm:$0xff]
      %v2061 = vld [vmem:[%s2047 + $0x68] sm:$0xff]
      %v2062 = vld [vmem:[%s2047 + $0x70] sm:$0xff]
      %v2063 = vld [vmem:[%s2047 + $0x78] sm:$0xff]
      %v2064 = vld [vmem:[%s2047 + $0x80] sm:$0xff]
      %v2065 = vld [vmem:[%s2047 + $0x88] sm:$0xff]
      %v2066 = vld [vmem:[%s2047 + $0x90] sm:$0xff]
      %v2067 = vld [vmem:[%s2047 + $0x98] sm:$0xff]
      %v2068 = vld [vmem:[%s2047 + $0xa0] sm:$0xff]
      %v2069 = vld [vmem:[%s2047 + $0xa8] sm:$0xff]
      %v2070 = vld [vmem:[%s2047 + $0xb0] sm:$0xff]
      %v2071 = vld [vmem:[%s2047 + $0xb8] sm:$0xff]
      %v2073 = vsel %vm268, %v1984, 0
      %v2076 = vsel %vm268, %v1986, 0
      %v2079 = vsel %vm268, %v1988, 0
      %v2082 = vsel %vm268, %v1990, 0
      %v2085 = vsel %vm268, %v1992, 0
      %v2088 = vsel %vm268, %v1994, 0
      %v2091 = vsel %vm268, %v1996, 0
      %v2094 = vsel %vm268, %v1998, 0
      %v2097 = vsel %vm268, %v2000, 0
      %v2100 = vsel %vm268, %v2002, 0
      %v2103 = vsel %vm268, %v2004, 0
      %v2106 = vsel %vm268, %v2006, 0
      %v2109 = vsel %vm268, %v2008, 0
      %v2112 = vsel %vm268, %v2010, 0
      %v2115 = vsel %vm268, %v2012, 0
      %v2118 = vsel %vm268, %v2014, 0
      %v2121 = vsel %vm268, %v2016, 0
      %v2124 = vsel %vm268, %v2018, 0
      %v2127 = vsel %vm268, %v2020, 0
      %v2130 = vsel %vm268, %v2022, 0
      %v2133 = vsel %vm268, %v2024, 0
      %v2136 = vsel %vm268, %v2026, 0
      %v2139 = vsel %vm268, %v2028, 0
      %v2142 = vsel %vm268, %v2030, 0
      %v2145 = vsel %vm268, %v2032, 0
      %v2148 = vsel %vm268, %v2034, 0
      %v2151 = vsel %vm268, %v2036, 0
      %v2154 = vsel %vm268, %v2038, 0
      %v2157 = vsel %vm268, %v2040, 0
      %v2160 = vsel %vm268, %v2042, 0
      %v2163 = vsel %vm268, %v2044, 0
      %v2166 = vsel %vm268, %v2046, 0
      %2168 = vmatprep.subr.mxu0 0.0
      %2169 = vmatpush1.msra.mxu0 %v2048
      %2170 = vmatprep.subr.mxu0 0.0
      %2171 = vmatpush1.msra.mxu0 %v2049
      %2172 = vmatprep.subr.mxu0 0.0
      %2173 = vmatpush1.msra.mxu0 %v2050
      %2174 = vmatprep.subr.mxu0 0.0
      %2175 = vmatpush1.msra.mxu0 %v2051
      %2176 = vmatprep.subr.mxu0 0.0
      %2177 = vmatpush1.msra.mxu0 %v2052
      %2178 = vmatprep.subr.mxu0 0.0
      %2179 = vmatpush1.msra.mxu0 %v2053
      %2180 = vmatprep.subr.mxu0 0.0
      %2181 = vmatpush1.msra.mxu0 %v2054
      %2182 = vmatprep.subr.mxu0 0.0
      %2183 = vmatpush1.msra.mxu0 %v2055
      %2184 = vmatprep.subr.mxu0 0.0
      %2185 = vmatpush1.msra.mxu0 %v2056
      %2186 = vmatprep.subr.mxu0 0.0
      %2187 = vmatpush1.msra.mxu0 %v2057
      %2188 = vmatprep.subr.mxu0 0.0
      %2189 = vmatpush1.msra.mxu0 %v2058
      %2190 = vmatprep.subr.mxu0 0.0
      %2191 = vmatpush1.msra.mxu0 %v2059
      %2192 = vmatprep.subr.mxu0 0.0
      %2193 = vmatpush1.msra.mxu0 %v2060
      %2194 = vmatprep.subr.mxu0 0.0
      %2195 = vmatpush1.msra.mxu0 %v2061
      %2196 = vmatprep.subr.mxu0 0.0
      %2197 = vmatpush1.msra.mxu0 %v2062
      %2198 = vmatprep.subr.mxu0 0.0
      %2199 = vmatpush1.msra.mxu0 %v2063
      %2200 = vmatprep.subr.mxu0 0.0
      %2201 = vmatpush1.msra.mxu0 %v2064
      %2202 = vmatprep.subr.mxu0 0.0
      %2203 = vmatpush1.msra.mxu0 %v2065
      %2204 = vmatprep.subr.mxu0 0.0
      %2205 = vmatpush1.msra.mxu0 %v2066
      %2206 = vmatprep.subr.mxu0 0.0
      %2207 = vmatpush1.msra.mxu0 %v2067
      %2208 = vmatprep.subr.mxu0 0.0
      %2209 = vmatpush1.msra.mxu0 %v2068
      %2210 = vmatprep.subr.mxu0 0.0
      %2211 = vmatpush1.msra.mxu0 %v2069
      %2212 = vmatprep.subr.mxu0 0.0
      %2213 = vmatpush1.msra.mxu0 %v2070
      %2214 = vmatprep.subr.mxu0 0.0
      %2215 = vmatpush1.msra.mxu0 %v2071
      %2216 = vmatprep.subr.mxu0 0.0
      %2217 = vmatpush1.msra.mxu0 0.0
      %2218 = vmatprep.subr.mxu0 0.0
      %2219 = vmatpush1.msra.mxu0 0.0
      %2220 = vmatprep.subr.mxu0 0.0
      %2221 = vmatpush1.msra.mxu0 0.0
      %2222 = vmatprep.subr.mxu0 0.0
      %2223 = vmatpush1.msra.mxu0 0.0
      %2224 = vmatprep.subr.mxu0 0.0
      %2225 = vmatpush1.msra.mxu0 0.0
      %2226 = vmatprep.subr.mxu0 0.0
      %2227 = vmatpush1.msra.mxu0 0.0
      %2228 = vmatprep.subr.mxu0 0.0
      %2229 = vmatpush1.msra.mxu0 0.0
      %2230 = vmatprep.subr.mxu0 0.0
      %2231 = vmatpush1.msra.mxu0 0.0
      %2232 = vmatprep.mubr.f32.mxu0 %v2073
      %2233 = vmatmul.mubr.f32.gmra.mrb[0].mxu0 %v1983
      %v2234 = vpop.f32.mrb[0].mxu0
      %v2235 = vadd.f32 0.0, %v2234
      %v2236 = vpop.f32.mrb[0].mxu0
      %2237 = vmatprep.mubr.f32.mxu0 %v2076
      %2238 = vmatmul.mubr.f32.gmra.mrb[0].mxu0 %v1985
      %v2239 = vpop.f32.mrb[0].mxu0
      %v2240 = vadd.f32 0.0, %v2239
      %v2241 = vpop.f32.mrb[0].mxu0
      %2242 = vmatprep.mubr.f32.mxu0 %v2079
      %2243 = vmatmul.mubr.f32.gmra.mrb[0].mxu0 %v1987
      %v2244 = vpop.f32.mrb[0].mxu0
      %v2245 = vadd.f32 0.0, %v2244
      %v2246 = vpop.f32.mrb[0].mxu0
      %2247 = vmatprep.mubr.f32.mxu0 %v2082
      %2248 = vmatmul.mubr.f32.gmra.mrb[0].mxu0 %v1989
      %v2249 = vpop.f32.mrb[0].mxu0
      %v2250 = vadd.f32 0.0, %v2249
      %v2251 = vpop.f32.mrb[0].mxu0
      %2252 = vmatprep.mubr.f32.mxu0 %v2085
      %2253 = vmatmul.mubr.f32.gmra.mrb[0].mxu0 %v1991
      %v2254 = vpop.f32.mrb[0].mxu0
      %v2255 = vadd.f32 0.0, %v2254
      %v2256 = vpop.f32.mrb[0].mxu0
      %2257 = vmatprep.mubr.f32.mxu0 %v2088
      %2258 = vmatmul.mubr.f32.gmra.mrb[0].mxu0 %v1993
      %v2259 = vpop.f32.mrb[0].mxu0
      %v2260 = vadd.f32 0.0, %v2259
      %v2261 = vpop.f32.mrb[0].mxu0
      %2262 = vmatprep.mubr.f32.mxu0 %v2091
      %2263 = vmatmul.mubr.f32.gmra.mrb[0].mxu0 %v1995
      %v2264 = vpop.f32.mrb[0].mxu0
      %v2265 = vadd.f32 0.0, %v2264
      %v2266 = vpop.f32.mrb[0].mxu0
      %2267 = vmatprep.mubr.f32.mxu0 %v2094
      %2268 = vmatmul.mubr.f32.gmra.mrb[0].mxu0 %v1997
      %v2269 = vpop.f32.mrb[0].mxu0
      %v2270 = vadd.f32 0.0, %v2269
      %v2271 = vpop.f32.mrb[0].mxu0
      %2272 = vmatprep.mubr.f32.mxu0 %v2097
      %2273 = vmatmul.mubr.f32.gmra.mrb[0].mxu0 %v1999
      %v2274 = vpop.f32.mrb[0].mxu0
      %v2275 = vadd.f32 0.0, %v2274
      %v2276 = vpop.f32.mrb[0].mxu0
      %2277 = vmatprep.mubr.f32.mxu0 %v2100
      %2278 = vmatmul.mubr.f32.gmra.mrb[0].mxu0 %v2001
      %v2279 = vpop.f32.mrb[0].mxu0
      %v2280 = vadd.f32 0.0, %v2279
      %v2281 = vpop.f32.mrb[0].mxu0
      %2282 = vmatprep.mubr.f32.mxu0 %v2103
      %2283 = vmatmul.mubr.f32.gmra.mrb[0].mxu0 %v2003
      %v2284 = vpop.f32.mrb[0].mxu0
      %v2285 = vadd.f32 0.0, %v2284
      %v2286 = vpop.f32.mrb[0].mxu0
      %2287 = vmatprep.mubr.f32.mxu0 %v2106
      %2288 = vmatmul.mubr.f32.gmra.mrb[0].mxu0 %v2005
      %v2289 = vpop.f32.mrb[0].mxu0
      %v2290 = vadd.f32 0.0, %v2289
      %v2291 = vpop.f32.mrb[0].mxu0
      %2292 = vmatprep.mubr.f32.mxu0 %v2109
      %2293 = vmatmul.mubr.f32.gmra.mrb[0].mxu0 %v2007
      %v2294 = vpop.f32.mrb[0].mxu0
      %v2295 = vadd.f32 0.0, %v2294
      %v2296 = vpop.f32.mrb[0].mxu0
      %2297 = vmatprep.mubr.f32.mxu0 %v2112
      %2298 = vmatmul.mubr.f32.gmra.mrb[0].mxu0 %v2009
      %v2299 = vpop.f32.mrb[0].mxu0
      %v2300 = vadd.f32 0.0, %v2299
      %v2301 = vpop.f32.mrb[0].mxu0
      %2302 = vmatprep.mubr.f32.mxu0 %v2115
      %2303 = vmatmul.mubr.f32.gmra.mrb[0].mxu0 %v2011
      %v2304 = vpop.f32.mrb[0].mxu0
      %v2305 = vadd.f32 0.0, %v2304
      %v2306 = vpop.f32.mrb[0].mxu0
      %2307 = vmatprep.mubr.f32.mxu0 %v2118
      %2308 = vmatmul.mubr.f32.gmra.mrb[0].mxu0 %v2013
      %v2309 = vpop.f32.mrb[0].mxu0
      %v2310 = vadd.f32 0.0, %v2309
      %v2311 = vpop.f32.mrb[0].mxu0
      %2312 = vmatprep.mubr.f32.mxu0 %v2121
      %2313 = vmatmul.mubr.f32.gmra.mrb[0].mxu0 %v2015
      %v2314 = vpop.f32.mrb[0].mxu0
      %v2315 = vadd.f32 0.0, %v2314
      %v2316 = vpop.f32.mrb[0].mxu0
      %2317 = vmatprep.mubr.f32.mxu0 %v2124
      %2318 = vmatmul.mubr.f32.gmra.mrb[0].mxu0 %v2017
      %v2319 = vpop.f32.mrb[0].mxu0
      %v2320 = vadd.f32 0.0, %v2319
      %v2321 = vpop.f32.mrb[0].mxu0
      %2322 = vmatprep.mubr.f32.mxu0 %v2127
      %2323 = vmatmul.mubr.f32.gmra.mrb[0].mxu0 %v2019
      %v2324 = vpop.f32.mrb[0].mxu0
      %v2325 = vadd.f32 0.0, %v2324
      %v2326 = vpop.f32.mrb[0].mxu0
      %2327 = vmatprep.mubr.f32.mxu0 %v2130
      %2328 = vmatmul.mubr.f32.gmra.mrb[0].mxu0 %v2021
      %v2329 = vpop.f32.mrb[0].mxu0
      %v2330 = vadd.f32 0.0, %v2329
      %v2331 = vpop.f32.mrb[0].mxu0
      %2332 = vmatprep.mubr.f32.mxu0 %v2133
      %2333 = vmatmul.mubr.f32.gmra.mrb[0].mxu0 %v2023
      %v2334 = vpop.f32.mrb[0].mxu0
      %v2335 = vadd.f32 0.0, %v2334
      %v2336 = vpop.f32.mrb[0].mxu0
      %2337 = vmatprep.mubr.f32.mxu0 %v2136
      %2338 = vmatmul.mubr.f32.gmra.mrb[0].mxu0 %v2025
      %v2339 = vpop.f32.mrb[0].mxu0
      %v2340 = vadd.f32 0.0, %v2339
      %v2341 = vpop.f32.mrb[0].mxu0
      %2342 = vmatprep.mubr.f32.mxu0 %v2139
      %2343 = vmatmul.mubr.f32.gmra.mrb[0].mxu0 %v2027
      %v2344 = vpop.f32.mrb[0].mxu0
      %v2345 = vadd.f32 0.0, %v2344
      %v2346 = vpop.f32.mrb[0].mxu0
      %2347 = vmatprep.mubr.f32.mxu0 %v2142
      %2348 = vmatmul.mubr.f32.gmra.mrb[0].mxu0 %v2029
      %v2349 = vpop.f32.mrb[0].mxu0
      %v2350 = vadd.f32 0.0, %v2349
      %v2351 = vpop.f32.mrb[0].mxu0
      %2352 = vmatprep.mubr.f32.mxu0 %v2145
      %2353 = vmatmul.mubr.f32.gmra.mrb[0].mxu0 %v2031
      %v2354 = vpop.f32.mrb[0].mxu0
      %v2355 = vadd.f32 0.0, %v2354
      %v2356 = vpop.f32.mrb[0].mxu0
      %2357 = vmatprep.mubr.f32.mxu0 %v2148
      %2358 = vmatmul.mubr.f32.gmra.mrb[0].mxu0 %v2033
      %v2359 = vpop.f32.mrb[0].mxu0
      %v2360 = vadd.f32 0.0, %v2359
      %v2361 = vpop.f32.mrb[0].mxu0
      %2362 = vmatprep.mubr.f32.mxu0 %v2151
      %2363 = vmatmul.mubr.f32.gmra.mrb[0].mxu0 %v2035
      %v2364 = vpop.f32.mrb[0].mxu0
      %v2365 = vadd.f32 0.0, %v2364
      %v2366 = vpop.f32.mrb[0].mxu0
      %2367 = vmatprep.mubr.f32.mxu0 %v2154
      %2368 = vmatmul.mubr.f32.gmra.mrb[0].mxu0 %v2037
      %v2369 = vpop.f32.mrb[0].mxu0
      %v2370 = vadd.f32 0.0, %v2369
      %v2371 = vpop.f32.mrb[0].mxu0
      %2372 = vmatprep.mubr.f32.mxu0 %v2157
      %2373 = vmatmul.mubr.f32.gmra.mrb[0].mxu0 %v2039
      %v2374 = vpop.f32.mrb[0].mxu0
      %v2375 = vadd.f32 0.0, %v2374
      %v2376 = vpop.f32.mrb[0].mxu0
      %2377 = vmatprep.mubr.f32.mxu0 %v2160
      %2378 = vmatmul.mubr.f32.gmra.mrb[0].mxu0 %v2041
      %v2379 = vpop.f32.mrb[0].mxu0
      %v2380 = vadd.f32 0.0, %v2379
      %v2381 = vpop.f32.mrb[0].mxu0
      %2382 = vmatprep.mubr.f32.mxu0 %v2163
      %2383 = vmatmul.mubr.f32.gmra.mrb[0].mxu0 %v2043
      %v2384 = vpop.f32.mrb[0].mxu0
      %v2385 = vadd.f32 0.0, %v2384
      %v2386 = vpop.f32.mrb[0].mxu0
      %2387 = vmatprep.mubr.f32.mxu0 %v2166
      %2388 = vmatmul.mubr.f32.gmra.mrb[0].mxu0 %v2045
      %v2389 = vpop.f32.mrb[0].mxu0
      %v2390 = vadd.f32 0.0, %v2389
      %v2391 = vpop.f32.mrb[0].mxu0
      %2392 = vdwg.mxu0
      %v2393 = vld [vmem:[%s260] sm:$0xff]
      %v2394 = vld [vmem:[%s260 + $0x8] sm:$0xff]
      %v2395 = vld [vmem:[%s260 + $0x10] sm:$0xff]
      %v2396 = vld [vmem:[%s260 + $0x18] sm:$0xff]
      %v2397 = vld [vmem:[%s260 + $0x20] sm:$0xff]
      %v2398 = vld [vmem:[%s260 + $0x28] sm:$0xff]
      %v2399 = vld [vmem:[%s260 + $0x30] sm:$0xff]
      %v2400 = vld [vmem:[%s260 + $0x38] sm:$0xff]
      %v2401 = vld [vmem:[%s260 + $0x40] sm:$0xff]
      %v2402 = vld [vmem:[%s260 + $0x48] sm:$0xff]
      %v2403 = vld [vmem:[%s260 + $0x50] sm:$0xff]
      %v2404 = vld [vmem:[%s260 + $0x58] sm:$0xff]
      %v2405 = vld [vmem:[%s260 + $0x60] sm:$0xff]
      %v2406 = vld [vmem:[%s260 + $0x68] sm:$0xff]
      %v2407 = vld [vmem:[%s260 + $0x70] sm:$0xff]
      %v2408 = vld [vmem:[%s260 + $0x78] sm:$0xff]
      %v2409 = vld [vmem:[%s260 + $0x80] sm:$0xff]
      %v2410 = vld [vmem:[%s260 + $0x88] sm:$0xff]
      %v2411 = vld [vmem:[%s260 + $0x90] sm:$0xff]
      %v2412 = vld [vmem:[%s260 + $0x98] sm:$0xff]
      %v2413 = vld [vmem:[%s260 + $0xa0] sm:$0xff]
      %v2414 = vld [vmem:[%s260 + $0xa8] sm:$0xff]
      %v2415 = vld [vmem:[%s260 + $0xb0] sm:$0xff]
      %v2416 = vld [vmem:[%s260 + $0xb8] sm:$0xff]
      %v2417 = vld [vmem:[%s260 + $0xc0] sm:$0xff]
      %v2418 = vld [vmem:[%s260 + $0xc8] sm:$0xff]
      %v2419 = vld [vmem:[%s260 + $0xd0] sm:$0xff]
      %v2420 = vld [vmem:[%s260 + $0xd8] sm:$0xff]
      %v2421 = vld [vmem:[%s260 + $0xe0] sm:$0xff]
      %v2422 = vld [vmem:[%s260 + $0xe8] sm:$0xff]
      %v2423 = vld [vmem:[%s260 + $0xf0] sm:$0xff]
      %v2424 = vld [vmem:[%s260 + $0xf8] sm:$0xff]
      %v2425 = vadd.f32 %v2393, %v2235
      %v2426 = vadd.f32 %v2394, %v2240
      %v2427 = vadd.f32 %v2395, %v2245
      %v2428 = vadd.f32 %v2396, %v2250
      %v2429 = vadd.f32 %v2397, %v2255
      %v2430 = vadd.f32 %v2398, %v2260
      %v2431 = vadd.f32 %v2399, %v2265
      %v2432 = vadd.f32 %v2400, %v2270
      %v2433 = vadd.f32 %v2401, %v2275
      %v2434 = vadd.f32 %v2402, %v2280
      %v2435 = vadd.f32 %v2403, %v2285
      %v2436 = vadd.f32 %v2404, %v2290
      %v2437 = vadd.f32 %v2405, %v2295
      %v2438 = vadd.f32 %v2406, %v2300
      %v2439 = vadd.f32 %v2407, %v2305
      %v2440 = vadd.f32 %v2408, %v2310
      %v2441 = vadd.f32 %v2409, %v2315
      %v2442 = vadd.f32 %v2410, %v2320
      %v2443 = vadd.f32 %v2411, %v2325
      %v2444 = vadd.f32 %v2412, %v2330
      %v2445 = vadd.f32 %v2413, %v2335
      %v2446 = vadd.f32 %v2414, %v2340
      %v2447 = vadd.f32 %v2415, %v2345
      %v2448 = vadd.f32 %v2416, %v2350
      %v2449 = vadd.f32 %v2417, %v2355
      %v2450 = vadd.f32 %v2418, %v2360
      %v2451 = vadd.f32 %v2419, %v2365
      %v2452 = vadd.f32 %v2420, %v2370
      %v2453 = vadd.f32 %v2421, %v2375
      %v2454 = vadd.f32 %v2422, %v2380
      %v2455 = vadd.f32 %v2423, %v2385
      %v2456 = vadd.f32 %v2424, %v2390
      %2457 = vst.msk [vmem:[%s260] sm:$0xff] %vm268, %v2425
      %2458 = vst.msk [vmem:[%s260 + $0x8] sm:$0xff] %vm268, %v2426
      %2459 = vst.msk [vmem:[%s260 + $0x10] sm:$0xff] %vm268, %v2427
      %2460 = vst.msk [vmem:[%s260 + $0x18] sm:$0xff] %vm268, %v2428
      %2461 = vst.msk [vmem:[%s260 + $0x20] sm:$0xff] %vm268, %v2429
      %2462 = vst.msk [vmem:[%s260 + $0x28] sm:$0xff] %vm268, %v2430
      %2463 = vst.msk [vmem:[%s260 + $0x30] sm:$0xff] %vm268, %v2431
      %2464 = vst.msk [vmem:[%s260 + $0x38] sm:$0xff] %vm268, %v2432
      %2465 = vst.msk [vmem:[%s260 + $0x40] sm:$0xff] %vm268, %v2433
      %2466 = vst.msk [vmem:[%s260 + $0x48] sm:$0xff] %vm268, %v2434
      %2467 = vst.msk [vmem:[%s260 + $0x50] sm:$0xff] %vm268, %v2435
      %2468 = vst.msk [vmem:[%s260 + $0x58] sm:$0xff] %vm268, %v2436
      %2469 = vst.msk [vmem:[%s260 + $0x60] sm:$0xff] %vm268, %v2437
      %2470 = vst.msk [vmem:[%s260 + $0x68] sm:$0xff] %vm268, %v2438
      %2471 = vst.msk [vmem:[%s260 + $0x70] sm:$0xff] %vm268, %v2439
      %2472 = vst.msk [vmem:[%s260 + $0x78] sm:$0xff] %vm268, %v2440
      %2473 = vst.msk [vmem:[%s260 + $0x80] sm:$0xff] %vm268, %v2441
      %2474 = vst.msk [vmem:[%s260 + $0x88] sm:$0xff] %vm268, %v2442
      %2475 = vst.msk [vmem:[%s260 + $0x90] sm:$0xff] %vm268, %v2443
      %2476 = vst.msk [vmem:[%s260 + $0x98] sm:$0xff] %vm268, %v2444
      %2477 = vst.msk [vmem:[%s260 + $0xa0] sm:$0xff] %vm268, %v2445
      %2478 = vst.msk [vmem:[%s260 + $0xa8] sm:$0xff] %vm268, %v2446
      %2479 = vst.msk [vmem:[%s260 + $0xb0] sm:$0xff] %vm268, %v2447
      %2480 = vst.msk [vmem:[%s260 + $0xb8] sm:$0xff] %vm268, %v2448
      %2481 = vst.msk [vmem:[%s260 + $0xc0] sm:$0xff] %vm268, %v2449
      %2482 = vst.msk [vmem:[%s260 + $0xc8] sm:$0xff] %vm268, %v2450
      %2483 = vst.msk [vmem:[%s260 + $0xd0] sm:$0xff] %vm268, %v2451
      %2484 = vst.msk [vmem:[%s260 + $0xd8] sm:$0xff] %vm268, %v2452
      %2485 = vst.msk [vmem:[%s260 + $0xe0] sm:$0xff] %vm268, %v2453
      %2486 = vst.msk [vmem:[%s260 + $0xe8] sm:$0xff] %vm268, %v2454
      %2487 = vst.msk [vmem:[%s260 + $0xf0] sm:$0xff] %vm268, %v2455
      %2488 = vst.msk [vmem:[%s260 + $0xf8] sm:$0xff] %vm268, %v2456
      %v2489 = vld [vmem:[#allocation2 + $0x40] sm:$0xff]
      %v2490 = vld [vmem:[#allocation2 + $0x48] sm:$0xff]
      %v2491 = vld [vmem:[#allocation2 + $0x50] sm:$0xff]
      %v2492 = vld [vmem:[#allocation2 + $0x58] sm:$0xff]
      %v2493 = vld [vmem:[#allocation2 + $0x60] sm:$0xff]
      %v2494 = vld [vmem:[#allocation2 + $0x68] sm:$0xff]
      %v2495 = vld [vmem:[#allocation2 + $0x70] sm:$0xff]
      %v2496 = vld [vmem:[#allocation2 + $0x78] sm:$0xff]
      %v2497 = vld [vmem:[#allocation2 + $0x80] sm:$0xff]
      %v2498 = vld [vmem:[#allocation2 + $0x88] sm:$0xff]
      %v2499 = vld [vmem:[#allocation2 + $0x90] sm:$0xff]
      %v2500 = vld [vmem:[#allocation2 + $0x98] sm:$0xff]
      %v2501 = vld [vmem:[#allocation2 + $0xa0] sm:$0xff]
      %v2502 = vld [vmem:[#allocation2 + $0xa8] sm:$0xff]
      %v2503 = vld [vmem:[#allocation2 + $0xb0] sm:$0xff]
      %v2504 = vld [vmem:[#allocation2 + $0xb8] sm:$0xff]
      %v2505 = vld [vmem:[#allocation2 + $0xc0] sm:$0xff]
      %v2506 = vld [vmem:[#allocation2 + $0xc8] sm:$0xff]
      %v2507 = vld [vmem:[#allocation2 + $0xd0] sm:$0xff]
      %v2508 = vld [vmem:[#allocation2 + $0xd8] sm:$0xff]
      %v2509 = vld [vmem:[#allocation2 + $0xe0] sm:$0xff]
      %v2510 = vld [vmem:[#allocation2 + $0xe8] sm:$0xff]
      %v2511 = vld [vmem:[#allocation2 + $0xf0] sm:$0xff]
      %v2512 = vld [vmem:[#allocation2 + $0xf8] sm:$0xff]
      %v2513 = vld [vmem:[#allocation2 + $0x100] sm:$0xff]
      %v2514 = vld [vmem:[#allocation2 + $0x108] sm:$0xff]
      %v2515 = vld [vmem:[#allocation2 + $0x110] sm:$0xff]
      %v2516 = vld [vmem:[#allocation2 + $0x118] sm:$0xff]
      %v2517 = vld [vmem:[#allocation2 + $0x120] sm:$0xff]
      %v2518 = vld [vmem:[#allocation2 + $0x128] sm:$0xff]
      %v2519 = vld [vmem:[#allocation2 + $0x130] sm:$0xff]
      %v2520 = vld [vmem:[#allocation2 + $0x138] sm:$0xff]
      %v2521 = vld [vmem:[#allocation2 + $0x140] sm:$0xff]
      %v2522 = vld [vmem:[#allocation2 + $0x148] sm:$0xff]
      %v2523 = vld [vmem:[#allocation2 + $0x150] sm:$0xff]
      %v2524 = vld [vmem:[#allocation2 + $0x158] sm:$0xff]
      %v2525 = vld [vmem:[#allocation2 + $0x160] sm:$0xff]
      %v2526 = vld [vmem:[#allocation2 + $0x168] sm:$0xff]
      %v2527 = vld [vmem:[#allocation2 + $0x170] sm:$0xff]
      %v2528 = vld [vmem:[#allocation2 + $0x178] sm:$0xff]
      %v2529 = vld [vmem:[#allocation2 + $0x180] sm:$0xff]
      %v2530 = vld [vmem:[#allocation2 + $0x188] sm:$0xff]
      %v2531 = vld [vmem:[#allocation2 + $0x190] sm:$0xff]
      %v2532 = vld [vmem:[#allocation2 + $0x198] sm:$0xff]
      %v2533 = vld [vmem:[#allocation2 + $0x1a0] sm:$0xff]
      %v2534 = vld [vmem:[#allocation2 + $0x1a8] sm:$0xff]
      %v2535 = vld [vmem:[#allocation2 + $0x1b0] sm:$0xff]
      %v2536 = vld [vmem:[#allocation2 + $0x1b8] sm:$0xff]
      %v2537 = vld [vmem:[#allocation2 + $0x1c0] sm:$0xff]
      %v2538 = vld [vmem:[#allocation2 + $0x1c8] sm:$0xff]
      %v2539 = vld [vmem:[#allocation2 + $0x1d0] sm:$0xff]
      %v2540 = vld [vmem:[#allocation2 + $0x1d8] sm:$0xff]
      %v2541 = vld [vmem:[#allocation2 + $0x1e0] sm:$0xff]
      %v2542 = vld [vmem:[#allocation2 + $0x1e8] sm:$0xff]
      %v2543 = vld [vmem:[#allocation2 + $0x1f0] sm:$0xff]
      %v2544 = vld [vmem:[#allocation2 + $0x1f8] sm:$0xff]
      %v2545 = vld [vmem:[#allocation2 + $0x200] sm:$0xff]
      %v2546 = vld [vmem:[#allocation2 + $0x208] sm:$0xff]
      %v2547 = vld [vmem:[#allocation2 + $0x210] sm:$0xff]
      %v2548 = vld [vmem:[#allocation2 + $0x218] sm:$0xff]
      %v2549 = vld [vmem:[#allocation2 + $0x220] sm:$0xff]
      %v2550 = vld [vmem:[#allocation2 + $0x228] sm:$0xff]
      %v2551 = vld [vmem:[#allocation2 + $0x230] sm:$0xff]
      %v2552 = vld [vmem:[#allocation2 + $0x238] sm:$0xff]
      %s2553 = scalar_lea.vmem %s4, 384
      %v2554 = vld [vmem:[%s2553] sm:$0xff]
      %v2555 = vld [vmem:[%s2553 + $0x8] sm:$0xff]
      %v2556 = vld [vmem:[%s2553 + $0x10] sm:$0xff]
      %v2557 = vld [vmem:[%s2553 + $0x18] sm:$0xff]
      %v2558 = vld [vmem:[%s2553 + $0x20] sm:$0xff]
      %v2559 = vld [vmem:[%s2553 + $0x28] sm:$0xff]
      %v2560 = vld [vmem:[%s2553 + $0x30] sm:$0xff]
      %v2561 = vld [vmem:[%s2553 + $0x38] sm:$0xff]
      %v2562 = vld [vmem:[%s2553 + $0x40] sm:$0xff]
      %v2563 = vld [vmem:[%s2553 + $0x48] sm:$0xff]
      %v2564 = vld [vmem:[%s2553 + $0x50] sm:$0xff]
      %v2565 = vld [vmem:[%s2553 + $0x58] sm:$0xff]
      %v2566 = vld [vmem:[%s2553 + $0x60] sm:$0xff]
      %v2567 = vld [vmem:[%s2553 + $0x68] sm:$0xff]
      %v2568 = vld [vmem:[%s2553 + $0x70] sm:$0xff]
      %v2569 = vld [vmem:[%s2553 + $0x78] sm:$0xff]
      %v2570 = vld [vmem:[%s2553 + $0x80] sm:$0xff]
      %v2571 = vld [vmem:[%s2553 + $0x88] sm:$0xff]
      %v2572 = vld [vmem:[%s2553 + $0x90] sm:$0xff]
      %v2573 = vld [vmem:[%s2553 + $0x98] sm:$0xff]
      %v2574 = vld [vmem:[%s2553 + $0xa0] sm:$0xff]
      %v2575 = vld [vmem:[%s2553 + $0xa8] sm:$0xff]
      %v2576 = vld [vmem:[%s2553 + $0xb0] sm:$0xff]
      %v2577 = vld [vmem:[%s2553 + $0xb8] sm:$0xff]
      %v2579 = vsel %vm268, %v2490, 0
      %v2582 = vsel %vm268, %v2492, 0
      %v2585 = vsel %vm268, %v2494, 0
      %v2588 = vsel %vm268, %v2496, 0
      %v2591 = vsel %vm268, %v2498, 0
      %v2594 = vsel %vm268, %v2500, 0
      %v2597 = vsel %vm268, %v2502, 0
      %v2600 = vsel %vm268, %v2504, 0
      %v2603 = vsel %vm268, %v2506, 0
      %v2606 = vsel %vm268, %v2508, 0
      %v2609 = vsel %vm268, %v2510, 0
      %v2612 = vsel %vm268, %v2512, 0
      %v2615 = vsel %vm268, %v2514, 0
      %v2618 = vsel %vm268, %v2516, 0
      %v2621 = vsel %vm268, %v2518, 0
      %v2624 = vsel %vm268, %v2520, 0
      %v2627 = vsel %vm268, %v2522, 0
      %v2630 = vsel %vm268, %v2524, 0
      %v2633 = vsel %vm268, %v2526, 0
      %v2636 = vsel %vm268, %v2528, 0
      %v2639 = vsel %vm268, %v2530, 0
      %v2642 = vsel %vm268, %v2532, 0
      %v2645 = vsel %vm268, %v2534, 0
      %v2648 = vsel %vm268, %v2536, 0
      %v2651 = vsel %vm268, %v2538, 0
      %v2654 = vsel %vm268, %v2540, 0
      %v2657 = vsel %vm268, %v2542, 0
      %v2660 = vsel %vm268, %v2544, 0
      %v2663 = vsel %vm268, %v2546, 0
      %v2666 = vsel %vm268, %v2548, 0
      %v2669 = vsel %vm268, %v2550, 0
      %v2672 = vsel %vm268, %v2552, 0
      %2674 = vmatprep.subr.mxu0 0.0
      %2675 = vmatpush1.msra.mxu0 %v2554
      %2676 = vmatprep.subr.mxu0 0.0
      %2677 = vmatpush1.msra.mxu0 %v2555
      %2678 = vmatprep.subr.mxu0 0.0
      %2679 = vmatpush1.msra.mxu0 %v2556
      %2680 = vmatprep.subr.mxu0 0.0
      %2681 = vmatpush1.msra.mxu0 %v2557
      %2682 = vmatprep.subr.mxu0 0.0
      %2683 = vmatpush1.msra.mxu0 %v2558
      %2684 = vmatprep.subr.mxu0 0.0
      %2685 = vmatpush1.msra.mxu0 %v2559
      %2686 = vmatprep.subr.mxu0 0.0
      %2687 = vmatpush1.msra.mxu0 %v2560
      %2688 = vmatprep.subr.mxu0 0.0
      %2689 = vmatpush1.msra.mxu0 %v2561
      %2690 = vmatprep.subr.mxu0 0.0
      %2691 = vmatpush1.msra.mxu0 %v2562
      %2692 = vmatprep.subr.mxu0 0.0
      %2693 = vmatpush1.msra.mxu0 %v2563
      %2694 = vmatprep.subr.mxu0 0.0
      %2695 = vmatpush1.msra.mxu0 %v2564
      %2696 = vmatprep.subr.mxu0 0.0
      %2697 = vmatpush1.msra.mxu0 %v2565
      %2698 = vmatprep.subr.mxu0 0.0
      %2699 = vmatpush1.msra.mxu0 %v2566
      %2700 = vmatprep.subr.mxu0 0.0
      %2701 = vmatpush1.msra.mxu0 %v2567
      %2702 = vmatprep.subr.mxu0 0.0
      %2703 = vmatpush1.msra.mxu0 %v2568
      %2704 = vmatprep.subr.mxu0 0.0
      %2705 = vmatpush1.msra.mxu0 %v2569
      %2706 = vmatprep.subr.mxu0 0.0
      %2707 = vmatpush1.msra.mxu0 %v2570
      %2708 = vmatprep.subr.mxu0 0.0
      %2709 = vmatpush1.msra.mxu0 %v2571
      %2710 = vmatprep.subr.mxu0 0.0
      %2711 = vmatpush1.msra.mxu0 %v2572
      %2712 = vmatprep.subr.mxu0 0.0
      %2713 = vmatpush1.msra.mxu0 %v2573
      %2714 = vmatprep.subr.mxu0 0.0
      %2715 = vmatpush1.msra.mxu0 %v2574
      %2716 = vmatprep.subr.mxu0 0.0
      %2717 = vmatpush1.msra.mxu0 %v2575
      %2718 = vmatprep.subr.mxu0 0.0
      %2719 = vmatpush1.msra.mxu0 %v2576
      %2720 = vmatprep.subr.mxu0 0.0
      %2721 = vmatpush1.msra.mxu0 %v2577
      %2722 = vmatprep.subr.mxu0 0.0
      %2723 = vmatpush1.msra.mxu0 0.0
      %2724 = vmatprep.subr.mxu0 0.0
      %2725 = vmatpush1.msra.mxu0 0.0
      %2726 = vmatprep.subr.mxu0 0.0
      %2727 = vmatpush1.msra.mxu0 0.0
      %2728 = vmatprep.subr.mxu0 0.0
      %2729 = vmatpush1.msra.mxu0 0.0
      %2730 = vmatprep.subr.mxu0 0.0
      %2731 = vmatpush1.msra.mxu0 0.0
      %2732 = vmatprep.subr.mxu0 0.0
      %2733 = vmatpush1.msra.mxu0 0.0
      %2734 = vmatprep.subr.mxu0 0.0
      %2735 = vmatpush1.msra.mxu0 0.0
      %2736 = vmatprep.subr.mxu0 0.0
      %2737 = vmatpush1.msra.mxu0 0.0
      %2738 = vmatprep.mubr.f32.mxu0 %v2579
      %2739 = vmatmul.mubr.f32.gmra.mrb[0].mxu0 %v2489
      %v2740 = vpop.f32.mrb[0].mxu0
      %v2741 = vadd.f32 0.0, %v2740
      %v2742 = vpop.f32.mrb[0].mxu0
      %2743 = vmatprep.mubr.f32.mxu0 %v2582
      %2744 = vmatmul.mubr.f32.gmra.mrb[0].mxu0 %v2491
      %v2745 = vpop.f32.mrb[0].mxu0
      %v2746 = vadd.f32 0.0, %v2745
      %v2747 = vpop.f32.mrb[0].mxu0
      %2748 = vmatprep.mubr.f32.mxu0 %v2585
      %2749 = vmatmul.mubr.f32.gmra.mrb[0].mxu0 %v2493
      %v2750 = vpop.f32.mrb[0].mxu0
      %v2751 = vadd.f32 0.0, %v2750
      %v2752 = vpop.f32.mrb[0].mxu0
      %2753 = vmatprep.mubr.f32.mxu0 %v2588
      %2754 = vmatmul.mubr.f32.gmra.mrb[0].mxu0 %v2495
      %v2755 = vpop.f32.mrb[0].mxu0
      %v2756 = vadd.f32 0.0, %v2755
      %v2757 = vpop.f32.mrb[0].mxu0
      %2758 = vmatprep.mubr.f32.mxu0 %v2591
      %2759 = vmatmul.mubr.f32.gmra.mrb[0].mxu0 %v2497
      %v2760 = vpop.f32.mrb[0].mxu0
      %v2761 = vadd.f32 0.0, %v2760
      %v2762 = vpop.f32.mrb[0].mxu0
      %2763 = vmatprep.mubr.f32.mxu0 %v2594
      %2764 = vmatmul.mubr.f32.gmra.mrb[0].mxu0 %v2499
      %v2765 = vpop.f32.mrb[0].mxu0
      %v2766 = vadd.f32 0.0, %v2765
      %v2767 = vpop.f32.mrb[0].mxu0
      %2768 = vmatprep.mubr.f32.mxu0 %v2597
      %2769 = vmatmul.mubr.f32.gmra.mrb[0].mxu0 %v2501
      %v2770 = vpop.f32.mrb[0].mxu0
      %v2771 = vadd.f32 0.0, %v2770
      %v2772 = vpop.f32.mrb[0].mxu0
      %2773 = vmatprep.mubr.f32.mxu0 %v2600
      %2774 = vmatmul.mubr.f32.gmra.mrb[0].mxu0 %v2503
      %v2775 = vpop.f32.mrb[0].mxu0
      %v2776 = vadd.f32 0.0, %v2775
      %v2777 = vpop.f32.mrb[0].mxu0
      %2778 = vmatprep.mubr.f32.mxu0 %v2603
      %2779 = vmatmul.mubr.f32.gmra.mrb[0].mxu0 %v2505
      %v2780 = vpop.f32.mrb[0].mxu0
      %v2781 = vadd.f32 0.0, %v2780
      %v2782 = vpop.f32.mrb[0].mxu0
      %2783 = vmatprep.mubr.f32.mxu0 %v2606
      %2784 = vmatmul.mubr.f32.gmra.mrb[0].mxu0 %v2507
      %v2785 = vpop.f32.mrb[0].mxu0
      %v2786 = vadd.f32 0.0, %v2785
      %v2787 = vpop.f32.mrb[0].mxu0
      %2788 = vmatprep.mubr.f32.mxu0 %v2609
      %2789 = vmatmul.mubr.f32.gmra.mrb[0].mxu0 %v2509
      %v2790 = vpop.f32.mrb[0].mxu0
      %v2791 = vadd.f32 0.0, %v2790
      %v2792 = vpop.f32.mrb[0].mxu0
      %2793 = vmatprep.mubr.f32.mxu0 %v2612
      %2794 = vmatmul.mubr.f32.gmra.mrb[0].mxu0 %v2511
      %v2795 = vpop.f32.mrb[0].mxu0
      %v2796 = vadd.f32 0.0, %v2795
      %v2797 = vpop.f32.mrb[0].mxu0
      %2798 = vmatprep.mubr.f32.mxu0 %v2615
      %2799 = vmatmul.mubr.f32.gmra.mrb[0].mxu0 %v2513
      %v2800 = vpop.f32.mrb[0].mxu0
      %v2801 = vadd.f32 0.0, %v2800
      %v2802 = vpop.f32.mrb[0].mxu0
      %2803 = vmatprep.mubr.f32.mxu0 %v2618
      %2804 = vmatmul.mubr.f32.gmra.mrb[0].mxu0 %v2515
      %v2805 = vpop.f32.mrb[0].mxu0
      %v2806 = vadd.f32 0.0, %v2805
      %v2807 = vpop.f32.mrb[0].mxu0
      %2808 = vmatprep.mubr.f32.mxu0 %v2621
      %2809 = vmatmul.mubr.f32.gmra.mrb[0].mxu0 %v2517
      %v2810 = vpop.f32.mrb[0].mxu0
      %v2811 = vadd.f32 0.0, %v2810
      %v2812 = vpop.f32.mrb[0].mxu0
      %2813 = vmatprep.mubr.f32.mxu0 %v2624
      %2814 = vmatmul.mubr.f32.gmra.mrb[0].mxu0 %v2519
      %v2815 = vpop.f32.mrb[0].mxu0
      %v2816 = vadd.f32 0.0, %v2815
      %v2817 = vpop.f32.mrb[0].mxu0
      %2818 = vmatprep.mubr.f32.mxu0 %v2627
      %2819 = vmatmul.mubr.f32.gmra.mrb[0].mxu0 %v2521
      %v2820 = vpop.f32.mrb[0].mxu0
      %v2821 = vadd.f32 0.0, %v2820
      %v2822 = vpop.f32.mrb[0].mxu0
      %2823 = vmatprep.mubr.f32.mxu0 %v2630
      %2824 = vmatmul.mubr.f32.gmra.mrb[0].mxu0 %v2523
      %v2825 = vpop.f32.mrb[0].mxu0
      %v2826 = vadd.f32 0.0, %v2825
      %v2827 = vpop.f32.mrb[0].mxu0
      %2828 = vmatprep.mubr.f32.mxu0 %v2633
      %2829 = vmatmul.mubr.f32.gmra.mrb[0].mxu0 %v2525
      %v2830 = vpop.f32.mrb[0].mxu0
      %v2831 = vadd.f32 0.0, %v2830
      %v2832 = vpop.f32.mrb[0].mxu0
      %2833 = vmatprep.mubr.f32.mxu0 %v2636
      %2834 = vmatmul.mubr.f32.gmra.mrb[0].mxu0 %v2527
      %v2835 = vpop.f32.mrb[0].mxu0
      %v2836 = vadd.f32 0.0, %v2835
      %v2837 = vpop.f32.mrb[0].mxu0
      %2838 = vmatprep.mubr.f32.mxu0 %v2639
      %2839 = vmatmul.mubr.f32.gmra.mrb[0].mxu0 %v2529
      %v2840 = vpop.f32.mrb[0].mxu0
      %v2841 = vadd.f32 0.0, %v2840
      %v2842 = vpop.f32.mrb[0].mxu0
      %2843 = vmatprep.mubr.f32.mxu0 %v2642
      %2844 = vmatmul.mubr.f32.gmra.mrb[0].mxu0 %v2531
      %v2845 = vpop.f32.mrb[0].mxu0
      %v2846 = vadd.f32 0.0, %v2845
      %v2847 = vpop.f32.mrb[0].mxu0
      %2848 = vmatprep.mubr.f32.mxu0 %v2645
      %2849 = vmatmul.mubr.f32.gmra.mrb[0].mxu0 %v2533
      %v2850 = vpop.f32.mrb[0].mxu0
      %v2851 = vadd.f32 0.0, %v2850
      %v2852 = vpop.f32.mrb[0].mxu0
      %2853 = vmatprep.mubr.f32.mxu0 %v2648
      %2854 = vmatmul.mubr.f32.gmra.mrb[0].mxu0 %v2535
      %v2855 = vpop.f32.mrb[0].mxu0
      %v2856 = vadd.f32 0.0, %v2855
      %v2857 = vpop.f32.mrb[0].mxu0
      %2858 = vmatprep.mubr.f32.mxu0 %v2651
      %2859 = vmatmul.mubr.f32.gmra.mrb[0].mxu0 %v2537
      %v2860 = vpop.f32.mrb[0].mxu0
      %v2861 = vadd.f32 0.0, %v2860
      %v2862 = vpop.f32.mrb[0].mxu0
      %2863 = vmatprep.mubr.f32.mxu0 %v2654
      %2864 = vmatmul.mubr.f32.gmra.mrb[0].mxu0 %v2539
      %v2865 = vpop.f32.mrb[0].mxu0
      %v2866 = vadd.f32 0.0, %v2865
      %v2867 = vpop.f32.mrb[0].mxu0
      %2868 = vmatprep.mubr.f32.mxu0 %v2657
      %2869 = vmatmul.mubr.f32.gmra.mrb[0].mxu0 %v2541
      %v2870 = vpop.f32.mrb[0].mxu0
      %v2871 = vadd.f32 0.0, %v2870
      %v2872 = vpop.f32.mrb[0].mxu0
      %2873 = vmatprep.mubr.f32.mxu0 %v2660
      %2874 = vmatmul.mubr.f32.gmra.mrb[0].mxu0 %v2543
      %v2875 = vpop.f32.mrb[0].mxu0
      %v2876 = vadd.f32 0.0, %v2875
      %v2877 = vpop.f32.mrb[0].mxu0
      %2878 = vmatprep.mubr.f32.mxu0 %v2663
      %2879 = vmatmul.mubr.f32.gmra.mrb[0].mxu0 %v2545
      %v2880 = vpop.f32.mrb[0].mxu0
      %v2881 = vadd.f32 0.0, %v2880
      %v2882 = vpop.f32.mrb[0].mxu0
      %2883 = vmatprep.mubr.f32.mxu0 %v2666
      %2884 = vmatmul.mubr.f32.gmra.mrb[0].mxu0 %v2547
      %v2885 = vpop.f32.mrb[0].mxu0
      %v2886 = vadd.f32 0.0, %v2885
      %v2887 = vpop.f32.mrb[0].mxu0
      %2888 = vmatprep.mubr.f32.mxu0 %v2669
      %2889 = vmatmul.mubr.f32.gmra.mrb[0].mxu0 %v2549
      %v2890 = vpop.f32.mrb[0].mxu0
      %v2891 = vadd.f32 0.0, %v2890
      %v2892 = vpop.f32.mrb[0].mxu0
      %2893 = vmatprep.mubr.f32.mxu0 %v2672
      %2894 = vmatmul.mubr.f32.gmra.mrb[0].mxu0 %v2551
      %v2895 = vpop.f32.mrb[0].mxu0
      %v2896 = vadd.f32 0.0, %v2895
      %v2897 = vpop.f32.mrb[0].mxu0
      %2898 = vdwg.mxu0
      %v2899 = vld [vmem:[%s260] sm:$0xff]
      %v2900 = vld [vmem:[%s260 + $0x8] sm:$0xff]
      %v2901 = vld [vmem:[%s260 + $0x10] sm:$0xff]
      %v2902 = vld [vmem:[%s260 + $0x18] sm:$0xff]
      %v2903 = vld [vmem:[%s260 + $0x20] sm:$0xff]
      %v2904 = vld [vmem:[%s260 + $0x28] sm:$0xff]
      %v2905 = vld [vmem:[%s260 + $0x30] sm:$0xff]
      %v2906 = vld [vmem:[%s260 + $0x38] sm:$0xff]
      %v2907 = vld [vmem:[%s260 + $0x40] sm:$0xff]
      %v2908 = vld [vmem:[%s260 + $0x48] sm:$0xff]
      %v2909 = vld [vmem:[%s260 + $0x50] sm:$0xff]
      %v2910 = vld [vmem:[%s260 + $0x58] sm:$0xff]
      %v2911 = vld [vmem:[%s260 + $0x60] sm:$0xff]
      %v2912 = vld [vmem:[%s260 + $0x68] sm:$0xff]
      %v2913 = vld [vmem:[%s260 + $0x70] sm:$0xff]
      %v2914 = vld [vmem:[%s260 + $0x78] sm:$0xff]
      %v2915 = vld [vmem:[%s260 + $0x80] sm:$0xff]
      %v2916 = vld [vmem:[%s260 + $0x88] sm:$0xff]
      %v2917 = vld [vmem:[%s260 + $0x90] sm:$0xff]
      %v2918 = vld [vmem:[%s260 + $0x98] sm:$0xff]
      %v2919 = vld [vmem:[%s260 + $0xa0] sm:$0xff]
      %v2920 = vld [vmem:[%s260 + $0xa8] sm:$0xff]
      %v2921 = vld [vmem:[%s260 + $0xb0] sm:$0xff]
      %v2922 = vld [vmem:[%s260 + $0xb8] sm:$0xff]
      %v2923 = vld [vmem:[%s260 + $0xc0] sm:$0xff]
      %v2924 = vld [vmem:[%s260 + $0xc8] sm:$0xff]
      %v2925 = vld [vmem:[%s260 + $0xd0] sm:$0xff]
      %v2926 = vld [vmem:[%s260 + $0xd8] sm:$0xff]
      %v2927 = vld [vmem:[%s260 + $0xe0] sm:$0xff]
      %v2928 = vld [vmem:[%s260 + $0xe8] sm:$0xff]
      %v2929 = vld [vmem:[%s260 + $0xf0] sm:$0xff]
      %v2930 = vld [vmem:[%s260 + $0xf8] sm:$0xff]
      %v2931 = vadd.f32 %v2899, %v2741
      %v2932 = vadd.f32 %v2900, %v2746
      %v2933 = vadd.f32 %v2901, %v2751
      %v2934 = vadd.f32 %v2902, %v2756
      %v2935 = vadd.f32 %v2903, %v2761
      %v2936 = vadd.f32 %v2904, %v2766
      %v2937 = vadd.f32 %v2905, %v2771
      %v2938 = vadd.f32 %v2906, %v2776
      %v2939 = vadd.f32 %v2907, %v2781
      %v2940 = vadd.f32 %v2908, %v2786
      %v2941 = vadd.f32 %v2909, %v2791
      %v2942 = vadd.f32 %v2910, %v2796
      %v2943 = vadd.f32 %v2911, %v2801
      %v2944 = vadd.f32 %v2912, %v2806
      %v2945 = vadd.f32 %v2913, %v2811
      %v2946 = vadd.f32 %v2914, %v2816
      %v2947 = vadd.f32 %v2915, %v2821
      %v2948 = vadd.f32 %v2916, %v2826
      %v2949 = vadd.f32 %v2917, %v2831
      %v2950 = vadd.f32 %v2918, %v2836
      %v2951 = vadd.f32 %v2919, %v2841
      %v2952 = vadd.f32 %v2920, %v2846
      %v2953 = vadd.f32 %v2921, %v2851
      %v2954 = vadd.f32 %v2922, %v2856
      %v2955 = vadd.f32 %v2923, %v2861
      %v2956 = vadd.f32 %v2924, %v2866
      %v2957 = vadd.f32 %v2925, %v2871
      %v2958 = vadd.f32 %v2926, %v2876
      %v2959 = vadd.f32 %v2927, %v2881
      %v2960 = vadd.f32 %v2928, %v2886
      %v2961 = vadd.f32 %v2929, %v2891
      %v2962 = vadd.f32 %v2930, %v2896
      %2963 = vst.msk [vmem:[%s260] sm:$0xff] %vm268, %v2931
      %2964 = vst.msk [vmem:[%s260 + $0x8] sm:$0xff] %vm268, %v2932
      %2965 = vst.msk [vmem:[%s260 + $0x10] sm:$0xff] %vm268, %v2933
      %2966 = vst.msk [vmem:[%s260 + $0x18] sm:$0xff] %vm268, %v2934
      %2967 = vst.msk [vmem:[%s260 + $0x20] sm:$0xff] %vm268, %v2935
      %2968 = vst.msk [vmem:[%s260 + $0x28] sm:$0xff] %vm268, %v2936
      %2969 = vst.msk [vmem:[%s260 + $0x30] sm:$0xff] %vm268, %v2937
      %2970 = vst.msk [vmem:[%s260 + $0x38] sm:$0xff] %vm268, %v2938
      %2971 = vst.msk [vmem:[%s260 + $0x40] sm:$0xff] %vm268, %v2939
      %2972 = vst.msk [vmem:[%s260 + $0x48] sm:$0xff] %vm268, %v2940
      %2973 = vst.msk [vmem:[%s260 + $0x50] sm:$0xff] %vm268, %v2941
      %2974 = vst.msk [vmem:[%s260 + $0x58] sm:$0xff] %vm268, %v2942
      %2975 = vst.msk [vmem:[%s260 + $0x60] sm:$0xff] %vm268, %v2943
      %2976 = vst.msk [vmem:[%s260 + $0x68] sm:$0xff] %vm268, %v2944
      %2977 = vst.msk [vmem:[%s260 + $0x70] sm:$0xff] %vm268, %v2945
      %2978 = vst.msk [vmem:[%s260 + $0x78] sm:$0xff] %vm268, %v2946
      %2979 = vst.msk [vmem:[%s260 + $0x80] sm:$0xff] %vm268, %v2947
      %2980 = vst.msk [vmem:[%s260 + $0x88] sm:$0xff] %vm268, %v2948
      %2981 = vst.msk [vmem:[%s260 + $0x90] sm:$0xff] %vm268, %v2949
      %2982 = vst.msk [vmem:[%s260 + $0x98] sm:$0xff] %vm268, %v2950
      %2983 = vst.msk [vmem:[%s260 + $0xa0] sm:$0xff] %vm268, %v2951
      %2984 = vst.msk [vmem:[%s260 + $0xa8] sm:$0xff] %vm268, %v2952
      %2985 = vst.msk [vmem:[%s260 + $0xb0] sm:$0xff] %vm268, %v2953
      %2986 = vst.msk [vmem:[%s260 + $0xb8] sm:$0xff] %vm268, %v2954
      %2987 = vst.msk [vmem:[%s260 + $0xc0] sm:$0xff] %vm268, %v2955
      %2988 = vst.msk [vmem:[%s260 + $0xc8] sm:$0xff] %vm268, %v2956
      %2989 = vst.msk [vmem:[%s260 + $0xd0] sm:$0xff] %vm268, %v2957
      %2990 = vst.msk [vmem:[%s260 + $0xd8] sm:$0xff] %vm268, %v2958
      %2991 = vst.msk [vmem:[%s260 + $0xe0] sm:$0xff] %vm268, %v2959
      %2992 = vst.msk [vmem:[%s260 + $0xe8] sm:$0xff] %vm268, %v2960
      %2993 = vst.msk [vmem:[%s260 + $0xf0] sm:$0xff] %vm268, %v2961
      %2994 = vst.msk [vmem:[%s260 + $0xf8] sm:$0xff] %vm268, %v2962
      %v2995 = vld [vmem:[%s260] sm:$0xff]
      %v2996 = vld [vmem:[%s260 + $0x8] sm:$0xff]
      %v2997 = vld [vmem:[%s260 + $0x10] sm:$0xff]
      %v2998 = vld [vmem:[%s260 + $0x18] sm:$0xff]
      %v2999 = vld [vmem:[%s260 + $0x20] sm:$0xff]
      %v3000 = vld [vmem:[%s260 + $0x28] sm:$0xff]
      %v3001 = vld [vmem:[%s260 + $0x30] sm:$0xff]
      %v3002 = vld [vmem:[%s260 + $0x38] sm:$0xff]
      %v3003 = vld [vmem:[%s260 + $0x40] sm:$0xff]
      %v3004 = vld [vmem:[%s260 + $0x48] sm:$0xff]
      %v3005 = vld [vmem:[%s260 + $0x50] sm:$0xff]
      %v3006 = vld [vmem:[%s260 + $0x58] sm:$0xff]
      %v3007 = vld [vmem:[%s260 + $0x60] sm:$0xff]
      %v3008 = vld [vmem:[%s260 + $0x68] sm:$0xff]
      %v3009 = vld [vmem:[%s260 + $0x70] sm:$0xff]
      %v3010 = vld [vmem:[%s260 + $0x78] sm:$0xff]
      %v3011 = vld [vmem:[%s260 + $0x80] sm:$0xff]
      %v3012 = vld [vmem:[%s260 + $0x88] sm:$0xff]
      %v3013 = vld [vmem:[%s260 + $0x90] sm:$0xff]
      %v3014 = vld [vmem:[%s260 + $0x98] sm:$0xff]
      %v3015 = vld [vmem:[%s260 + $0xa0] sm:$0xff]
      %v3016 = vld [vmem:[%s260 + $0xa8] sm:$0xff]
      %v3017 = vld [vmem:[%s260 + $0xb0] sm:$0xff]
      %v3018 = vld [vmem:[%s260 + $0xb8] sm:$0xff]
      %v3019 = vld [vmem:[%s260 + $0xc0] sm:$0xff]
      %v3020 = vld [vmem:[%s260 + $0xc8] sm:$0xff]
      %v3021 = vld [vmem:[%s260 + $0xd0] sm:$0xff]
      %v3022 = vld [vmem:[%s260 + $0xd8] sm:$0xff]
      %v3023 = vld [vmem:[%s260 + $0xe0] sm:$0xff]
      %v3024 = vld [vmem:[%s260 + $0xe8] sm:$0xff]
      %v3025 = vld [vmem:[%s260 + $0xf0] sm:$0xff]
      %v3026 = vld [vmem:[%s260 + $0xf8] sm:$0xff]
      %v3027 = vsel %vm268, %v2995, 0.0
      %v3028 = vsel %vm268, %v2996, 0.0
      %v3029 = vadd.f32 %v3027, %v3028
      %v3030 = vsel %vm268, %v2997, 0.0
      %v3031 = vadd.f32 %v3029, %v3030
      %v3032 = vsel %vm268, %v2998, 0.0
      %v3033 = vadd.f32 %v3031, %v3032
      %v3034 = vsel %vm268, %v2999, 0.0
      %v3035 = vadd.f32 %v3033, %v3034
      %v3036 = vsel %vm268, %v3000, 0.0
      %v3037 = vadd.f32 %v3035, %v3036
      %v3038 = vsel %vm268, %v3001, 0.0
      %v3039 = vadd.f32 %v3037, %v3038
      %v3040 = vsel %vm268, %v3002, 0.0
      %v3041 = vadd.f32 %v3039, %v3040
      %v3042 = vsel %vm268, %v3003, 0.0
      %v3043 = vadd.f32 %v3041, %v3042
      %v3044 = vsel %vm268, %v3004, 0.0
      %v3045 = vadd.f32 %v3043, %v3044
      %v3046 = vsel %vm268, %v3005, 0.0
      %v3047 = vadd.f32 %v3045, %v3046
      %v3048 = vsel %vm268, %v3006, 0.0
      %v3049 = vadd.f32 %v3047, %v3048
      %v3050 = vsel %vm268, %v3007, 0.0
      %v3051 = vadd.f32 %v3049, %v3050
      %v3052 = vsel %vm268, %v3008, 0.0
      %v3053 = vadd.f32 %v3051, %v3052
      %v3054 = vsel %vm268, %v3009, 0.0
      %v3055 = vadd.f32 %v3053, %v3054
      %v3056 = vsel %vm268, %v3010, 0.0
      %v3057 = vadd.f32 %v3055, %v3056
      %v3058 = vsel %vm268, %v3011, 0.0
      %v3059 = vadd.f32 %v3057, %v3058
      %v3060 = vsel %vm268, %v3012, 0.0
      %v3061 = vadd.f32 %v3059, %v3060
      %v3062 = vsel %vm268, %v3013, 0.0
      %v3063 = vadd.f32 %v3061, %v3062
      %v3064 = vsel %vm268, %v3014, 0.0
      %v3065 = vadd.f32 %v3063, %v3064
      %v3066 = vsel %vm268, %v3015, 0.0
      %v3067 = vadd.f32 %v3065, %v3066
      %v3068 = vsel %vm268, %v3016, 0.0
      %v3069 = vadd.f32 %v3067, %v3068
      %v3070 = vsel %vm268, %v3017, 0.0
      %v3071 = vadd.f32 %v3069, %v3070
      %v3072 = vsel %vm268, %v3018, 0.0
      %v3073 = vadd.f32 %v3071, %v3072
      %v3074 = vsel %vm268, %v3019, 0.0
      %v3075 = vadd.f32 %v3073, %v3074
      %v3076 = vsel %vm268, %v3020, 0.0
      %v3077 = vadd.f32 %v3075, %v3076
      %v3078 = vsel %vm268, %v3021, 0.0
      %v3079 = vadd.f32 %v3077, %v3078
      %v3080 = vsel %vm268, %v3022, 0.0
      %v3081 = vadd.f32 %v3079, %v3080
      %v3082 = vsel %vm268, %v3023, 0.0
      %v3083 = vadd.f32 %v3081, %v3082
      %v3084 = vsel %vm268, %v3024, 0.0
      %v3085 = vadd.f32 %v3083, %v3084
      %v3086 = vsel %vm268, %v3025, 0.0
      %v3087 = vadd.f32 %v3085, %v3086
      %v3088 = vsel %vm268, %v3026, 0.0
      %v3089 = vadd.f32 %v3087, %v3088
      %v3090 = vrot.slane %v3089, 4
      %v3091 = vadd.f32 %v3089, %v3090
      %v3092 = vrot.slane %v3091, 2
      %v3093 = vadd.f32 %v3091, %v3092
      %v3094 = vrot.slane %v3093, 1
      %v3095 = vadd.f32 %v3093, %v3094
      %v3096 = vmul.f32 %v2995, %v2995
      %v3097 = vmul.f32 %v2996, %v2996
      %v3098 = vmul.f32 %v2997, %v2997
      %v3099 = vmul.f32 %v2998, %v2998
      %v3100 = vmul.f32 %v2999, %v2999
      %v3101 = vmul.f32 %v3000, %v3000
      %v3102 = vmul.f32 %v3001, %v3001
      %v3103 = vmul.f32 %v3002, %v3002
      %v3104 = vmul.f32 %v3003, %v3003
      %v3105 = vmul.f32 %v3004, %v3004
      %v3106 = vmul.f32 %v3005, %v3005
      %v3107 = vmul.f32 %v3006, %v3006
      %v3108 = vmul.f32 %v3007, %v3007
      %v3109 = vmul.f32 %v3008, %v3008
      %v3110 = vmul.f32 %v3009, %v3009
      %v3111 = vmul.f32 %v3010, %v3010
      %v3112 = vmul.f32 %v3011, %v3011
      %v3113 = vmul.f32 %v3012, %v3012
      %v3114 = vmul.f32 %v3013, %v3013
      %v3115 = vmul.f32 %v3014, %v3014
      %v3116 = vmul.f32 %v3015, %v3015
      %v3117 = vmul.f32 %v3016, %v3016
      %v3118 = vmul.f32 %v3017, %v3017
      %v3119 = vmul.f32 %v3018, %v3018
      %v3120 = vmul.f32 %v3019, %v3019
      %v3121 = vmul.f32 %v3020, %v3020
      %v3122 = vmul.f32 %v3021, %v3021
      %v3123 = vmul.f32 %v3022, %v3022
      %v3124 = vmul.f32 %v3023, %v3023
      %v3125 = vmul.f32 %v3024, %v3024
      %v3126 = vmul.f32 %v3025, %v3025
      %v3127 = vmul.f32 %v3026, %v3026
      %v3128 = vsel %vm268, %v3096, 0.0
      %v3129 = vsel %vm268, %v3097, 0.0
      %v3130 = vadd.f32 %v3128, %v3129
      %v3131 = vsel %vm268, %v3098, 0.0
      %v3132 = vadd.f32 %v3130, %v3131
      %v3133 = vsel %vm268, %v3099, 0.0
      %v3134 = vadd.f32 %v3132, %v3133
      %v3135 = vsel %vm268, %v3100, 0.0
      %v3136 = vadd.f32 %v3134, %v3135
      %v3137 = vsel %vm268, %v3101, 0.0
      %v3138 = vadd.f32 %v3136, %v3137
      %v3139 = vsel %vm268, %v3102, 0.0
      %v3140 = vadd.f32 %v3138, %v3139
      %v3141 = vsel %vm268, %v3103, 0.0
      %v3142 = vadd.f32 %v3140, %v3141
      %v3143 = vsel %vm268, %v3104, 0.0
      %v3144 = vadd.f32 %v3142, %v3143
      %v3145 = vsel %vm268, %v3105, 0.0
      %v3146 = vadd.f32 %v3144, %v3145
      %v3147 = vsel %vm268, %v3106, 0.0
      %v3148 = vadd.f32 %v3146, %v3147
      %v3149 = vsel %vm268, %v3107, 0.0
      %v3150 = vadd.f32 %v3148, %v3149
      %v3151 = vsel %vm268, %v3108, 0.0
      %v3152 = vadd.f32 %v3150, %v3151
      %v3153 = vsel %vm268, %v3109, 0.0
      %v3154 = vadd.f32 %v3152, %v3153
      %v3155 = vsel %vm268, %v3110, 0.0
      %v3156 = vadd.f32 %v3154, %v3155
      %v3157 = vsel %vm268, %v3111, 0.0
      %v3158 = vadd.f32 %v3156, %v3157
      %v3159 = vsel %vm268, %v3112, 0.0
      %v3160 = vadd.f32 %v3158, %v3159
      %v3161 = vsel %vm268, %v3113, 0.0
      %v3162 = vadd.f32 %v3160, %v3161
      %v3163 = vsel %vm268, %v3114, 0.0
      %v3164 = vadd.f32 %v3162, %v3163
      %v3165 = vsel %vm268, %v3115, 0.0
      %v3166 = vadd.f32 %v3164, %v3165
      %v3167 = vsel %vm268, %v3116, 0.0
      %v3168 = vadd.f32 %v3166, %v3167
      %v3169 = vsel %vm268, %v3117, 0.0
      %v3170 = vadd.f32 %v3168, %v3169
      %v3171 = vsel %vm268, %v3118, 0.0
      %v3172 = vadd.f32 %v3170, %v3171
      %v3173 = vsel %vm268, %v3119, 0.0
      %v3174 = vadd.f32 %v3172, %v3173
      %v3175 = vsel %vm268, %v3120, 0.0
      %v3176 = vadd.f32 %v3174, %v3175
      %v3177 = vsel %vm268, %v3121, 0.0
      %v3178 = vadd.f32 %v3176, %v3177
      %v3179 = vsel %vm268, %v3122, 0.0
      %v3180 = vadd.f32 %v3178, %v3179
      %v3181 = vsel %vm268, %v3123, 0.0
      %v3182 = vadd.f32 %v3180, %v3181
      %v3183 = vsel %vm268, %v3124, 0.0
      %v3184 = vadd.f32 %v3182, %v3183
      %v3185 = vsel %vm268, %v3125, 0.0
      %v3186 = vadd.f32 %v3184, %v3185
      %v3187 = vsel %vm268, %v3126, 0.0
      %v3188 = vadd.f32 %v3186, %v3187
      %v3189 = vsel %vm268, %v3127, 0.0
      %v3190 = vadd.f32 %v3188, %v3189
      %v3191 = vrot.slane %v3190, 4
      %v3192 = vadd.f32 %v3190, %v3191
      %v3193 = vrot.slane %v3192, 2
      %v3194 = vadd.f32 %v3192, %v3193
      %v3195 = vrot.slane %v3194, 1
      %v3196 = vadd.f32 %v3194, %v3195
      %vm3197 = vcmp.eq.s32.totalorder %v443, 0
      %vm3198 = vcmp.eq.s32.totalorder %v443, 1
      %v3199 = vsel %vm3198, %v3196, 0.0
      %v3200 = vsel %vm3197, %v3095, %v3199
      %3201 = vst.msk [vmem:[%s265] sm:$0xff] %vm268, %v3200
      %s3202 = smul.u32 32, %s18
      %p3203 = scmp.lt.s32.totalorder %s3202, 63
      %s3204 = scalar_select %p3203, %s3202, 63
      %s3205 = smul.addr %s3204, 8
      %s3206 = scalar_lea.vmem %s5, %s3205
      %p3207 = scmp.lt.s32.totalorder %s18, 1
      %s3208 = scalar_select %p3207, %s18, 1
      %s3209 = smul.addr %s3208, 8
      %s3210 = scalar_lea.vmem %s6, %s3209
      // Predicated region
      $region41: #{bottleneck_forward.5} parent=39 // pred_check
        %p3211 = pneg %p146
      $region42: #{bottleneck_forward.5} parent=39 // pred_check_branch
        %3213 = sbr.rel (%p3211) target = $region44
      $region43: #{bottleneck_forward.5} parent=39 // pred_region
        %s3214 = smul.u32 32, %s18
      $region44: #{bottleneck_forward.5} parent=39 // pred_fallthru
        _
      // Predicated region
      $region45: #{bottleneck_forward.5} parent=39 // pred_check
        %p3215 = pneg %p172
      $region46: #{bottleneck_forward.5} parent=39 // pred_check_branch
        %3217 = sbr.rel (%p3215) target = $region48
      $region47: #{bottleneck_forward.5} parent=39 // pred_region
        _
      $region48: #{bottleneck_forward.5} parent=39 // pred_fallthru
        _
    $region40: #{bottleneck_forward.5} parent=5 // pred_fallthru
      _
    %p3218 = scmp.le.s32.totalorder 2, %s13
    // Predicated region
    $region49: #{bottleneck_forward.5} parent=5 // pred_check
      %p3219 = pneg %p3218
    $region50: #{bottleneck_forward.5} parent=5 // pred_check_branch
      %3221 = sbr.rel (%p3219) target = $region52
    $region51: #{bottleneck_forward.5} parent=5 // pred_region
      %s3222 = ssub.s32 %s13, 2
      // Predicated region
      $region53: #{bottleneck_forward.5} parent=51 // pred_check
        %p3223 = pneg %p152
      $region54: #{bottleneck_forward.5} parent=51 // pred_check_branch
        %3225 = sbr.rel (%p3223) target = $region56
      $region55: #{bottleneck_forward.5} parent=51 // pred_region
        %s3226 = smul.u32 32, %s19
        %p3227 = scmp.lt.s32.totalorder %s3226, 63
        %s3228 = scalar_select %p3227, %s3226, 63
        %s3229 = smul.addr %s3228, 8
        %s3230 = scalar_lea.vmem %s5, %s3229
      $region56: #{bottleneck_forward.5} parent=51 // pred_fallthru
        _
      // Predicated region
      $region57: #{bottleneck_forward.5} parent=51 // pred_check
        %p3231 = pneg %p178
      $region58: #{bottleneck_forward.5} parent=51 // pred_check_branch
        %3233 = sbr.rel (%p3231) target = $region60
      $region59: #{bottleneck_forward.5} parent=51 // pred_region
        %p3234 = scmp.lt.s32.totalorder %s19, 1
        %s3235 = scalar_select %p3234, %s19, 1
        %s3236 = smul.addr %s3235, 8
        %s3237 = scalar_lea.vmem %s6, %s3236
      $region60: #{bottleneck_forward.5} parent=51 // pred_fallthru
        _
    $region52: #{bottleneck_forward.5} parent=5 // pred_fallthru
      _
  $region6: #{bottleneck_forward.5} parent=0 // loop_footer
    %s17 = sadd.s32 1, %s13
  $region7: #{bottleneck_forward.5} parent=0 // loop_footer_branch
    %12 = sbr.rel target = $region3
  $region8: #{bottleneck_forward.5} parent=0 // loop_exit
    _

</llo_original>
